<compile_context>
chip_gen: v6e
topology: v6e:2x2x1
jax: 0.10.0
libtpu: 0.0.40
codegen_flags: <defaults>
</compile_context>

<pallas_src>
import numpy as np
import jax
import jax.numpy as jnp
from jax.experimental import pallas as pl
from jax.experimental.pallas import tpu as pltpu


def _round_up(x, m):
    return (x + m - 1) // m * m


# ----------------------------------------------------------------------------
# Pallas kernels: fused GEMM + bias + ReLU (f32 accumulate / epilogue)
# ----------------------------------------------------------------------------
def _wx_bias_relu_kernel(w_ref, x_ref, b_ref, o_ref):
    # out(O, TN) = relu(W(O, K) @ X(K, TN) + b(O, 1)), bias broadcasts over lanes.
    acc = jnp.dot(w_ref[...], x_ref[...], preferred_element_type=jnp.float32)
    acc = acc + b_ref[...]
    o_ref[...] = jnp.maximum(acc, 0.0).astype(o_ref.dtype)


def _xw_bias_relu_kernel(a_ref, w_ref, b_ref, o_ref):
    # out(M, N) = relu(A(M, K) @ W(K, N) + b(1, N)), bias broadcasts over rows.
    acc = jnp.dot(a_ref[...], w_ref[...], preferred_element_type=jnp.float32)
    acc = acc + b_ref[...]
    o_ref[...] = jnp.maximum(acc, 0.0).astype(o_ref.dtype)


def _pick_tn(m):
    """Lane-tile width for the big M axis (multiple of 128, up to 1024)."""
    mp = _round_up(m, 128)
    if mp >= 4096:
        return 1024
    if mp >= 1024:
        return 512
    return mp  # single lane tile


def gemm_t_bias_relu(w, x, b):
    """relu(w @ x + b).  w: (Op, K) bf16 (prepared), x: (K, M), b: (Op, 1) f32.

    M (the large B*Ho*Wo axis) is tiled on lanes; O and K are single
    full-extent blocks.  Returns (Op, Mp) f32; caller slices off padding.
    """
    O, K = w.shape
    K2, M = x.shape
    assert K == K2
    x = x.astype(jnp.bfloat16)
    TN = _pick_tn(M)
    Mp = _round_up(M, TN)
    if Mp != M:
        x = jnp.pad(x, ((0, 0), (0, Mp - M)))
    grid = (Mp // TN,)
    return pl.pallas_call(
        _wx_bias_relu_kernel,
        out_shape=jax.ShapeDtypeStruct((O, Mp), jnp.float32),
        grid_spec=pltpu.PrefetchScalarGridSpec(
            num_scalar_prefetch=0,
            grid=grid,
            in_specs=[
                pl.BlockSpec((O, K), lambda j: (0, 0)),   # weights: VMEM-resident
                pl.BlockSpec((K, TN), lambda j: (0, j)),  # activations: lane tiles
                pl.BlockSpec((O, 1), lambda j: (0, 0)),   # bias column
            ],
            out_specs=pl.BlockSpec((O, TN), lambda j: (0, j)),
        ),
        compiler_params=pltpu.CompilerParams(
            dimension_semantics=("parallel",)),
    )(w, x, b)


def fc_bias_relu(a, w, b):
    """relu(a @ w + b).  a: (Bp, K) (rows padded to 8), w: (K, N) bf16, b: (1, N)."""
    Bm, K = a.shape
    K2, N = w.shape
    assert K == K2
    a = a.astype(jnp.bfloat16)
    return pl.pallas_call(
        _xw_bias_relu_kernel,
        out_shape=jax.ShapeDtypeStruct((Bm, N), jnp.float32),
        grid_spec=pltpu.PrefetchScalarGridSpec(
            num_scalar_prefetch=0,
            grid=(1,),
            in_specs=[
                pl.BlockSpec((Bm, K), lambda i: (0, 0)),
                pl.BlockSpec((K, N), lambda i: (0, 0)),
                pl.BlockSpec((1, N), lambda i: (0, 0)),
            ],
            out_specs=pl.BlockSpec((Bm, N), lambda i: (0, 0)),
        ),
        compiler_params=pltpu.CompilerParams(
            dimension_semantics=("arbitrary",)),
    )(a, w, b)


# ----------------------------------------------------------------------------
# Conv / ConvTranspose via CNHW im2col + Pallas GEMM (no inter-layer transposes)
# ----------------------------------------------------------------------------
def _im2col_t(x, kh, kw, stride, pad):
    """x: (C, B, H, W) -> cols (C*kh*kw, B*Ho*Wo), row order (c, i, j)."""
    C, B, H, W = x.shape
    xp = jnp.pad(x, ((0, 0), (0, 0), (pad, pad), (pad, pad)))
    Ho = (H + 2 * pad - kh) // stride + 1
    Wo = (W + 2 * pad - kw) // stride + 1
    patches = []
    for i in range(kh):
        for j in range(kw):
            patches.append(
                xp[:, :, i:i + stride * Ho:stride, j:j + stride * Wo:stride])
    p = jnp.stack(patches, axis=1)                 # (C, kh*kw, B, Ho, Wo)
    return p.reshape(C * kh * kw, B * Ho * Wo), Ho, Wo


def _dilate(x, stride):
    if stride == 1:
        return x
    C, B, H, W = x.shape
    out = jnp.zeros((C, B, (H - 1) * stride + 1, (W - 1) * stride + 1), x.dtype)
    return out.at[:, :, ::stride, ::stride].set(x)


def conv2d_relu(x, w_mat, b_col, c_out, kh, kw, stride, pad):
    """PyTorch Conv2d + ReLU.  x CNHW (C,B,H,W), prepared w_mat (Op, C*kh*kw)."""
    _, B, _, _ = x.shape
    cols, Ho, Wo = _im2col_t(x.astype(jnp.bfloat16), kh, kw, stride, pad)
    out = gemm_t_bias_relu(w_mat, cols, b_col)     # (Op, Mp)
    return out[:c_out, :B * Ho * Wo].reshape(c_out, B, Ho, Wo)


def conv_transpose2d_relu(x, w_mat, b_col, c_out, kh, kw, stride, pad):
    """PyTorch ConvTranspose2d + ReLU as dilated stride-1 conv (weights pre-flipped)."""
    xd = _dilate(x.astype(jnp.bfloat16), stride)
    return conv2d_relu(xd, w_mat, b_col, c_out, kh, kw, stride=1, pad=kh - 1 - pad)


# ----------------------------------------------------------------------------
# Parameters: deterministic init + one-time GEMM-ready preparation
# ----------------------------------------------------------------------------
def _uniform(key, shape, fan_in):
    bound = 1.0 / np.sqrt(fan_in)
    return jax.random.uniform(key, shape, jnp.float32, -bound, bound)


def init_params(key):
    ks = jax.random.split(key, 16)
    p = {}
    # encoder (Conv2d weights: (O, C, kh, kw))
    p["enc1_w"] = _uniform(ks[0], (16, 1, 4, 4), 1 * 4 * 4)
    p["enc1_b"] = _uniform(ks[1], (16,), 1 * 4 * 4)
    p["enc2_w"] = _uniform(ks[2], (64, 16, 5, 5), 16 * 5 * 5)
    p["enc2_b"] = _uniform(ks[3], (64,), 16 * 5 * 5)
    p["enc3_w"] = _uniform(ks[4], (32, 64, 3, 3), 64 * 3 * 3)
    p["enc3_b"] = _uniform(ks[5], (32,), 64 * 3 * 3)
    # fully connected (PyTorch layout: (out, in))
    p["fc1_w"] = _uniform(ks[6], (128, 1856), 1856)
    p["fc1_b"] = _uniform(ks[7], (128,), 1856)
    p["fc2_w"] = _uniform(ks[8], (1856, 128), 128)
    p["fc2_b"] = _uniform(ks[9], (1856,), 128)
    # decoder (ConvTranspose2d weights: (C_in, C_out, kh, kw))
    p["dec1_w"] = _uniform(ks[10], (32, 64, 3, 3), 64 * 3 * 3)
    p["dec1_b"] = _uniform(ks[11], (64,), 64 * 3 * 3)
    p["dec2_w"] = _uniform(ks[12], (64, 16, 5, 5), 16 * 5 * 5)
    p["dec2_b"] = _uniform(ks[13], (16,), 16 * 5 * 5)
    p["dec3_w"] = _uniform(ks[14], (16, 1, 4, 4), 1 * 4 * 4)
    p["dec3_b"] = _uniform(ks[15], (1,), 1 * 4 * 4)
    return p


def prepare_params(p):
    """One-time conversion into GEMM-ready operands (runs outside jit).

    Conv  (O, C, kh, kw)      -> (round_up(O,8), C*kh*kw) bf16, bias (Op, 1) f32
    ConvT (C_in, C_out, k, k) -> spatially flipped + channel-swapped conv weight
    Linear (out, in)          -> (in, out) bf16, bias (1, out) f32
    """
    def conv(w, b):
        O, C, kh, kw = w.shape
        K = C * kh * kw
        Op = _round_up(O, 8)
        w_mat = jnp.zeros((Op, K), jnp.bfloat16).at[:O].set(
            w.reshape(O, K).astype(jnp.bfloat16))
        b_col = jnp.zeros((Op, 1), jnp.float32).at[:O, 0].set(
            b.astype(jnp.float32))
        return w_mat, b_col

    def convT(w, b):
        w_conv = jnp.flip(w, axis=(2, 3)).transpose(1, 0, 2, 3)
        return conv(w_conv, b)

    def fc(w, b):
        return w.T.astype(jnp.bfloat16), b.reshape(1, -1).astype(jnp.float32)

    prep = {}
    prep["enc1_w"], prep["enc1_b"] = conv(p["enc1_w"], p["enc1_b"])
    prep["enc2_w"], prep["enc2_b"] = conv(p["enc2_w"], p["enc2_b"])
    prep["enc3_w"], prep["enc3_b"] = conv(p["enc3_w"], p["enc3_b"])
    prep["fc1_w"], prep["fc1_b"] = fc(p["fc1_w"], p["fc1_b"])
    prep["fc2_w"], prep["fc2_b"] = fc(p["fc2_w"], p["fc2_b"])
    prep["dec1_w"], prep["dec1_b"] = convT(p["dec1_w"], p["dec1_b"])
    prep["dec2_w"], prep["dec2_b"] = convT(p["dec2_w"], p["dec2_b"])
    prep["dec3_w"], prep["dec3_b"] = convT(p["dec3_w"], p["dec3_b"])
    return prep


# ----------------------------------------------------------------------------
# Forward pass (matches visual_autoencoder.forward)
# ----------------------------------------------------------------------------
def forward(prep, x):
    B = x.size // (1 * 18 * 342)
    # NCHW (B,1,18,342) -> CNHW (1,B,18,342): pure reshape because C == 1.
    xc = x.reshape(B, 1, 18, 342).reshape(1, B, 18, 342)

    # encoder (activations stay CNHW; GEMMs are lane-dense over B*Ho*Wo)
    h = conv2d_relu(xc, prep["enc1_w"], prep["enc1_b"], 16, 4, 4, stride=2, pad=1)  # (16,B,9,171)
    h = conv2d_relu(h, prep["enc2_w"], prep["enc2_b"], 64, 5, 5, stride=2, pad=1)   # (64,B,4,85)
    h = conv2d_relu(h, prep["enc3_w"], prep["enc3_b"], 32, 3, 3, stride=3, pad=1)   # (32,B,2,29)

    # fully connected (row-major GEMM; batch rows padded to 8 sublanes)
    Bp = _round_up(B, 8)
    flat = h.transpose(1, 0, 2, 3).reshape(B, 32 * 2 * 29)   # PyTorch (c,h,w) flatten order
    flat = jnp.pad(flat, ((0, Bp - B), (0, 0)))
    lat_p = fc_bias_relu(flat, prep["fc1_w"], prep["fc1_b"])            # (Bp,128)
    latent = lat_p[:B]                                                  # (B,128)
    x_hat = fc_bias_relu(lat_p, prep["fc2_w"], prep["fc2_b"])[:B]       # (B,1856)
    d = x_hat.reshape(B, 32, 2, 29).transpose(1, 0, 2, 3)               # CNHW (32,B,2,29)

    # decoder
    d = conv_transpose2d_relu(d, prep["dec1_w"], prep["dec1_b"], 64, 3, 3, stride=3, pad=1)  # (64,B,4,85)
    d = conv_transpose2d_relu(d, prep["dec2_w"], prep["dec2_b"], 16, 5, 5, stride=2, pad=1)  # (16,B,9,171)
    d = conv_transpose2d_relu(d, prep["dec3_w"], prep["dec3_b"], 1, 4, 4, stride=2, pad=1)   # (1,B,18,342)

    # CNHW (1,B,18,342) -> NCHW (B,1,18,342): pure reshape because C == 1.
    reconstructed = d.reshape(-1, 1, 18, 342)
    return latent, reconstructed


if __name__ == "__main__":
    key = jax.random.PRNGKey(0)
    k_x, k_p = jax.random.split(key)

    # the module hard-codes the 1x18x342 input geometry (fc1 = 29*2*32)
    B = 2
    x = jax.random.normal(k_x, (B, 1, 18, 342), dtype=jnp.float32)
    params = init_params(k_p)
    prep = prepare_params(params)     # one-time weight prep, outside jit

    fwd = jax.jit(forward)
    latent, rec = fwd(prep, x)
    latent = jax.block_until_ready(latent)
    rec = jax.block_until_ready(rec)

    assert latent.shape == (B, 128), latent.shape
    assert rec.shape == (B, 1, 18, 342), rec.shape
    assert jnp.all(jnp.isfinite(latent)) and jnp.all(jnp.isfinite(rec))
    assert jnp.all(latent >= 0.0) and jnp.all(rec >= 0.0)   # ReLU outputs

    print("KERNEL_OK")
</pallas_src>

<mosaic_0001>
module attributes {stable_mosaic.version = 11 : i64} {
  func.func @_wx_bias_relu_kernel(%arg0: i32, %arg1: memref<16x16xbf16, #tpu.memory_space<vmem>>, %arg2: memref<16x512xbf16, #tpu.memory_space<vmem>>, %arg3: memref<16x1xf32, #tpu.memory_space<vmem>>, %arg4: memref<16x512xf32, #tpu.memory_space<vmem>>) attributes {dimension_semantics = [#tpu.dimension_semantics<parallel>], iteration_bounds = array<i64: 7>, scalar_prefetch = 0 : i64, scratch_operands = 0 : i64, tpu.core_type = #tpu.core_type<tc>, window_params = [{pipeline_mode = #tpu.pipeline_mode<synchronous>, transform_indices = @transform_0, window_bounds = array<i64: 16, 16>}, {transform_indices = @transform_1, window_bounds = array<i64: 16, 512>}, {pipeline_mode = #tpu.pipeline_mode<synchronous>, transform_indices = @transform_2, window_bounds = array<i64: 16, 1>}, {transform_indices = @transform_3, window_bounds = array<i64: 16, 512>}]} {
    %c0 = arith.constant 0 : index
    %c0_0 = arith.constant 0 : index
    %0 = vector.load %arg1[%c0, %c0_0] : memref<16x16xbf16, #tpu.memory_space<vmem>>, vector<16x16xbf16>
    %c0_1 = arith.constant 0 : index
    %c0_2 = arith.constant 0 : index
    %1 = vector.load %arg2[%c0_1, %c0_2] : memref<16x512xbf16, #tpu.memory_space<vmem>>, vector<16x512xbf16>
    %cst = arith.constant dense<0.000000e+00> : vector<16x512xf32>
    %2 = tpu.matmul %0, %1, %cst {dimension_numbers = #tpu.dot_dimension_numbers<[1], [0], [0], [1], [0, 0, 1, 1], [], []>} : vector<16x16xbf16>, vector<16x512xbf16>, vector<16x512xf32> -> vector<16x512xf32>
    %c0_3 = arith.constant 0 : index
    %c0_4 = arith.constant 0 : index
    %3 = vector.load %arg3[%c0_3, %c0_4] : memref<16x1xf32, #tpu.memory_space<vmem>>, vector<16x1xf32>
    %4 = vector.broadcast %3 : vector<16x1xf32> to vector<16x512xf32>
    %5 = arith.addf %2, %4 : vector<16x512xf32>
    %cst_5 = arith.constant 0.000000e+00 : f32
    %6 = vector.broadcast %cst_5 : f32 to vector<16x512xf32>
    %7 = arith.maximumf %5, %6 : vector<16x512xf32>
    %c0_6 = arith.constant 0 : index
    %c0_7 = arith.constant 0 : index
    %8 = vector.load %arg4[%c0_6, %c0_7] : memref<16x512xf32, #tpu.memory_space<vmem>>, vector<16x512xf32>
    tpu.vector_store %arg4[%c0_6, %c0_7], %7 {strides = array<i32>} : memref<16x512xf32, #tpu.memory_space<vmem>>, vector<16x512xf32>,
    return
  }
  func.func @transform_0(%arg0: i32) -> (i32, i32) {
    %c0_i32 = arith.constant 0 : i32
    %c0_i32_0 = arith.constant 0 : i32
    %c0_i32_1 = arith.constant 0 : i32
    return %c0_i32, %c0_i32_0 : i32, i32
  }
  func.func @transform_1(%arg0: i32) -> (i32, i32) {
    %c0_i32 = arith.constant 0 : i32
    %c0_i32_0 = arith.constant 0 : i32
    return %c0_i32, %arg0 : i32, i32
  }
  func.func @transform_2(%arg0: i32) -> (i32, i32) {
    %c0_i32 = arith.constant 0 : i32
    %c0_i32_0 = arith.constant 0 : i32
    %c0_i32_1 = arith.constant 0 : i32
    return %c0_i32, %c0_i32_0 : i32, i32
  }
  func.func @transform_3(%arg0: i32) -> (i32, i32) {
    %c0_i32 = arith.constant 0 : i32
    %c0_i32_0 = arith.constant 0 : i32
    return %c0_i32, %arg0 : i32, i32
  }
}

module attributes {stable_mosaic.version = 11 : i64} {
  func.func @_wx_bias_relu_kernel(%arg0: i32, %arg1: memref<64x400xbf16, #tpu.memory_space<vmem>>, %arg2: memref<400x768xbf16, #tpu.memory_space<vmem>>, %arg3: memref<64x1xf32, #tpu.memory_space<vmem>>, %arg4: memref<64x768xf32, #tpu.memory_space<vmem>>) attributes {dimension_semantics = [#tpu.dimension_semantics<parallel>], iteration_bounds = array<i64: 1>, scalar_prefetch = 0 : i64, scratch_operands = 0 : i64, tpu.core_type = #tpu.core_type<tc>, window_params = [{pipeline_mode = #tpu.pipeline_mode<synchronous>, transform_indices = @transform_0, window_bounds = array<i64: 64, 400>}, {transform_indices = @transform_1, window_bounds = array<i64: 400, 768>}, {pipeline_mode = #tpu.pipeline_mode<synchronous>, transform_indices = @transform_2, window_bounds = array<i64: 64, 1>}, {transform_indices = @transform_3, window_bounds = array<i64: 64, 768>}]} {
    %c0 = arith.constant 0 : index
    %c0_0 = arith.constant 0 : index
    %0 = vector.load %arg1[%c0, %c0_0] : memref<64x400xbf16, #tpu.memory_space<vmem>>, vector<64x400xbf16>
    %c0_1 = arith.constant 0 : index
    %c0_2 = arith.constant 0 : index
    %1 = vector.load %arg2[%c0_1, %c0_2] : memref<400x768xbf16, #tpu.memory_space<vmem>>, vector<400x768xbf16>
    %cst = arith.constant dense<0.000000e+00> : vector<64x768xf32>
    %2 = tpu.matmul %0, %1, %cst {dimension_numbers = #tpu.dot_dimension_numbers<[1], [0], [0], [1], [0, 0, 1, 1], [], []>} : vector<64x400xbf16>, vector<400x768xbf16>, vector<64x768xf32> -> vector<64x768xf32>
    %c0_3 = arith.constant 0 : index
    %c0_4 = arith.constant 0 : index
    %3 = vector.load %arg3[%c0_3, %c0_4] : memref<64x1xf32, #tpu.memory_space<vmem>>, vector<64x1xf32>
    %4 = vector.broadcast %3 : vector<64x1xf32> to vector<64x768xf32>
    %5 = arith.addf %2, %4 : vector<64x768xf32>
    %cst_5 = arith.constant 0.000000e+00 : f32
    %6 = vector.broadcast %cst_5 : f32 to vector<64x768xf32>
    %7 = arith.maximumf %5, %6 : vector<64x768xf32>
    %c0_6 = arith.constant 0 : index
    %c0_7 = arith.constant 0 : index
    %8 = vector.load %arg4[%c0_6, %c0_7] : memref<64x768xf32, #tpu.memory_space<vmem>>, vector<64x768xf32>
    tpu.vector_store %arg4[%c0_6, %c0_7], %7 {strides = array<i32>} : memref<64x768xf32, #tpu.memory_space<vmem>>, vector<64x768xf32>,
    return
  }
  func.func @transform_0(%arg0: i32) -> (i32, i32) {
    %c0_i32 = arith.constant 0 : i32
    %c0_i32_0 = arith.constant 0 : i32
    %c0_i32_1 = arith.constant 0 : i32
    return %c0_i32, %c0_i32_0 : i32, i32
  }
  func.func @transform_1(%arg0: i32) -> (i32, i32) {
    %c0_i32 = arith.constant 0 : i32
    %c0_i32_0 = arith.constant 0 : i32
    return %c0_i32, %arg0 : i32, i32
  }
  func.func @transform_2(%arg0: i32) -> (i32, i32) {
    %c0_i32 = arith.constant 0 : i32
    %c0_i32_0 = arith.constant 0 : i32
    %c0_i32_1 = arith.constant 0 : i32
    return %c0_i32, %c0_i32_0 : i32, i32
  }
  func.func @transform_3(%arg0: i32) -> (i32, i32) {
    %c0_i32 = arith.constant 0 : i32
    %c0_i32_0 = arith.constant 0 : i32
    return %c0_i32, %arg0 : i32, i32
  }
}

module attributes {stable_mosaic.version = 11 : i64} {
  func.func @_wx_bias_relu_kernel(%arg0: i32, %arg1: memref<32x576xbf16, #tpu.memory_space<vmem>>, %arg2: memref<576x128xbf16, #tpu.memory_space<vmem>>, %arg3: memref<32x1xf32, #tpu.memory_space<vmem>>, %arg4: memref<32x128xf32, #tpu.memory_space<vmem>>) attributes {dimension_semantics = [#tpu.dimension_semantics<parallel>], iteration_bounds = array<i64: 1>, scalar_prefetch = 0 : i64, scratch_operands = 0 : i64, tpu.core_type = #tpu.core_type<tc>, window_params = [{pipeline_mode = #tpu.pipeline_mode<synchronous>, transform_indices = @transform_0, window_bounds = array<i64: 32, 576>}, {transform_indices = @transform_1, window_bounds = array<i64: 576, 128>}, {pipeline_mode = #tpu.pipeline_mode<synchronous>, transform_indices = @transform_2, window_bounds = array<i64: 32, 1>}, {transform_indices = @transform_3, window_bounds = array<i64: 32, 128>}]} {
    %c0 = arith.constant 0 : index
    %c0_0 = arith.constant 0 : index
    %0 = vector.load %arg1[%c0, %c0_0] : memref<32x576xbf16, #tpu.memory_space<vmem>>, vector<32x576xbf16>
    %c0_1 = arith.constant 0 : index
    %c0_2 = arith.constant 0 : index
    %1 = vector.load %arg2[%c0_1, %c0_2] : memref<576x128xbf16, #tpu.memory_space<vmem>>, vector<576x128xbf16>
    %cst = arith.constant dense<0.000000e+00> : vector<32x128xf32>
    %2 = tpu.matmul %0, %1, %cst {dimension_numbers = #tpu.dot_dimension_numbers<[1], [0], [0], [1], [0, 0, 1, 1], [], []>} : vector<32x576xbf16>, vector<576x128xbf16>, vector<32x128xf32> -> vector<32x128xf32>
    %c0_3 = arith.constant 0 : index
    %c0_4 = arith.constant 0 : index
    %3 = vector.load %arg3[%c0_3, %c0_4] : memref<32x1xf32, #tpu.memory_space<vmem>>, vector<32x1xf32>
    %4 = vector.broadcast %3 : vector<32x1xf32> to vector<32x128xf32>
    %5 = arith.addf %2, %4 : vector<32x128xf32>
    %cst_5 = arith.constant 0.000000e+00 : f32
    %6 = vector.broadcast %cst_5 : f32 to vector<32x128xf32>
    %7 = arith.maximumf %5, %6 : vector<32x128xf32>
    %c0_6 = arith.constant 0 : index
    %c0_7 = arith.constant 0 : index
    %8 = vector.load %arg4[%c0_6, %c0_7] : memref<32x128xf32, #tpu.memory_space<vmem>>, vector<32x128xf32>
    tpu.vector_store %arg4[%c0_6, %c0_7], %7 {strides = array<i32>} : memref<32x128xf32, #tpu.memory_space<vmem>>, vector<32x128xf32>,
    return
  }
  func.func @transform_0(%arg0: i32) -> (i32, i32) {
    %c0_i32 = arith.constant 0 : i32
    %c0_i32_0 = arith.constant 0 : i32
    %c0_i32_1 = arith.constant 0 : i32
    return %c0_i32, %c0_i32_0 : i32, i32
  }
  func.func @transform_1(%arg0: i32) -> (i32, i32) {
    %c0_i32 = arith.constant 0 : i32
    %c0_i32_0 = arith.constant 0 : i32
    return %c0_i32, %arg0 : i32, i32
  }
  func.func @transform_2(%arg0: i32) -> (i32, i32) {
    %c0_i32 = arith.constant 0 : i32
    %c0_i32_0 = arith.constant 0 : i32
    %c0_i32_1 = arith.constant 0 : i32
    return %c0_i32, %c0_i32_0 : i32, i32
  }
  func.func @transform_3(%arg0: i32) -> (i32, i32) {
    %c0_i32 = arith.constant 0 : i32
    %c0_i32_0 = arith.constant 0 : i32
    return %c0_i32, %arg0 : i32, i32
  }
}

module attributes {stable_mosaic.version = 11 : i64} {
  func.func @_xw_bias_relu_kernel(%arg0: i32, %arg1: memref<8x1856xbf16, #tpu.memory_space<vmem>>, %arg2: memref<1856x128xbf16, #tpu.memory_space<vmem>>, %arg3: memref<1x128xf32, #tpu.memory_space<vmem>>, %arg4: memref<8x128xf32, #tpu.memory_space<vmem>>) attributes {dimension_semantics = [#tpu.dimension_semantics<arbitrary>], iteration_bounds = array<i64: 1>, scalar_prefetch = 0 : i64, scratch_operands = 0 : i64, tpu.core_type = #tpu.core_type<tc>, window_params = [{pipeline_mode = #tpu.pipeline_mode<synchronous>, transform_indices = @transform_0, window_bounds = array<i64: 8, 1856>}, {pipeline_mode = #tpu.pipeline_mode<synchronous>, transform_indices = @transform_1, window_bounds = array<i64: 1856, 128>}, {pipeline_mode = #tpu.pipeline_mode<synchronous>, transform_indices = @transform_2, window_bounds = array<i64: 1, 128>}, {pipeline_mode = #tpu.pipeline_mode<synchronous>, transform_indices = @transform_3, window_bounds = array<i64: 8, 128>}]} {
    %c0 = arith.constant 0 : index
    %c0_0 = arith.constant 0 : index
    %0 = vector.load %arg1[%c0, %c0_0] : memref<8x1856xbf16, #tpu.memory_space<vmem>>, vector<8x1856xbf16>
    %c0_1 = arith.constant 0 : index
    %c0_2 = arith.constant 0 : index
    %1 = vector.load %arg2[%c0_1, %c0_2] : memref<1856x128xbf16, #tpu.memory_space<vmem>>, vector<1856x128xbf16>
    %cst = arith.constant dense<0.000000e+00> : vector<8x128xf32>
    %2 = tpu.matmul %0, %1, %cst {dimension_numbers = #tpu.dot_dimension_numbers<[1], [0], [0], [1], [0, 0, 1, 1], [], []>} : vector<8x1856xbf16>, vector<1856x128xbf16>, vector<8x128xf32> -> vector<8x128xf32>
    %c0_3 = arith.constant 0 : index
    %c0_4 = arith.constant 0 : index
    %3 = vector.load %arg3[%c0_3, %c0_4] : memref<1x128xf32, #tpu.memory_space<vmem>>, vector<1x128xf32>
    %4 = vector.broadcast %3 : vector<1x128xf32> to vector<8x128xf32>
    %5 = arith.addf %2, %4 : vector<8x128xf32>
    %cst_5 = arith.constant 0.000000e+00 : f32
    %6 = vector.broadcast %cst_5 : f32 to vector<8x128xf32>
    %7 = arith.maximumf %5, %6 : vector<8x128xf32>
    %c0_6 = arith.constant 0 : index
    %c0_7 = arith.constant 0 : index
    %8 = vector.load %arg4[%c0_6, %c0_7] : memref<8x128xf32, #tpu.memory_space<vmem>>, vector<8x128xf32>
    tpu.vector_store %arg4[%c0_6, %c0_7], %7 {strides = array<i32>} : memref<8x128xf32, #tpu.memory_space<vmem>>, vector<8x128xf32>,
    return
  }
  func.func @transform_0(%arg0: i32) -> (i32, i32) {
    %c0_i32 = arith.constant 0 : i32
    %c0_i32_0 = arith.constant 0 : i32
    %c0_i32_1 = arith.constant 0 : i32
    return %c0_i32, %c0_i32_0 : i32, i32
  }
  func.func @transform_1(%arg0: i32) -> (i32, i32) {
    %c0_i32 = arith.constant 0 : i32
    %c0_i32_0 = arith.constant 0 : i32
    %c0_i32_1 = arith.constant 0 : i32
    return %c0_i32, %c0_i32_0 : i32, i32
  }
  func.func @transform_2(%arg0: i32) -> (i32, i32) {
    %c0_i32 = arith.constant 0 : i32
    %c0_i32_0 = arith.constant 0 : i32
    %c0_i32_1 = arith.constant 0 : i32
    return %c0_i32, %c0_i32_0 : i32, i32
  }
  func.func @transform_3(%arg0: i32) -> (i32, i32) {
    %c0_i32 = arith.constant 0 : i32
    %c0_i32_0 = arith.constant 0 : i32
    %c0_i32_1 = arith.constant 0 : i32
    return %c0_i32, %c0_i32_0 : i32, i32
  }
}

module attributes {stable_mosaic.version = 11 : i64} {
  func.func @_xw_bias_relu_kernel(%arg0: i32, %arg1: memref<8x128xbf16, #tpu.memory_space<vmem>>, %arg2: memref<128x1856xbf16, #tpu.memory_space<vmem>>, %arg3: memref<1x1856xf32, #tpu.memory_space<vmem>>, %arg4: memref<8x1856xf32, #tpu.memory_space<vmem>>) attributes {dimension_semantics = [#tpu.dimension_semantics<arbitrary>], iteration_bounds = array<i64: 1>, scalar_prefetch = 0 : i64, scratch_operands = 0 : i64, tpu.core_type = #tpu.core_type<tc>, window_params = [{pipeline_mode = #tpu.pipeline_mode<synchronous>, transform_indices = @transform_0, window_bounds = array<i64: 8, 128>}, {pipeline_mode = #tpu.pipeline_mode<synchronous>, transform_indices = @transform_1, window_bounds = array<i64: 128, 1856>}, {pipeline_mode = #tpu.pipeline_mode<synchronous>, transform_indices = @transform_2, window_bounds = array<i64: 1, 1856>}, {pipeline_mode = #tpu.pipeline_mode<synchronous>, transform_indices = @transform_3, window_bounds = array<i64: 8, 1856>}]} {
    %c0 = arith.constant 0 : index
    %c0_0 = arith.constant 0 : index
    %0 = vector.load %arg1[%c0, %c0_0] : memref<8x128xbf16, #tpu.memory_space<vmem>>, vector<8x128xbf16>
    %c0_1 = arith.constant 0 : index
    %c0_2 = arith.constant 0 : index
    %1 = vector.load %arg2[%c0_1, %c0_2] : memref<128x1856xbf16, #tpu.memory_space<vmem>>, vector<128x1856xbf16>
    %cst = arith.constant dense<0.000000e+00> : vector<8x1856xf32>
    %2 = tpu.matmul %0, %1, %cst {dimension_numbers = #tpu.dot_dimension_numbers<[1], [0], [0], [1], [0, 0, 1, 1], [], []>} : vector<8x128xbf16>, vector<128x1856xbf16>, vector<8x1856xf32> -> vector<8x1856xf32>
    %c0_3 = arith.constant 0 : index
    %c0_4 = arith.constant 0 : index
    %3 = vector.load %arg3[%c0_3, %c0_4] : memref<1x1856xf32, #tpu.memory_space<vmem>>, vector<1x1856xf32>
    %4 = vector.broadcast %3 : vector<1x1856xf32> to vector<8x1856xf32>
    %5 = arith.addf %2, %4 : vector<8x1856xf32>
    %cst_5 = arith.constant 0.000000e+00 : f32
    %6 = vector.broadcast %cst_5 : f32 to vector<8x1856xf32>
    %7 = arith.maximumf %5, %6 : vector<8x1856xf32>
    %c0_6 = arith.constant 0 : index
    %c0_7 = arith.constant 0 : index
    %8 = vector.load %arg4[%c0_6, %c0_7] : memref<8x1856xf32, #tpu.memory_space<vmem>>, vector<8x1856xf32>
    tpu.vector_store %arg4[%c0_6, %c0_7], %7 {strides = array<i32>} : memref<8x1856xf32, #tpu.memory_space<vmem>>, vector<8x1856xf32>,
    return
  }
  func.func @transform_0(%arg0: i32) -> (i32, i32) {
    %c0_i32 = arith.constant 0 : i32
    %c0_i32_0 = arith.constant 0 : i32
    %c0_i32_1 = arith.constant 0 : i32
    return %c0_i32, %c0_i32_0 : i32, i32
  }
  func.func @transform_1(%arg0: i32) -> (i32, i32) {
    %c0_i32 = arith.constant 0 : i32
    %c0_i32_0 = arith.constant 0 : i32
    %c0_i32_1 = arith.constant 0 : i32
    return %c0_i32, %c0_i32_0 : i32, i32
  }
  func.func @transform_2(%arg0: i32) -> (i32, i32) {
    %c0_i32 = arith.constant 0 : i32
    %c0_i32_0 = arith.constant 0 : i32
    %c0_i32_1 = arith.constant 0 : i32
    return %c0_i32, %c0_i32_0 : i32, i32
  }
  func.func @transform_3(%arg0: i32) -> (i32, i32) {
    %c0_i32 = arith.constant 0 : i32
    %c0_i32_0 = arith.constant 0 : i32
    %c0_i32_1 = arith.constant 0 : i32
    return %c0_i32, %c0_i32_0 : i32, i32
  }
}

module attributes {stable_mosaic.version = 11 : i64} {
  func.func @_wx_bias_relu_kernel(%arg0: i32, %arg1: memref<64x288xbf16, #tpu.memory_space<vmem>>, %arg2: memref<288x768xbf16, #tpu.memory_space<vmem>>, %arg3: memref<64x1xf32, #tpu.memory_space<vmem>>, %arg4: memref<64x768xf32, #tpu.memory_space<vmem>>) attributes {dimension_semantics = [#tpu.dimension_semantics<parallel>], iteration_bounds = array<i64: 1>, scalar_prefetch = 0 : i64, scratch_operands = 0 : i64, tpu.core_type = #tpu.core_type<tc>, window_params = [{pipeline_mode = #tpu.pipeline_mode<synchronous>, transform_indices = @transform_0, window_bounds = array<i64: 64, 288>}, {transform_indices = @transform_1, window_bounds = array<i64: 288, 768>}, {pipeline_mode = #tpu.pipeline_mode<synchronous>, transform_indices = @transform_2, window_bounds = array<i64: 64, 1>}, {transform_indices = @transform_3, window_bounds = array<i64: 64, 768>}]} {
    %c0 = arith.constant 0 : index
    %c0_0 = arith.constant 0 : index
    %0 = vector.load %arg1[%c0, %c0_0] : memref<64x288xbf16, #tpu.memory_space<vmem>>, vector<64x288xbf16>
    %c0_1 = arith.constant 0 : index
    %c0_2 = arith.constant 0 : index
    %1 = vector.load %arg2[%c0_1, %c0_2] : memref<288x768xbf16, #tpu.memory_space<vmem>>, vector<288x768xbf16>
    %cst = arith.constant dense<0.000000e+00> : vector<64x768xf32>
    %2 = tpu.matmul %0, %1, %cst {dimension_numbers = #tpu.dot_dimension_numbers<[1], [0], [0], [1], [0, 0, 1, 1], [], []>} : vector<64x288xbf16>, vector<288x768xbf16>, vector<64x768xf32> -> vector<64x768xf32>
    %c0_3 = arith.constant 0 : index
    %c0_4 = arith.constant 0 : index
    %3 = vector.load %arg3[%c0_3, %c0_4] : memref<64x1xf32, #tpu.memory_space<vmem>>, vector<64x1xf32>
    %4 = vector.broadcast %3 : vector<64x1xf32> to vector<64x768xf32>
    %5 = arith.addf %2, %4 : vector<64x768xf32>
    %cst_5 = arith.constant 0.000000e+00 : f32
    %6 = vector.broadcast %cst_5 : f32 to vector<64x768xf32>
    %7 = arith.maximumf %5, %6 : vector<64x768xf32>
    %c0_6 = arith.constant 0 : index
    %c0_7 = arith.constant 0 : index
    %8 = vector.load %arg4[%c0_6, %c0_7] : memref<64x768xf32, #tpu.memory_space<vmem>>, vector<64x768xf32>
    tpu.vector_store %arg4[%c0_6, %c0_7], %7 {strides = array<i32>} : memref<64x768xf32, #tpu.memory_space<vmem>>, vector<64x768xf32>,
    return
  }
  func.func @transform_0(%arg0: i32) -> (i32, i32) {
    %c0_i32 = arith.constant 0 : i32
    %c0_i32_0 = arith.constant 0 : i32
    %c0_i32_1 = arith.constant 0 : i32
    return %c0_i32, %c0_i32_0 : i32, i32
  }
  func.func @transform_1(%arg0: i32) -> (i32, i32) {
    %c0_i32 = arith.constant 0 : i32
    %c0_i32_0 = arith.constant 0 : i32
    return %c0_i32, %arg0 : i32, i32
  }
  func.func @transform_2(%arg0: i32) -> (i32, i32) {
    %c0_i32 = arith.constant 0 : i32
    %c0_i32_0 = arith.constant 0 : i32
    %c0_i32_1 = arith.constant 0 : i32
    return %c0_i32, %c0_i32_0 : i32, i32
  }
  func.func @transform_3(%arg0: i32) -> (i32, i32) {
    %c0_i32 = arith.constant 0 : i32
    %c0_i32_0 = arith.constant 0 : i32
    return %c0_i32, %arg0 : i32, i32
  }
}

module attributes {stable_mosaic.version = 11 : i64} {
  func.func @_wx_bias_relu_kernel(%arg0: i32, %arg1: memref<16x1600xbf16, #tpu.memory_space<vmem>>, %arg2: memref<1600x512xbf16, #tpu.memory_space<vmem>>, %arg3: memref<16x1xf32, #tpu.memory_space<vmem>>, %arg4: memref<16x512xf32, #tpu.memory_space<vmem>>) attributes {dimension_semantics = [#tpu.dimension_semantics<parallel>], iteration_bounds = array<i64: 7>, scalar_prefetch = 0 : i64, scratch_operands = 0 : i64, tpu.core_type = #tpu.core_type<tc>, window_params = [{pipeline_mode = #tpu.pipeline_mode<synchronous>, transform_indices = @transform_0, window_bounds = array<i64: 16, 1600>}, {transform_indices = @transform_1, window_bounds = array<i64: 1600, 512>}, {pipeline_mode = #tpu.pipeline_mode<synchronous>, transform_indices = @transform_2, window_bounds = array<i64: 16, 1>}, {transform_indices = @transform_3, window_bounds = array<i64: 16, 512>}]} {
    %c0 = arith.constant 0 : index
    %c0_0 = arith.constant 0 : index
    %0 = vector.load %arg1[%c0, %c0_0] : memref<16x1600xbf16, #tpu.memory_space<vmem>>, vector<16x1600xbf16>
    %c0_1 = arith.constant 0 : index
    %c0_2 = arith.constant 0 : index
    %1 = vector.load %arg2[%c0_1, %c0_2] : memref<1600x512xbf16, #tpu.memory_space<vmem>>, vector<1600x512xbf16>
    %cst = arith.constant dense<0.000000e+00> : vector<16x512xf32>
    %2 = tpu.matmul %0, %1, %cst {dimension_numbers = #tpu.dot_dimension_numbers<[1], [0], [0], [1], [0, 0, 1, 1], [], []>} : vector<16x1600xbf16>, vector<1600x512xbf16>, vector<16x512xf32> -> vector<16x512xf32>
    %c0_3 = arith.constant 0 : index
    %c0_4 = arith.constant 0 : index
    %3 = vector.load %arg3[%c0_3, %c0_4] : memref<16x1xf32, #tpu.memory_space<vmem>>, vector<16x1xf32>
    %4 = vector.broadcast %3 : vector<16x1xf32> to vector<16x512xf32>
    %5 = arith.addf %2, %4 : vector<16x512xf32>
    %cst_5 = arith.constant 0.000000e+00 : f32
    %6 = vector.broadcast %cst_5 : f32 to vector<16x512xf32>
    %7 = arith.maximumf %5, %6 : vector<16x512xf32>
    %c0_6 = arith.constant 0 : index
    %c0_7 = arith.constant 0 : index
    %8 = vector.load %arg4[%c0_6, %c0_7] : memref<16x512xf32, #tpu.memory_space<vmem>>, vector<16x512xf32>
    tpu.vector_store %arg4[%c0_6, %c0_7], %7 {strides = array<i32>} : memref<16x512xf32, #tpu.memory_space<vmem>>, vector<16x512xf32>,
    return
  }
  func.func @transform_0(%arg0: i32) -> (i32, i32) {
    %c0_i32 = arith.constant 0 : i32
    %c0_i32_0 = arith.constant 0 : i32
    %c0_i32_1 = arith.constant 0 : i32
    return %c0_i32, %c0_i32_0 : i32, i32
  }
  func.func @transform_1(%arg0: i32) -> (i32, i32) {
    %c0_i32 = arith.constant 0 : i32
    %c0_i32_0 = arith.constant 0 : i32
    return %c0_i32, %arg0 : i32, i32
  }
  func.func @transform_2(%arg0: i32) -> (i32, i32) {
    %c0_i32 = arith.constant 0 : i32
    %c0_i32_0 = arith.constant 0 : i32
    %c0_i32_1 = arith.constant 0 : i32
    return %c0_i32, %c0_i32_0 : i32, i32
  }
  func.func @transform_3(%arg0: i32) -> (i32, i32) {
    %c0_i32 = arith.constant 0 : i32
    %c0_i32_0 = arith.constant 0 : i32
    return %c0_i32, %arg0 : i32, i32
  }
}

module attributes {stable_mosaic.version = 11 : i64} {
  func.func @_wx_bias_relu_kernel(%arg0: i32, %arg1: memref<8x256xbf16, #tpu.memory_space<vmem>>, %arg2: memref<256x1024xbf16, #tpu.memory_space<vmem>>, %arg3: memref<8x1xf32, #tpu.memory_space<vmem>>, %arg4: memref<8x1024xf32, #tpu.memory_space<vmem>>) attributes {dimension_semantics = [#tpu.dimension_semantics<parallel>], iteration_bounds = array<i64: 13>, scalar_prefetch = 0 : i64, scratch_operands = 0 : i64, tpu.core_type = #tpu.core_type<tc>, window_params = [{pipeline_mode = #tpu.pipeline_mode<synchronous>, transform_indices = @transform_0, window_bounds = array<i64: 8, 256>}, {transform_indices = @transform_1, window_bounds = array<i64: 256, 1024>}, {pipeline_mode = #tpu.pipeline_mode<synchronous>, transform_indices = @transform_2, window_bounds = array<i64: 8, 1>}, {transform_indices = @transform_3, window_bounds = array<i64: 8, 1024>}]} {
    %c0 = arith.constant 0 : index
    %c0_0 = arith.constant 0 : index
    %0 = vector.load %arg1[%c0, %c0_0] : memref<8x256xbf16, #tpu.memory_space<vmem>>, vector<8x256xbf16>
    %c0_1 = arith.constant 0 : index
    %c0_2 = arith.constant 0 : index
    %1 = vector.load %arg2[%c0_1, %c0_2] : memref<256x1024xbf16, #tpu.memory_space<vmem>>, vector<256x1024xbf16>
    %cst = arith.constant dense<0.000000e+00> : vector<8x1024xf32>
    %2 = tpu.matmul %0, %1, %cst {dimension_numbers = #tpu.dot_dimension_numbers<[1], [0], [0], [1], [0, 0, 1, 1], [], []>} : vector<8x256xbf16>, vector<256x1024xbf16>, vector<8x1024xf32> -> vector<8x1024xf32>
    %c0_3 = arith.constant 0 : index
    %c0_4 = arith.constant 0 : index
    %3 = vector.load %arg3[%c0_3, %c0_4] : memref<8x1xf32, #tpu.memory_space<vmem>>, vector<8x1xf32>
    %4 = vector.broadcast %3 : vector<8x1xf32> to vector<8x1024xf32>
    %5 = arith.addf %2, %4 : vector<8x1024xf32>
    %cst_5 = arith.constant 0.000000e+00 : f32
    %6 = vector.broadcast %cst_5 : f32 to vector<8x1024xf32>
    %7 = arith.maximumf %5, %6 : vector<8x1024xf32>
    %c0_6 = arith.constant 0 : index
    %c0_7 = arith.constant 0 : index
    %8 = vector.load %arg4[%c0_6, %c0_7] : memref<8x1024xf32, #tpu.memory_space<vmem>>, vector<8x1024xf32>
    tpu.vector_store %arg4[%c0_6, %c0_7], %7 {strides = array<i32>} : memref<8x1024xf32, #tpu.memory_space<vmem>>, vector<8x1024xf32>,
    return
  }
  func.func @transform_0(%arg0: i32) -> (i32, i32) {
    %c0_i32 = arith.constant 0 : i32
    %c0_i32_0 = arith.constant 0 : i32
    %c0_i32_1 = arith.constant 0 : i32
    return %c0_i32, %c0_i32_0 : i32, i32
  }
  func.func @transform_1(%arg0: i32) -> (i32, i32) {
    %c0_i32 = arith.constant 0 : i32
    %c0_i32_0 = arith.constant 0 : i32
    return %c0_i32, %arg0 : i32, i32
  }
  func.func @transform_2(%arg0: i32) -> (i32, i32) {
    %c0_i32 = arith.constant 0 : i32
    %c0_i32_0 = arith.constant 0 : i32
    %c0_i32_1 = arith.constant 0 : i32
    return %c0_i32, %c0_i32_0 : i32, i32
  }
  func.func @transform_3(%arg0: i32) -> (i32, i32) {
    %c0_i32 = arith.constant 0 : i32
    %c0_i32_0 = arith.constant 0 : i32
    return %c0_i32, %arg0 : i32, i32
  }
}

</mosaic_0001>

<llo_original>
// kernel: forward.8
$region0: #{forward.8}
  #allocation0 [shape = 'u32[]', space=smem, size = 0x4, offset = 0x4, fixed_abs, tag = 'smem constant byte address 0x4 - core index']
  #allocation1 [shape = 'u32[144,128]{1,0:T(1,128)}', space=vmem, size = 0x12000, scoped, tag = 'internal scratch']
  %s0 = inlined_call_operand.hbm [shape: bf16[16,16], index: 0, kind: input, shape index: {}]
  %s1 = inlined_call_operand.vmem [shape: bf16[16,3584], index: 1, kind: input, shape index: {}]
  %s2 = inlined_call_operand.vmem [shape: f32[16,1], index: 2, kind: input, shape index: {}]
  %s3 = inlined_call_operand.vmem [shape: f32[16,3584], index: 3, kind: output, shape index: {}]
  %s4 = sld [smem:[#allocation0]]
  $region91: #{forward.8} parent=0
    _
  %s6 = ssub.s32 1, %s4
  %s7 = scalar_select 0, %s6, %s4
  $region1: #{forward.8} parent=0
    #allocation2 [shape = 'u8[4096]{0}', space=vmem, size = 0x1000, scoped, tag = 'input window, operand 0, single buffered']
    #allocation3 [shape = 's32[2]{0}', space=sflag, size = 0x8, scoped, tag = 'scoped memory for forward.8']
    #allocation4 [shape = 'u8[32768]{0}', space=vmem, size = 0x8000, scoped, tag = 'input window, operand 1']
    #allocation5 [shape = 'u8[65536]{0}', space=vmem, size = 0x10000, scoped, tag = 'output window, operand 0']
    %8 = vsyncpa [#allocation3], 0
    loop: start=0, step=1, limit=9
    $region2: #{forward.8} parent=1 // loop_pre_header
      _
    $region3: #{forward.8} parent=1 // loop_header
      %s10 = sphi 0, %s14
      %p11 = scmp.ge.s32.totalorder %s10, 9
      %s18 = sphi 0, %s18
      %s20 = sphi 0, %s18
      %s21 = sphi 0, %s20
      %s35 = sphi 0, %s21
      %s41 = sphi 0, %s43
      %s44 = sphi 0, %s41
      %s45 = sphi 0, %s44
      %s61 = sphi 0, %s45
      %s65 = sphi 0, %s65
      %s67 = sphi 0, %s65
      %s68 = sphi 0, %s67
      %s82 = sphi 0, %s68
      %s88 = sphi 0, %s90
      %s91 = sphi 0, %s88
      %s92 = sphi 0, %s91
      %s108 = sphi 0, %s92
    $region4: #{forward.8} parent=1 // loop_header_branch
      %13 = sbr.rel (%p11) target = $region8
    $region5: #{forward.8} parent=1 // loop_body
      %s15 = ssub.s32 %s10, 1
      %s16 = ssub.s32 %s10, 2
      %s17 = sadd.s32 %s10, 1
      %s19 = sadd.s32 %s18, 1
      %p22 = scmp.eq.s32.totalorder %s10, 6
      %p23 = scmp.ne.s32.totalorder %s18, %s20
      %p24 = scmp.eq.s32.totalorder %s10, 0
      %p25 = por %p23, %p24
      %p26 = scmp.ne.s32.totalorder %s18, %s20
      %p27 = scmp.eq.s32.totalorder %s15, 6
      %p28 = por %p26, %p27
      %p29 = scmp.ne.s32.totalorder %s20, %s21
      %p30 = scmp.eq.s32.totalorder %s15, 0
      %p31 = por %p29, %p30
      %p32 = scmp.ne.s32.totalorder %s20, %s21
      %p33 = scmp.eq.s32.totalorder %s16, 6
      %p34 = por %p32, %p33
      %p36 = scmp.ne.s32.totalorder %s21, %s35
      %p37 = scmp.eq.s32.totalorder %s16, 0
      %p38 = por %p36, %p37
      %s39 = ssub.s32 %s10, %s17
      %p40 = scmp.eq.s32.totalorder %s39, 0
      %s42 = sadd.s32 %s41, 1
      %s43 = scalar_select %p40, %s41, %s42
      %p46 = pneg %p40
      %p47 = scmp.eq.s32.totalorder %s10, 6
      %p48 = por %p46, %p47
      %p49 = scmp.ne.s32.totalorder %s41, %s44
      %p50 = scmp.eq.s32.totalorder %s10, 0
      %p51 = por %p49, %p50
      %p52 = scmp.ne.s32.totalorder %s41, %s44
      %p53 = scmp.eq.s32.totalorder %s15, 6
      %p54 = por %p52, %p53
      %p55 = scmp.ne.s32.totalorder %s44, %s45
      %p56 = scmp.eq.s32.totalorder %s15, 0
      %p57 = por %p55, %p56
      %p58 = scmp.ne.s32.totalorder %s44, %s45
      %p59 = scmp.eq.s32.totalorder %s16, 6
      %p60 = por %p58, %p59
      %p62 = scmp.ne.s32.totalorder %s45, %s61
      %p63 = scmp.eq.s32.totalorder %s16, 0
      %p64 = por %p62, %p63
      %s66 = sadd.s32 %s65, 1
      %p69 = scmp.eq.s32.totalorder %s10, 6
      %p70 = scmp.ne.s32.totalorder %s65, %s67
      %p71 = scmp.eq.s32.totalorder %s10, 0
      %p72 = por %p70, %p71
      %p73 = scmp.ne.s32.totalorder %s65, %s67
      %p74 = scmp.eq.s32.totalorder %s15, 6
      %p75 = por %p73, %p74
      %p76 = scmp.ne.s32.totalorder %s67, %s68
      %p77 = scmp.eq.s32.totalorder %s15, 0
      %p78 = por %p76, %p77
      %p79 = scmp.ne.s32.totalorder %s67, %s68
      %p80 = scmp.eq.s32.totalorder %s16, 6
      %p81 = por %p79, %p80
      %p83 = scmp.ne.s32.totalorder %s68, %s82
      %p84 = scmp.eq.s32.totalorder %s16, 0
      %p85 = por %p83, %p84
      %s86 = ssub.s32 %s10, %s17
      %p87 = scmp.eq.s32.totalorder %s86, 0
      %s89 = sadd.s32 %s88, 1
      %s90 = scalar_select %p87, %s88, %s89
      %p93 = pneg %p87
      %p94 = scmp.eq.s32.totalorder %s10, 6
      %p95 = por %p93, %p94
      %p96 = scmp.ne.s32.totalorder %s88, %s91
      %p97 = scmp.eq.s32.totalorder %s10, 0
      %p98 = por %p96, %p97
      %p99 = scmp.ne.s32.totalorder %s88, %s91
      %p100 = scmp.eq.s32.totalorder %s15, 6
      %p101 = por %p99, %p100
      %p102 = scmp.ne.s32.totalorder %s91, %s92
      %p103 = scmp.eq.s32.totalorder %s15, 0
      %p104 = por %p102, %p103
      %p105 = scmp.ne.s32.totalorder %s91, %s92
      %p106 = scmp.eq.s32.totalorder %s16, 6
      %p107 = por %p105, %p106
      %p109 = scmp.ne.s32.totalorder %s92, %s108
      %p110 = scmp.eq.s32.totalorder %s16, 0
      %p111 = por %p109, %p110
      %p112 = scmp.le.s32.totalorder 1, %s10
      %p113 = scmp.lt.s32.totalorder %s10, 8
      %p114 = pnand %p112, %p113
      %p115 = pneg %p114
      // Predicated region
      $region9: #{forward.8} parent=5 // pred_check
        _
      $region10: #{forward.8} parent=5 // pred_check_branch
        %117 = sbr.rel (%p114) target = $region12
      $region11: #{forward.8} parent=5 // pred_region
        %s118 = ssub.s32 %s10, 1
        // Predicated region
        $region13: #{forward.8} parent=11 // pred_check
          %p119 = pneg %p31
        $region14: #{forward.8} parent=11 // pred_check_branch
          %121 = sbr.rel (%p119) target = $region16
        $region15: #{forward.8} parent=11 // pred_region
          %s123 = ssub.s32 128, 128
          %124 = vsyncadd [#allocation3], %s123
          %s125 = sshll.u32 [#allocation2], 4
          %s126 = int_to_ptr.vmem [resolvable:$true] %s125
          %131 = dma.hbm_to_vmem [thread:$0]  %s0, 128, %s126, [#allocation3], 64, 64, 4
        $region16: #{forward.8} parent=11 // pred_fallthru
          _
        // Predicated region
        $region17: #{forward.8} parent=11 // pred_check
          %p132 = pneg %p78
        $region18: #{forward.8} parent=11 // pred_check_branch
          %134 = sbr.rel (%p132) target = $region20
        $region19: #{forward.8} parent=11 // pred_region
          _
        $region20: #{forward.8} parent=11 // pred_fallthru
          _
      $region12: #{forward.8} parent=5 // pred_fallthru
        _
      %p135 = scmp.lt.s32.totalorder %s10, 7
      // Predicated region
      $region21: #{forward.8} parent=5 // pred_check
        %p136 = pneg %p135
      $region22: #{forward.8} parent=5 // pred_check_branch
        %138 = sbr.rel (%p136) target = $region24
      $region23: #{forward.8} parent=5 // pred_region
        // Predicated region
        $region25: #{forward.8} parent=23 // pred_check
          %p139 = pneg %p51
        $region26: #{forward.8} parent=23 // pred_check_branch
          %141 = sbr.rel (%p139) target = $region28
        $region27: #{forward.8} parent=23 // pred_region
          %s142 = sand.u32 %s41, 1
          %s143 = sand.u32 %s41, 1
          %s144 = smul.addr %s143, 32
          %s145 = scalar_lea.vmem [#allocation4], %s144
          %s146 = smul.u32 4, %s10
          %s147 = smul.addr %s146, 4
          %s148 = scalar_lea.vmem %s1, %s147
          // Predicated region
          $region29: #{forward.8} parent=27 // pred_check
            _
          $region30: #{forward.8} parent=27 // pred_check_branch
            %150 = sbr.rel (0) target = $region32
          $region31: #{forward.8} parent=27 // pred_region
            // Predicated region
            $region33: #{forward.8} parent=31 // pred_check
              _
            $region34: #{forward.8} parent=31 // pred_check_branch
              %152 = sbr.rel (0) target = $region36
            $region35: #{forward.8} parent=31 // pred_region
              loop: start=0, step=1, limit=1
              $region37: #{forward.8} parent=35 // loop_pre_header
                _
              $region38: #{forward.8} parent=35 // loop_header
                %s154 = sphi 0, %s158
                %p155 = scmp.ge.s32.totalorder %s154, 1
                %s159 = sphi %s148, %s148
                %s160 = sphi %s145, %s145
              $region39: #{forward.8} parent=35 // loop_header_branch
                %157 = sbr.rel (%p155) target = $region43
              $region40: #{forward.8} parent=35 // loop_body
                %v161 = vld [vmem:[%s159] sm:$0xff]
                %162 = vst [vmem:[%s160] sm:$0xff] %v161
                %v163 = vld [vmem:[%s159 + $0x8] sm:$0xff]
                %164 = vst [vmem:[%s160 + $0x8] sm:$0xff] %v163
                %v165 = vld [vmem:[%s159 + $0x70] sm:$0xff]
                %166 = vst [vmem:[%s160 + $0x10] sm:$0xff] %v165
                %v167 = vld [vmem:[%s159 + $0x78] sm:$0xff]
                %168 = vst [vmem:[%s160 + $0x18] sm:$0xff] %v167
              $region41: #{forward.8} parent=35 // loop_footer
                %s158 = sadd.s32 1, %s154
              $region42: #{forward.8} parent=35 // loop_footer_branch
                %153 = sbr.rel target = $region38
              $region43: #{forward.8} parent=35 // loop_exit
                _
            $region36: #{forward.8} parent=31 // pred_fallthru
              _
            // Predicated region
            $region44: #{forward.8} parent=31 // pred_check
              _
            $region45: #{forward.8} parent=31 // pred_check_branch
              %170 = sbr.rel target = $region47
            $region46: #{forward.8} parent=31 // pred_region
              _
            $region47: #{forward.8} parent=31 // pred_fallthru
              _
          $region32: #{forward.8} parent=27 // pred_fallthru
            _
          %171 = vnop
        $region28: #{forward.8} parent=23 // pred_fallthru
          _
      $region24: #{forward.8} parent=5 // pred_fallthru
        _
      %p172 = scmp.le.s32.totalorder 1, %s10
      %p173 = scmp.lt.s32.totalorder %s10, 8
      %p174 = pnand %p172, %p173
      %p175 = pneg %p174
      // Predicated region
      $region48: #{forward.8} parent=5 // pred_check
        _
      $region49: #{forward.8} parent=5 // pred_check_branch
        %177 = sbr.rel (%p174) target = $region51
      $region50: #{forward.8} parent=5 // pred_region
        %s178 = ssub.s32 %s10, 1
        // Predicated region
        $region52: #{forward.8} parent=50 // pred_check
          %p179 = pneg %p31
        $region53: #{forward.8} parent=50 // pred_check_branch
          %181 = sbr.rel (%p179) target = $region55
        $region54: #{forward.8} parent=50 // pred_region
          %182 = dma.done [#allocation3], 128
        $region55: #{forward.8} parent=50 // pred_fallthru
          _
        %s183 = sand.u32 %s44, 1
        %s184 = sand.u32 %s44, 1
        %s185 = smul.addr %s184, 32
        %s186 = scalar_lea.vmem [#allocation4], %s185
        // Predicated region
        $region56: #{forward.8} parent=50 // pred_check
          %p187 = pneg %p57
        $region57: #{forward.8} parent=50 // pred_check_branch
          %189 = sbr.rel (%p187) target = $region59
        $region58: #{forward.8} parent=50 // pred_region
          _
        $region59: #{forward.8} parent=50 // pred_fallthru
          _
        %p190 = pneg %p31
        %p191 = pneg %p28
        %s192 = sand.u32 %s44, 1
        %s193 = sand.u32 %s44, 1
        %s194 = smul.addr %s193, 32
        %s195 = scalar_lea.vmem [#allocation4], %s194
        %p196 = pneg %p57
        %p197 = pneg %p54
        %p198 = pneg %p78
        %p199 = pneg %p75
        %p200 = pneg %p104
        %p201 = pneg %p101
        %s202 = sand.u32 %s91, 1
        %s203 = sand.u32 %s91, 1
        %s204 = smul.addr %s203, 64
        %s205 = scalar_lea.vmem [#allocation5], %s204
        %s206 = smul.u32 4, %s15
        %s207 = smul.u32 4, %s15
        %v209 = vld [vmem:[#allocation2] sm:$0xf]
        %v210 = vld [vmem:[#allocation2 + $0x4] sm:$0xf]
        %v211 = vld [vmem:[%s186] sm:$0xff]
        %v212 = vld [vmem:[%s186 + $0x8] sm:$0xff]
        %v213 = vld [vmem:[%s186 + $0x10] sm:$0xff]
        %v214 = vld [vmem:[%s186 + $0x18] sm:$0xff]
        %v215 = vld [vmem:[%s2] sm:$0xff]
        %v216 = vld [vmem:[%s2 + $0x8] sm:$0xff]
        %218 = vset.pattern.permute.xlu0 0
        %219 = vperm.xlu0 %218, %v215
        %v220 = vpop.permute.xlu0 %219
        %223 = vset.pattern.permute.xlu0 0
        %224 = vperm.xlu0 %223, %v216
        %v225 = vpop.permute.xlu0 %224
        %v229 = vunpack.c.l.b16 %v209
        %v230 = vunpack.c.l.b16 %v210
        %v231 = vpack.c.b16 %v230, %v229
        %v236 = vunpack.c.l.b16 %v211
        %v237 = vunpack.c.h.b16 %v211
        %v238 = vunpack.c.l.b16 %v212
        %v239 = vunpack.c.h.b16 %v212
        %v240 = vunpack.c.l.b16 %v213
        %v241 = vunpack.c.h.b16 %v213
        %v242 = vunpack.c.l.b16 %v214
        %v243 = vunpack.c.h.b16 %v214
        %v244 = vpack.c.b16 %v240, %v236
        %v245 = vpack.c.b16 %v241, %v237
        %v246 = vpack.c.b16 %v242, %v238
        %v247 = vpack.c.b16 %v243, %v239
        %vm252 = vcmask 130048
        %v254 = vsel %vm252, %v231, 0
        %256 = vmatprep.subr.bf16.mxu0 0
        %257 = vmatpush1.bf16.msra.mxu0 0
        %258 = vmatprep.subr.bf16.mxu0 0
        %259 = vmatpush1.bf16.msra.mxu0 0
        %260 = vmatprep.subr.bf16.mxu0 0
        %261 = vmatpush1.bf16.msra.mxu0 0
        %262 = vmatprep.subr.bf16.mxu0 0
        %263 = vmatpush1.bf16.msra.mxu0 0
        %264 = vmatprep.subr.bf16.mxu0 0
        %265 = vmatpush1.bf16.msra.mxu0 0
        %266 = vmatprep.subr.bf16.mxu0 0
        %267 = vmatpush1.bf16.msra.mxu0 0
        %268 = vmatprep.subr.bf16.mxu0 0
        %269 = vmatpush1.bf16.msra.mxu0 0
        %270 = vmatprep.subr.bf16.mxu0 %v245
        %271 = vmatpush1.bf16.msra.mxu0 %v244
        %272 = vmatprep.subr.bf16.mxu0 0
        %273 = vmatpush2.bf16.msra.mxu0 0
        %274 = vmatprep.subr.bf16.mxu0 0
        %275 = vmatpush2.bf16.msra.mxu0 0
        %276 = vmatprep.subr.bf16.mxu0 0
        %277 = vmatpush2.bf16.msra.mxu0 0
        %278 = vmatprep.subr.bf16.mxu0 0
        %279 = vmatpush2.bf16.msra.mxu0 0
        %280 = vmatprep.subr.bf16.mxu0 0
        %281 = vmatpush2.bf16.msra.mxu0 0
        %282 = vmatprep.subr.bf16.mxu0 0
        %283 = vmatpush2.bf16.msra.mxu0 0
        %284 = vmatprep.subr.bf16.mxu0 0
        %285 = vmatpush2.bf16.msra.mxu0 0
        %286 = vmatprep.subr.bf16.mxu0 0
        %287 = vmatpush2.bf16.msra.mxu0 0
        %288 = vmatprep.mubr.bf16.mxu0 0
        %289 = vmatmul.mubr.bf16.gmra.mxu0 %v254
        %v290 = vpop.f32.mrf.mxu0
        %v291 = vadd.f32 %v220, %v290
        %v292 = vpop.f32.mrf.mxu0
        %v293 = vadd.f32 %v220, %v292
        %v294 = vpop.f32.mrf.mxu0
        %v295 = vadd.f32 %v225, %v294
        %v296 = vpop.f32.mrf.mxu0
        %v297 = vadd.f32 %v225, %v296
        %298 = vdwg.mxu0
        %299 = vmatprep.subr.bf16.mxu0 0
        %300 = vmatpush1.bf16.msra.mxu0 0
        %301 = vmatprep.subr.bf16.mxu0 0
        %302 = vmatpush1.bf16.msra.mxu0 0
        %303 = vmatprep.subr.bf16.mxu0 0
        %304 = vmatpush1.bf16.msra.mxu0 0
        %305 = vmatprep.subr.bf16.mxu0 0
        %306 = vmatpush1.bf16.msra.mxu0 0
        %307 = vmatprep.subr.bf16.mxu0 0
        %308 = vmatpush1.bf16.msra.mxu0 0
        %309 = vmatprep.subr.bf16.mxu0 0
        %310 = vmatpush1.bf16.msra.mxu0 0
        %311 = vmatprep.subr.bf16.mxu0 0
        %312 = vmatpush1.bf16.msra.mxu0 0
        %313 = vmatprep.subr.bf16.mxu0 %v247
        %314 = vmatpush1.bf16.msra.mxu0 %v246
        %315 = vmatprep.subr.bf16.mxu0 0
        %316 = vmatpush2.bf16.msra.mxu0 0
        %317 = vmatprep.subr.bf16.mxu0 0
        %318 = vmatpush2.bf16.msra.mxu0 0
        %319 = vmatprep.subr.bf16.mxu0 0
        %320 = vmatpush2.bf16.msra.mxu0 0
        %321 = vmatprep.subr.bf16.mxu0 0
        %322 = vmatpush2.bf16.msra.mxu0 0
        %323 = vmatprep.subr.bf16.mxu0 0
        %324 = vmatpush2.bf16.msra.mxu0 0
        %325 = vmatprep.subr.bf16.mxu0 0
        %326 = vmatpush2.bf16.msra.mxu0 0
        %327 = vmatprep.subr.bf16.mxu0 0
        %328 = vmatpush2.bf16.msra.mxu0 0
        %329 = vmatprep.subr.bf16.mxu0 0
        %330 = vmatpush2.bf16.msra.mxu0 0
        %331 = vmatprep.mubr.bf16.mxu0 0
        %332 = vmatmul.mubr.bf16.gmra.mxu0 %v254
        %v333 = vpop.f32.mrf.mxu0
        %v334 = vadd.f32 %v220, %v333
        %v335 = vpop.f32.mrf.mxu0
        %v336 = vadd.f32 %v220, %v335
        %v337 = vpop.f32.mrf.mxu0
        %v338 = vadd.f32 %v225, %v337
        %v339 = vpop.f32.mrf.mxu0
        %v340 = vadd.f32 %v225, %v339
        %341 = vdwg.mxu0
        %v342 = vmax.f32 %v291, 0.0
        %v343 = vmax.f32 %v293, 0.0
        %v344 = vmax.f32 %v334, 0.0
        %v345 = vmax.f32 %v336, 0.0
        %v346 = vmax.f32 %v295, 0.0
        %v347 = vmax.f32 %v297, 0.0
        %v348 = vmax.f32 %v338, 0.0
        %v349 = vmax.f32 %v340, 0.0
        %350 = vst [vmem:[%s205] sm:$0xff] %v342
        %351 = vst [vmem:[%s205 + $0x8] sm:$0xff] %v343
        %352 = vst [vmem:[%s205 + $0x10] sm:$0xff] %v344
        %353 = vst [vmem:[%s205 + $0x18] sm:$0xff] %v345
        %354 = vst [vmem:[%s205 + $0x20] sm:$0xff] %v346
        %355 = vst [vmem:[%s205 + $0x28] sm:$0xff] %v347
        %356 = vst [vmem:[%s205 + $0x30] sm:$0xff] %v348
        %357 = vst [vmem:[%s205 + $0x38] sm:$0xff] %v349
        %s358 = sand.u32 %s91, 1
        %s359 = sand.u32 %s91, 1
        %s360 = smul.addr %s359, 64
        %s361 = scalar_lea.vmem [#allocation5], %s360
        // Predicated region
        $region60: #{forward.8} parent=50 // pred_check
          %p362 = pneg %p101
        $region61: #{forward.8} parent=50 // pred_check_branch
          %364 = sbr.rel (%p362) target = $region63
        $region62: #{forward.8} parent=50 // pred_region
          %s365 = smul.u32 4, %s15
          %s366 = smul.addr %s365, 8
          %s367 = scalar_lea.vmem %s3, %s366
          // Predicated region
          $region64: #{forward.8} parent=62 // pred_check
            _
          $region65: #{forward.8} parent=62 // pred_check_branch
            %369 = sbr.rel (0) target = $region67
          $region66: #{forward.8} parent=62 // pred_region
            // Predicated region
            $region68: #{forward.8} parent=66 // pred_check
              _
            $region69: #{forward.8} parent=66 // pred_check_branch
              %371 = sbr.rel (0) target = $region71
            $region70: #{forward.8} parent=66 // pred_region
              loop: start=0, step=1, limit=1
              $region72: #{forward.8} parent=70 // loop_pre_header
                _
              $region73: #{forward.8} parent=70 // loop_header
                %s373 = sphi 0, %s377
                %p374 = scmp.ge.s32.totalorder %s373, 1
                %s378 = sphi %s361, %s361
                %s379 = sphi %s367, %s367
              $region74: #{forward.8} parent=70 // loop_header_branch
                %376 = sbr.rel (%p374) target = $region78
              $region75: #{forward.8} parent=70 // loop_body
                %v380 = vld [vmem:[%s378] sm:$0xff]
                %381 = vst [vmem:[%s379] sm:$0xff] %v380
                %v382 = vld [vmem:[%s378 + $0x8] sm:$0xff]
                %383 = vst [vmem:[%s379 + $0x8] sm:$0xff] %v382
                %v384 = vld [vmem:[%s378 + $0x10] sm:$0xff]
                %385 = vst [vmem:[%s379 + $0x10] sm:$0xff] %v384
                %v386 = vld [vmem:[%s378 + $0x18] sm:$0xff]
                %387 = vst [vmem:[%s379 + $0x18] sm:$0xff] %v386
                %v388 = vld [vmem:[%s378 + $0x20] sm:$0xff]
                %389 = vst [vmem:[%s379 + $0xe0] sm:$0xff] %v388
                %v390 = vld [vmem:[%s378 + $0x28] sm:$0xff]
                %391 = vst [vmem:[%s379 + $0xe8] sm:$0xff] %v390
                %v392 = vld [vmem:[%s378 + $0x30] sm:$0xff]
                %393 = vst [vmem:[%s379 + $0xf0] sm:$0xff] %v392
                %v394 = vld [vmem:[%s378 + $0x38] sm:$0xff]
                %395 = vst [vmem:[%s379 + $0xf8] sm:$0xff] %v394
              $region76: #{forward.8} parent=70 // loop_footer
                %s377 = sadd.s32 1, %s373
              $region77: #{forward.8} parent=70 // loop_footer_branch
                %372 = sbr.rel target = $region73
              $region78: #{forward.8} parent=70 // loop_exit
                _
            $region71: #{forward.8} parent=66 // pred_fallthru
              _
            // Predicated region
            $region79: #{forward.8} parent=66 // pred_check
              _
            $region80: #{forward.8} parent=66 // pred_check_branch
              %397 = sbr.rel target = $region82
            $region81: #{forward.8} parent=66 // pred_region
              _
            $region82: #{forward.8} parent=66 // pred_fallthru
              _
          $region67: #{forward.8} parent=62 // pred_fallthru
            _
          %398 = vnop
        $region63: #{forward.8} parent=50 // pred_fallthru
          _
      $region51: #{forward.8} parent=5 // pred_fallthru
        _
      %p399 = scmp.le.s32.totalorder 2, %s10
      // Predicated region
      $region83: #{forward.8} parent=5 // pred_check
        %p400 = pneg %p399
      $region84: #{forward.8} parent=5 // pred_check_branch
        %402 = sbr.rel (%p400) target = $region86
      $region85: #{forward.8} parent=5 // pred_region
        %s403 = ssub.s32 %s10, 2
        // Predicated region
        $region87: #{forward.8} parent=85 // pred_check
          %p404 = pneg %p107
        $region88: #{forward.8} parent=85 // pred_check_branch
          %406 = sbr.rel (%p404) target = $region90
        $region89: #{forward.8} parent=85 // pred_region
          %s407 = sand.u32 %s92, 1
          %s408 = sand.u32 %s92, 1
          %s409 = smul.addr %s408, 64
          %s410 = scalar_lea.vmem [#allocation5], %s409
        $region90: #{forward.8} parent=85 // pred_fallthru
          _
      $region86: #{forward.8} parent=5 // pred_fallthru
        _
    $region6: #{forward.8} parent=1 // loop_footer
      %s14 = sadd.s32 1, %s10
    $region7: #{forward.8} parent=1 // loop_footer_branch
      %9 = sbr.rel target = $region3
    $region8: #{forward.8} parent=1 // loop_exit
      _
    %411 = vsyncpa [#allocation3], 1
    %s412 = scalar_lea.sflag [#allocation3], 1
    %413 = vsyncpa %s412, 1

// kernel: forward.9
$region0: #{forward.9}
  #allocation0 [shape = 'u32[]', space=smem, size = 0x4, offset = 0x4, fixed_abs, tag = 'smem constant byte address 0x4 - core index']
  #allocation1 [shape = 'u32[144,128]{1,0:T(1,128)}', space=vmem, size = 0x12000, scoped, tag = 'internal scratch']
  %s0 = inlined_call_operand.vmem [shape: bf16[64,400], index: 0, kind: input, shape index: {}]
  %s1 = inlined_call_operand.vmem [shape: bf16[400,768], index: 1, kind: input, shape index: {}]
  %s2 = inlined_call_operand.vmem [shape: f32[64,1], index: 2, kind: input, shape index: {}]
  %s3 = inlined_call_operand.vmem [shape: f32[64,768], index: 3, kind: output, shape index: {}]
  %s4 = sld [smem:[#allocation0]]
  $region22: #{forward.9} parent=0
    _
  %s6 = ssub.s32 1, %s4
  %s7 = scalar_select 0, %s6, %s4
  // Predicated region
  $region2: #{forward.9} parent=0 // pred_check
    _
  $region3: #{forward.9} parent=0 // pred_check_branch
    %9 = sbr.rel (0) target = $region5
  $region4: #{forward.9} parent=0 // pred_region
    _
  $region5: #{forward.9} parent=0 // pred_fallthru
    _
  // Predicated region
  $region6: #{forward.9} parent=0 // pred_check
    _
  $region7: #{forward.9} parent=0 // pred_check_branch
    %11 = sbr.rel (0) target = $region9
  $region8: #{forward.9} parent=0 // pred_region
    _
  $region9: #{forward.9} parent=0 // pred_fallthru
    _
  // Predicated region
  $region10: #{forward.9} parent=0 // pred_check
    _
  $region11: #{forward.9} parent=0 // pred_check_branch
    %13 = sbr.rel (0) target = $region13
  $region12: #{forward.9} parent=0 // pred_region
    _
  $region13: #{forward.9} parent=0 // pred_fallthru
    _
  %v15 = vld [vmem:[%s0] sm:$0xff]
  %v16 = vld [vmem:[%s0 + $0x8] sm:$0xff]
  %v17 = vld [vmem:[%s0 + $0x10] sm:$0xff]
  %v18 = vld [vmem:[%s0 + $0x18] sm:$0xff]
  %v19 = vld [vmem:[%s0 + $0x20] sm:$0xff]
  %v20 = vld [vmem:[%s0 + $0x28] sm:$0xff]
  %v21 = vld [vmem:[%s0 + $0x30] sm:$0xff]
  %v22 = vld [vmem:[%s0 + $0x38] sm:$0xff]
  %v23 = vld [vmem:[%s0 + $0x40] sm:$0xff]
  %v24 = vld [vmem:[%s0 + $0x48] sm:$0xff]
  %v25 = vld [vmem:[%s0 + $0x50] sm:$0xff]
  %v26 = vld [vmem:[%s0 + $0x58] sm:$0xff]
  %v27 = vld [vmem:[%s0 + $0x60] sm:$0xff]
  %v28 = vld [vmem:[%s0 + $0x68] sm:$0xff]
  %v29 = vld [vmem:[%s0 + $0x70] sm:$0xff]
  %v30 = vld [vmem:[%s0 + $0x78] sm:$0xff]
  %v31 = vld [vmem:[%s1] sm:$0xff]
  %v32 = vld [vmem:[%s1 + $0x8] sm:$0xff]
  %v33 = vld [vmem:[%s1 + $0x10] sm:$0xff]
  %v34 = vld [vmem:[%s1 + $0x18] sm:$0xff]
  %v35 = vld [vmem:[%s1 + $0x20] sm:$0xff]
  %v36 = vld [vmem:[%s1 + $0x28] sm:$0xff]
  %v37 = vld [vmem:[%s1 + $0x30] sm:$0xff]
  %v38 = vld [vmem:[%s1 + $0x38] sm:$0xff]
  %v39 = vld [vmem:[%s1 + $0x40] sm:$0xff]
  %v40 = vld [vmem:[%s1 + $0x48] sm:$0xff]
  %v41 = vld [vmem:[%s1 + $0x50] sm:$0xff]
  %v42 = vld [vmem:[%s1 + $0x58] sm:$0xff]
  %v43 = vld [vmem:[%s1 + $0x60] sm:$0xff]
  %v44 = vld [vmem:[%s1 + $0x68] sm:$0xff]
  %v45 = vld [vmem:[%s1 + $0x70] sm:$0xff]
  %v46 = vld [vmem:[%s1 + $0x78] sm:$0xff]
  %v47 = vld [vmem:[%s1 + $0x80] sm:$0xff]
  %v48 = vld [vmem:[%s1 + $0x88] sm:$0xff]
  %v49 = vld [vmem:[%s1 + $0x90] sm:$0xff]
  %v50 = vld [vmem:[%s1 + $0x98] sm:$0xff]
  %v51 = vld [vmem:[%s1 + $0xa0] sm:$0xff]
  %v52 = vld [vmem:[%s1 + $0xa8] sm:$0xff]
  %v53 = vld [vmem:[%s1 + $0xb0] sm:$0xff]
  %v54 = vld [vmem:[%s1 + $0xb8] sm:$0xff]
  %v55 = vld [vmem:[%s1 + $0xc0] sm:$0xff]
  %v56 = vld [vmem:[%s1 + $0xc8] sm:$0xff]
  %v57 = vld [vmem:[%s1 + $0xd0] sm:$0xff]
  %v58 = vld [vmem:[%s1 + $0xd8] sm:$0xff]
  %v59 = vld [vmem:[%s1 + $0xe0] sm:$0xff]
  %v60 = vld [vmem:[%s1 + $0xe8] sm:$0xff]
  %v61 = vld [vmem:[%s1 + $0xf0] sm:$0xff]
  %v62 = vld [vmem:[%s1 + $0xf8] sm:$0xff]
  %v63 = vld [vmem:[%s1 + $0x100] sm:$0xff]
  %v64 = vld [vmem:[%s1 + $0x108] sm:$0xff]
  %v65 = vld [vmem:[%s1 + $0x110] sm:$0xff]
  %v66 = vld [vmem:[%s1 + $0x118] sm:$0xff]
  %v67 = vld [vmem:[%s1 + $0x120] sm:$0xff]
  %v68 = vld [vmem:[%s1 + $0x128] sm:$0xff]
  %v69 = vld [vmem:[%s1 + $0x130] sm:$0xff]
  %v70 = vld [vmem:[%s1 + $0x138] sm:$0xff]
  %v71 = vld [vmem:[%s1 + $0x140] sm:$0xff]
  %v72 = vld [vmem:[%s1 + $0x148] sm:$0xff]
  %v73 = vld [vmem:[%s1 + $0x150] sm:$0xff]
  %v74 = vld [vmem:[%s1 + $0x158] sm:$0xff]
  %v75 = vld [vmem:[%s1 + $0x160] sm:$0xff]
  %v76 = vld [vmem:[%s1 + $0x168] sm:$0xff]
  %v77 = vld [vmem:[%s1 + $0x170] sm:$0xff]
  %v78 = vld [vmem:[%s1 + $0x178] sm:$0xff]
  %v79 = vld [vmem:[%s1 + $0x180] sm:$0xff]
  %v80 = vld [vmem:[%s1 + $0x188] sm:$0xff]
  %v81 = vld [vmem:[%s1 + $0x190] sm:$0xff]
  %v82 = vld [vmem:[%s1 + $0x198] sm:$0xff]
  %v83 = vld [vmem:[%s1 + $0x1a0] sm:$0xff]
  %v84 = vld [vmem:[%s1 + $0x1a8] sm:$0xff]
  %v85 = vld [vmem:[%s1 + $0x1b0] sm:$0xff]
  %v86 = vld [vmem:[%s1 + $0x1b8] sm:$0xff]
  %v87 = vld [vmem:[%s1 + $0x1c0] sm:$0xff]
  %v88 = vld [vmem:[%s1 + $0x1c8] sm:$0xff]
  %v89 = vld [vmem:[%s1 + $0x1d0] sm:$0xff]
  %v90 = vld [vmem:[%s1 + $0x1d8] sm:$0xff]
  %v91 = vld [vmem:[%s1 + $0x1e0] sm:$0xff]
  %v92 = vld [vmem:[%s1 + $0x1e8] sm:$0xff]
  %v93 = vld [vmem:[%s1 + $0x1f0] sm:$0xff]
  %v94 = vld [vmem:[%s1 + $0x1f8] sm:$0xff]
  %v95 = vld [vmem:[%s1 + $0x200] sm:$0xff]
  %v96 = vld [vmem:[%s1 + $0x208] sm:$0xff]
  %v97 = vld [vmem:[%s1 + $0x210] sm:$0xff]
  %v98 = vld [vmem:[%s1 + $0x218] sm:$0xff]
  %v99 = vld [vmem:[%s1 + $0x220] sm:$0xff]
  %v100 = vld [vmem:[%s1 + $0x228] sm:$0xff]
  %v101 = vld [vmem:[%s1 + $0x230] sm:$0xff]
  %v102 = vld [vmem:[%s1 + $0x238] sm:$0xff]
  %v103 = vld [vmem:[%s1 + $0x240] sm:$0xff]
  %v104 = vld [vmem:[%s1 + $0x248] sm:$0xff]
  %v105 = vld [vmem:[%s1 + $0x250] sm:$0xff]
  %v106 = vld [vmem:[%s1 + $0x258] sm:$0xff]
  %v107 = vld [vmem:[%s1 + $0x260] sm:$0xff]
  %v108 = vld [vmem:[%s1 + $0x268] sm:$0xff]
  %v109 = vld [vmem:[%s1 + $0x270] sm:$0xff]
  %v110 = vld [vmem:[%s1 + $0x278] sm:$0xff]
  %v111 = vld [vmem:[%s1 + $0x280] sm:$0xff]
  %v112 = vld [vmem:[%s1 + $0x288] sm:$0xff]
  %v113 = vld [vmem:[%s1 + $0x290] sm:$0xff]
  %v114 = vld [vmem:[%s1 + $0x298] sm:$0xff]
  %v115 = vld [vmem:[%s1 + $0x2a0] sm:$0xff]
  %v116 = vld [vmem:[%s1 + $0x2a8] sm:$0xff]
  %v117 = vld [vmem:[%s1 + $0x2b0] sm:$0xff]
  %v118 = vld [vmem:[%s1 + $0x2b8] sm:$0xff]
  %v119 = vld [vmem:[%s1 + $0x2c0] sm:$0xff]
  %v120 = vld [vmem:[%s1 + $0x2c8] sm:$0xff]
  %v121 = vld [vmem:[%s1 + $0x2d0] sm:$0xff]
  %v122 = vld [vmem:[%s1 + $0x2d8] sm:$0xff]
  %v123 = vld [vmem:[%s1 + $0x2e0] sm:$0xff]
  %v124 = vld [vmem:[%s1 + $0x2e8] sm:$0xff]
  %v125 = vld [vmem:[%s1 + $0x2f0] sm:$0xff]
  %v126 = vld [vmem:[%s1 + $0x2f8] sm:$0xff]
  %v127 = vld [vmem:[%s1 + $0x300] sm:$0xff]
  %v128 = vld [vmem:[%s1 + $0x308] sm:$0xff]
  %v129 = vld [vmem:[%s1 + $0x310] sm:$0xff]
  %v130 = vld [vmem:[%s1 + $0x318] sm:$0xff]
  %v131 = vld [vmem:[%s1 + $0x320] sm:$0xff]
  %v132 = vld [vmem:[%s1 + $0x328] sm:$0xff]
  %v133 = vld [vmem:[%s1 + $0x330] sm:$0xff]
  %v134 = vld [vmem:[%s1 + $0x338] sm:$0xff]
  %v135 = vld [vmem:[%s1 + $0x340] sm:$0xff]
  %v136 = vld [vmem:[%s1 + $0x348] sm:$0xff]
  %v137 = vld [vmem:[%s1 + $0x350] sm:$0xff]
  %v138 = vld [vmem:[%s1 + $0x358] sm:$0xff]
  %v139 = vld [vmem:[%s1 + $0x360] sm:$0xff]
  %v140 = vld [vmem:[%s1 + $0x368] sm:$0xff]
  %v141 = vld [vmem:[%s1 + $0x370] sm:$0xff]
  %v142 = vld [vmem:[%s1 + $0x378] sm:$0xff]
  %v143 = vld [vmem:[%s1 + $0x380] sm:$0xff]
  %v144 = vld [vmem:[%s1 + $0x388] sm:$0xff]
  %v145 = vld [vmem:[%s1 + $0x390] sm:$0xff]
  %v146 = vld [vmem:[%s1 + $0x398] sm:$0xff]
  %v147 = vld [vmem:[%s1 + $0x3a0] sm:$0xff]
  %v148 = vld [vmem:[%s1 + $0x3a8] sm:$0xff]
  %v149 = vld [vmem:[%s1 + $0x3b0] sm:$0xff]
  %v150 = vld [vmem:[%s1 + $0x3b8] sm:$0xff]
  %v151 = vld [vmem:[%s1 + $0x3c0] sm:$0xff]
  %v152 = vld [vmem:[%s1 + $0x3c8] sm:$0xff]
  %v153 = vld [vmem:[%s1 + $0x3d0] sm:$0xff]
  %v154 = vld [vmem:[%s1 + $0x3d8] sm:$0xff]
  %v155 = vld [vmem:[%s1 + $0x3e0] sm:$0xff]
  %v156 = vld [vmem:[%s1 + $0x3e8] sm:$0xff]
  %v157 = vld [vmem:[%s1 + $0x3f0] sm:$0xff]
  %v158 = vld [vmem:[%s1 + $0x3f8] sm:$0xff]
  %v159 = vld [vmem:[%s1 + $0x400] sm:$0xff]
  %v160 = vld [vmem:[%s1 + $0x408] sm:$0xff]
  %v161 = vld [vmem:[%s1 + $0x410] sm:$0xff]
  %v162 = vld [vmem:[%s1 + $0x418] sm:$0xff]
  %v163 = vld [vmem:[%s1 + $0x420] sm:$0xff]
  %v164 = vld [vmem:[%s1 + $0x428] sm:$0xff]
  %v165 = vld [vmem:[%s1 + $0x430] sm:$0xff]
  %v166 = vld [vmem:[%s1 + $0x438] sm:$0xff]
  %v167 = vld [vmem:[%s1 + $0x440] sm:$0xff]
  %v168 = vld [vmem:[%s1 + $0x448] sm:$0xff]
  %v169 = vld [vmem:[%s1 + $0x450] sm:$0xff]
  %v170 = vld [vmem:[%s1 + $0x458] sm:$0xff]
  %v171 = vld [vmem:[%s1 + $0x460] sm:$0xff]
  %v172 = vld [vmem:[%s1 + $0x468] sm:$0xff]
  %v173 = vld [vmem:[%s1 + $0x470] sm:$0xff]
  %v174 = vld [vmem:[%s1 + $0x478] sm:$0xff]
  %v175 = vld [vmem:[%s1 + $0x480] sm:$0xff]
  %v176 = vld [vmem:[%s1 + $0x488] sm:$0xff]
  %v177 = vld [vmem:[%s1 + $0x490] sm:$0xff]
  %v178 = vld [vmem:[%s1 + $0x498] sm:$0xff]
  %v179 = vld [vmem:[%s1 + $0x4a0] sm:$0xff]
  %v180 = vld [vmem:[%s1 + $0x4a8] sm:$0xff]
  %v181 = vld [vmem:[%s2] sm:$0xff]
  %v182 = vld [vmem:[%s2 + $0x8] sm:$0xff]
  %v183 = vld [vmem:[%s2 + $0x10] sm:$0xff]
  %v184 = vld [vmem:[%s2 + $0x18] sm:$0xff]
  %v185 = vld [vmem:[%s2 + $0x20] sm:$0xff]
  %v186 = vld [vmem:[%s2 + $0x28] sm:$0xff]
  %v187 = vld [vmem:[%s2 + $0x30] sm:$0xff]
  %v188 = vld [vmem:[%s2 + $0x38] sm:$0xff]
  %190 = vset.pattern.permute.xlu0 0
  %191 = vperm.xlu0 %190, %v181
  %v192 = vpop.permute.xlu0 %191
  %195 = vset.pattern.permute.xlu0 0
  %196 = vperm.xlu0 %195, %v182
  %v197 = vpop.permute.xlu0 %196
  %200 = vset.pattern.permute.xlu0 0
  %201 = vperm.xlu0 %200, %v183
  %v202 = vpop.permute.xlu0 %201
  %205 = vset.pattern.permute.xlu0 0
  %206 = vperm.xlu0 %205, %v184
  %v207 = vpop.permute.xlu0 %206
  %210 = vset.pattern.permute.xlu0 0
  %211 = vperm.xlu0 %210, %v185
  %v212 = vpop.permute.xlu0 %211
  %215 = vset.pattern.permute.xlu0 0
  %216 = vperm.xlu0 %215, %v186
  %v217 = vpop.permute.xlu0 %216
  %220 = vset.pattern.permute.xlu0 0
  %221 = vperm.xlu0 %220, %v187
  %v222 = vpop.permute.xlu0 %221
  %225 = vset.pattern.permute.xlu0 0
  %226 = vperm.xlu0 %225, %v188
  %v227 = vpop.permute.xlu0 %226
  %v245 = vunpack.c.l.b16 %v15
  %v246 = vunpack.c.h.b16 %v15
  %v247 = vunpack.c.l.b16 %v16
  %v248 = vunpack.c.h.b16 %v16
  %v249 = vunpack.c.l.b16 %v17
  %v250 = vunpack.c.h.b16 %v17
  %v251 = vunpack.c.l.b16 %v18
  %v252 = vunpack.c.h.b16 %v18
  %v253 = vunpack.c.l.b16 %v19
  %v254 = vunpack.c.h.b16 %v19
  %v255 = vunpack.c.l.b16 %v20
  %v256 = vunpack.c.h.b16 %v20
  %v257 = vunpack.c.l.b16 %v21
  %v258 = vunpack.c.h.b16 %v21
  %v259 = vunpack.c.l.b16 %v22
  %v260 = vunpack.c.h.b16 %v22
  %v261 = vunpack.c.l.b16 %v23
  %v262 = vunpack.c.h.b16 %v23
  %v263 = vunpack.c.l.b16 %v24
  %v264 = vunpack.c.h.b16 %v24
  %v265 = vunpack.c.l.b16 %v25
  %v266 = vunpack.c.h.b16 %v25
  %v267 = vunpack.c.l.b16 %v26
  %v268 = vunpack.c.h.b16 %v26
  %v269 = vunpack.c.l.b16 %v27
  %v270 = vunpack.c.h.b16 %v27
  %v271 = vunpack.c.l.b16 %v28
  %v272 = vunpack.c.h.b16 %v28
  %v273 = vunpack.c.l.b16 %v29
  %v274 = vunpack.c.h.b16 %v29
  %v275 = vunpack.c.l.b16 %v30
  %v276 = vunpack.c.h.b16 %v30
  %v277 = vpack.c.b16 %v249, %v245
  %v278 = vpack.c.b16 %v250, %v246
  %v279 = vpack.c.b16 %v251, %v247
  %v280 = vpack.c.b16 %v252, %v248
  %v281 = vpack.c.b16 %v257, %v253
  %v282 = vpack.c.b16 %v258, %v254
  %v283 = vpack.c.b16 %v259, %v255
  %v284 = vpack.c.b16 %v260, %v256
  %v285 = vpack.c.b16 %v265, %v261
  %v286 = vpack.c.b16 %v266, %v262
  %v287 = vpack.c.b16 %v267, %v263
  %v288 = vpack.c.b16 %v268, %v264
  %v289 = vpack.c.b16 %v273, %v269
  %v290 = vpack.c.b16 %v274, %v270
  %v291 = vpack.c.b16 %v275, %v271
  %v292 = vpack.c.b16 %v276, %v272
  %v455 = vunpack.c.l.b16 %v31
  %v456 = vunpack.c.h.b16 %v31
  %v457 = vunpack.c.l.b16 %v32
  %v458 = vunpack.c.h.b16 %v32
  %v459 = vunpack.c.l.b16 %v33
  %v460 = vunpack.c.h.b16 %v33
  %v461 = vunpack.c.l.b16 %v34
  %v462 = vunpack.c.h.b16 %v34
  %v463 = vunpack.c.l.b16 %v35
  %v464 = vunpack.c.h.b16 %v35
  %v465 = vunpack.c.l.b16 %v36
  %v466 = vunpack.c.h.b16 %v36
  %v467 = vunpack.c.l.b16 %v37
  %v468 = vunpack.c.h.b16 %v37
  %v469 = vunpack.c.l.b16 %v38
  %v470 = vunpack.c.h.b16 %v38
  %v471 = vunpack.c.l.b16 %v39
  %v472 = vunpack.c.h.b16 %v39
  %v473 = vunpack.c.l.b16 %v40
  %v474 = vunpack.c.h.b16 %v40
  %v475 = vunpack.c.l.b16 %v41
  %v476 = vunpack.c.h.b16 %v41
  %v477 = vunpack.c.l.b16 %v42
  %v478 = vunpack.c.h.b16 %v42
  %v479 = vunpack.c.l.b16 %v43
  %v480 = vunpack.c.h.b16 %v43
  %v481 = vunpack.c.l.b16 %v44
  %v482 = vunpack.c.h.b16 %v44
  %v483 = vunpack.c.l.b16 %v45
  %v484 = vunpack.c.h.b16 %v45
  %v485 = vunpack.c.l.b16 %v46
  %v486 = vunpack.c.h.b16 %v46
  %v487 = vunpack.c.l.b16 %v47
  %v488 = vunpack.c.h.b16 %v47
  %v489 = vunpack.c.l.b16 %v48
  %v490 = vunpack.c.h.b16 %v48
  %v491 = vunpack.c.l.b16 %v49
  %v492 = vunpack.c.h.b16 %v49
  %v493 = vunpack.c.l.b16 %v50
  %v494 = vunpack.c.h.b16 %v50
  %v495 = vunpack.c.l.b16 %v51
  %v496 = vunpack.c.h.b16 %v51
  %v497 = vunpack.c.l.b16 %v52
  %v498 = vunpack.c.h.b16 %v52
  %v499 = vunpack.c.l.b16 %v53
  %v500 = vunpack.c.h.b16 %v53
  %v501 = vunpack.c.l.b16 %v54
  %v502 = vunpack.c.h.b16 %v54
  %v503 = vunpack.c.l.b16 %v55
  %v504 = vunpack.c.h.b16 %v55
  %v505 = vunpack.c.l.b16 %v56
  %v506 = vunpack.c.h.b16 %v56
  %v507 = vunpack.c.l.b16 %v57
  %v508 = vunpack.c.h.b16 %v57
  %v509 = vunpack.c.l.b16 %v58
  %v510 = vunpack.c.h.b16 %v58
  %v511 = vunpack.c.l.b16 %v59
  %v512 = vunpack.c.h.b16 %v59
  %v513 = vunpack.c.l.b16 %v60
  %v514 = vunpack.c.h.b16 %v60
  %v515 = vunpack.c.l.b16 %v61
  %v516 = vunpack.c.h.b16 %v61
  %v517 = vunpack.c.l.b16 %v62
  %v518 = vunpack.c.h.b16 %v62
  %v519 = vunpack.c.l.b16 %v63
  %v520 = vunpack.c.h.b16 %v63
  %v521 = vunpack.c.l.b16 %v64
  %v522 = vunpack.c.h.b16 %v64
  %v523 = vunpack.c.l.b16 %v65
  %v524 = vunpack.c.h.b16 %v65
  %v525 = vunpack.c.l.b16 %v66
  %v526 = vunpack.c.h.b16 %v66
  %v527 = vunpack.c.l.b16 %v67
  %v528 = vunpack.c.h.b16 %v67
  %v529 = vunpack.c.l.b16 %v68
  %v530 = vunpack.c.h.b16 %v68
  %v531 = vunpack.c.l.b16 %v69
  %v532 = vunpack.c.h.b16 %v69
  %v533 = vunpack.c.l.b16 %v70
  %v534 = vunpack.c.h.b16 %v70
  %v535 = vunpack.c.l.b16 %v71
  %v536 = vunpack.c.h.b16 %v71
  %v537 = vunpack.c.l.b16 %v72
  %v538 = vunpack.c.h.b16 %v72
  %v539 = vunpack.c.l.b16 %v73
  %v540 = vunpack.c.h.b16 %v73
  %v541 = vunpack.c.l.b16 %v74
  %v542 = vunpack.c.h.b16 %v74
  %v543 = vunpack.c.l.b16 %v75
  %v544 = vunpack.c.h.b16 %v75
  %v545 = vunpack.c.l.b16 %v76
  %v546 = vunpack.c.h.b16 %v76
  %v547 = vunpack.c.l.b16 %v77
  %v548 = vunpack.c.h.b16 %v77
  %v549 = vunpack.c.l.b16 %v78
  %v550 = vunpack.c.h.b16 %v78
  %v551 = vunpack.c.l.b16 %v79
  %v552 = vunpack.c.h.b16 %v79
  %v553 = vunpack.c.l.b16 %v80
  %v554 = vunpack.c.h.b16 %v80
  %v555 = vunpack.c.l.b16 %v81
  %v556 = vunpack.c.h.b16 %v81
  %v557 = vunpack.c.l.b16 %v82
  %v558 = vunpack.c.h.b16 %v82
  %v559 = vunpack.c.l.b16 %v83
  %v560 = vunpack.c.h.b16 %v83
  %v561 = vunpack.c.l.b16 %v84
  %v562 = vunpack.c.h.b16 %v84
  %v563 = vunpack.c.l.b16 %v85
  %v564 = vunpack.c.h.b16 %v85
  %v565 = vunpack.c.l.b16 %v86
  %v566 = vunpack.c.h.b16 %v86
  %v567 = vunpack.c.l.b16 %v87
  %v568 = vunpack.c.h.b16 %v87
  %v569 = vunpack.c.l.b16 %v88
  %v570 = vunpack.c.h.b16 %v88
  %v571 = vunpack.c.l.b16 %v89
  %v572 = vunpack.c.h.b16 %v89
  %v573 = vunpack.c.l.b16 %v90
  %v574 = vunpack.c.h.b16 %v90
  %v575 = vunpack.c.l.b16 %v91
  %v576 = vunpack.c.h.b16 %v91
  %v577 = vunpack.c.l.b16 %v92
  %v578 = vunpack.c.h.b16 %v92
  %v579 = vunpack.c.l.b16 %v93
  %v580 = vunpack.c.h.b16 %v93
  %v581 = vunpack.c.l.b16 %v94
  %v582 = vunpack.c.h.b16 %v94
  %v583 = vunpack.c.l.b16 %v95
  %v584 = vunpack.c.h.b16 %v95
  %v585 = vunpack.c.l.b16 %v96
  %v586 = vunpack.c.h.b16 %v96
  %v587 = vunpack.c.l.b16 %v97
  %v588 = vunpack.c.h.b16 %v97
  %v589 = vunpack.c.l.b16 %v98
  %v590 = vunpack.c.h.b16 %v98
  %v591 = vunpack.c.l.b16 %v99
  %v592 = vunpack.c.h.b16 %v99
  %v593 = vunpack.c.l.b16 %v100
  %v594 = vunpack.c.h.b16 %v100
  %v595 = vunpack.c.l.b16 %v101
  %v596 = vunpack.c.h.b16 %v101
  %v597 = vunpack.c.l.b16 %v102
  %v598 = vunpack.c.h.b16 %v102
  %v599 = vunpack.c.l.b16 %v103
  %v600 = vunpack.c.h.b16 %v103
  %v601 = vunpack.c.l.b16 %v104
  %v602 = vunpack.c.h.b16 %v104
  %v603 = vunpack.c.l.b16 %v105
  %v604 = vunpack.c.h.b16 %v105
  %v605 = vunpack.c.l.b16 %v106
  %v606 = vunpack.c.h.b16 %v106
  %v607 = vunpack.c.l.b16 %v107
  %v608 = vunpack.c.h.b16 %v107
  %v609 = vunpack.c.l.b16 %v108
  %v610 = vunpack.c.h.b16 %v108
  %v611 = vunpack.c.l.b16 %v109
  %v612 = vunpack.c.h.b16 %v109
  %v613 = vunpack.c.l.b16 %v110
  %v614 = vunpack.c.h.b16 %v110
  %v615 = vunpack.c.l.b16 %v111
  %v616 = vunpack.c.h.b16 %v111
  %v617 = vunpack.c.l.b16 %v112
  %v618 = vunpack.c.h.b16 %v112
  %v619 = vunpack.c.l.b16 %v113
  %v620 = vunpack.c.h.b16 %v113
  %v621 = vunpack.c.l.b16 %v114
  %v622 = vunpack.c.h.b16 %v114
  %v623 = vunpack.c.l.b16 %v115
  %v624 = vunpack.c.h.b16 %v115
  %v625 = vunpack.c.l.b16 %v116
  %v626 = vunpack.c.h.b16 %v116
  %v627 = vunpack.c.l.b16 %v117
  %v628 = vunpack.c.h.b16 %v117
  %v629 = vunpack.c.l.b16 %v118
  %v630 = vunpack.c.h.b16 %v118
  %v631 = vunpack.c.l.b16 %v119
  %v632 = vunpack.c.h.b16 %v119
  %v633 = vunpack.c.l.b16 %v120
  %v634 = vunpack.c.h.b16 %v120
  %v635 = vunpack.c.l.b16 %v121
  %v636 = vunpack.c.h.b16 %v121
  %v637 = vunpack.c.l.b16 %v122
  %v638 = vunpack.c.h.b16 %v122
  %v639 = vunpack.c.l.b16 %v123
  %v640 = vunpack.c.h.b16 %v123
  %v641 = vunpack.c.l.b16 %v124
  %v642 = vunpack.c.h.b16 %v124
  %v643 = vunpack.c.l.b16 %v125
  %v644 = vunpack.c.h.b16 %v125
  %v645 = vunpack.c.l.b16 %v126
  %v646 = vunpack.c.h.b16 %v126
  %v647 = vunpack.c.l.b16 %v127
  %v648 = vunpack.c.h.b16 %v127
  %v649 = vunpack.c.l.b16 %v128
  %v650 = vunpack.c.h.b16 %v128
  %v651 = vunpack.c.l.b16 %v129
  %v652 = vunpack.c.h.b16 %v129
  %v653 = vunpack.c.l.b16 %v130
  %v654 = vunpack.c.h.b16 %v130
  %v655 = vunpack.c.l.b16 %v131
  %v656 = vunpack.c.h.b16 %v131
  %v657 = vunpack.c.l.b16 %v132
  %v658 = vunpack.c.h.b16 %v132
  %v659 = vunpack.c.l.b16 %v133
  %v660 = vunpack.c.h.b16 %v133
  %v661 = vunpack.c.l.b16 %v134
  %v662 = vunpack.c.h.b16 %v134
  %v663 = vunpack.c.l.b16 %v135
  %v664 = vunpack.c.h.b16 %v135
  %v665 = vunpack.c.l.b16 %v136
  %v666 = vunpack.c.h.b16 %v136
  %v667 = vunpack.c.l.b16 %v137
  %v668 = vunpack.c.h.b16 %v137
  %v669 = vunpack.c.l.b16 %v138
  %v670 = vunpack.c.h.b16 %v138
  %v671 = vunpack.c.l.b16 %v139
  %v672 = vunpack.c.h.b16 %v139
  %v673 = vunpack.c.l.b16 %v140
  %v674 = vunpack.c.h.b16 %v140
  %v675 = vunpack.c.l.b16 %v141
  %v676 = vunpack.c.h.b16 %v141
  %v677 = vunpack.c.l.b16 %v142
  %v678 = vunpack.c.h.b16 %v142
  %v679 = vunpack.c.l.b16 %v143
  %v680 = vunpack.c.h.b16 %v143
  %v681 = vunpack.c.l.b16 %v144
  %v682 = vunpack.c.h.b16 %v144
  %v683 = vunpack.c.l.b16 %v145
  %v684 = vunpack.c.h.b16 %v145
  %v685 = vunpack.c.l.b16 %v146
  %v686 = vunpack.c.h.b16 %v146
  %v687 = vunpack.c.l.b16 %v147
  %v688 = vunpack.c.h.b16 %v147
  %v689 = vunpack.c.l.b16 %v148
  %v690 = vunpack.c.h.b16 %v148
  %v691 = vunpack.c.l.b16 %v149
  %v692 = vunpack.c.h.b16 %v149
  %v693 = vunpack.c.l.b16 %v150
  %v694 = vunpack.c.h.b16 %v150
  %v695 = vunpack.c.l.b16 %v151
  %v696 = vunpack.c.h.b16 %v151
  %v697 = vunpack.c.l.b16 %v152
  %v698 = vunpack.c.h.b16 %v152
  %v699 = vunpack.c.l.b16 %v153
  %v700 = vunpack.c.h.b16 %v153
  %v701 = vunpack.c.l.b16 %v154
  %v702 = vunpack.c.h.b16 %v154
  %v703 = vunpack.c.l.b16 %v155
  %v704 = vunpack.c.h.b16 %v155
  %v705 = vunpack.c.l.b16 %v156
  %v706 = vunpack.c.h.b16 %v156
  %v707 = vunpack.c.l.b16 %v157
  %v708 = vunpack.c.h.b16 %v157
  %v709 = vunpack.c.l.b16 %v158
  %v710 = vunpack.c.h.b16 %v158
  %v711 = vunpack.c.l.b16 %v159
  %v712 = vunpack.c.h.b16 %v159
  %v713 = vunpack.c.l.b16 %v160
  %v714 = vunpack.c.h.b16 %v160
  %v715 = vunpack.c.l.b16 %v161
  %v716 = vunpack.c.h.b16 %v161
  %v717 = vunpack.c.l.b16 %v162
  %v718 = vunpack.c.h.b16 %v162
  %v719 = vunpack.c.l.b16 %v163
  %v720 = vunpack.c.h.b16 %v163
  %v721 = vunpack.c.l.b16 %v164
  %v722 = vunpack.c.h.b16 %v164
  %v723 = vunpack.c.l.b16 %v165
  %v724 = vunpack.c.h.b16 %v165
  %v725 = vunpack.c.l.b16 %v166
  %v726 = vunpack.c.h.b16 %v166
  %v727 = vunpack.c.l.b16 %v167
  %v728 = vunpack.c.h.b16 %v167
  %v729 = vunpack.c.l.b16 %v168
  %v730 = vunpack.c.h.b16 %v168
  %v731 = vunpack.c.l.b16 %v169
  %v732 = vunpack.c.h.b16 %v169
  %v733 = vunpack.c.l.b16 %v170
  %v734 = vunpack.c.h.b16 %v170
  %v735 = vunpack.c.l.b16 %v171
  %v736 = vunpack.c.h.b16 %v171
  %v737 = vunpack.c.l.b16 %v172
  %v738 = vunpack.c.h.b16 %v172
  %v739 = vunpack.c.l.b16 %v173
  %v740 = vunpack.c.h.b16 %v173
  %v741 = vunpack.c.l.b16 %v174
  %v742 = vunpack.c.h.b16 %v174
  %v743 = vunpack.c.l.b16 %v175
  %v744 = vunpack.c.h.b16 %v175
  %v745 = vunpack.c.l.b16 %v176
  %v746 = vunpack.c.h.b16 %v176
  %v747 = vunpack.c.l.b16 %v177
  %v748 = vunpack.c.h.b16 %v177
  %v749 = vunpack.c.l.b16 %v178
  %v750 = vunpack.c.h.b16 %v178
  %v751 = vunpack.c.l.b16 %v179
  %v752 = vunpack.c.h.b16 %v179
  %v753 = vunpack.c.l.b16 %v180
  %v754 = vunpack.c.h.b16 %v180
  %v755 = vpack.c.b16 %v461, %v455
  %v756 = vpack.c.b16 %v462, %v456
  %v757 = vpack.c.b16 %v463, %v457
  %v758 = vpack.c.b16 %v464, %v458
  %v759 = vpack.c.b16 %v465, %v459
  %v760 = vpack.c.b16 %v466, %v460
  %v761 = vpack.c.b16 %v473, %v467
  %v762 = vpack.c.b16 %v474, %v468
  %v763 = vpack.c.b16 %v475, %v469
  %v764 = vpack.c.b16 %v476, %v470
  %v765 = vpack.c.b16 %v477, %v471
  %v766 = vpack.c.b16 %v478, %v472
  %v767 = vpack.c.b16 %v485, %v479
  %v768 = vpack.c.b16 %v486, %v480
  %v769 = vpack.c.b16 %v487, %v481
  %v770 = vpack.c.b16 %v488, %v482
  %v771 = vpack.c.b16 %v489, %v483
  %v772 = vpack.c.b16 %v490, %v484
  %v773 = vpack.c.b16 %v497, %v491
  %v774 = vpack.c.b16 %v498, %v492
  %v775 = vpack.c.b16 %v499, %v493
  %v776 = vpack.c.b16 %v500, %v494
  %v777 = vpack.c.b16 %v501, %v495
  %v778 = vpack.c.b16 %v502, %v496
  %v779 = vpack.c.b16 %v509, %v503
  %v780 = vpack.c.b16 %v510, %v504
  %v781 = vpack.c.b16 %v511, %v505
  %v782 = vpack.c.b16 %v512, %v506
  %v783 = vpack.c.b16 %v513, %v507
  %v784 = vpack.c.b16 %v514, %v508
  %v785 = vpack.c.b16 %v521, %v515
  %v786 = vpack.c.b16 %v522, %v516
  %v787 = vpack.c.b16 %v523, %v517
  %v788 = vpack.c.b16 %v524, %v518
  %v789 = vpack.c.b16 %v525, %v519
  %v790 = vpack.c.b16 %v526, %v520
  %v791 = vpack.c.b16 %v533, %v527
  %v792 = vpack.c.b16 %v534, %v528
  %v793 = vpack.c.b16 %v535, %v529
  %v794 = vpack.c.b16 %v536, %v530
  %v795 = vpack.c.b16 %v537, %v531
  %v796 = vpack.c.b16 %v538, %v532
  %v797 = vpack.c.b16 %v545, %v539
  %v798 = vpack.c.b16 %v546, %v540
  %v799 = vpack.c.b16 %v547, %v541
  %v800 = vpack.c.b16 %v548, %v542
  %v801 = vpack.c.b16 %v549, %v543
  %v802 = vpack.c.b16 %v550, %v544
  %v803 = vpack.c.b16 %v557, %v551
  %v804 = vpack.c.b16 %v558, %v552
  %v805 = vpack.c.b16 %v559, %v553
  %v806 = vpack.c.b16 %v560, %v554
  %v807 = vpack.c.b16 %v561, %v555
  %v808 = vpack.c.b16 %v562, %v556
  %v809 = vpack.c.b16 %v569, %v563
  %v810 = vpack.c.b16 %v570, %v564
  %v811 = vpack.c.b16 %v571, %v565
  %v812 = vpack.c.b16 %v572, %v566
  %v813 = vpack.c.b16 %v573, %v567
  %v814 = vpack.c.b16 %v574, %v568
  %v815 = vpack.c.b16 %v581, %v575
  %v816 = vpack.c.b16 %v582, %v576
  %v817 = vpack.c.b16 %v583, %v577
  %v818 = vpack.c.b16 %v584, %v578
  %v819 = vpack.c.b16 %v585, %v579
  %v820 = vpack.c.b16 %v586, %v580
  %v821 = vpack.c.b16 %v593, %v587
  %v822 = vpack.c.b16 %v594, %v588
  %v823 = vpack.c.b16 %v595, %v589
  %v824 = vpack.c.b16 %v596, %v590
  %v825 = vpack.c.b16 %v597, %v591
  %v826 = vpack.c.b16 %v598, %v592
  %v827 = vpack.c.b16 %v605, %v599
  %v828 = vpack.c.b16 %v606, %v600
  %v829 = vpack.c.b16 %v607, %v601
  %v830 = vpack.c.b16 %v608, %v602
  %v831 = vpack.c.b16 %v609, %v603
  %v832 = vpack.c.b16 %v610, %v604
  %v833 = vpack.c.b16 %v617, %v611
  %v834 = vpack.c.b16 %v618, %v612
  %v835 = vpack.c.b16 %v619, %v613
  %v836 = vpack.c.b16 %v620, %v614
  %v837 = vpack.c.b16 %v621, %v615
  %v838 = vpack.c.b16 %v622, %v616
  %v839 = vpack.c.b16 %v629, %v623
  %v840 = vpack.c.b16 %v630, %v624
  %v841 = vpack.c.b16 %v631, %v625
  %v842 = vpack.c.b16 %v632, %v626
  %v843 = vpack.c.b16 %v633, %v627
  %v844 = vpack.c.b16 %v634, %v628
  %v845 = vpack.c.b16 %v641, %v635
  %v846 = vpack.c.b16 %v642, %v636
  %v847 = vpack.c.b16 %v643, %v637
  %v848 = vpack.c.b16 %v644, %v638
  %v849 = vpack.c.b16 %v645, %v639
  %v850 = vpack.c.b16 %v646, %v640
  %v851 = vpack.c.b16 %v653, %v647
  %v852 = vpack.c.b16 %v654, %v648
  %v853 = vpack.c.b16 %v655, %v649
  %v854 = vpack.c.b16 %v656, %v650
  %v855 = vpack.c.b16 %v657, %v651
  %v856 = vpack.c.b16 %v658, %v652
  %v857 = vpack.c.b16 %v665, %v659
  %v858 = vpack.c.b16 %v666, %v660
  %v859 = vpack.c.b16 %v667, %v661
  %v860 = vpack.c.b16 %v668, %v662
  %v861 = vpack.c.b16 %v669, %v663
  %v862 = vpack.c.b16 %v670, %v664
  %v863 = vpack.c.b16 %v677, %v671
  %v864 = vpack.c.b16 %v678, %v672
  %v865 = vpack.c.b16 %v679, %v673
  %v866 = vpack.c.b16 %v680, %v674
  %v867 = vpack.c.b16 %v681, %v675
  %v868 = vpack.c.b16 %v682, %v676
  %v869 = vpack.c.b16 %v689, %v683
  %v870 = vpack.c.b16 %v690, %v684
  %v871 = vpack.c.b16 %v691, %v685
  %v872 = vpack.c.b16 %v692, %v686
  %v873 = vpack.c.b16 %v693, %v687
  %v874 = vpack.c.b16 %v694, %v688
  %v875 = vpack.c.b16 %v701, %v695
  %v876 = vpack.c.b16 %v702, %v696
  %v877 = vpack.c.b16 %v703, %v697
  %v878 = vpack.c.b16 %v704, %v698
  %v879 = vpack.c.b16 %v705, %v699
  %v880 = vpack.c.b16 %v706, %v700
  %v881 = vpack.c.b16 %v713, %v707
  %v882 = vpack.c.b16 %v714, %v708
  %v883 = vpack.c.b16 %v715, %v709
  %v884 = vpack.c.b16 %v716, %v710
  %v885 = vpack.c.b16 %v717, %v711
  %v886 = vpack.c.b16 %v718, %v712
  %v887 = vpack.c.b16 %v725, %v719
  %v888 = vpack.c.b16 %v726, %v720
  %v889 = vpack.c.b16 %v727, %v721
  %v890 = vpack.c.b16 %v728, %v722
  %v891 = vpack.c.b16 %v729, %v723
  %v892 = vpack.c.b16 %v730, %v724
  %v893 = vpack.c.b16 %v737, %v731
  %v894 = vpack.c.b16 %v738, %v732
  %v895 = vpack.c.b16 %v739, %v733
  %v896 = vpack.c.b16 %v740, %v734
  %v897 = vpack.c.b16 %v741, %v735
  %v898 = vpack.c.b16 %v742, %v736
  %v899 = vpack.c.b16 %v749, %v743
  %v900 = vpack.c.b16 %v750, %v744
  %v901 = vpack.c.b16 %v751, %v745
  %v902 = vpack.c.b16 %v752, %v746
  %v903 = vpack.c.b16 %v753, %v747
  %v904 = vpack.c.b16 %v754, %v748
  %vm1055 = vcmask 130048
  %v1057 = vsel %vm1055, %v280, 0
  %v1060 = vsel %vm1055, %v284, 0
  %v1063 = vsel %vm1055, %v288, 0
  %v1066 = vsel %vm1055, %v292, 0
  %1068 = vmatprep.subr.bf16.mxu0 %v798
  %1069 = vmatpush1.bf16.msra.mxu0 %v797
  %1070 = vmatprep.subr.bf16.mxu0 %v792
  %1071 = vmatpush1.bf16.msra.mxu0 %v791
  %1072 = vmatprep.subr.bf16.mxu0 %v786
  %1073 = vmatpush1.bf16.msra.mxu0 %v785
  %1074 = vmatprep.subr.bf16.mxu0 %v780
  %1075 = vmatpush1.bf16.msra.mxu0 %v779
  %1076 = vmatprep.subr.bf16.mxu0 %v774
  %1077 = vmatpush1.bf16.msra.mxu0 %v773
  %1078 = vmatprep.subr.bf16.mxu0 %v768
  %1079 = vmatpush1.bf16.msra.mxu0 %v767
  %1080 = vmatprep.subr.bf16.mxu0 %v762
  %1081 = vmatpush1.bf16.msra.mxu0 %v761
  %1082 = vmatprep.subr.bf16.mxu0 %v756
  %1083 = vmatpush1.bf16.msra.mxu0 %v755
  %1084 = vmatprep.subr.bf16.mxu0 %v846
  %1085 = vmatpush2.bf16.msra.mxu0 %v845
  %1086 = vmatprep.subr.bf16.mxu0 %v840
  %1087 = vmatpush2.bf16.msra.mxu0 %v839
  %1088 = vmatprep.subr.bf16.mxu0 %v834
  %1089 = vmatpush2.bf16.msra.mxu0 %v833
  %1090 = vmatprep.subr.bf16.mxu0 %v828
  %1091 = vmatpush2.bf16.msra.mxu0 %v827
  %1092 = vmatprep.subr.bf16.mxu0 %v822
  %1093 = vmatpush2.bf16.msra.mxu0 %v821
  %1094 = vmatprep.subr.bf16.mxu0 %v816
  %1095 = vmatpush2.bf16.msra.mxu0 %v815
  %1096 = vmatprep.subr.bf16.mxu0 %v810
  %1097 = vmatpush2.bf16.msra.mxu0 %v809
  %1098 = vmatprep.subr.bf16.mxu0 %v804
  %1099 = vmatpush2.bf16.msra.mxu0 %v803
  %1100 = vmatprep.mubr.bf16.mxu0 %v278
  %1101 = vmatmul.mubr.bf16.gmra.mxu0 %v277
  %v1102 = vpop.f32.mrf.mxu0
  %v1103 = vadd.f32 %v192, %v1102
  %v1104 = vpop.f32.mrf.mxu0
  %v1105 = vadd.f32 %v192, %v1104
  %v1106 = vpop.f32.mrf.mxu0
  %v1107 = vadd.f32 %v197, %v1106
  %v1108 = vpop.f32.mrf.mxu0
  %v1109 = vadd.f32 %v197, %v1108
  %1110 = vmatprep.mubr.bf16.mxu0 %v282
  %1111 = vmatmul.mubr.bf16.gmra.mxu0 %v281
  %v1112 = vpop.f32.mrf.mxu0
  %v1113 = vadd.f32 %v202, %v1112
  %v1114 = vpop.f32.mrf.mxu0
  %v1115 = vadd.f32 %v202, %v1114
  %v1116 = vpop.f32.mrf.mxu0
  %v1117 = vadd.f32 %v207, %v1116
  %v1118 = vpop.f32.mrf.mxu0
  %v1119 = vadd.f32 %v207, %v1118
  %1120 = vmatprep.mubr.bf16.mxu0 %v286
  %1121 = vmatmul.mubr.bf16.gmra.mxu0 %v285
  %v1122 = vpop.f32.mrf.mxu0
  %v1123 = vadd.f32 %v212, %v1122
  %v1124 = vpop.f32.mrf.mxu0
  %v1125 = vadd.f32 %v212, %v1124
  %v1126 = vpop.f32.mrf.mxu0
  %v1127 = vadd.f32 %v217, %v1126
  %v1128 = vpop.f32.mrf.mxu0
  %v1129 = vadd.f32 %v217, %v1128
  %1130 = vmatprep.mubr.bf16.mxu0 %v290
  %1131 = vmatmul.mubr.bf16.gmra.mxu0 %v289
  %v1132 = vpop.f32.mrf.mxu0
  %v1133 = vadd.f32 %v222, %v1132
  %v1134 = vpop.f32.mrf.mxu0
  %v1135 = vadd.f32 %v222, %v1134
  %v1136 = vpop.f32.mrf.mxu0
  %v1137 = vadd.f32 %v227, %v1136
  %v1138 = vpop.f32.mrf.mxu0
  %v1139 = vadd.f32 %v227, %v1138
  %1140 = vdwg.mxu0
  %1141 = vmatprep.subr.bf16.mxu0 %v894
  %1142 = vmatpush1.bf16.msra.mxu0 %v893
  %1143 = vmatprep.subr.bf16.mxu0 %v888
  %1144 = vmatpush1.bf16.msra.mxu0 %v887
  %1145 = vmatprep.subr.bf16.mxu0 %v882
  %1146 = vmatpush1.bf16.msra.mxu0 %v881
  %1147 = vmatprep.subr.bf16.mxu0 %v876
  %1148 = vmatpush1.bf16.msra.mxu0 %v875
  %1149 = vmatprep.subr.bf16.mxu0 %v870
  %1150 = vmatpush1.bf16.msra.mxu0 %v869
  %1151 = vmatprep.subr.bf16.mxu0 %v864
  %1152 = vmatpush1.bf16.msra.mxu0 %v863
  %1153 = vmatprep.subr.bf16.mxu0 %v858
  %1154 = vmatpush1.bf16.msra.mxu0 %v857
  %1155 = vmatprep.subr.bf16.mxu0 %v852
  %1156 = vmatpush1.bf16.msra.mxu0 %v851
  %1157 = vmatprep.subr.bf16.mxu0 0
  %1158 = vmatpush2.bf16.msra.mxu0 0
  %1159 = vmatprep.subr.bf16.mxu0 0
  %1160 = vmatpush2.bf16.msra.mxu0 0
  %1161 = vmatprep.subr.bf16.mxu0 0
  %1162 = vmatpush2.bf16.msra.mxu0 0
  %1163 = vmatprep.subr.bf16.mxu0 0
  %1164 = vmatpush2.bf16.msra.mxu0 0
  %1165 = vmatprep.subr.bf16.mxu0 0
  %1166 = vmatpush2.bf16.msra.mxu0 0
  %1167 = vmatprep.subr.bf16.mxu0 0
  %1168 = vmatpush2.bf16.msra.mxu0 0
  %1169 = vmatprep.subr.bf16.mxu0 0
  %1170 = vmatpush2.bf16.msra.mxu0 0
  %1171 = vmatprep.subr.bf16.mxu0 %v900
  %1172 = vmatpush2.bf16.msra.mxu0 %v899
  %1173 = vmatprep.mubr.bf16.mxu0 %v1057
  %1174 = vmatmul.mubr.bf16.gmra.mxu0 %v279
  %v1175 = vpop.f32.mrf.mxu0
  %v1176 = vadd.f32 %v1103, %v1175
  %v1177 = vpop.f32.mrf.mxu0
  %v1178 = vadd.f32 %v1105, %v1177
  %v1179 = vpop.f32.mrf.mxu0
  %v1180 = vadd.f32 %v1107, %v1179
  %v1181 = vpop.f32.mrf.mxu0
  %v1182 = vadd.f32 %v1109, %v1181
  %1183 = vmatprep.mubr.bf16.mxu0 %v1060
  %1184 = vmatmul.mubr.bf16.gmra.mxu0 %v283
  %v1185 = vpop.f32.mrf.mxu0
  %v1186 = vadd.f32 %v1113, %v1185
  %v1187 = vpop.f32.mrf.mxu0
  %v1188 = vadd.f32 %v1115, %v1187
  %v1189 = vpop.f32.mrf.mxu0
  %v1190 = vadd.f32 %v1117, %v1189
  %v1191 = vpop.f32.mrf.mxu0
  %v1192 = vadd.f32 %v1119, %v1191
  %1193 = vmatprep.mubr.bf16.mxu0 %v1063
  %1194 = vmatmul.mubr.bf16.gmra.mxu0 %v287
  %v1195 = vpop.f32.mrf.mxu0
  %v1196 = vadd.f32 %v1123, %v1195
  %v1197 = vpop.f32.mrf.mxu0
  %v1198 = vadd.f32 %v1125, %v1197
  %v1199 = vpop.f32.mrf.mxu0
  %v1200 = vadd.f32 %v1127, %v1199
  %v1201 = vpop.f32.mrf.mxu0
  %v1202 = vadd.f32 %v1129, %v1201
  %1203 = vmatprep.mubr.bf16.mxu0 %v1066
  %1204 = vmatmul.mubr.bf16.gmra.mxu0 %v291
  %v1205 = vpop.f32.mrf.mxu0
  %v1206 = vadd.f32 %v1133, %v1205
  %v1207 = vpop.f32.mrf.mxu0
  %v1208 = vadd.f32 %v1135, %v1207
  %v1209 = vpop.f32.mrf.mxu0
  %v1210 = vadd.f32 %v1137, %v1209
  %v1211 = vpop.f32.mrf.mxu0
  %v1212 = vadd.f32 %v1139, %v1211
  %1213 = vdwg.mxu0
  %1214 = vmatprep.subr.bf16.mxu0 %v800
  %1215 = vmatpush1.bf16.msra.mxu0 %v799
  %1216 = vmatprep.subr.bf16.mxu0 %v794
  %1217 = vmatpush1.bf16.msra.mxu0 %v793
  %1218 = vmatprep.subr.bf16.mxu0 %v788
  %1219 = vmatpush1.bf16.msra.mxu0 %v787
  %1220 = vmatprep.subr.bf16.mxu0 %v782
  %1221 = vmatpush1.bf16.msra.mxu0 %v781
  %1222 = vmatprep.subr.bf16.mxu0 %v776
  %1223 = vmatpush1.bf16.msra.mxu0 %v775
  %1224 = vmatprep.subr.bf16.mxu0 %v770
  %1225 = vmatpush1.bf16.msra.mxu0 %v769
  %1226 = vmatprep.subr.bf16.mxu0 %v764
  %1227 = vmatpush1.bf16.msra.mxu0 %v763
  %1228 = vmatprep.subr.bf16.mxu0 %v758
  %1229 = vmatpush1.bf16.msra.mxu0 %v757
  %1230 = vmatprep.subr.bf16.mxu0 %v848
  %1231 = vmatpush2.bf16.msra.mxu0 %v847
  %1232 = vmatprep.subr.bf16.mxu0 %v842
  %1233 = vmatpush2.bf16.msra.mxu0 %v841
  %1234 = vmatprep.subr.bf16.mxu0 %v836
  %1235 = vmatpush2.bf16.msra.mxu0 %v835
  %1236 = vmatprep.subr.bf16.mxu0 %v830
  %1237 = vmatpush2.bf16.msra.mxu0 %v829
  %1238 = vmatprep.subr.bf16.mxu0 %v824
  %1239 = vmatpush2.bf16.msra.mxu0 %v823
  %1240 = vmatprep.subr.bf16.mxu0 %v818
  %1241 = vmatpush2.bf16.msra.mxu0 %v817
  %1242 = vmatprep.subr.bf16.mxu0 %v812
  %1243 = vmatpush2.bf16.msra.mxu0 %v811
  %1244 = vmatprep.subr.bf16.mxu0 %v806
  %1245 = vmatpush2.bf16.msra.mxu0 %v805
  %1246 = vmatprep.mubr.bf16.mxu0 %v278
  %1247 = vmatmul.mubr.bf16.gmra.mxu0 %v277
  %v1248 = vpop.f32.mrf.mxu0
  %v1249 = vadd.f32 %v192, %v1248
  %v1250 = vpop.f32.mrf.mxu0
  %v1251 = vadd.f32 %v192, %v1250
  %v1252 = vpop.f32.mrf.mxu0
  %v1253 = vadd.f32 %v197, %v1252
  %v1254 = vpop.f32.mrf.mxu0
  %v1255 = vadd.f32 %v197, %v1254
  %1256 = vmatprep.mubr.bf16.mxu0 %v282
  %1257 = vmatmul.mubr.bf16.gmra.mxu0 %v281
  %v1258 = vpop.f32.mrf.mxu0
  %v1259 = vadd.f32 %v202, %v1258
  %v1260 = vpop.f32.mrf.mxu0
  %v1261 = vadd.f32 %v202, %v1260
  %v1262 = vpop.f32.mrf.mxu0
  %v1263 = vadd.f32 %v207, %v1262
  %v1264 = vpop.f32.mrf.mxu0
  %v1265 = vadd.f32 %v207, %v1264
  %1266 = vmatprep.mubr.bf16.mxu0 %v286
  %1267 = vmatmul.mubr.bf16.gmra.mxu0 %v285
  %v1268 = vpop.f32.mrf.mxu0
  %v1269 = vadd.f32 %v212, %v1268
  %v1270 = vpop.f32.mrf.mxu0
  %v1271 = vadd.f32 %v212, %v1270
  %v1272 = vpop.f32.mrf.mxu0
  %v1273 = vadd.f32 %v217, %v1272
  %v1274 = vpop.f32.mrf.mxu0
  %v1275 = vadd.f32 %v217, %v1274
  %1276 = vmatprep.mubr.bf16.mxu0 %v290
  %1277 = vmatmul.mubr.bf16.gmra.mxu0 %v289
  %v1278 = vpop.f32.mrf.mxu0
  %v1279 = vadd.f32 %v222, %v1278
  %v1280 = vpop.f32.mrf.mxu0
  %v1281 = vadd.f32 %v222, %v1280
  %v1282 = vpop.f32.mrf.mxu0
  %v1283 = vadd.f32 %v227, %v1282
  %v1284 = vpop.f32.mrf.mxu0
  %v1285 = vadd.f32 %v227, %v1284
  %1286 = vdwg.mxu0
  %1287 = vmatprep.subr.bf16.mxu0 %v896
  %1288 = vmatpush1.bf16.msra.mxu0 %v895
  %1289 = vmatprep.subr.bf16.mxu0 %v890
  %1290 = vmatpush1.bf16.msra.mxu0 %v889
  %1291 = vmatprep.subr.bf16.mxu0 %v884
  %1292 = vmatpush1.bf16.msra.mxu0 %v883
  %1293 = vmatprep.subr.bf16.mxu0 %v878
  %1294 = vmatpush1.bf16.msra.mxu0 %v877
  %1295 = vmatprep.subr.bf16.mxu0 %v872
  %1296 = vmatpush1.bf16.msra.mxu0 %v871
  %1297 = vmatprep.subr.bf16.mxu0 %v866
  %1298 = vmatpush1.bf16.msra.mxu0 %v865
  %1299 = vmatprep.subr.bf16.mxu0 %v860
  %1300 = vmatpush1.bf16.msra.mxu0 %v859
  %1301 = vmatprep.subr.bf16.mxu0 %v854
  %1302 = vmatpush1.bf16.msra.mxu0 %v853
  %1303 = vmatprep.subr.bf16.mxu0 0
  %1304 = vmatpush2.bf16.msra.mxu0 0
  %1305 = vmatprep.subr.bf16.mxu0 0
  %1306 = vmatpush2.bf16.msra.mxu0 0
  %1307 = vmatprep.subr.bf16.mxu0 0
  %1308 = vmatpush2.bf16.msra.mxu0 0
  %1309 = vmatprep.subr.bf16.mxu0 0
  %1310 = vmatpush2.bf16.msra.mxu0 0
  %1311 = vmatprep.subr.bf16.mxu0 0
  %1312 = vmatpush2.bf16.msra.mxu0 0
  %1313 = vmatprep.subr.bf16.mxu0 0
  %1314 = vmatpush2.bf16.msra.mxu0 0
  %1315 = vmatprep.subr.bf16.mxu0 0
  %1316 = vmatpush2.bf16.msra.mxu0 0
  %1317 = vmatprep.subr.bf16.mxu0 %v902
  %1318 = vmatpush2.bf16.msra.mxu0 %v901
  %1319 = vmatprep.mubr.bf16.mxu0 %v1057
  %1320 = vmatmul.mubr.bf16.gmra.mxu0 %v279
  %v1321 = vpop.f32.mrf.mxu0
  %v1322 = vadd.f32 %v1249, %v1321
  %v1323 = vpop.f32.mrf.mxu0
  %v1324 = vadd.f32 %v1251, %v1323
  %v1325 = vpop.f32.mrf.mxu0
  %v1326 = vadd.f32 %v1253, %v1325
  %v1327 = vpop.f32.mrf.mxu0
  %v1328 = vadd.f32 %v1255, %v1327
  %1329 = vmatprep.mubr.bf16.mxu0 %v1060
  %1330 = vmatmul.mubr.bf16.gmra.mxu0 %v283
  %v1331 = vpop.f32.mrf.mxu0
  %v1332 = vadd.f32 %v1259, %v1331
  %v1333 = vpop.f32.mrf.mxu0
  %v1334 = vadd.f32 %v1261, %v1333
  %v1335 = vpop.f32.mrf.mxu0
  %v1336 = vadd.f32 %v1263, %v1335
  %v1337 = vpop.f32.mrf.mxu0
  %v1338 = vadd.f32 %v1265, %v1337
  %1339 = vmatprep.mubr.bf16.mxu0 %v1063
  %1340 = vmatmul.mubr.bf16.gmra.mxu0 %v287
  %v1341 = vpop.f32.mrf.mxu0
  %v1342 = vadd.f32 %v1269, %v1341
  %v1343 = vpop.f32.mrf.mxu0
  %v1344 = vadd.f32 %v1271, %v1343
  %v1345 = vpop.f32.mrf.mxu0
  %v1346 = vadd.f32 %v1273, %v1345
  %v1347 = vpop.f32.mrf.mxu0
  %v1348 = vadd.f32 %v1275, %v1347
  %1349 = vmatprep.mubr.bf16.mxu0 %v1066
  %1350 = vmatmul.mubr.bf16.gmra.mxu0 %v291
  %v1351 = vpop.f32.mrf.mxu0
  %v1352 = vadd.f32 %v1279, %v1351
  %v1353 = vpop.f32.mrf.mxu0
  %v1354 = vadd.f32 %v1281, %v1353
  %v1355 = vpop.f32.mrf.mxu0
  %v1356 = vadd.f32 %v1283, %v1355
  %v1357 = vpop.f32.mrf.mxu0
  %v1358 = vadd.f32 %v1285, %v1357
  %1359 = vdwg.mxu0
  %1360 = vmatprep.subr.bf16.mxu0 %v802
  %1361 = vmatpush1.bf16.msra.mxu0 %v801
  %1362 = vmatprep.subr.bf16.mxu0 %v796
  %1363 = vmatpush1.bf16.msra.mxu0 %v795
  %1364 = vmatprep.subr.bf16.mxu0 %v790
  %1365 = vmatpush1.bf16.msra.mxu0 %v789
  %1366 = vmatprep.subr.bf16.mxu0 %v784
  %1367 = vmatpush1.bf16.msra.mxu0 %v783
  %1368 = vmatprep.subr.bf16.mxu0 %v778
  %1369 = vmatpush1.bf16.msra.mxu0 %v777
  %1370 = vmatprep.subr.bf16.mxu0 %v772
  %1371 = vmatpush1.bf16.msra.mxu0 %v771
  %1372 = vmatprep.subr.bf16.mxu0 %v766
  %1373 = vmatpush1.bf16.msra.mxu0 %v765
  %1374 = vmatprep.subr.bf16.mxu0 %v760
  %1375 = vmatpush1.bf16.msra.mxu0 %v759
  %1376 = vmatprep.subr.bf16.mxu0 %v850
  %1377 = vmatpush2.bf16.msra.mxu0 %v849
  %1378 = vmatprep.subr.bf16.mxu0 %v844
  %1379 = vmatpush2.bf16.msra.mxu0 %v843
  %1380 = vmatprep.subr.bf16.mxu0 %v838
  %1381 = vmatpush2.bf16.msra.mxu0 %v837
  %1382 = vmatprep.subr.bf16.mxu0 %v832
  %1383 = vmatpush2.bf16.msra.mxu0 %v831
  %1384 = vmatprep.subr.bf16.mxu0 %v826
  %1385 = vmatpush2.bf16.msra.mxu0 %v825
  %1386 = vmatprep.subr.bf16.mxu0 %v820
  %1387 = vmatpush2.bf16.msra.mxu0 %v819
  %1388 = vmatprep.subr.bf16.mxu0 %v814
  %1389 = vmatpush2.bf16.msra.mxu0 %v813
  %1390 = vmatprep.subr.bf16.mxu0 %v808
  %1391 = vmatpush2.bf16.msra.mxu0 %v807
  %1392 = vmatprep.mubr.bf16.mxu0 %v278
  %1393 = vmatmul.mubr.bf16.gmra.mxu0 %v277
  %v1394 = vpop.f32.mrf.mxu0
  %v1395 = vadd.f32 %v192, %v1394
  %v1396 = vpop.f32.mrf.mxu0
  %v1397 = vadd.f32 %v192, %v1396
  %v1398 = vpop.f32.mrf.mxu0
  %v1399 = vadd.f32 %v197, %v1398
  %v1400 = vpop.f32.mrf.mxu0
  %v1401 = vadd.f32 %v197, %v1400
  %1402 = vmatprep.mubr.bf16.mxu0 %v282
  %1403 = vmatmul.mubr.bf16.gmra.mxu0 %v281
  %v1404 = vpop.f32.mrf.mxu0
  %v1405 = vadd.f32 %v202, %v1404
  %v1406 = vpop.f32.mrf.mxu0
  %v1407 = vadd.f32 %v202, %v1406
  %v1408 = vpop.f32.mrf.mxu0
  %v1409 = vadd.f32 %v207, %v1408
  %v1410 = vpop.f32.mrf.mxu0
  %v1411 = vadd.f32 %v207, %v1410
  %1412 = vmatprep.mubr.bf16.mxu0 %v286
  %1413 = vmatmul.mubr.bf16.gmra.mxu0 %v285
  %v1414 = vpop.f32.mrf.mxu0
  %v1415 = vadd.f32 %v212, %v1414
  %v1416 = vpop.f32.mrf.mxu0
  %v1417 = vadd.f32 %v212, %v1416
  %v1418 = vpop.f32.mrf.mxu0
  %v1419 = vadd.f32 %v217, %v1418
  %v1420 = vpop.f32.mrf.mxu0
  %v1421 = vadd.f32 %v217, %v1420
  %1422 = vmatprep.mubr.bf16.mxu0 %v290
  %1423 = vmatmul.mubr.bf16.gmra.mxu0 %v289
  %v1424 = vpop.f32.mrf.mxu0
  %v1425 = vadd.f32 %v222, %v1424
  %v1426 = vpop.f32.mrf.mxu0
  %v1427 = vadd.f32 %v222, %v1426
  %v1428 = vpop.f32.mrf.mxu0
  %v1429 = vadd.f32 %v227, %v1428
  %v1430 = vpop.f32.mrf.mxu0
  %v1431 = vadd.f32 %v227, %v1430
  %1432 = vdwg.mxu0
  %1433 = vmatprep.subr.bf16.mxu0 %v898
  %1434 = vmatpush1.bf16.msra.mxu0 %v897
  %1435 = vmatprep.subr.bf16.mxu0 %v892
  %1436 = vmatpush1.bf16.msra.mxu0 %v891
  %1437 = vmatprep.subr.bf16.mxu0 %v886
  %1438 = vmatpush1.bf16.msra.mxu0 %v885
  %1439 = vmatprep.subr.bf16.mxu0 %v880
  %1440 = vmatpush1.bf16.msra.mxu0 %v879
  %1441 = vmatprep.subr.bf16.mxu0 %v874
  %1442 = vmatpush1.bf16.msra.mxu0 %v873
  %1443 = vmatprep.subr.bf16.mxu0 %v868
  %1444 = vmatpush1.bf16.msra.mxu0 %v867
  %1445 = vmatprep.subr.bf16.mxu0 %v862
  %1446 = vmatpush1.bf16.msra.mxu0 %v861
  %1447 = vmatprep.subr.bf16.mxu0 %v856
  %1448 = vmatpush1.bf16.msra.mxu0 %v855
  %1449 = vmatprep.subr.bf16.mxu0 0
  %1450 = vmatpush2.bf16.msra.mxu0 0
  %1451 = vmatprep.subr.bf16.mxu0 0
  %1452 = vmatpush2.bf16.msra.mxu0 0
  %1453 = vmatprep.subr.bf16.mxu0 0
  %1454 = vmatpush2.bf16.msra.mxu0 0
  %1455 = vmatprep.subr.bf16.mxu0 0
  %1456 = vmatpush2.bf16.msra.mxu0 0
  %1457 = vmatprep.subr.bf16.mxu0 0
  %1458 = vmatpush2.bf16.msra.mxu0 0
  %1459 = vmatprep.subr.bf16.mxu0 0
  %1460 = vmatpush2.bf16.msra.mxu0 0
  %1461 = vmatprep.subr.bf16.mxu0 0
  %1462 = vmatpush2.bf16.msra.mxu0 0
  %1463 = vmatprep.subr.bf16.mxu0 %v904
  %1464 = vmatpush2.bf16.msra.mxu0 %v903
  %1465 = vmatprep.mubr.bf16.mxu0 %v1057
  %1466 = vmatmul.mubr.bf16.gmra.mxu0 %v279
  %v1467 = vpop.f32.mrf.mxu0
  %v1468 = vadd.f32 %v1395, %v1467
  %v1469 = vpop.f32.mrf.mxu0
  %v1470 = vadd.f32 %v1397, %v1469
  %v1471 = vpop.f32.mrf.mxu0
  %v1472 = vadd.f32 %v1399, %v1471
  %v1473 = vpop.f32.mrf.mxu0
  %v1474 = vadd.f32 %v1401, %v1473
  %1475 = vmatprep.mubr.bf16.mxu0 %v1060
  %1476 = vmatmul.mubr.bf16.gmra.mxu0 %v283
  %v1477 = vpop.f32.mrf.mxu0
  %v1478 = vadd.f32 %v1405, %v1477
  %v1479 = vpop.f32.mrf.mxu0
  %v1480 = vadd.f32 %v1407, %v1479
  %v1481 = vpop.f32.mrf.mxu0
  %v1482 = vadd.f32 %v1409, %v1481
  %v1483 = vpop.f32.mrf.mxu0
  %v1484 = vadd.f32 %v1411, %v1483
  %1485 = vmatprep.mubr.bf16.mxu0 %v1063
  %1486 = vmatmul.mubr.bf16.gmra.mxu0 %v287
  %v1487 = vpop.f32.mrf.mxu0
  %v1488 = vadd.f32 %v1415, %v1487
  %v1489 = vpop.f32.mrf.mxu0
  %v1490 = vadd.f32 %v1417, %v1489
  %v1491 = vpop.f32.mrf.mxu0
  %v1492 = vadd.f32 %v1419, %v1491
  %v1493 = vpop.f32.mrf.mxu0
  %v1494 = vadd.f32 %v1421, %v1493
  %1495 = vmatprep.mubr.bf16.mxu0 %v1066
  %1496 = vmatmul.mubr.bf16.gmra.mxu0 %v291
  %v1497 = vpop.f32.mrf.mxu0
  %v1498 = vadd.f32 %v1425, %v1497
  %v1499 = vpop.f32.mrf.mxu0
  %v1500 = vadd.f32 %v1427, %v1499
  %v1501 = vpop.f32.mrf.mxu0
  %v1502 = vadd.f32 %v1429, %v1501
  %v1503 = vpop.f32.mrf.mxu0
  %v1504 = vadd.f32 %v1431, %v1503
  %1505 = vdwg.mxu0
  %v1506 = vmax.f32 %v1176, 0.0
  %v1507 = vmax.f32 %v1178, 0.0
  %v1508 = vmax.f32 %v1322, 0.0
  %v1509 = vmax.f32 %v1324, 0.0
  %v1510 = vmax.f32 %v1468, 0.0
  %v1511 = vmax.f32 %v1470, 0.0
  %v1512 = vmax.f32 %v1180, 0.0
  %v1513 = vmax.f32 %v1182, 0.0
  %v1514 = vmax.f32 %v1326, 0.0
  %v1515 = vmax.f32 %v1328, 0.0
  %v1516 = vmax.f32 %v1472, 0.0
  %v1517 = vmax.f32 %v1474, 0.0
  %v1518 = vmax.f32 %v1186, 0.0
  %v1519 = vmax.f32 %v1188, 0.0
  %v1520 = vmax.f32 %v1332, 0.0
  %v1521 = vmax.f32 %v1334, 0.0
  %v1522 = vmax.f32 %v1478, 0.0
  %v1523 = vmax.f32 %v1480, 0.0
  %v1524 = vmax.f32 %v1190, 0.0
  %v1525 = vmax.f32 %v1192, 0.0
  %v1526 = vmax.f32 %v1336, 0.0
  %v1527 = vmax.f32 %v1338, 0.0
  %v1528 = vmax.f32 %v1482, 0.0
  %v1529 = vmax.f32 %v1484, 0.0
  %v1530 = vmax.f32 %v1196, 0.0
  %v1531 = vmax.f32 %v1198, 0.0
  %v1532 = vmax.f32 %v1342, 0.0
  %v1533 = vmax.f32 %v1344, 0.0
  %v1534 = vmax.f32 %v1488, 0.0
  %v1535 = vmax.f32 %v1490, 0.0
  %v1536 = vmax.f32 %v1200, 0.0
  %v1537 = vmax.f32 %v1202, 0.0
  %v1538 = vmax.f32 %v1346, 0.0
  %v1539 = vmax.f32 %v1348, 0.0
  %v1540 = vmax.f32 %v1492, 0.0
  %v1541 = vmax.f32 %v1494, 0.0
  %v1542 = vmax.f32 %v1206, 0.0
  %v1543 = vmax.f32 %v1208, 0.0
  %v1544 = vmax.f32 %v1352, 0.0
  %v1545 = vmax.f32 %v1354, 0.0
  %v1546 = vmax.f32 %v1498, 0.0
  %v1547 = vmax.f32 %v1500, 0.0
  %v1548 = vmax.f32 %v1210, 0.0
  %v1549 = vmax.f32 %v1212, 0.0
  %v1550 = vmax.f32 %v1356, 0.0
  %v1551 = vmax.f32 %v1358, 0.0
  %v1552 = vmax.f32 %v1502, 0.0
  %v1553 = vmax.f32 %v1504, 0.0
  %1554 = vst [vmem:[%s3] sm:$0xff] %v1506
  %1555 = vst [vmem:[%s3 + $0x8] sm:$0xff] %v1507
  %1556 = vst [vmem:[%s3 + $0x10] sm:$0xff] %v1508
  %1557 = vst [vmem:[%s3 + $0x18] sm:$0xff] %v1509
  %1558 = vst [vmem:[%s3 + $0x20] sm:$0xff] %v1510
  %1559 = vst [vmem:[%s3 + $0x28] sm:$0xff] %v1511
  %1560 = vst [vmem:[%s3 + $0x30] sm:$0xff] %v1512
  %1561 = vst [vmem:[%s3 + $0x38] sm:$0xff] %v1513
  %1562 = vst [vmem:[%s3 + $0x40] sm:$0xff] %v1514
  %1563 = vst [vmem:[%s3 + $0x48] sm:$0xff] %v1515
  %1564 = vst [vmem:[%s3 + $0x50] sm:$0xff] %v1516
  %1565 = vst [vmem:[%s3 + $0x58] sm:$0xff] %v1517
  %1566 = vst [vmem:[%s3 + $0x60] sm:$0xff] %v1518
  %1567 = vst [vmem:[%s3 + $0x68] sm:$0xff] %v1519
  %1568 = vst [vmem:[%s3 + $0x70] sm:$0xff] %v1520
  %1569 = vst [vmem:[%s3 + $0x78] sm:$0xff] %v1521
  %1570 = vst [vmem:[%s3 + $0x80] sm:$0xff] %v1522
  %1571 = vst [vmem:[%s3 + $0x88] sm:$0xff] %v1523
  %1572 = vst [vmem:[%s3 + $0x90] sm:$0xff] %v1524
  %1573 = vst [vmem:[%s3 + $0x98] sm:$0xff] %v1525
  %1574 = vst [vmem:[%s3 + $0xa0] sm:$0xff] %v1526
  %1575 = vst [vmem:[%s3 + $0xa8] sm:$0xff] %v1527
  %1576 = vst [vmem:[%s3 + $0xb0] sm:$0xff] %v1528
  %1577 = vst [vmem:[%s3 + $0xb8] sm:$0xff] %v1529
  %1578 = vst [vmem:[%s3 + $0xc0] sm:$0xff] %v1530
  %1579 = vst [vmem:[%s3 + $0xc8] sm:$0xff] %v1531
  %1580 = vst [vmem:[%s3 + $0xd0] sm:$0xff] %v1532
  %1581 = vst [vmem:[%s3 + $0xd8] sm:$0xff] %v1533
  %1582 = vst [vmem:[%s3 + $0xe0] sm:$0xff] %v1534
  %1583 = vst [vmem:[%s3 + $0xe8] sm:$0xff] %v1535
  %1584 = vst [vmem:[%s3 + $0xf0] sm:$0xff] %v1536
  %1585 = vst [vmem:[%s3 + $0xf8] sm:$0xff] %v1537
  %1586 = vst [vmem:[%s3 + $0x100] sm:$0xff] %v1538
  %1587 = vst [vmem:[%s3 + $0x108] sm:$0xff] %v1539
  %1588 = vst [vmem:[%s3 + $0x110] sm:$0xff] %v1540
  %1589 = vst [vmem:[%s3 + $0x118] sm:$0xff] %v1541
  %1590 = vst [vmem:[%s3 + $0x120] sm:$0xff] %v1542
  %1591 = vst [vmem:[%s3 + $0x128] sm:$0xff] %v1543
  %1592 = vst [vmem:[%s3 + $0x130] sm:$0xff] %v1544
  %1593 = vst [vmem:[%s3 + $0x138] sm:$0xff] %v1545
  %1594 = vst [vmem:[%s3 + $0x140] sm:$0xff] %v1546
  %1595 = vst [vmem:[%s3 + $0x148] sm:$0xff] %v1547
  %1596 = vst [vmem:[%s3 + $0x150] sm:$0xff] %v1548
  %1597 = vst [vmem:[%s3 + $0x158] sm:$0xff] %v1549
  %1598 = vst [vmem:[%s3 + $0x160] sm:$0xff] %v1550
  %1599 = vst [vmem:[%s3 + $0x168] sm:$0xff] %v1551
  %1600 = vst [vmem:[%s3 + $0x170] sm:$0xff] %v1552
  %1601 = vst [vmem:[%s3 + $0x178] sm:$0xff] %v1553
  // Predicated region
  $region14: #{forward.9} parent=0 // pred_check
    _
  $region15: #{forward.9} parent=0 // pred_check_branch
    %1603 = sbr.rel (0) target = $region17
  $region16: #{forward.9} parent=0 // pred_region
    _
  $region17: #{forward.9} parent=0 // pred_fallthru
    _
  // Predicated region
  $region18: #{forward.9} parent=0 // pred_check
    _
  $region19: #{forward.9} parent=0 // pred_check_branch
    %1605 = sbr.rel (0) target = $region21
  $region20: #{forward.9} parent=0 // pred_region
    _
  $region21: #{forward.9} parent=0 // pred_fallthru
    _

// kernel: forward.10
$region0: #{forward.10}
  #allocation0 [shape = 'u32[]', space=smem, size = 0x4, offset = 0x4, fixed_abs, tag = 'smem constant byte address 0x4 - core index']
  #allocation1 [shape = 'u32[144,128]{1,0:T(1,128)}', space=vmem, size = 0x12000, scoped, tag = 'internal scratch']
  %s0 = inlined_call_operand.vmem [shape: bf16[32,576], index: 0, kind: input, shape index: {}]
  %s1 = inlined_call_operand.vmem [shape: bf16[576,128], index: 1, kind: input, shape index: {}]
  %s2 = inlined_call_operand.vmem [shape: f32[32,1], index: 2, kind: input, shape index: {}]
  %s3 = inlined_call_operand.vmem [shape: f32[32,128], index: 3, kind: output, shape index: {}]
  %s4 = sld [smem:[#allocation0]]
  $region22: #{forward.10} parent=0
    _
  %s6 = ssub.s32 1, %s4
  %s7 = scalar_select 0, %s6, %s4
  // Predicated region
  $region2: #{forward.10} parent=0 // pred_check
    _
  $region3: #{forward.10} parent=0 // pred_check_branch
    %9 = sbr.rel (0) target = $region5
  $region4: #{forward.10} parent=0 // pred_region
    _
  $region5: #{forward.10} parent=0 // pred_fallthru
    _
  // Predicated region
  $region6: #{forward.10} parent=0 // pred_check
    _
  $region7: #{forward.10} parent=0 // pred_check_branch
    %11 = sbr.rel (0) target = $region9
  $region8: #{forward.10} parent=0 // pred_region
    _
  $region9: #{forward.10} parent=0 // pred_fallthru
    _
  // Predicated region
  $region10: #{forward.10} parent=0 // pred_check
    _
  $region11: #{forward.10} parent=0 // pred_check_branch
    %13 = sbr.rel (0) target = $region13
  $region12: #{forward.10} parent=0 // pred_region
    _
  $region13: #{forward.10} parent=0 // pred_fallthru
    _
  %v15 = vld [vmem:[%s0] sm:$0xff]
  %v16 = vld [vmem:[%s0 + $0x8] sm:$0xff]
  %v17 = vld [vmem:[%s0 + $0x10] sm:$0xf]
  %v18 = vld [vmem:[%s0 + $0x14] sm:$0xff]
  %v19 = vld [vmem:[%s0 + $0x1c] sm:$0xff]
  %v20 = vld [vmem:[%s0 + $0x24] sm:$0xf]
  %v21 = vld [vmem:[%s0 + $0x28] sm:$0xff]
  %v22 = vld [vmem:[%s0 + $0x30] sm:$0xff]
  %v23 = vld [vmem:[%s0 + $0x38] sm:$0xf]
  %v24 = vld [vmem:[%s0 + $0x3c] sm:$0xff]
  %v25 = vld [vmem:[%s0 + $0x44] sm:$0xff]
  %v26 = vld [vmem:[%s0 + $0x4c] sm:$0xf]
  %v27 = vld [vmem:[%s1] sm:$0xf]
  %v28 = vld [vmem:[%s1 + $0x4] sm:$0xf]
  %v29 = vld [vmem:[%s1 + $0x8] sm:$0xf]
  %v30 = vld [vmem:[%s1 + $0xc] sm:$0xf]
  %v31 = vld [vmem:[%s1 + $0x10] sm:$0xf]
  %v32 = vld [vmem:[%s1 + $0x14] sm:$0xf]
  %v33 = vld [vmem:[%s1 + $0x18] sm:$0xf]
  %v34 = vld [vmem:[%s1 + $0x1c] sm:$0xf]
  %v35 = vld [vmem:[%s1 + $0x20] sm:$0xf]
  %v36 = vld [vmem:[%s1 + $0x24] sm:$0xf]
  %v37 = vld [vmem:[%s1 + $0x28] sm:$0xf]
  %v38 = vld [vmem:[%s1 + $0x2c] sm:$0xf]
  %v39 = vld [vmem:[%s1 + $0x30] sm:$0xf]
  %v40 = vld [vmem:[%s1 + $0x34] sm:$0xf]
  %v41 = vld [vmem:[%s1 + $0x38] sm:$0xf]
  %v42 = vld [vmem:[%s1 + $0x3c] sm:$0xf]
  %v43 = vld [vmem:[%s1 + $0x40] sm:$0xf]
  %v44 = vld [vmem:[%s1 + $0x44] sm:$0xf]
  %v45 = vld [vmem:[%s1 + $0x48] sm:$0xf]
  %v46 = vld [vmem:[%s1 + $0x4c] sm:$0xf]
  %v47 = vld [vmem:[%s1 + $0x50] sm:$0xf]
  %v48 = vld [vmem:[%s1 + $0x54] sm:$0xf]
  %v49 = vld [vmem:[%s1 + $0x58] sm:$0xf]
  %v50 = vld [vmem:[%s1 + $0x5c] sm:$0xf]
  %v51 = vld [vmem:[%s1 + $0x60] sm:$0xf]
  %v52 = vld [vmem:[%s1 + $0x64] sm:$0xf]
  %v53 = vld [vmem:[%s1 + $0x68] sm:$0xf]
  %v54 = vld [vmem:[%s1 + $0x6c] sm:$0xf]
  %v55 = vld [vmem:[%s1 + $0x70] sm:$0xf]
  %v56 = vld [vmem:[%s1 + $0x74] sm:$0xf]
  %v57 = vld [vmem:[%s1 + $0x78] sm:$0xf]
  %v58 = vld [vmem:[%s1 + $0x7c] sm:$0xf]
  %v59 = vld [vmem:[%s1 + $0x80] sm:$0xf]
  %v60 = vld [vmem:[%s1 + $0x84] sm:$0xf]
  %v61 = vld [vmem:[%s1 + $0x88] sm:$0xf]
  %v62 = vld [vmem:[%s1 + $0x8c] sm:$0xf]
  %v63 = vld [vmem:[%s1 + $0x90] sm:$0xf]
  %v64 = vld [vmem:[%s1 + $0x94] sm:$0xf]
  %v65 = vld [vmem:[%s1 + $0x98] sm:$0xf]
  %v66 = vld [vmem:[%s1 + $0x9c] sm:$0xf]
  %v67 = vld [vmem:[%s1 + $0xa0] sm:$0xf]
  %v68 = vld [vmem:[%s1 + $0xa4] sm:$0xf]
  %v69 = vld [vmem:[%s1 + $0xa8] sm:$0xf]
  %v70 = vld [vmem:[%s1 + $0xac] sm:$0xf]
  %v71 = vld [vmem:[%s1 + $0xb0] sm:$0xf]
  %v72 = vld [vmem:[%s1 + $0xb4] sm:$0xf]
  %v73 = vld [vmem:[%s1 + $0xb8] sm:$0xf]
  %v74 = vld [vmem:[%s1 + $0xbc] sm:$0xf]
  %v75 = vld [vmem:[%s1 + $0xc0] sm:$0xf]
  %v76 = vld [vmem:[%s1 + $0xc4] sm:$0xf]
  %v77 = vld [vmem:[%s1 + $0xc8] sm:$0xf]
  %v78 = vld [vmem:[%s1 + $0xcc] sm:$0xf]
  %v79 = vld [vmem:[%s1 + $0xd0] sm:$0xf]
  %v80 = vld [vmem:[%s1 + $0xd4] sm:$0xf]
  %v81 = vld [vmem:[%s1 + $0xd8] sm:$0xf]
  %v82 = vld [vmem:[%s1 + $0xdc] sm:$0xf]
  %v83 = vld [vmem:[%s1 + $0xe0] sm:$0xf]
  %v84 = vld [vmem:[%s1 + $0xe4] sm:$0xf]
  %v85 = vld [vmem:[%s1 + $0xe8] sm:$0xf]
  %v86 = vld [vmem:[%s1 + $0xec] sm:$0xf]
  %v87 = vld [vmem:[%s1 + $0xf0] sm:$0xf]
  %v88 = vld [vmem:[%s1 + $0xf4] sm:$0xf]
  %v89 = vld [vmem:[%s1 + $0xf8] sm:$0xf]
  %v90 = vld [vmem:[%s1 + $0xfc] sm:$0xf]
  %v91 = vld [vmem:[%s1 + $0x100] sm:$0xf]
  %v92 = vld [vmem:[%s1 + $0x104] sm:$0xf]
  %v93 = vld [vmem:[%s1 + $0x108] sm:$0xf]
  %v94 = vld [vmem:[%s1 + $0x10c] sm:$0xf]
  %v95 = vld [vmem:[%s1 + $0x110] sm:$0xf]
  %v96 = vld [vmem:[%s1 + $0x114] sm:$0xf]
  %v97 = vld [vmem:[%s1 + $0x118] sm:$0xf]
  %v98 = vld [vmem:[%s1 + $0x11c] sm:$0xf]
  %v99 = vld [vmem:[%s2] sm:$0xff]
  %v100 = vld [vmem:[%s2 + $0x8] sm:$0xff]
  %v101 = vld [vmem:[%s2 + $0x10] sm:$0xff]
  %v102 = vld [vmem:[%s2 + $0x18] sm:$0xff]
  %104 = vset.pattern.permute.xlu0 0
  %105 = vperm.xlu0 %104, %v99
  %v106 = vpop.permute.xlu0 %105
  %109 = vset.pattern.permute.xlu0 0
  %110 = vperm.xlu0 %109, %v100
  %v111 = vpop.permute.xlu0 %110
  %114 = vset.pattern.permute.xlu0 0
  %115 = vperm.xlu0 %114, %v101
  %v116 = vpop.permute.xlu0 %115
  %119 = vset.pattern.permute.xlu0 0
  %120 = vperm.xlu0 %119, %v102
  %v121 = vpop.permute.xlu0 %120
  %v135 = vunpack.c.l.b16 %v15
  %v136 = vunpack.c.h.b16 %v15
  %v137 = vunpack.c.l.b16 %v16
  %v138 = vunpack.c.h.b16 %v16
  %v139 = vunpack.c.l.b16 %v17
  %v140 = vunpack.c.l.b16 %v18
  %v141 = vunpack.c.h.b16 %v18
  %v142 = vunpack.c.l.b16 %v19
  %v143 = vunpack.c.h.b16 %v19
  %v144 = vunpack.c.l.b16 %v20
  %v145 = vunpack.c.l.b16 %v21
  %v146 = vunpack.c.h.b16 %v21
  %v147 = vunpack.c.l.b16 %v22
  %v148 = vunpack.c.h.b16 %v22
  %v149 = vunpack.c.l.b16 %v23
  %v150 = vunpack.c.l.b16 %v24
  %v151 = vunpack.c.h.b16 %v24
  %v152 = vunpack.c.l.b16 %v25
  %v153 = vunpack.c.h.b16 %v25
  %v154 = vunpack.c.l.b16 %v26
  %v155 = vpack.c.b16 %v140, %v135
  %v156 = vpack.c.b16 %v141, %v136
  %v157 = vpack.c.b16 %v142, %v137
  %v158 = vpack.c.b16 %v143, %v138
  %v159 = vpack.c.b16 %v144, %v139
  %v160 = vpack.c.b16 %v150, %v145
  %v161 = vpack.c.b16 %v151, %v146
  %v162 = vpack.c.b16 %v152, %v147
  %v163 = vpack.c.b16 %v153, %v148
  %v164 = vpack.c.b16 %v154, %v149
  %v245 = vunpack.c.l.b16 %v27
  %v246 = vunpack.c.l.b16 %v28
  %v247 = vunpack.c.l.b16 %v29
  %v248 = vunpack.c.l.b16 %v30
  %v249 = vunpack.c.l.b16 %v31
  %v250 = vunpack.c.l.b16 %v32
  %v251 = vunpack.c.l.b16 %v33
  %v252 = vunpack.c.l.b16 %v34
  %v253 = vunpack.c.l.b16 %v35
  %v254 = vunpack.c.l.b16 %v36
  %v255 = vunpack.c.l.b16 %v37
  %v256 = vunpack.c.l.b16 %v38
  %v257 = vunpack.c.l.b16 %v39
  %v258 = vunpack.c.l.b16 %v40
  %v259 = vunpack.c.l.b16 %v41
  %v260 = vunpack.c.l.b16 %v42
  %v261 = vunpack.c.l.b16 %v43
  %v262 = vunpack.c.l.b16 %v44
  %v263 = vunpack.c.l.b16 %v45
  %v264 = vunpack.c.l.b16 %v46
  %v265 = vunpack.c.l.b16 %v47
  %v266 = vunpack.c.l.b16 %v48
  %v267 = vunpack.c.l.b16 %v49
  %v268 = vunpack.c.l.b16 %v50
  %v269 = vunpack.c.l.b16 %v51
  %v270 = vunpack.c.l.b16 %v52
  %v271 = vunpack.c.l.b16 %v53
  %v272 = vunpack.c.l.b16 %v54
  %v273 = vunpack.c.l.b16 %v55
  %v274 = vunpack.c.l.b16 %v56
  %v275 = vunpack.c.l.b16 %v57
  %v276 = vunpack.c.l.b16 %v58
  %v277 = vunpack.c.l.b16 %v59
  %v278 = vunpack.c.l.b16 %v60
  %v279 = vunpack.c.l.b16 %v61
  %v280 = vunpack.c.l.b16 %v62
  %v281 = vunpack.c.l.b16 %v63
  %v282 = vunpack.c.l.b16 %v64
  %v283 = vunpack.c.l.b16 %v65
  %v284 = vunpack.c.l.b16 %v66
  %v285 = vunpack.c.l.b16 %v67
  %v286 = vunpack.c.l.b16 %v68
  %v287 = vunpack.c.l.b16 %v69
  %v288 = vunpack.c.l.b16 %v70
  %v289 = vunpack.c.l.b16 %v71
  %v290 = vunpack.c.l.b16 %v72
  %v291 = vunpack.c.l.b16 %v73
  %v292 = vunpack.c.l.b16 %v74
  %v293 = vunpack.c.l.b16 %v75
  %v294 = vunpack.c.l.b16 %v76
  %v295 = vunpack.c.l.b16 %v77
  %v296 = vunpack.c.l.b16 %v78
  %v297 = vunpack.c.l.b16 %v79
  %v298 = vunpack.c.l.b16 %v80
  %v299 = vunpack.c.l.b16 %v81
  %v300 = vunpack.c.l.b16 %v82
  %v301 = vunpack.c.l.b16 %v83
  %v302 = vunpack.c.l.b16 %v84
  %v303 = vunpack.c.l.b16 %v85
  %v304 = vunpack.c.l.b16 %v86
  %v305 = vunpack.c.l.b16 %v87
  %v306 = vunpack.c.l.b16 %v88
  %v307 = vunpack.c.l.b16 %v89
  %v308 = vunpack.c.l.b16 %v90
  %v309 = vunpack.c.l.b16 %v91
  %v310 = vunpack.c.l.b16 %v92
  %v311 = vunpack.c.l.b16 %v93
  %v312 = vunpack.c.l.b16 %v94
  %v313 = vunpack.c.l.b16 %v95
  %v314 = vunpack.c.l.b16 %v96
  %v315 = vunpack.c.l.b16 %v97
  %v316 = vunpack.c.l.b16 %v98
  %v317 = vpack.c.b16 %v246, %v245
  %v318 = vpack.c.b16 %v248, %v247
  %v319 = vpack.c.b16 %v250, %v249
  %v320 = vpack.c.b16 %v252, %v251
  %v321 = vpack.c.b16 %v254, %v253
  %v322 = vpack.c.b16 %v256, %v255
  %v323 = vpack.c.b16 %v258, %v257
  %v324 = vpack.c.b16 %v260, %v259
  %v325 = vpack.c.b16 %v262, %v261
  %v326 = vpack.c.b16 %v264, %v263
  %v327 = vpack.c.b16 %v266, %v265
  %v328 = vpack.c.b16 %v268, %v267
  %v329 = vpack.c.b16 %v270, %v269
  %v330 = vpack.c.b16 %v272, %v271
  %v331 = vpack.c.b16 %v274, %v273
  %v332 = vpack.c.b16 %v276, %v275
  %v333 = vpack.c.b16 %v278, %v277
  %v334 = vpack.c.b16 %v280, %v279
  %v335 = vpack.c.b16 %v282, %v281
  %v336 = vpack.c.b16 %v284, %v283
  %v337 = vpack.c.b16 %v286, %v285
  %v338 = vpack.c.b16 %v288, %v287
  %v339 = vpack.c.b16 %v290, %v289
  %v340 = vpack.c.b16 %v292, %v291
  %v341 = vpack.c.b16 %v294, %v293
  %v342 = vpack.c.b16 %v296, %v295
  %v343 = vpack.c.b16 %v298, %v297
  %v344 = vpack.c.b16 %v300, %v299
  %v345 = vpack.c.b16 %v302, %v301
  %v346 = vpack.c.b16 %v304, %v303
  %v347 = vpack.c.b16 %v306, %v305
  %v348 = vpack.c.b16 %v308, %v307
  %v349 = vpack.c.b16 %v310, %v309
  %v350 = vpack.c.b16 %v312, %v311
  %v351 = vpack.c.b16 %v314, %v313
  %v352 = vpack.c.b16 %v316, %v315
  %vm389 = vcmask 523264
  %v391 = vsel %vm389, %v159, 0
  %v394 = vsel %vm389, %v164, 0
  %396 = vmatprep.subr.bf16.mxu0 0
  %397 = vmatpush1.bf16.msra.mxu0 %v324
  %398 = vmatprep.subr.bf16.mxu0 0
  %399 = vmatpush1.bf16.msra.mxu0 %v323
  %400 = vmatprep.subr.bf16.mxu0 0
  %401 = vmatpush1.bf16.msra.mxu0 %v322
  %402 = vmatprep.subr.bf16.mxu0 0
  %403 = vmatpush1.bf16.msra.mxu0 %v321
  %404 = vmatprep.subr.bf16.mxu0 0
  %405 = vmatpush1.bf16.msra.mxu0 %v320
  %406 = vmatprep.subr.bf16.mxu0 0
  %407 = vmatpush1.bf16.msra.mxu0 %v319
  %408 = vmatprep.subr.bf16.mxu0 0
  %409 = vmatpush1.bf16.msra.mxu0 %v318
  %410 = vmatprep.subr.bf16.mxu0 0
  %411 = vmatpush1.bf16.msra.mxu0 %v317
  %412 = vmatprep.subr.bf16.mxu0 0
  %413 = vmatpush2.bf16.msra.mxu0 %v332
  %414 = vmatprep.subr.bf16.mxu0 0
  %415 = vmatpush2.bf16.msra.mxu0 %v331
  %416 = vmatprep.subr.bf16.mxu0 0
  %417 = vmatpush2.bf16.msra.mxu0 %v330
  %418 = vmatprep.subr.bf16.mxu0 0
  %419 = vmatpush2.bf16.msra.mxu0 %v329
  %420 = vmatprep.subr.bf16.mxu0 0
  %421 = vmatpush2.bf16.msra.mxu0 %v328
  %422 = vmatprep.subr.bf16.mxu0 0
  %423 = vmatpush2.bf16.msra.mxu0 %v327
  %424 = vmatprep.subr.bf16.mxu0 0
  %425 = vmatpush2.bf16.msra.mxu0 %v326
  %426 = vmatprep.subr.bf16.mxu0 0
  %427 = vmatpush2.bf16.msra.mxu0 %v325
  %428 = vmatprep.mubr.bf16.mxu0 %v156
  %429 = vmatmul.mubr.bf16.gmra.mxu0 %v155
  %v430 = vpop.f32.mrf.mxu0
  %v431 = vadd.f32 %v106, %v430
  %v432 = vpop.f32.mrf.mxu0
  %v433 = vpop.f32.mrf.mxu0
  %v434 = vadd.f32 %v111, %v433
  %v435 = vpop.f32.mrf.mxu0
  %436 = vmatprep.mubr.bf16.mxu0 %v161
  %437 = vmatmul.mubr.bf16.gmra.mxu0 %v160
  %v438 = vpop.f32.mrf.mxu0
  %v439 = vadd.f32 %v116, %v438
  %v440 = vpop.f32.mrf.mxu0
  %v441 = vpop.f32.mrf.mxu0
  %v442 = vadd.f32 %v121, %v441
  %v443 = vpop.f32.mrf.mxu0
  %444 = vdwg.mxu0
  %445 = vmatprep.subr.bf16.mxu0 0
  %446 = vmatpush1.bf16.msra.mxu0 %v340
  %447 = vmatprep.subr.bf16.mxu0 0
  %448 = vmatpush1.bf16.msra.mxu0 %v339
  %449 = vmatprep.subr.bf16.mxu0 0
  %450 = vmatpush1.bf16.msra.mxu0 %v338
  %451 = vmatprep.subr.bf16.mxu0 0
  %452 = vmatpush1.bf16.msra.mxu0 %v337
  %453 = vmatprep.subr.bf16.mxu0 0
  %454 = vmatpush1.bf16.msra.mxu0 %v336
  %455 = vmatprep.subr.bf16.mxu0 0
  %456 = vmatpush1.bf16.msra.mxu0 %v335
  %457 = vmatprep.subr.bf16.mxu0 0
  %458 = vmatpush1.bf16.msra.mxu0 %v334
  %459 = vmatprep.subr.bf16.mxu0 0
  %460 = vmatpush1.bf16.msra.mxu0 %v333
  %461 = vmatprep.subr.bf16.mxu0 0
  %462 = vmatpush2.bf16.msra.mxu0 %v348
  %463 = vmatprep.subr.bf16.mxu0 0
  %464 = vmatpush2.bf16.msra.mxu0 %v347
  %465 = vmatprep.subr.bf16.mxu0 0
  %466 = vmatpush2.bf16.msra.mxu0 %v346
  %467 = vmatprep.subr.bf16.mxu0 0
  %468 = vmatpush2.bf16.msra.mxu0 %v345
  %469 = vmatprep.subr.bf16.mxu0 0
  %470 = vmatpush2.bf16.msra.mxu0 %v344
  %471 = vmatprep.subr.bf16.mxu0 0
  %472 = vmatpush2.bf16.msra.mxu0 %v343
  %473 = vmatprep.subr.bf16.mxu0 0
  %474 = vmatpush2.bf16.msra.mxu0 %v342
  %475 = vmatprep.subr.bf16.mxu0 0
  %476 = vmatpush2.bf16.msra.mxu0 %v341
  %477 = vmatprep.mubr.bf16.mxu0 %v158
  %478 = vmatmul.mubr.bf16.gmra.mxu0 %v157
  %v479 = vpop.f32.mrf.mxu0
  %v480 = vadd.f32 %v431, %v479
  %v481 = vpop.f32.mrf.mxu0
  %v482 = vpop.f32.mrf.mxu0
  %v483 = vadd.f32 %v434, %v482
  %v484 = vpop.f32.mrf.mxu0
  %485 = vmatprep.mubr.bf16.mxu0 %v163
  %486 = vmatmul.mubr.bf16.gmra.mxu0 %v162
  %v487 = vpop.f32.mrf.mxu0
  %v488 = vadd.f32 %v439, %v487
  %v489 = vpop.f32.mrf.mxu0
  %v490 = vpop.f32.mrf.mxu0
  %v491 = vadd.f32 %v442, %v490
  %v492 = vpop.f32.mrf.mxu0
  %493 = vdwg.mxu0
  %494 = vmatprep.subr.bf16.mxu0 0
  %495 = vmatpush1.bf16.msra.mxu0 0
  %496 = vmatprep.subr.bf16.mxu0 0
  %497 = vmatpush1.bf16.msra.mxu0 0
  %498 = vmatprep.subr.bf16.mxu0 0
  %499 = vmatpush1.bf16.msra.mxu0 0
  %500 = vmatprep.subr.bf16.mxu0 0
  %501 = vmatpush1.bf16.msra.mxu0 0
  %502 = vmatprep.subr.bf16.mxu0 0
  %503 = vmatpush1.bf16.msra.mxu0 %v352
  %504 = vmatprep.subr.bf16.mxu0 0
  %505 = vmatpush1.bf16.msra.mxu0 %v351
  %506 = vmatprep.subr.bf16.mxu0 0
  %507 = vmatpush1.bf16.msra.mxu0 %v350
  %508 = vmatprep.subr.bf16.mxu0 0
  %509 = vmatpush1.bf16.msra.mxu0 %v349
  %510 = vmatprep.subr.bf16.mxu0 0
  %511 = vmatpush2.bf16.msra.mxu0 0
  %512 = vmatprep.subr.bf16.mxu0 0
  %513 = vmatpush2.bf16.msra.mxu0 0
  %514 = vmatprep.subr.bf16.mxu0 0
  %515 = vmatpush2.bf16.msra.mxu0 0
  %516 = vmatprep.subr.bf16.mxu0 0
  %517 = vmatpush2.bf16.msra.mxu0 0
  %518 = vmatprep.subr.bf16.mxu0 0
  %519 = vmatpush2.bf16.msra.mxu0 0
  %520 = vmatprep.subr.bf16.mxu0 0
  %521 = vmatpush2.bf16.msra.mxu0 0
  %522 = vmatprep.subr.bf16.mxu0 0
  %523 = vmatpush2.bf16.msra.mxu0 0
  %524 = vmatprep.subr.bf16.mxu0 0
  %525 = vmatpush2.bf16.msra.mxu0 0
  %526 = vmatprep.mubr.bf16.mxu0 0
  %527 = vmatmul.mubr.bf16.gmra.mxu0 %v391
  %v528 = vpop.f32.mrf.mxu0
  %v529 = vadd.f32 %v480, %v528
  %v530 = vpop.f32.mrf.mxu0
  %v531 = vpop.f32.mrf.mxu0
  %v532 = vadd.f32 %v483, %v531
  %v533 = vpop.f32.mrf.mxu0
  %534 = vmatprep.mubr.bf16.mxu0 0
  %535 = vmatmul.mubr.bf16.gmra.mxu0 %v394
  %v536 = vpop.f32.mrf.mxu0
  %v537 = vadd.f32 %v488, %v536
  %v538 = vpop.f32.mrf.mxu0
  %v539 = vpop.f32.mrf.mxu0
  %v540 = vadd.f32 %v491, %v539
  %v541 = vpop.f32.mrf.mxu0
  %542 = vdwg.mxu0
  %v543 = vmax.f32 %v529, 0.0
  %v544 = vmax.f32 %v532, 0.0
  %v545 = vmax.f32 %v537, 0.0
  %v546 = vmax.f32 %v540, 0.0
  %547 = vst [vmem:[%s3] sm:$0xff] %v543
  %548 = vst [vmem:[%s3 + $0x8] sm:$0xff] %v544
  %549 = vst [vmem:[%s3 + $0x10] sm:$0xff] %v545
  %550 = vst [vmem:[%s3 + $0x18] sm:$0xff] %v546
  // Predicated region
  $region14: #{forward.10} parent=0 // pred_check
    _
  $region15: #{forward.10} parent=0 // pred_check_branch
    %552 = sbr.rel (0) target = $region17
  $region16: #{forward.10} parent=0 // pred_region
    _
  $region17: #{forward.10} parent=0 // pred_fallthru
    _
  // Predicated region
  $region18: #{forward.10} parent=0 // pred_check
    _
  $region19: #{forward.10} parent=0 // pred_check_branch
    %554 = sbr.rel (0) target = $region21
  $region20: #{forward.10} parent=0 // pred_region
    _
  $region21: #{forward.10} parent=0 // pred_fallthru
    _

// kernel: forward.11
$region0: #{forward.11}
  #allocation0 [shape = 'u32[]', space=smem, size = 0x4, offset = 0x4, fixed_abs, tag = 'smem constant byte address 0x4 - core index']
  #allocation1 [shape = 'u32[144,128]{1,0:T(1,128)}', space=vmem, size = 0x12000, scoped, tag = 'internal scratch']
  %s0 = inlined_call_operand.vmem [shape: bf16[8,1856], index: 0, kind: input, shape index: {}]
  %s1 = inlined_call_operand.vmem [shape: bf16[1856,128], index: 1, kind: input, shape index: {}]
  %s2 = inlined_call_operand.vmem [shape: f32[1,128], index: 2, kind: input, shape index: {}]
  %s3 = inlined_call_operand.vmem [shape: f32[8,128], index: 3, kind: output, shape index: {}]
  %s4 = sld [smem:[#allocation0]]
  $region22: #{forward.11} parent=0
    _
  %s6 = ssub.s32 1, %s4
  %s7 = scalar_select 0, %s6, %s4
  // Predicated region
  $region2: #{forward.11} parent=0 // pred_check
    _
  $region3: #{forward.11} parent=0 // pred_check_branch
    %9 = sbr.rel (0) target = $region5
  $region4: #{forward.11} parent=0 // pred_region
    _
  $region5: #{forward.11} parent=0 // pred_fallthru
    _
  // Predicated region
  $region6: #{forward.11} parent=0 // pred_check
    _
  $region7: #{forward.11} parent=0 // pred_check_branch
    %11 = sbr.rel (0) target = $region9
  $region8: #{forward.11} parent=0 // pred_region
    _
  $region9: #{forward.11} parent=0 // pred_fallthru
    _
  // Predicated region
  $region10: #{forward.11} parent=0 // pred_check
    _
  $region11: #{forward.11} parent=0 // pred_check_branch
    %13 = sbr.rel (0) target = $region13
  $region12: #{forward.11} parent=0 // pred_region
    _
  $region13: #{forward.11} parent=0 // pred_fallthru
    _
  %v15 = vld [vmem:[%s0] sm:$0xff]
  %v16 = vld [vmem:[%s0 + $0x8] sm:$0xff]
  %v17 = vld [vmem:[%s0 + $0x10] sm:$0xff]
  %v18 = vld [vmem:[%s0 + $0x18] sm:$0xff]
  %v19 = vld [vmem:[%s0 + $0x20] sm:$0xff]
  %v20 = vld [vmem:[%s0 + $0x28] sm:$0xff]
  %v21 = vld [vmem:[%s0 + $0x30] sm:$0xff]
  %v22 = vld [vmem:[%s0 + $0x38] sm:$0xf]
  %v23 = vld [vmem:[%s1] sm:$0xf]
  %v24 = vld [vmem:[%s1 + $0x4] sm:$0xf]
  %v25 = vld [vmem:[%s1 + $0x8] sm:$0xf]
  %v26 = vld [vmem:[%s1 + $0xc] sm:$0xf]
  %v27 = vld [vmem:[%s1 + $0x10] sm:$0xf]
  %v28 = vld [vmem:[%s1 + $0x14] sm:$0xf]
  %v29 = vld [vmem:[%s1 + $0x18] sm:$0xf]
  %v30 = vld [vmem:[%s1 + $0x1c] sm:$0xf]
  %v31 = vld [vmem:[%s1 + $0x20] sm:$0xf]
  %v32 = vld [vmem:[%s1 + $0x24] sm:$0xf]
  %v33 = vld [vmem:[%s1 + $0x28] sm:$0xf]
  %v34 = vld [vmem:[%s1 + $0x2c] sm:$0xf]
  %v35 = vld [vmem:[%s1 + $0x30] sm:$0xf]
  %v36 = vld [vmem:[%s1 + $0x34] sm:$0xf]
  %v37 = vld [vmem:[%s1 + $0x38] sm:$0xf]
  %v38 = vld [vmem:[%s1 + $0x3c] sm:$0xf]
  %v39 = vld [vmem:[%s1 + $0x40] sm:$0xf]
  %v40 = vld [vmem:[%s1 + $0x44] sm:$0xf]
  %v41 = vld [vmem:[%s1 + $0x48] sm:$0xf]
  %v42 = vld [vmem:[%s1 + $0x4c] sm:$0xf]
  %v43 = vld [vmem:[%s1 + $0x50] sm:$0xf]
  %v44 = vld [vmem:[%s1 + $0x54] sm:$0xf]
  %v45 = vld [vmem:[%s1 + $0x58] sm:$0xf]
  %v46 = vld [vmem:[%s1 + $0x5c] sm:$0xf]
  %v47 = vld [vmem:[%s1 + $0x60] sm:$0xf]
  %v48 = vld [vmem:[%s1 + $0x64] sm:$0xf]
  %v49 = vld [vmem:[%s1 + $0x68] sm:$0xf]
  %v50 = vld [vmem:[%s1 + $0x6c] sm:$0xf]
  %v51 = vld [vmem:[%s1 + $0x70] sm:$0xf]
  %v52 = vld [vmem:[%s1 + $0x74] sm:$0xf]
  %v53 = vld [vmem:[%s1 + $0x78] sm:$0xf]
  %v54 = vld [vmem:[%s1 + $0x7c] sm:$0xf]
  %v55 = vld [vmem:[%s1 + $0x80] sm:$0xf]
  %v56 = vld [vmem:[%s1 + $0x84] sm:$0xf]
  %v57 = vld [vmem:[%s1 + $0x88] sm:$0xf]
  %v58 = vld [vmem:[%s1 + $0x8c] sm:$0xf]
  %v59 = vld [vmem:[%s1 + $0x90] sm:$0xf]
  %v60 = vld [vmem:[%s1 + $0x94] sm:$0xf]
  %v61 = vld [vmem:[%s1 + $0x98] sm:$0xf]
  %v62 = vld [vmem:[%s1 + $0x9c] sm:$0xf]
  %v63 = vld [vmem:[%s1 + $0xa0] sm:$0xf]
  %v64 = vld [vmem:[%s1 + $0xa4] sm:$0xf]
  %v65 = vld [vmem:[%s1 + $0xa8] sm:$0xf]
  %v66 = vld [vmem:[%s1 + $0xac] sm:$0xf]
  %v67 = vld [vmem:[%s1 + $0xb0] sm:$0xf]
  %v68 = vld [vmem:[%s1 + $0xb4] sm:$0xf]
  %v69 = vld [vmem:[%s1 + $0xb8] sm:$0xf]
  %v70 = vld [vmem:[%s1 + $0xbc] sm:$0xf]
  %v71 = vld [vmem:[%s1 + $0xc0] sm:$0xf]
  %v72 = vld [vmem:[%s1 + $0xc4] sm:$0xf]
  %v73 = vld [vmem:[%s1 + $0xc8] sm:$0xf]
  %v74 = vld [vmem:[%s1 + $0xcc] sm:$0xf]
  %v75 = vld [vmem:[%s1 + $0xd0] sm:$0xf]
  %v76 = vld [vmem:[%s1 + $0xd4] sm:$0xf]
  %v77 = vld [vmem:[%s1 + $0xd8] sm:$0xf]
  %v78 = vld [vmem:[%s1 + $0xdc] sm:$0xf]
  %v79 = vld [vmem:[%s1 + $0xe0] sm:$0xf]
  %v80 = vld [vmem:[%s1 + $0xe4] sm:$0xf]
  %v81 = vld [vmem:[%s1 + $0xe8] sm:$0xf]
  %v82 = vld [vmem:[%s1 + $0xec] sm:$0xf]
  %v83 = vld [vmem:[%s1 + $0xf0] sm:$0xf]
  %v84 = vld [vmem:[%s1 + $0xf4] sm:$0xf]
  %v85 = vld [vmem:[%s1 + $0xf8] sm:$0xf]
  %v86 = vld [vmem:[%s1 + $0xfc] sm:$0xf]
  %v87 = vld [vmem:[%s1 + $0x100] sm:$0xf]
  %v88 = vld [vmem:[%s1 + $0x104] sm:$0xf]
  %v89 = vld [vmem:[%s1 + $0x108] sm:$0xf]
  %v90 = vld [vmem:[%s1 + $0x10c] sm:$0xf]
  %v91 = vld [vmem:[%s1 + $0x110] sm:$0xf]
  %v92 = vld [vmem:[%s1 + $0x114] sm:$0xf]
  %v93 = vld [vmem:[%s1 + $0x118] sm:$0xf]
  %v94 = vld [vmem:[%s1 + $0x11c] sm:$0xf]
  %v95 = vld [vmem:[%s1 + $0x120] sm:$0xf]
  %v96 = vld [vmem:[%s1 + $0x124] sm:$0xf]
  %v97 = vld [vmem:[%s1 + $0x128] sm:$0xf]
  %v98 = vld [vmem:[%s1 + $0x12c] sm:$0xf]
  %v99 = vld [vmem:[%s1 + $0x130] sm:$0xf]
  %v100 = vld [vmem:[%s1 + $0x134] sm:$0xf]
  %v101 = vld [vmem:[%s1 + $0x138] sm:$0xf]
  %v102 = vld [vmem:[%s1 + $0x13c] sm:$0xf]
  %v103 = vld [vmem:[%s1 + $0x140] sm:$0xf]
  %v104 = vld [vmem:[%s1 + $0x144] sm:$0xf]
  %v105 = vld [vmem:[%s1 + $0x148] sm:$0xf]
  %v106 = vld [vmem:[%s1 + $0x14c] sm:$0xf]
  %v107 = vld [vmem:[%s1 + $0x150] sm:$0xf]
  %v108 = vld [vmem:[%s1 + $0x154] sm:$0xf]
  %v109 = vld [vmem:[%s1 + $0x158] sm:$0xf]
  %v110 = vld [vmem:[%s1 + $0x15c] sm:$0xf]
  %v111 = vld [vmem:[%s1 + $0x160] sm:$0xf]
  %v112 = vld [vmem:[%s1 + $0x164] sm:$0xf]
  %v113 = vld [vmem:[%s1 + $0x168] sm:$0xf]
  %v114 = vld [vmem:[%s1 + $0x16c] sm:$0xf]
  %v115 = vld [vmem:[%s1 + $0x170] sm:$0xf]
  %v116 = vld [vmem:[%s1 + $0x174] sm:$0xf]
  %v117 = vld [vmem:[%s1 + $0x178] sm:$0xf]
  %v118 = vld [vmem:[%s1 + $0x17c] sm:$0xf]
  %v119 = vld [vmem:[%s1 + $0x180] sm:$0xf]
  %v120 = vld [vmem:[%s1 + $0x184] sm:$0xf]
  %v121 = vld [vmem:[%s1 + $0x188] sm:$0xf]
  %v122 = vld [vmem:[%s1 + $0x18c] sm:$0xf]
  %v123 = vld [vmem:[%s1 + $0x190] sm:$0xf]
  %v124 = vld [vmem:[%s1 + $0x194] sm:$0xf]
  %v125 = vld [vmem:[%s1 + $0x198] sm:$0xf]
  %v126 = vld [vmem:[%s1 + $0x19c] sm:$0xf]
  %v127 = vld [vmem:[%s1 + $0x1a0] sm:$0xf]
  %v128 = vld [vmem:[%s1 + $0x1a4] sm:$0xf]
  %v129 = vld [vmem:[%s1 + $0x1a8] sm:$0xf]
  %v130 = vld [vmem:[%s1 + $0x1ac] sm:$0xf]
  %v131 = vld [vmem:[%s1 + $0x1b0] sm:$0xf]
  %v132 = vld [vmem:[%s1 + $0x1b4] sm:$0xf]
  %v133 = vld [vmem:[%s1 + $0x1b8] sm:$0xf]
  %v134 = vld [vmem:[%s1 + $0x1bc] sm:$0xf]
  %v135 = vld [vmem:[%s1 + $0x1c0] sm:$0xf]
  %v136 = vld [vmem:[%s1 + $0x1c4] sm:$0xf]
  %v137 = vld [vmem:[%s1 + $0x1c8] sm:$0xf]
  %v138 = vld [vmem:[%s1 + $0x1cc] sm:$0xf]
  %v139 = vld [vmem:[%s1 + $0x1d0] sm:$0xf]
  %v140 = vld [vmem:[%s1 + $0x1d4] sm:$0xf]
  %v141 = vld [vmem:[%s1 + $0x1d8] sm:$0xf]
  %v142 = vld [vmem:[%s1 + $0x1dc] sm:$0xf]
  %v143 = vld [vmem:[%s1 + $0x1e0] sm:$0xf]
  %v144 = vld [vmem:[%s1 + $0x1e4] sm:$0xf]
  %v145 = vld [vmem:[%s1 + $0x1e8] sm:$0xf]
  %v146 = vld [vmem:[%s1 + $0x1ec] sm:$0xf]
  %v147 = vld [vmem:[%s1 + $0x1f0] sm:$0xf]
  %v148 = vld [vmem:[%s1 + $0x1f4] sm:$0xf]
  %v149 = vld [vmem:[%s1 + $0x1f8] sm:$0xf]
  %v150 = vld [vmem:[%s1 + $0x1fc] sm:$0xf]
  %v151 = vld [vmem:[%s1 + $0x200] sm:$0xf]
  %v152 = vld [vmem:[%s1 + $0x204] sm:$0xf]
  %v153 = vld [vmem:[%s1 + $0x208] sm:$0xf]
  %v154 = vld [vmem:[%s1 + $0x20c] sm:$0xf]
  %v155 = vld [vmem:[%s1 + $0x210] sm:$0xf]
  %v156 = vld [vmem:[%s1 + $0x214] sm:$0xf]
  %v157 = vld [vmem:[%s1 + $0x218] sm:$0xf]
  %v158 = vld [vmem:[%s1 + $0x21c] sm:$0xf]
  %v159 = vld [vmem:[%s1 + $0x220] sm:$0xf]
  %v160 = vld [vmem:[%s1 + $0x224] sm:$0xf]
  %v161 = vld [vmem:[%s1 + $0x228] sm:$0xf]
  %v162 = vld [vmem:[%s1 + $0x22c] sm:$0xf]
  %v163 = vld [vmem:[%s1 + $0x230] sm:$0xf]
  %v164 = vld [vmem:[%s1 + $0x234] sm:$0xf]
  %v165 = vld [vmem:[%s1 + $0x238] sm:$0xf]
  %v166 = vld [vmem:[%s1 + $0x23c] sm:$0xf]
  %v167 = vld [vmem:[%s1 + $0x240] sm:$0xf]
  %v168 = vld [vmem:[%s1 + $0x244] sm:$0xf]
  %v169 = vld [vmem:[%s1 + $0x248] sm:$0xf]
  %v170 = vld [vmem:[%s1 + $0x24c] sm:$0xf]
  %v171 = vld [vmem:[%s1 + $0x250] sm:$0xf]
  %v172 = vld [vmem:[%s1 + $0x254] sm:$0xf]
  %v173 = vld [vmem:[%s1 + $0x258] sm:$0xf]
  %v174 = vld [vmem:[%s1 + $0x25c] sm:$0xf]
  %v175 = vld [vmem:[%s1 + $0x260] sm:$0xf]
  %v176 = vld [vmem:[%s1 + $0x264] sm:$0xf]
  %v177 = vld [vmem:[%s1 + $0x268] sm:$0xf]
  %v178 = vld [vmem:[%s1 + $0x26c] sm:$0xf]
  %v179 = vld [vmem:[%s1 + $0x270] sm:$0xf]
  %v180 = vld [vmem:[%s1 + $0x274] sm:$0xf]
  %v181 = vld [vmem:[%s1 + $0x278] sm:$0xf]
  %v182 = vld [vmem:[%s1 + $0x27c] sm:$0xf]
  %v183 = vld [vmem:[%s1 + $0x280] sm:$0xf]
  %v184 = vld [vmem:[%s1 + $0x284] sm:$0xf]
  %v185 = vld [vmem:[%s1 + $0x288] sm:$0xf]
  %v186 = vld [vmem:[%s1 + $0x28c] sm:$0xf]
  %v187 = vld [vmem:[%s1 + $0x290] sm:$0xf]
  %v188 = vld [vmem:[%s1 + $0x294] sm:$0xf]
  %v189 = vld [vmem:[%s1 + $0x298] sm:$0xf]
  %v190 = vld [vmem:[%s1 + $0x29c] sm:$0xf]
  %v191 = vld [vmem:[%s1 + $0x2a0] sm:$0xf]
  %v192 = vld [vmem:[%s1 + $0x2a4] sm:$0xf]
  %v193 = vld [vmem:[%s1 + $0x2a8] sm:$0xf]
  %v194 = vld [vmem:[%s1 + $0x2ac] sm:$0xf]
  %v195 = vld [vmem:[%s1 + $0x2b0] sm:$0xf]
  %v196 = vld [vmem:[%s1 + $0x2b4] sm:$0xf]
  %v197 = vld [vmem:[%s1 + $0x2b8] sm:$0xf]
  %v198 = vld [vmem:[%s1 + $0x2bc] sm:$0xf]
  %v199 = vld [vmem:[%s1 + $0x2c0] sm:$0xf]
  %v200 = vld [vmem:[%s1 + $0x2c4] sm:$0xf]
  %v201 = vld [vmem:[%s1 + $0x2c8] sm:$0xf]
  %v202 = vld [vmem:[%s1 + $0x2cc] sm:$0xf]
  %v203 = vld [vmem:[%s1 + $0x2d0] sm:$0xf]
  %v204 = vld [vmem:[%s1 + $0x2d4] sm:$0xf]
  %v205 = vld [vmem:[%s1 + $0x2d8] sm:$0xf]
  %v206 = vld [vmem:[%s1 + $0x2dc] sm:$0xf]
  %v207 = vld [vmem:[%s1 + $0x2e0] sm:$0xf]
  %v208 = vld [vmem:[%s1 + $0x2e4] sm:$0xf]
  %v209 = vld [vmem:[%s1 + $0x2e8] sm:$0xf]
  %v210 = vld [vmem:[%s1 + $0x2ec] sm:$0xf]
  %v211 = vld [vmem:[%s1 + $0x2f0] sm:$0xf]
  %v212 = vld [vmem:[%s1 + $0x2f4] sm:$0xf]
  %v213 = vld [vmem:[%s1 + $0x2f8] sm:$0xf]
  %v214 = vld [vmem:[%s1 + $0x2fc] sm:$0xf]
  %v215 = vld [vmem:[%s1 + $0x300] sm:$0xf]
  %v216 = vld [vmem:[%s1 + $0x304] sm:$0xf]
  %v217 = vld [vmem:[%s1 + $0x308] sm:$0xf]
  %v218 = vld [vmem:[%s1 + $0x30c] sm:$0xf]
  %v219 = vld [vmem:[%s1 + $0x310] sm:$0xf]
  %v220 = vld [vmem:[%s1 + $0x314] sm:$0xf]
  %v221 = vld [vmem:[%s1 + $0x318] sm:$0xf]
  %v222 = vld [vmem:[%s1 + $0x31c] sm:$0xf]
  %v223 = vld [vmem:[%s1 + $0x320] sm:$0xf]
  %v224 = vld [vmem:[%s1 + $0x324] sm:$0xf]
  %v225 = vld [vmem:[%s1 + $0x328] sm:$0xf]
  %v226 = vld [vmem:[%s1 + $0x32c] sm:$0xf]
  %v227 = vld [vmem:[%s1 + $0x330] sm:$0xf]
  %v228 = vld [vmem:[%s1 + $0x334] sm:$0xf]
  %v229 = vld [vmem:[%s1 + $0x338] sm:$0xf]
  %v230 = vld [vmem:[%s1 + $0x33c] sm:$0xf]
  %v231 = vld [vmem:[%s1 + $0x340] sm:$0xf]
  %v232 = vld [vmem:[%s1 + $0x344] sm:$0xf]
  %v233 = vld [vmem:[%s1 + $0x348] sm:$0xf]
  %v234 = vld [vmem:[%s1 + $0x34c] sm:$0xf]
  %v235 = vld [vmem:[%s1 + $0x350] sm:$0xf]
  %v236 = vld [vmem:[%s1 + $0x354] sm:$0xf]
  %v237 = vld [vmem:[%s1 + $0x358] sm:$0xf]
  %v238 = vld [vmem:[%s1 + $0x35c] sm:$0xf]
  %v239 = vld [vmem:[%s1 + $0x360] sm:$0xf]
  %v240 = vld [vmem:[%s1 + $0x364] sm:$0xf]
  %v241 = vld [vmem:[%s1 + $0x368] sm:$0xf]
  %v242 = vld [vmem:[%s1 + $0x36c] sm:$0xf]
  %v243 = vld [vmem:[%s1 + $0x370] sm:$0xf]
  %v244 = vld [vmem:[%s1 + $0x374] sm:$0xf]
  %v245 = vld [vmem:[%s1 + $0x378] sm:$0xf]
  %v246 = vld [vmem:[%s1 + $0x37c] sm:$0xf]
  %v247 = vld [vmem:[%s1 + $0x380] sm:$0xf]
  %v248 = vld [vmem:[%s1 + $0x384] sm:$0xf]
  %v249 = vld [vmem:[%s1 + $0x388] sm:$0xf]
  %v250 = vld [vmem:[%s1 + $0x38c] sm:$0xf]
  %v251 = vld [vmem:[%s1 + $0x390] sm:$0xf]
  %v252 = vld [vmem:[%s1 + $0x394] sm:$0xf]
  %v253 = vld [vmem:[%s1 + $0x398] sm:$0xf]
  %v254 = vld [vmem:[%s1 + $0x39c] sm:$0xf]
  %v255 = vld [vmem:[%s2] sm:$0x1]
  %v257 = vlaneseq
  %v258 = vshrl.u32 %v257, 7
  %v259 = vsub.s32 0, %v258
  %v260 = vrot.slane %v255, %v259
  %v270 = vunpack.c.l.b16 %v15
  %v271 = vunpack.c.h.b16 %v15
  %v272 = vunpack.c.l.b16 %v16
  %v273 = vunpack.c.h.b16 %v16
  %v274 = vunpack.c.l.b16 %v17
  %v275 = vunpack.c.h.b16 %v17
  %v276 = vunpack.c.l.b16 %v18
  %v277 = vunpack.c.h.b16 %v18
  %v278 = vunpack.c.l.b16 %v19
  %v279 = vunpack.c.h.b16 %v19
  %v280 = vunpack.c.l.b16 %v20
  %v281 = vunpack.c.h.b16 %v20
  %v282 = vunpack.c.l.b16 %v21
  %v283 = vunpack.c.h.b16 %v21
  %v284 = vunpack.c.l.b16 %v22
  %v285 = vpack.c.b16 %v270, %v270
  %v286 = vpack.c.b16 %v271, %v271
  %v287 = vpack.c.b16 %v272, %v272
  %v288 = vpack.c.b16 %v273, %v273
  %v289 = vpack.c.b16 %v274, %v274
  %v290 = vpack.c.b16 %v275, %v275
  %v291 = vpack.c.b16 %v276, %v276
  %v292 = vpack.c.b16 %v277, %v277
  %v293 = vpack.c.b16 %v278, %v278
  %v294 = vpack.c.b16 %v279, %v279
  %v295 = vpack.c.b16 %v280, %v280
  %v296 = vpack.c.b16 %v281, %v281
  %v297 = vpack.c.b16 %v282, %v282
  %v298 = vpack.c.b16 %v283, %v283
  %v299 = vpack.c.b16 %v284, %v284
  %v546 = vunpack.c.l.b16 %v23
  %v547 = vunpack.c.l.b16 %v24
  %v548 = vunpack.c.l.b16 %v25
  %v549 = vunpack.c.l.b16 %v26
  %v550 = vunpack.c.l.b16 %v27
  %v551 = vunpack.c.l.b16 %v28
  %v552 = vunpack.c.l.b16 %v29
  %v553 = vunpack.c.l.b16 %v30
  %v554 = vunpack.c.l.b16 %v31
  %v555 = vunpack.c.l.b16 %v32
  %v556 = vunpack.c.l.b16 %v33
  %v557 = vunpack.c.l.b16 %v34
  %v558 = vunpack.c.l.b16 %v35
  %v559 = vunpack.c.l.b16 %v36
  %v560 = vunpack.c.l.b16 %v37
  %v561 = vunpack.c.l.b16 %v38
  %v562 = vunpack.c.l.b16 %v39
  %v563 = vunpack.c.l.b16 %v40
  %v564 = vunpack.c.l.b16 %v41
  %v565 = vunpack.c.l.b16 %v42
  %v566 = vunpack.c.l.b16 %v43
  %v567 = vunpack.c.l.b16 %v44
  %v568 = vunpack.c.l.b16 %v45
  %v569 = vunpack.c.l.b16 %v46
  %v570 = vunpack.c.l.b16 %v47
  %v571 = vunpack.c.l.b16 %v48
  %v572 = vunpack.c.l.b16 %v49
  %v573 = vunpack.c.l.b16 %v50
  %v574 = vunpack.c.l.b16 %v51
  %v575 = vunpack.c.l.b16 %v52
  %v576 = vunpack.c.l.b16 %v53
  %v577 = vunpack.c.l.b16 %v54
  %v578 = vunpack.c.l.b16 %v55
  %v579 = vunpack.c.l.b16 %v56
  %v580 = vunpack.c.l.b16 %v57
  %v581 = vunpack.c.l.b16 %v58
  %v582 = vunpack.c.l.b16 %v59
  %v583 = vunpack.c.l.b16 %v60
  %v584 = vunpack.c.l.b16 %v61
  %v585 = vunpack.c.l.b16 %v62
  %v586 = vunpack.c.l.b16 %v63
  %v587 = vunpack.c.l.b16 %v64
  %v588 = vunpack.c.l.b16 %v65
  %v589 = vunpack.c.l.b16 %v66
  %v590 = vunpack.c.l.b16 %v67
  %v591 = vunpack.c.l.b16 %v68
  %v592 = vunpack.c.l.b16 %v69
  %v593 = vunpack.c.l.b16 %v70
  %v594 = vunpack.c.l.b16 %v71
  %v595 = vunpack.c.l.b16 %v72
  %v596 = vunpack.c.l.b16 %v73
  %v597 = vunpack.c.l.b16 %v74
  %v598 = vunpack.c.l.b16 %v75
  %v599 = vunpack.c.l.b16 %v76
  %v600 = vunpack.c.l.b16 %v77
  %v601 = vunpack.c.l.b16 %v78
  %v602 = vunpack.c.l.b16 %v79
  %v603 = vunpack.c.l.b16 %v80
  %v604 = vunpack.c.l.b16 %v81
  %v605 = vunpack.c.l.b16 %v82
  %v606 = vunpack.c.l.b16 %v83
  %v607 = vunpack.c.l.b16 %v84
  %v608 = vunpack.c.l.b16 %v85
  %v609 = vunpack.c.l.b16 %v86
  %v610 = vunpack.c.l.b16 %v87
  %v611 = vunpack.c.l.b16 %v88
  %v612 = vunpack.c.l.b16 %v89
  %v613 = vunpack.c.l.b16 %v90
  %v614 = vunpack.c.l.b16 %v91
  %v615 = vunpack.c.l.b16 %v92
  %v616 = vunpack.c.l.b16 %v93
  %v617 = vunpack.c.l.b16 %v94
  %v618 = vunpack.c.l.b16 %v95
  %v619 = vunpack.c.l.b16 %v96
  %v620 = vunpack.c.l.b16 %v97
  %v621 = vunpack.c.l.b16 %v98
  %v622 = vunpack.c.l.b16 %v99
  %v623 = vunpack.c.l.b16 %v100
  %v624 = vunpack.c.l.b16 %v101
  %v625 = vunpack.c.l.b16 %v102
  %v626 = vunpack.c.l.b16 %v103
  %v627 = vunpack.c.l.b16 %v104
  %v628 = vunpack.c.l.b16 %v105
  %v629 = vunpack.c.l.b16 %v106
  %v630 = vunpack.c.l.b16 %v107
  %v631 = vunpack.c.l.b16 %v108
  %v632 = vunpack.c.l.b16 %v109
  %v633 = vunpack.c.l.b16 %v110
  %v634 = vunpack.c.l.b16 %v111
  %v635 = vunpack.c.l.b16 %v112
  %v636 = vunpack.c.l.b16 %v113
  %v637 = vunpack.c.l.b16 %v114
  %v638 = vunpack.c.l.b16 %v115
  %v639 = vunpack.c.l.b16 %v116
  %v640 = vunpack.c.l.b16 %v117
  %v641 = vunpack.c.l.b16 %v118
  %v642 = vunpack.c.l.b16 %v119
  %v643 = vunpack.c.l.b16 %v120
  %v644 = vunpack.c.l.b16 %v121
  %v645 = vunpack.c.l.b16 %v122
  %v646 = vunpack.c.l.b16 %v123
  %v647 = vunpack.c.l.b16 %v124
  %v648 = vunpack.c.l.b16 %v125
  %v649 = vunpack.c.l.b16 %v126
  %v650 = vunpack.c.l.b16 %v127
  %v651 = vunpack.c.l.b16 %v128
  %v652 = vunpack.c.l.b16 %v129
  %v653 = vunpack.c.l.b16 %v130
  %v654 = vunpack.c.l.b16 %v131
  %v655 = vunpack.c.l.b16 %v132
  %v656 = vunpack.c.l.b16 %v133
  %v657 = vunpack.c.l.b16 %v134
  %v658 = vunpack.c.l.b16 %v135
  %v659 = vunpack.c.l.b16 %v136
  %v660 = vunpack.c.l.b16 %v137
  %v661 = vunpack.c.l.b16 %v138
  %v662 = vunpack.c.l.b16 %v139
  %v663 = vunpack.c.l.b16 %v140
  %v664 = vunpack.c.l.b16 %v141
  %v665 = vunpack.c.l.b16 %v142
  %v666 = vunpack.c.l.b16 %v143
  %v667 = vunpack.c.l.b16 %v144
  %v668 = vunpack.c.l.b16 %v145
  %v669 = vunpack.c.l.b16 %v146
  %v670 = vunpack.c.l.b16 %v147
  %v671 = vunpack.c.l.b16 %v148
  %v672 = vunpack.c.l.b16 %v149
  %v673 = vunpack.c.l.b16 %v150
  %v674 = vunpack.c.l.b16 %v151
  %v675 = vunpack.c.l.b16 %v152
  %v676 = vunpack.c.l.b16 %v153
  %v677 = vunpack.c.l.b16 %v154
  %v678 = vunpack.c.l.b16 %v155
  %v679 = vunpack.c.l.b16 %v156
  %v680 = vunpack.c.l.b16 %v157
  %v681 = vunpack.c.l.b16 %v158
  %v682 = vunpack.c.l.b16 %v159
  %v683 = vunpack.c.l.b16 %v160
  %v684 = vunpack.c.l.b16 %v161
  %v685 = vunpack.c.l.b16 %v162
  %v686 = vunpack.c.l.b16 %v163
  %v687 = vunpack.c.l.b16 %v164
  %v688 = vunpack.c.l.b16 %v165
  %v689 = vunpack.c.l.b16 %v166
  %v690 = vunpack.c.l.b16 %v167
  %v691 = vunpack.c.l.b16 %v168
  %v692 = vunpack.c.l.b16 %v169
  %v693 = vunpack.c.l.b16 %v170
  %v694 = vunpack.c.l.b16 %v171
  %v695 = vunpack.c.l.b16 %v172
  %v696 = vunpack.c.l.b16 %v173
  %v697 = vunpack.c.l.b16 %v174
  %v698 = vunpack.c.l.b16 %v175
  %v699 = vunpack.c.l.b16 %v176
  %v700 = vunpack.c.l.b16 %v177
  %v701 = vunpack.c.l.b16 %v178
  %v702 = vunpack.c.l.b16 %v179
  %v703 = vunpack.c.l.b16 %v180
  %v704 = vunpack.c.l.b16 %v181
  %v705 = vunpack.c.l.b16 %v182
  %v706 = vunpack.c.l.b16 %v183
  %v707 = vunpack.c.l.b16 %v184
  %v708 = vunpack.c.l.b16 %v185
  %v709 = vunpack.c.l.b16 %v186
  %v710 = vunpack.c.l.b16 %v187
  %v711 = vunpack.c.l.b16 %v188
  %v712 = vunpack.c.l.b16 %v189
  %v713 = vunpack.c.l.b16 %v190
  %v714 = vunpack.c.l.b16 %v191
  %v715 = vunpack.c.l.b16 %v192
  %v716 = vunpack.c.l.b16 %v193
  %v717 = vunpack.c.l.b16 %v194
  %v718 = vunpack.c.l.b16 %v195
  %v719 = vunpack.c.l.b16 %v196
  %v720 = vunpack.c.l.b16 %v197
  %v721 = vunpack.c.l.b16 %v198
  %v722 = vunpack.c.l.b16 %v199
  %v723 = vunpack.c.l.b16 %v200
  %v724 = vunpack.c.l.b16 %v201
  %v725 = vunpack.c.l.b16 %v202
  %v726 = vunpack.c.l.b16 %v203
  %v727 = vunpack.c.l.b16 %v204
  %v728 = vunpack.c.l.b16 %v205
  %v729 = vunpack.c.l.b16 %v206
  %v730 = vunpack.c.l.b16 %v207
  %v731 = vunpack.c.l.b16 %v208
  %v732 = vunpack.c.l.b16 %v209
  %v733 = vunpack.c.l.b16 %v210
  %v734 = vunpack.c.l.b16 %v211
  %v735 = vunpack.c.l.b16 %v212
  %v736 = vunpack.c.l.b16 %v213
  %v737 = vunpack.c.l.b16 %v214
  %v738 = vunpack.c.l.b16 %v215
  %v739 = vunpack.c.l.b16 %v216
  %v740 = vunpack.c.l.b16 %v217
  %v741 = vunpack.c.l.b16 %v218
  %v742 = vunpack.c.l.b16 %v219
  %v743 = vunpack.c.l.b16 %v220
  %v744 = vunpack.c.l.b16 %v221
  %v745 = vunpack.c.l.b16 %v222
  %v746 = vunpack.c.l.b16 %v223
  %v747 = vunpack.c.l.b16 %v224
  %v748 = vunpack.c.l.b16 %v225
  %v749 = vunpack.c.l.b16 %v226
  %v750 = vunpack.c.l.b16 %v227
  %v751 = vunpack.c.l.b16 %v228
  %v752 = vunpack.c.l.b16 %v229
  %v753 = vunpack.c.l.b16 %v230
  %v754 = vunpack.c.l.b16 %v231
  %v755 = vunpack.c.l.b16 %v232
  %v756 = vunpack.c.l.b16 %v233
  %v757 = vunpack.c.l.b16 %v234
  %v758 = vunpack.c.l.b16 %v235
  %v759 = vunpack.c.l.b16 %v236
  %v760 = vunpack.c.l.b16 %v237
  %v761 = vunpack.c.l.b16 %v238
  %v762 = vunpack.c.l.b16 %v239
  %v763 = vunpack.c.l.b16 %v240
  %v764 = vunpack.c.l.b16 %v241
  %v765 = vunpack.c.l.b16 %v242
  %v766 = vunpack.c.l.b16 %v243
  %v767 = vunpack.c.l.b16 %v244
  %v768 = vunpack.c.l.b16 %v245
  %v769 = vunpack.c.l.b16 %v246
  %v770 = vunpack.c.l.b16 %v247
  %v771 = vunpack.c.l.b16 %v248
  %v772 = vunpack.c.l.b16 %v249
  %v773 = vunpack.c.l.b16 %v250
  %v774 = vunpack.c.l.b16 %v251
  %v775 = vunpack.c.l.b16 %v252
  %v776 = vunpack.c.l.b16 %v253
  %v777 = vunpack.c.l.b16 %v254
  %v778 = vpack.c.b16 %v547, %v546
  %v779 = vpack.c.b16 %v549, %v548
  %v780 = vpack.c.b16 %v551, %v550
  %v781 = vpack.c.b16 %v553, %v552
  %v782 = vpack.c.b16 %v555, %v554
  %v783 = vpack.c.b16 %v557, %v556
  %v784 = vpack.c.b16 %v559, %v558
  %v785 = vpack.c.b16 %v561, %v560
  %v786 = vpack.c.b16 %v563, %v562
  %v787 = vpack.c.b16 %v565, %v564
  %v788 = vpack.c.b16 %v567, %v566
  %v789 = vpack.c.b16 %v569, %v568
  %v790 = vpack.c.b16 %v571, %v570
  %v791 = vpack.c.b16 %v573, %v572
  %v792 = vpack.c.b16 %v575, %v574
  %v793 = vpack.c.b16 %v577, %v576
  %v794 = vpack.c.b16 %v579, %v578
  %v795 = vpack.c.b16 %v581, %v580
  %v796 = vpack.c.b16 %v583, %v582
  %v797 = vpack.c.b16 %v585, %v584
  %v798 = vpack.c.b16 %v587, %v586
  %v799 = vpack.c.b16 %v589, %v588
  %v800 = vpack.c.b16 %v591, %v590
  %v801 = vpack.c.b16 %v593, %v592
  %v802 = vpack.c.b16 %v595, %v594
  %v803 = vpack.c.b16 %v597, %v596
  %v804 = vpack.c.b16 %v599, %v598
  %v805 = vpack.c.b16 %v601, %v600
  %v806 = vpack.c.b16 %v603, %v602
  %v807 = vpack.c.b16 %v605, %v604
  %v808 = vpack.c.b16 %v607, %v606
  %v809 = vpack.c.b16 %v609, %v608
  %v810 = vpack.c.b16 %v611, %v610
  %v811 = vpack.c.b16 %v613, %v612
  %v812 = vpack.c.b16 %v615, %v614
  %v813 = vpack.c.b16 %v617, %v616
  %v814 = vpack.c.b16 %v619, %v618
  %v815 = vpack.c.b16 %v621, %v620
  %v816 = vpack.c.b16 %v623, %v622
  %v817 = vpack.c.b16 %v625, %v624
  %v818 = vpack.c.b16 %v627, %v626
  %v819 = vpack.c.b16 %v629, %v628
  %v820 = vpack.c.b16 %v631, %v630
  %v821 = vpack.c.b16 %v633, %v632
  %v822 = vpack.c.b16 %v635, %v634
  %v823 = vpack.c.b16 %v637, %v636
  %v824 = vpack.c.b16 %v639, %v638
  %v825 = vpack.c.b16 %v641, %v640
  %v826 = vpack.c.b16 %v643, %v642
  %v827 = vpack.c.b16 %v645, %v644
  %v828 = vpack.c.b16 %v647, %v646
  %v829 = vpack.c.b16 %v649, %v648
  %v830 = vpack.c.b16 %v651, %v650
  %v831 = vpack.c.b16 %v653, %v652
  %v832 = vpack.c.b16 %v655, %v654
  %v833 = vpack.c.b16 %v657, %v656
  %v834 = vpack.c.b16 %v659, %v658
  %v835 = vpack.c.b16 %v661, %v660
  %v836 = vpack.c.b16 %v663, %v662
  %v837 = vpack.c.b16 %v665, %v664
  %v838 = vpack.c.b16 %v667, %v666
  %v839 = vpack.c.b16 %v669, %v668
  %v840 = vpack.c.b16 %v671, %v670
  %v841 = vpack.c.b16 %v673, %v672
  %v842 = vpack.c.b16 %v675, %v674
  %v843 = vpack.c.b16 %v677, %v676
  %v844 = vpack.c.b16 %v679, %v678
  %v845 = vpack.c.b16 %v681, %v680
  %v846 = vpack.c.b16 %v683, %v682
  %v847 = vpack.c.b16 %v685, %v684
  %v848 = vpack.c.b16 %v687, %v686
  %v849 = vpack.c.b16 %v689, %v688
  %v850 = vpack.c.b16 %v691, %v690
  %v851 = vpack.c.b16 %v693, %v692
  %v852 = vpack.c.b16 %v695, %v694
  %v853 = vpack.c.b16 %v697, %v696
  %v854 = vpack.c.b16 %v699, %v698
  %v855 = vpack.c.b16 %v701, %v700
  %v856 = vpack.c.b16 %v703, %v702
  %v857 = vpack.c.b16 %v705, %v704
  %v858 = vpack.c.b16 %v707, %v706
  %v859 = vpack.c.b16 %v709, %v708
  %v860 = vpack.c.b16 %v711, %v710
  %v861 = vpack.c.b16 %v713, %v712
  %v862 = vpack.c.b16 %v715, %v714
  %v863 = vpack.c.b16 %v717, %v716
  %v864 = vpack.c.b16 %v719, %v718
  %v865 = vpack.c.b16 %v721, %v720
  %v866 = vpack.c.b16 %v723, %v722
  %v867 = vpack.c.b16 %v725, %v724
  %v868 = vpack.c.b16 %v727, %v726
  %v869 = vpack.c.b16 %v729, %v728
  %v870 = vpack.c.b16 %v731, %v730
  %v871 = vpack.c.b16 %v733, %v732
  %v872 = vpack.c.b16 %v735, %v734
  %v873 = vpack.c.b16 %v737, %v736
  %v874 = vpack.c.b16 %v739, %v738
  %v875 = vpack.c.b16 %v741, %v740
  %v876 = vpack.c.b16 %v743, %v742
  %v877 = vpack.c.b16 %v745, %v744
  %v878 = vpack.c.b16 %v747, %v746
  %v879 = vpack.c.b16 %v749, %v748
  %v880 = vpack.c.b16 %v751, %v750
  %v881 = vpack.c.b16 %v753, %v752
  %v882 = vpack.c.b16 %v755, %v754
  %v883 = vpack.c.b16 %v757, %v756
  %v884 = vpack.c.b16 %v759, %v758
  %v885 = vpack.c.b16 %v761, %v760
  %v886 = vpack.c.b16 %v763, %v762
  %v887 = vpack.c.b16 %v765, %v764
  %v888 = vpack.c.b16 %v767, %v766
  %v889 = vpack.c.b16 %v769, %v768
  %v890 = vpack.c.b16 %v771, %v770
  %v891 = vpack.c.b16 %v773, %v772
  %v892 = vpack.c.b16 %v775, %v774
  %v893 = vpack.c.b16 %v777, %v776
  %vm1010 = vcmask 523264
  %v1012 = vsel %vm1010, %v299, 0
  %1014 = vmatprep.subr.bf16.mxu0 0
  %1015 = vmatpush1.bf16.msra.mxu0 %v785
  %1016 = vmatprep.subr.bf16.mxu0 0
  %1017 = vmatpush1.bf16.msra.mxu0 %v784
  %1018 = vmatprep.subr.bf16.mxu0 0
  %1019 = vmatpush1.bf16.msra.mxu0 %v783
  %1020 = vmatprep.subr.bf16.mxu0 0
  %1021 = vmatpush1.bf16.msra.mxu0 %v782
  %1022 = vmatprep.subr.bf16.mxu0 0
  %1023 = vmatpush1.bf16.msra.mxu0 %v781
  %1024 = vmatprep.subr.bf16.mxu0 0
  %1025 = vmatpush1.bf16.msra.mxu0 %v780
  %1026 = vmatprep.subr.bf16.mxu0 0
  %1027 = vmatpush1.bf16.msra.mxu0 %v779
  %1028 = vmatprep.subr.bf16.mxu0 0
  %1029 = vmatpush1.bf16.msra.mxu0 %v778
  %1030 = vmatprep.subr.bf16.mxu0 0
  %1031 = vmatpush2.bf16.msra.mxu0 %v793
  %1032 = vmatprep.subr.bf16.mxu0 0
  %1033 = vmatpush2.bf16.msra.mxu0 %v792
  %1034 = vmatprep.subr.bf16.mxu0 0
  %1035 = vmatpush2.bf16.msra.mxu0 %v791
  %1036 = vmatprep.subr.bf16.mxu0 0
  %1037 = vmatpush2.bf16.msra.mxu0 %v790
  %1038 = vmatprep.subr.bf16.mxu0 0
  %1039 = vmatpush2.bf16.msra.mxu0 %v789
  %1040 = vmatprep.subr.bf16.mxu0 0
  %1041 = vmatpush2.bf16.msra.mxu0 %v788
  %1042 = vmatprep.subr.bf16.mxu0 0
  %1043 = vmatpush2.bf16.msra.mxu0 %v787
  %1044 = vmatprep.subr.bf16.mxu0 0
  %1045 = vmatpush2.bf16.msra.mxu0 %v786
  %1046 = vmatprep.mubr.bf16.mxu0 %v286
  %1047 = vmatmul.mubr.bf16.gmra.mxu0 %v285
  %v1048 = vpop.f32.mrf.mxu0
  %v1049 = vadd.f32 %v260, %v1048
  %v1050 = vpop.f32.mrf.mxu0
  %v1051 = vpop.f32.mrf.mxu0
  %v1052 = vpop.f32.mrf.mxu0
  %1053 = vdwg.mxu0
  %1054 = vmatprep.subr.bf16.mxu0 0
  %1055 = vmatpush1.bf16.msra.mxu0 %v801
  %1056 = vmatprep.subr.bf16.mxu0 0
  %1057 = vmatpush1.bf16.msra.mxu0 %v800
  %1058 = vmatprep.subr.bf16.mxu0 0
  %1059 = vmatpush1.bf16.msra.mxu0 %v799
  %1060 = vmatprep.subr.bf16.mxu0 0
  %1061 = vmatpush1.bf16.msra.mxu0 %v798
  %1062 = vmatprep.subr.bf16.mxu0 0
  %1063 = vmatpush1.bf16.msra.mxu0 %v797
  %1064 = vmatprep.subr.bf16.mxu0 0
  %1065 = vmatpush1.bf16.msra.mxu0 %v796
  %1066 = vmatprep.subr.bf16.mxu0 0
  %1067 = vmatpush1.bf16.msra.mxu0 %v795
  %1068 = vmatprep.subr.bf16.mxu0 0
  %1069 = vmatpush1.bf16.msra.mxu0 %v794
  %1070 = vmatprep.subr.bf16.mxu0 0
  %1071 = vmatpush2.bf16.msra.mxu0 %v809
  %1072 = vmatprep.subr.bf16.mxu0 0
  %1073 = vmatpush2.bf16.msra.mxu0 %v808
  %1074 = vmatprep.subr.bf16.mxu0 0
  %1075 = vmatpush2.bf16.msra.mxu0 %v807
  %1076 = vmatprep.subr.bf16.mxu0 0
  %1077 = vmatpush2.bf16.msra.mxu0 %v806
  %1078 = vmatprep.subr.bf16.mxu0 0
  %1079 = vmatpush2.bf16.msra.mxu0 %v805
  %1080 = vmatprep.subr.bf16.mxu0 0
  %1081 = vmatpush2.bf16.msra.mxu0 %v804
  %1082 = vmatprep.subr.bf16.mxu0 0
  %1083 = vmatpush2.bf16.msra.mxu0 %v803
  %1084 = vmatprep.subr.bf16.mxu0 0
  %1085 = vmatpush2.bf16.msra.mxu0 %v802
  %1086 = vmatprep.mubr.bf16.mxu0 %v288
  %1087 = vmatmul.mubr.bf16.gmra.mxu0 %v287
  %v1088 = vpop.f32.mrf.mxu0
  %v1089 = vadd.f32 %v1049, %v1088
  %v1090 = vpop.f32.mrf.mxu0
  %v1091 = vpop.f32.mrf.mxu0
  %v1092 = vpop.f32.mrf.mxu0
  %1093 = vdwg.mxu0
  %1094 = vmatprep.subr.bf16.mxu0 0
  %1095 = vmatpush1.bf16.msra.mxu0 %v817
  %1096 = vmatprep.subr.bf16.mxu0 0
  %1097 = vmatpush1.bf16.msra.mxu0 %v816
  %1098 = vmatprep.subr.bf16.mxu0 0
  %1099 = vmatpush1.bf16.msra.mxu0 %v815
  %1100 = vmatprep.subr.bf16.mxu0 0
  %1101 = vmatpush1.bf16.msra.mxu0 %v814
  %1102 = vmatprep.subr.bf16.mxu0 0
  %1103 = vmatpush1.bf16.msra.mxu0 %v813
  %1104 = vmatprep.subr.bf16.mxu0 0
  %1105 = vmatpush1.bf16.msra.mxu0 %v812
  %1106 = vmatprep.subr.bf16.mxu0 0
  %1107 = vmatpush1.bf16.msra.mxu0 %v811
  %1108 = vmatprep.subr.bf16.mxu0 0
  %1109 = vmatpush1.bf16.msra.mxu0 %v810
  %1110 = vmatprep.subr.bf16.mxu0 0
  %1111 = vmatpush2.bf16.msra.mxu0 %v825
  %1112 = vmatprep.subr.bf16.mxu0 0
  %1113 = vmatpush2.bf16.msra.mxu0 %v824
  %1114 = vmatprep.subr.bf16.mxu0 0
  %1115 = vmatpush2.bf16.msra.mxu0 %v823
  %1116 = vmatprep.subr.bf16.mxu0 0
  %1117 = vmatpush2.bf16.msra.mxu0 %v822
  %1118 = vmatprep.subr.bf16.mxu0 0
  %1119 = vmatpush2.bf16.msra.mxu0 %v821
  %1120 = vmatprep.subr.bf16.mxu0 0
  %1121 = vmatpush2.bf16.msra.mxu0 %v820
  %1122 = vmatprep.subr.bf16.mxu0 0
  %1123 = vmatpush2.bf16.msra.mxu0 %v819
  %1124 = vmatprep.subr.bf16.mxu0 0
  %1125 = vmatpush2.bf16.msra.mxu0 %v818
  %1126 = vmatprep.mubr.bf16.mxu0 %v290
  %1127 = vmatmul.mubr.bf16.gmra.mxu0 %v289
  %v1128 = vpop.f32.mrf.mxu0
  %v1129 = vadd.f32 %v1089, %v1128
  %v1130 = vpop.f32.mrf.mxu0
  %v1131 = vpop.f32.mrf.mxu0
  %v1132 = vpop.f32.mrf.mxu0
  %1133 = vdwg.mxu0
  %1134 = vmatprep.subr.bf16.mxu0 0
  %1135 = vmatpush1.bf16.msra.mxu0 %v833
  %1136 = vmatprep.subr.bf16.mxu0 0
  %1137 = vmatpush1.bf16.msra.mxu0 %v832
  %1138 = vmatprep.subr.bf16.mxu0 0
  %1139 = vmatpush1.bf16.msra.mxu0 %v831
  %1140 = vmatprep.subr.bf16.mxu0 0
  %1141 = vmatpush1.bf16.msra.mxu0 %v830
  %1142 = vmatprep.subr.bf16.mxu0 0
  %1143 = vmatpush1.bf16.msra.mxu0 %v829
  %1144 = vmatprep.subr.bf16.mxu0 0
  %1145 = vmatpush1.bf16.msra.mxu0 %v828
  %1146 = vmatprep.subr.bf16.mxu0 0
  %1147 = vmatpush1.bf16.msra.mxu0 %v827
  %1148 = vmatprep.subr.bf16.mxu0 0
  %1149 = vmatpush1.bf16.msra.mxu0 %v826
  %1150 = vmatprep.subr.bf16.mxu0 0
  %1151 = vmatpush2.bf16.msra.mxu0 %v841
  %1152 = vmatprep.subr.bf16.mxu0 0
  %1153 = vmatpush2.bf16.msra.mxu0 %v840
  %1154 = vmatprep.subr.bf16.mxu0 0
  %1155 = vmatpush2.bf16.msra.mxu0 %v839
  %1156 = vmatprep.subr.bf16.mxu0 0
  %1157 = vmatpush2.bf16.msra.mxu0 %v838
  %1158 = vmatprep.subr.bf16.mxu0 0
  %1159 = vmatpush2.bf16.msra.mxu0 %v837
  %1160 = vmatprep.subr.bf16.mxu0 0
  %1161 = vmatpush2.bf16.msra.mxu0 %v836
  %1162 = vmatprep.subr.bf16.mxu0 0
  %1163 = vmatpush2.bf16.msra.mxu0 %v835
  %1164 = vmatprep.subr.bf16.mxu0 0
  %1165 = vmatpush2.bf16.msra.mxu0 %v834
  %1166 = vmatprep.mubr.bf16.mxu0 %v292
  %1167 = vmatmul.mubr.bf16.gmra.mxu0 %v291
  %v1168 = vpop.f32.mrf.mxu0
  %v1169 = vadd.f32 %v1129, %v1168
  %v1170 = vpop.f32.mrf.mxu0
  %v1171 = vpop.f32.mrf.mxu0
  %v1172 = vpop.f32.mrf.mxu0
  %1173 = vdwg.mxu0
  %1174 = vmatprep.subr.bf16.mxu0 0
  %1175 = vmatpush1.bf16.msra.mxu0 %v849
  %1176 = vmatprep.subr.bf16.mxu0 0
  %1177 = vmatpush1.bf16.msra.mxu0 %v848
  %1178 = vmatprep.subr.bf16.mxu0 0
  %1179 = vmatpush1.bf16.msra.mxu0 %v847
  %1180 = vmatprep.subr.bf16.mxu0 0
  %1181 = vmatpush1.bf16.msra.mxu0 %v846
  %1182 = vmatprep.subr.bf16.mxu0 0
  %1183 = vmatpush1.bf16.msra.mxu0 %v845
  %1184 = vmatprep.subr.bf16.mxu0 0
  %1185 = vmatpush1.bf16.msra.mxu0 %v844
  %1186 = vmatprep.subr.bf16.mxu0 0
  %1187 = vmatpush1.bf16.msra.mxu0 %v843
  %1188 = vmatprep.subr.bf16.mxu0 0
  %1189 = vmatpush1.bf16.msra.mxu0 %v842
  %1190 = vmatprep.subr.bf16.mxu0 0
  %1191 = vmatpush2.bf16.msra.mxu0 %v857
  %1192 = vmatprep.subr.bf16.mxu0 0
  %1193 = vmatpush2.bf16.msra.mxu0 %v856
  %1194 = vmatprep.subr.bf16.mxu0 0
  %1195 = vmatpush2.bf16.msra.mxu0 %v855
  %1196 = vmatprep.subr.bf16.mxu0 0
  %1197 = vmatpush2.bf16.msra.mxu0 %v854
  %1198 = vmatprep.subr.bf16.mxu0 0
  %1199 = vmatpush2.bf16.msra.mxu0 %v853
  %1200 = vmatprep.subr.bf16.mxu0 0
  %1201 = vmatpush2.bf16.msra.mxu0 %v852
  %1202 = vmatprep.subr.bf16.mxu0 0
  %1203 = vmatpush2.bf16.msra.mxu0 %v851
  %1204 = vmatprep.subr.bf16.mxu0 0
  %1205 = vmatpush2.bf16.msra.mxu0 %v850
  %1206 = vmatprep.mubr.bf16.mxu0 %v294
  %1207 = vmatmul.mubr.bf16.gmra.mxu0 %v293
  %v1208 = vpop.f32.mrf.mxu0
  %v1209 = vadd.f32 %v1169, %v1208
  %v1210 = vpop.f32.mrf.mxu0
  %v1211 = vpop.f32.mrf.mxu0
  %v1212 = vpop.f32.mrf.mxu0
  %1213 = vdwg.mxu0
  %1214 = vmatprep.subr.bf16.mxu0 0
  %1215 = vmatpush1.bf16.msra.mxu0 %v865
  %1216 = vmatprep.subr.bf16.mxu0 0
  %1217 = vmatpush1.bf16.msra.mxu0 %v864
  %1218 = vmatprep.subr.bf16.mxu0 0
  %1219 = vmatpush1.bf16.msra.mxu0 %v863
  %1220 = vmatprep.subr.bf16.mxu0 0
  %1221 = vmatpush1.bf16.msra.mxu0 %v862
  %1222 = vmatprep.subr.bf16.mxu0 0
  %1223 = vmatpush1.bf16.msra.mxu0 %v861
  %1224 = vmatprep.subr.bf16.mxu0 0
  %1225 = vmatpush1.bf16.msra.mxu0 %v860
  %1226 = vmatprep.subr.bf16.mxu0 0
  %1227 = vmatpush1.bf16.msra.mxu0 %v859
  %1228 = vmatprep.subr.bf16.mxu0 0
  %1229 = vmatpush1.bf16.msra.mxu0 %v858
  %1230 = vmatprep.subr.bf16.mxu0 0
  %1231 = vmatpush2.bf16.msra.mxu0 %v873
  %1232 = vmatprep.subr.bf16.mxu0 0
  %1233 = vmatpush2.bf16.msra.mxu0 %v872
  %1234 = vmatprep.subr.bf16.mxu0 0
  %1235 = vmatpush2.bf16.msra.mxu0 %v871
  %1236 = vmatprep.subr.bf16.mxu0 0
  %1237 = vmatpush2.bf16.msra.mxu0 %v870
  %1238 = vmatprep.subr.bf16.mxu0 0
  %1239 = vmatpush2.bf16.msra.mxu0 %v869
  %1240 = vmatprep.subr.bf16.mxu0 0
  %1241 = vmatpush2.bf16.msra.mxu0 %v868
  %1242 = vmatprep.subr.bf16.mxu0 0
  %1243 = vmatpush2.bf16.msra.mxu0 %v867
  %1244 = vmatprep.subr.bf16.mxu0 0
  %1245 = vmatpush2.bf16.msra.mxu0 %v866
  %1246 = vmatprep.mubr.bf16.mxu0 %v296
  %1247 = vmatmul.mubr.bf16.gmra.mxu0 %v295
  %v1248 = vpop.f32.mrf.mxu0
  %v1249 = vadd.f32 %v1209, %v1248
  %v1250 = vpop.f32.mrf.mxu0
  %v1251 = vpop.f32.mrf.mxu0
  %v1252 = vpop.f32.mrf.mxu0
  %1253 = vdwg.mxu0
  %1254 = vmatprep.subr.bf16.mxu0 0
  %1255 = vmatpush1.bf16.msra.mxu0 %v881
  %1256 = vmatprep.subr.bf16.mxu0 0
  %1257 = vmatpush1.bf16.msra.mxu0 %v880
  %1258 = vmatprep.subr.bf16.mxu0 0
  %1259 = vmatpush1.bf16.msra.mxu0 %v879
  %1260 = vmatprep.subr.bf16.mxu0 0
  %1261 = vmatpush1.bf16.msra.mxu0 %v878
  %1262 = vmatprep.subr.bf16.mxu0 0
  %1263 = vmatpush1.bf16.msra.mxu0 %v877
  %1264 = vmatprep.subr.bf16.mxu0 0
  %1265 = vmatpush1.bf16.msra.mxu0 %v876
  %1266 = vmatprep.subr.bf16.mxu0 0
  %1267 = vmatpush1.bf16.msra.mxu0 %v875
  %1268 = vmatprep.subr.bf16.mxu0 0
  %1269 = vmatpush1.bf16.msra.mxu0 %v874
  %1270 = vmatprep.subr.bf16.mxu0 0
  %1271 = vmatpush2.bf16.msra.mxu0 %v889
  %1272 = vmatprep.subr.bf16.mxu0 0
  %1273 = vmatpush2.bf16.msra.mxu0 %v888
  %1274 = vmatprep.subr.bf16.mxu0 0
  %1275 = vmatpush2.bf16.msra.mxu0 %v887
  %1276 = vmatprep.subr.bf16.mxu0 0
  %1277 = vmatpush2.bf16.msra.mxu0 %v886
  %1278 = vmatprep.subr.bf16.mxu0 0
  %1279 = vmatpush2.bf16.msra.mxu0 %v885
  %1280 = vmatprep.subr.bf16.mxu0 0
  %1281 = vmatpush2.bf16.msra.mxu0 %v884
  %1282 = vmatprep.subr.bf16.mxu0 0
  %1283 = vmatpush2.bf16.msra.mxu0 %v883
  %1284 = vmatprep.subr.bf16.mxu0 0
  %1285 = vmatpush2.bf16.msra.mxu0 %v882
  %1286 = vmatprep.mubr.bf16.mxu0 %v298
  %1287 = vmatmul.mubr.bf16.gmra.mxu0 %v297
  %v1288 = vpop.f32.mrf.mxu0
  %v1289 = vadd.f32 %v1249, %v1288
  %v1290 = vpop.f32.mrf.mxu0
  %v1291 = vpop.f32.mrf.mxu0
  %v1292 = vpop.f32.mrf.mxu0
  %1293 = vdwg.mxu0
  %1294 = vmatprep.subr.bf16.mxu0 0
  %1295 = vmatpush1.bf16.msra.mxu0 0
  %1296 = vmatprep.subr.bf16.mxu0 0
  %1297 = vmatpush1.bf16.msra.mxu0 0
  %1298 = vmatprep.subr.bf16.mxu0 0
  %1299 = vmatpush1.bf16.msra.mxu0 0
  %1300 = vmatprep.subr.bf16.mxu0 0
  %1301 = vmatpush1.bf16.msra.mxu0 0
  %1302 = vmatprep.subr.bf16.mxu0 0
  %1303 = vmatpush1.bf16.msra.mxu0 %v893
  %1304 = vmatprep.subr.bf16.mxu0 0
  %1305 = vmatpush1.bf16.msra.mxu0 %v892
  %1306 = vmatprep.subr.bf16.mxu0 0
  %1307 = vmatpush1.bf16.msra.mxu0 %v891
  %1308 = vmatprep.subr.bf16.mxu0 0
  %1309 = vmatpush1.bf16.msra.mxu0 %v890
  %1310 = vmatprep.subr.bf16.mxu0 0
  %1311 = vmatpush2.bf16.msra.mxu0 0
  %1312 = vmatprep.subr.bf16.mxu0 0
  %1313 = vmatpush2.bf16.msra.mxu0 0
  %1314 = vmatprep.subr.bf16.mxu0 0
  %1315 = vmatpush2.bf16.msra.mxu0 0
  %1316 = vmatprep.subr.bf16.mxu0 0
  %1317 = vmatpush2.bf16.msra.mxu0 0
  %1318 = vmatprep.subr.bf16.mxu0 0
  %1319 = vmatpush2.bf16.msra.mxu0 0
  %1320 = vmatprep.subr.bf16.mxu0 0
  %1321 = vmatpush2.bf16.msra.mxu0 0
  %1322 = vmatprep.subr.bf16.mxu0 0
  %1323 = vmatpush2.bf16.msra.mxu0 0
  %1324 = vmatprep.subr.bf16.mxu0 0
  %1325 = vmatpush2.bf16.msra.mxu0 0
  %1326 = vmatprep.mubr.bf16.mxu0 0
  %1327 = vmatmul.mubr.bf16.gmra.mxu0 %v1012
  %v1328 = vpop.f32.mrf.mxu0
  %v1329 = vadd.f32 %v1289, %v1328
  %v1330 = vpop.f32.mrf.mxu0
  %v1331 = vpop.f32.mrf.mxu0
  %v1332 = vpop.f32.mrf.mxu0
  %1333 = vdwg.mxu0
  %v1334 = vmax.f32 %v1329, 0.0
  %1335 = vst [vmem:[%s3] sm:$0xff] %v1334
  // Predicated region
  $region14: #{forward.11} parent=0 // pred_check
    _
  $region15: #{forward.11} parent=0 // pred_check_branch
    %1337 = sbr.rel (0) target = $region17
  $region16: #{forward.11} parent=0 // pred_region
    _
  $region17: #{forward.11} parent=0 // pred_fallthru
    _
  // Predicated region
  $region18: #{forward.11} parent=0 // pred_check
    _
  $region19: #{forward.11} parent=0 // pred_check_branch
    %1339 = sbr.rel (0) target = $region21
  $region20: #{forward.11} parent=0 // pred_region
    _
  $region21: #{forward.11} parent=0 // pred_fallthru
    _

// kernel: forward.12
$region0: #{forward.12}
  #allocation0 [shape = 'u32[]', space=smem, size = 0x4, offset = 0x4, fixed_abs, tag = 'smem constant byte address 0x4 - core index']
  #allocation1 [shape = 'u32[144,128]{1,0:T(1,128)}', space=vmem, size = 0x12000, scoped, tag = 'internal scratch']
  %s0 = inlined_call_operand.vmem [shape: bf16[8,128], index: 0, kind: input, shape index: {}]
  %s1 = inlined_call_operand.vmem [shape: bf16[128,1856], index: 1, kind: input, shape index: {}]
  %s2 = inlined_call_operand.vmem [shape: f32[1,1856], index: 2, kind: input, shape index: {}]
  %s3 = inlined_call_operand.vmem [shape: f32[8,1856], index: 3, kind: output, shape index: {}]
  %s4 = sld [smem:[#allocation0]]
  $region22: #{forward.12} parent=0
    _
  %s6 = ssub.s32 1, %s4
  %s7 = scalar_select 0, %s6, %s4
  // Predicated region
  $region2: #{forward.12} parent=0 // pred_check
    _
  $region3: #{forward.12} parent=0 // pred_check_branch
    %9 = sbr.rel (0) target = $region5
  $region4: #{forward.12} parent=0 // pred_region
    _
  $region5: #{forward.12} parent=0 // pred_fallthru
    _
  // Predicated region
  $region6: #{forward.12} parent=0 // pred_check
    _
  $region7: #{forward.12} parent=0 // pred_check_branch
    %11 = sbr.rel (0) target = $region9
  $region8: #{forward.12} parent=0 // pred_region
    _
  $region9: #{forward.12} parent=0 // pred_fallthru
    _
  // Predicated region
  $region10: #{forward.12} parent=0 // pred_check
    _
  $region11: #{forward.12} parent=0 // pred_check_branch
    %13 = sbr.rel (0) target = $region13
  $region12: #{forward.12} parent=0 // pred_region
    _
  $region13: #{forward.12} parent=0 // pred_fallthru
    _
  %v15 = vld [vmem:[%s0] sm:$0xf]
  %v16 = vld [vmem:[%s1] sm:$0xff]
  %v17 = vld [vmem:[%s1 + $0x8] sm:$0xff]
  %v18 = vld [vmem:[%s1 + $0x10] sm:$0xff]
  %v19 = vld [vmem:[%s1 + $0x18] sm:$0xff]
  %v20 = vld [vmem:[%s1 + $0x20] sm:$0xff]
  %v21 = vld [vmem:[%s1 + $0x28] sm:$0xff]
  %v22 = vld [vmem:[%s1 + $0x30] sm:$0xff]
  %v23 = vld [vmem:[%s1 + $0x38] sm:$0xf]
  %v24 = vld [vmem:[%s1 + $0x3c] sm:$0xff]
  %v25 = vld [vmem:[%s1 + $0x44] sm:$0xff]
  %v26 = vld [vmem:[%s1 + $0x4c] sm:$0xff]
  %v27 = vld [vmem:[%s1 + $0x54] sm:$0xff]
  %v28 = vld [vmem:[%s1 + $0x5c] sm:$0xff]
  %v29 = vld [vmem:[%s1 + $0x64] sm:$0xff]
  %v30 = vld [vmem:[%s1 + $0x6c] sm:$0xff]
  %v31 = vld [vmem:[%s1 + $0x74] sm:$0xf]
  %v32 = vld [vmem:[%s1 + $0x78] sm:$0xff]
  %v33 = vld [vmem:[%s1 + $0x80] sm:$0xff]
  %v34 = vld [vmem:[%s1 + $0x88] sm:$0xff]
  %v35 = vld [vmem:[%s1 + $0x90] sm:$0xff]
  %v36 = vld [vmem:[%s1 + $0x98] sm:$0xff]
  %v37 = vld [vmem:[%s1 + $0xa0] sm:$0xff]
  %v38 = vld [vmem:[%s1 + $0xa8] sm:$0xff]
  %v39 = vld [vmem:[%s1 + $0xb0] sm:$0xf]
  %v40 = vld [vmem:[%s1 + $0xb4] sm:$0xff]
  %v41 = vld [vmem:[%s1 + $0xbc] sm:$0xff]
  %v42 = vld [vmem:[%s1 + $0xc4] sm:$0xff]
  %v43 = vld [vmem:[%s1 + $0xcc] sm:$0xff]
  %v44 = vld [vmem:[%s1 + $0xd4] sm:$0xff]
  %v45 = vld [vmem:[%s1 + $0xdc] sm:$0xff]
  %v46 = vld [vmem:[%s1 + $0xe4] sm:$0xff]
  %v47 = vld [vmem:[%s1 + $0xec] sm:$0xf]
  %v48 = vld [vmem:[%s1 + $0xf0] sm:$0xff]
  %v49 = vld [vmem:[%s1 + $0xf8] sm:$0xff]
  %v50 = vld [vmem:[%s1 + $0x100] sm:$0xff]
  %v51 = vld [vmem:[%s1 + $0x108] sm:$0xff]
  %v52 = vld [vmem:[%s1 + $0x110] sm:$0xff]
  %v53 = vld [vmem:[%s1 + $0x118] sm:$0xff]
  %v54 = vld [vmem:[%s1 + $0x120] sm:$0xff]
  %v55 = vld [vmem:[%s1 + $0x128] sm:$0xf]
  %v56 = vld [vmem:[%s1 + $0x12c] sm:$0xff]
  %v57 = vld [vmem:[%s1 + $0x134] sm:$0xff]
  %v58 = vld [vmem:[%s1 + $0x13c] sm:$0xff]
  %v59 = vld [vmem:[%s1 + $0x144] sm:$0xff]
  %v60 = vld [vmem:[%s1 + $0x14c] sm:$0xff]
  %v61 = vld [vmem:[%s1 + $0x154] sm:$0xff]
  %v62 = vld [vmem:[%s1 + $0x15c] sm:$0xff]
  %v63 = vld [vmem:[%s1 + $0x164] sm:$0xf]
  %v64 = vld [vmem:[%s1 + $0x168] sm:$0xff]
  %v65 = vld [vmem:[%s1 + $0x170] sm:$0xff]
  %v66 = vld [vmem:[%s1 + $0x178] sm:$0xff]
  %v67 = vld [vmem:[%s1 + $0x180] sm:$0xff]
  %v68 = vld [vmem:[%s1 + $0x188] sm:$0xff]
  %v69 = vld [vmem:[%s1 + $0x190] sm:$0xff]
  %v70 = vld [vmem:[%s1 + $0x198] sm:$0xff]
  %v71 = vld [vmem:[%s1 + $0x1a0] sm:$0xf]
  %v72 = vld [vmem:[%s1 + $0x1a4] sm:$0xff]
  %v73 = vld [vmem:[%s1 + $0x1ac] sm:$0xff]
  %v74 = vld [vmem:[%s1 + $0x1b4] sm:$0xff]
  %v75 = vld [vmem:[%s1 + $0x1bc] sm:$0xff]
  %v76 = vld [vmem:[%s1 + $0x1c4] sm:$0xff]
  %v77 = vld [vmem:[%s1 + $0x1cc] sm:$0xff]
  %v78 = vld [vmem:[%s1 + $0x1d4] sm:$0xff]
  %v79 = vld [vmem:[%s1 + $0x1dc] sm:$0xf]
  %v80 = vld [vmem:[%s1 + $0x1e0] sm:$0xff]
  %v81 = vld [vmem:[%s1 + $0x1e8] sm:$0xff]
  %v82 = vld [vmem:[%s1 + $0x1f0] sm:$0xff]
  %v83 = vld [vmem:[%s1 + $0x1f8] sm:$0xff]
  %v84 = vld [vmem:[%s1 + $0x200] sm:$0xff]
  %v85 = vld [vmem:[%s1 + $0x208] sm:$0xff]
  %v86 = vld [vmem:[%s1 + $0x210] sm:$0xff]
  %v87 = vld [vmem:[%s1 + $0x218] sm:$0xf]
  %v88 = vld [vmem:[%s1 + $0x21c] sm:$0xff]
  %v89 = vld [vmem:[%s1 + $0x224] sm:$0xff]
  %v90 = vld [vmem:[%s1 + $0x22c] sm:$0xff]
  %v91 = vld [vmem:[%s1 + $0x234] sm:$0xff]
  %v92 = vld [vmem:[%s1 + $0x23c] sm:$0xff]
  %v93 = vld [vmem:[%s1 + $0x244] sm:$0xff]
  %v94 = vld [vmem:[%s1 + $0x24c] sm:$0xff]
  %v95 = vld [vmem:[%s1 + $0x254] sm:$0xf]
  %v96 = vld [vmem:[%s1 + $0x258] sm:$0xff]
  %v97 = vld [vmem:[%s1 + $0x260] sm:$0xff]
  %v98 = vld [vmem:[%s1 + $0x268] sm:$0xff]
  %v99 = vld [vmem:[%s1 + $0x270] sm:$0xff]
  %v100 = vld [vmem:[%s1 + $0x278] sm:$0xff]
  %v101 = vld [vmem:[%s1 + $0x280] sm:$0xff]
  %v102 = vld [vmem:[%s1 + $0x288] sm:$0xff]
  %v103 = vld [vmem:[%s1 + $0x290] sm:$0xf]
  %v104 = vld [vmem:[%s1 + $0x294] sm:$0xff]
  %v105 = vld [vmem:[%s1 + $0x29c] sm:$0xff]
  %v106 = vld [vmem:[%s1 + $0x2a4] sm:$0xff]
  %v107 = vld [vmem:[%s1 + $0x2ac] sm:$0xff]
  %v108 = vld [vmem:[%s1 + $0x2b4] sm:$0xff]
  %v109 = vld [vmem:[%s1 + $0x2bc] sm:$0xff]
  %v110 = vld [vmem:[%s1 + $0x2c4] sm:$0xff]
  %v111 = vld [vmem:[%s1 + $0x2cc] sm:$0xf]
  %v112 = vld [vmem:[%s1 + $0x2d0] sm:$0xff]
  %v113 = vld [vmem:[%s1 + $0x2d8] sm:$0xff]
  %v114 = vld [vmem:[%s1 + $0x2e0] sm:$0xff]
  %v115 = vld [vmem:[%s1 + $0x2e8] sm:$0xff]
  %v116 = vld [vmem:[%s1 + $0x2f0] sm:$0xff]
  %v117 = vld [vmem:[%s1 + $0x2f8] sm:$0xff]
  %v118 = vld [vmem:[%s1 + $0x300] sm:$0xff]
  %v119 = vld [vmem:[%s1 + $0x308] sm:$0xf]
  %v120 = vld [vmem:[%s1 + $0x30c] sm:$0xff]
  %v121 = vld [vmem:[%s1 + $0x314] sm:$0xff]
  %v122 = vld [vmem:[%s1 + $0x31c] sm:$0xff]
  %v123 = vld [vmem:[%s1 + $0x324] sm:$0xff]
  %v124 = vld [vmem:[%s1 + $0x32c] sm:$0xff]
  %v125 = vld [vmem:[%s1 + $0x334] sm:$0xff]
  %v126 = vld [vmem:[%s1 + $0x33c] sm:$0xff]
  %v127 = vld [vmem:[%s1 + $0x344] sm:$0xf]
  %v128 = vld [vmem:[%s1 + $0x348] sm:$0xff]
  %v129 = vld [vmem:[%s1 + $0x350] sm:$0xff]
  %v130 = vld [vmem:[%s1 + $0x358] sm:$0xff]
  %v131 = vld [vmem:[%s1 + $0x360] sm:$0xff]
  %v132 = vld [vmem:[%s1 + $0x368] sm:$0xff]
  %v133 = vld [vmem:[%s1 + $0x370] sm:$0xff]
  %v134 = vld [vmem:[%s1 + $0x378] sm:$0xff]
  %v135 = vld [vmem:[%s1 + $0x380] sm:$0xf]
  %v136 = vld [vmem:[%s1 + $0x384] sm:$0xff]
  %v137 = vld [vmem:[%s1 + $0x38c] sm:$0xff]
  %v138 = vld [vmem:[%s1 + $0x394] sm:$0xff]
  %v139 = vld [vmem:[%s1 + $0x39c] sm:$0xff]
  %v140 = vld [vmem:[%s1 + $0x3a4] sm:$0xff]
  %v141 = vld [vmem:[%s1 + $0x3ac] sm:$0xff]
  %v142 = vld [vmem:[%s1 + $0x3b4] sm:$0xff]
  %v143 = vld [vmem:[%s1 + $0x3bc] sm:$0xf]
  %v144 = vld [vmem:[%s2] sm:$0xff]
  %v145 = vld [vmem:[%s2 + $0x8] sm:$0x7f]
  %v148 = vlaneseq
  %v149 = vshrl.u32 %v148, 7
  %v150 = vsub.s32 0, %v149
  %v151 = vrot.slane %v144, %v150
  %v152 = vlaneseq
  %v153 = vshrl.u32 %v152, 7
  %v154 = vsub.s32 1, %v153
  %v155 = vrot.slane %v144, %v154
  %v156 = vlaneseq
  %v157 = vshrl.u32 %v156, 7
  %v158 = vsub.s32 2, %v157
  %v159 = vrot.slane %v144, %v158
  %v160 = vlaneseq
  %v161 = vshrl.u32 %v160, 7
  %v162 = vsub.s32 3, %v161
  %v163 = vrot.slane %v144, %v162
  %v164 = vlaneseq
  %v165 = vshrl.u32 %v164, 7
  %v166 = vsub.s32 4, %v165
  %v167 = vrot.slane %v144, %v166
  %v168 = vlaneseq
  %v169 = vshrl.u32 %v168, 7
  %v170 = vsub.s32 5, %v169
  %v171 = vrot.slane %v144, %v170
  %v172 = vlaneseq
  %v173 = vshrl.u32 %v172, 7
  %v174 = vsub.s32 6, %v173
  %v175 = vrot.slane %v144, %v174
  %v176 = vlaneseq
  %v177 = vshrl.u32 %v176, 7
  %v178 = vsub.s32 7, %v177
  %v179 = vrot.slane %v144, %v178
  %v180 = vlaneseq
  %v181 = vshrl.u32 %v180, 7
  %v182 = vsub.s32 0, %v181
  %v183 = vrot.slane %v145, %v182
  %v184 = vlaneseq
  %v185 = vshrl.u32 %v184, 7
  %v186 = vsub.s32 1, %v185
  %v187 = vrot.slane %v145, %v186
  %v188 = vlaneseq
  %v189 = vshrl.u32 %v188, 7
  %v190 = vsub.s32 2, %v189
  %v191 = vrot.slane %v145, %v190
  %v192 = vlaneseq
  %v193 = vshrl.u32 %v192, 7
  %v194 = vsub.s32 3, %v193
  %v195 = vrot.slane %v145, %v194
  %v196 = vlaneseq
  %v197 = vshrl.u32 %v196, 7
  %v198 = vsub.s32 4, %v197
  %v199 = vrot.slane %v145, %v198
  %v200 = vlaneseq
  %v201 = vshrl.u32 %v200, 7
  %v202 = vsub.s32 5, %v201
  %v203 = vrot.slane %v145, %v202
  %v204 = vlaneseq
  %v205 = vshrl.u32 %v204, 7
  %v206 = vsub.s32 6, %v205
  %v207 = vrot.slane %v145, %v206
  %v351 = vunpack.c.l.b16 %v16
  %v352 = vunpack.c.h.b16 %v16
  %v353 = vunpack.c.l.b16 %v17
  %v354 = vunpack.c.h.b16 %v17
  %v355 = vunpack.c.l.b16 %v18
  %v356 = vunpack.c.h.b16 %v18
  %v357 = vunpack.c.l.b16 %v19
  %v358 = vunpack.c.h.b16 %v19
  %v359 = vunpack.c.l.b16 %v20
  %v360 = vunpack.c.h.b16 %v20
  %v361 = vunpack.c.l.b16 %v21
  %v362 = vunpack.c.h.b16 %v21
  %v363 = vunpack.c.l.b16 %v22
  %v364 = vunpack.c.h.b16 %v22
  %v365 = vunpack.c.l.b16 %v23
  %v366 = vunpack.c.l.b16 %v24
  %v367 = vunpack.c.h.b16 %v24
  %v368 = vunpack.c.l.b16 %v25
  %v369 = vunpack.c.h.b16 %v25
  %v370 = vunpack.c.l.b16 %v26
  %v371 = vunpack.c.h.b16 %v26
  %v372 = vunpack.c.l.b16 %v27
  %v373 = vunpack.c.h.b16 %v27
  %v374 = vunpack.c.l.b16 %v28
  %v375 = vunpack.c.h.b16 %v28
  %v376 = vunpack.c.l.b16 %v29
  %v377 = vunpack.c.h.b16 %v29
  %v378 = vunpack.c.l.b16 %v30
  %v379 = vunpack.c.h.b16 %v30
  %v380 = vunpack.c.l.b16 %v31
  %v381 = vunpack.c.l.b16 %v32
  %v382 = vunpack.c.h.b16 %v32
  %v383 = vunpack.c.l.b16 %v33
  %v384 = vunpack.c.h.b16 %v33
  %v385 = vunpack.c.l.b16 %v34
  %v386 = vunpack.c.h.b16 %v34
  %v387 = vunpack.c.l.b16 %v35
  %v388 = vunpack.c.h.b16 %v35
  %v389 = vunpack.c.l.b16 %v36
  %v390 = vunpack.c.h.b16 %v36
  %v391 = vunpack.c.l.b16 %v37
  %v392 = vunpack.c.h.b16 %v37
  %v393 = vunpack.c.l.b16 %v38
  %v394 = vunpack.c.h.b16 %v38
  %v395 = vunpack.c.l.b16 %v39
  %v396 = vunpack.c.l.b16 %v40
  %v397 = vunpack.c.h.b16 %v40
  %v398 = vunpack.c.l.b16 %v41
  %v399 = vunpack.c.h.b16 %v41
  %v400 = vunpack.c.l.b16 %v42
  %v401 = vunpack.c.h.b16 %v42
  %v402 = vunpack.c.l.b16 %v43
  %v403 = vunpack.c.h.b16 %v43
  %v404 = vunpack.c.l.b16 %v44
  %v405 = vunpack.c.h.b16 %v44
  %v406 = vunpack.c.l.b16 %v45
  %v407 = vunpack.c.h.b16 %v45
  %v408 = vunpack.c.l.b16 %v46
  %v409 = vunpack.c.h.b16 %v46
  %v410 = vunpack.c.l.b16 %v47
  %v411 = vunpack.c.l.b16 %v48
  %v412 = vunpack.c.h.b16 %v48
  %v413 = vunpack.c.l.b16 %v49
  %v414 = vunpack.c.h.b16 %v49
  %v415 = vunpack.c.l.b16 %v50
  %v416 = vunpack.c.h.b16 %v50
  %v417 = vunpack.c.l.b16 %v51
  %v418 = vunpack.c.h.b16 %v51
  %v419 = vunpack.c.l.b16 %v52
  %v420 = vunpack.c.h.b16 %v52
  %v421 = vunpack.c.l.b16 %v53
  %v422 = vunpack.c.h.b16 %v53
  %v423 = vunpack.c.l.b16 %v54
  %v424 = vunpack.c.h.b16 %v54
  %v425 = vunpack.c.l.b16 %v55
  %v426 = vunpack.c.l.b16 %v56
  %v427 = vunpack.c.h.b16 %v56
  %v428 = vunpack.c.l.b16 %v57
  %v429 = vunpack.c.h.b16 %v57
  %v430 = vunpack.c.l.b16 %v58
  %v431 = vunpack.c.h.b16 %v58
  %v432 = vunpack.c.l.b16 %v59
  %v433 = vunpack.c.h.b16 %v59
  %v434 = vunpack.c.l.b16 %v60
  %v435 = vunpack.c.h.b16 %v60
  %v436 = vunpack.c.l.b16 %v61
  %v437 = vunpack.c.h.b16 %v61
  %v438 = vunpack.c.l.b16 %v62
  %v439 = vunpack.c.h.b16 %v62
  %v440 = vunpack.c.l.b16 %v63
  %v441 = vunpack.c.l.b16 %v64
  %v442 = vunpack.c.h.b16 %v64
  %v443 = vunpack.c.l.b16 %v65
  %v444 = vunpack.c.h.b16 %v65
  %v445 = vunpack.c.l.b16 %v66
  %v446 = vunpack.c.h.b16 %v66
  %v447 = vunpack.c.l.b16 %v67
  %v448 = vunpack.c.h.b16 %v67
  %v449 = vunpack.c.l.b16 %v68
  %v450 = vunpack.c.h.b16 %v68
  %v451 = vunpack.c.l.b16 %v69
  %v452 = vunpack.c.h.b16 %v69
  %v453 = vunpack.c.l.b16 %v70
  %v454 = vunpack.c.h.b16 %v70
  %v455 = vunpack.c.l.b16 %v71
  %v456 = vunpack.c.l.b16 %v72
  %v457 = vunpack.c.h.b16 %v72
  %v458 = vunpack.c.l.b16 %v73
  %v459 = vunpack.c.h.b16 %v73
  %v460 = vunpack.c.l.b16 %v74
  %v461 = vunpack.c.h.b16 %v74
  %v462 = vunpack.c.l.b16 %v75
  %v463 = vunpack.c.h.b16 %v75
  %v464 = vunpack.c.l.b16 %v76
  %v465 = vunpack.c.h.b16 %v76
  %v466 = vunpack.c.l.b16 %v77
  %v467 = vunpack.c.h.b16 %v77
  %v468 = vunpack.c.l.b16 %v78
  %v469 = vunpack.c.h.b16 %v78
  %v470 = vunpack.c.l.b16 %v79
  %v471 = vunpack.c.l.b16 %v80
  %v472 = vunpack.c.h.b16 %v80
  %v473 = vunpack.c.l.b16 %v81
  %v474 = vunpack.c.h.b16 %v81
  %v475 = vunpack.c.l.b16 %v82
  %v476 = vunpack.c.h.b16 %v82
  %v477 = vunpack.c.l.b16 %v83
  %v478 = vunpack.c.h.b16 %v83
  %v479 = vunpack.c.l.b16 %v84
  %v480 = vunpack.c.h.b16 %v84
  %v481 = vunpack.c.l.b16 %v85
  %v482 = vunpack.c.h.b16 %v85
  %v483 = vunpack.c.l.b16 %v86
  %v484 = vunpack.c.h.b16 %v86
  %v485 = vunpack.c.l.b16 %v87
  %v486 = vunpack.c.l.b16 %v88
  %v487 = vunpack.c.h.b16 %v88
  %v488 = vunpack.c.l.b16 %v89
  %v489 = vunpack.c.h.b16 %v89
  %v490 = vunpack.c.l.b16 %v90
  %v491 = vunpack.c.h.b16 %v90
  %v492 = vunpack.c.l.b16 %v91
  %v493 = vunpack.c.h.b16 %v91
  %v494 = vunpack.c.l.b16 %v92
  %v495 = vunpack.c.h.b16 %v92
  %v496 = vunpack.c.l.b16 %v93
  %v497 = vunpack.c.h.b16 %v93
  %v498 = vunpack.c.l.b16 %v94
  %v499 = vunpack.c.h.b16 %v94
  %v500 = vunpack.c.l.b16 %v95
  %v501 = vunpack.c.l.b16 %v96
  %v502 = vunpack.c.h.b16 %v96
  %v503 = vunpack.c.l.b16 %v97
  %v504 = vunpack.c.h.b16 %v97
  %v505 = vunpack.c.l.b16 %v98
  %v506 = vunpack.c.h.b16 %v98
  %v507 = vunpack.c.l.b16 %v99
  %v508 = vunpack.c.h.b16 %v99
  %v509 = vunpack.c.l.b16 %v100
  %v510 = vunpack.c.h.b16 %v100
  %v511 = vunpack.c.l.b16 %v101
  %v512 = vunpack.c.h.b16 %v101
  %v513 = vunpack.c.l.b16 %v102
  %v514 = vunpack.c.h.b16 %v102
  %v515 = vunpack.c.l.b16 %v103
  %v516 = vunpack.c.l.b16 %v104
  %v517 = vunpack.c.h.b16 %v104
  %v518 = vunpack.c.l.b16 %v105
  %v519 = vunpack.c.h.b16 %v105
  %v520 = vunpack.c.l.b16 %v106
  %v521 = vunpack.c.h.b16 %v106
  %v522 = vunpack.c.l.b16 %v107
  %v523 = vunpack.c.h.b16 %v107
  %v524 = vunpack.c.l.b16 %v108
  %v525 = vunpack.c.h.b16 %v108
  %v526 = vunpack.c.l.b16 %v109
  %v527 = vunpack.c.h.b16 %v109
  %v528 = vunpack.c.l.b16 %v110
  %v529 = vunpack.c.h.b16 %v110
  %v530 = vunpack.c.l.b16 %v111
  %v531 = vunpack.c.l.b16 %v112
  %v532 = vunpack.c.h.b16 %v112
  %v533 = vunpack.c.l.b16 %v113
  %v534 = vunpack.c.h.b16 %v113
  %v535 = vunpack.c.l.b16 %v114
  %v536 = vunpack.c.h.b16 %v114
  %v537 = vunpack.c.l.b16 %v115
  %v538 = vunpack.c.h.b16 %v115
  %v539 = vunpack.c.l.b16 %v116
  %v540 = vunpack.c.h.b16 %v116
  %v541 = vunpack.c.l.b16 %v117
  %v542 = vunpack.c.h.b16 %v117
  %v543 = vunpack.c.l.b16 %v118
  %v544 = vunpack.c.h.b16 %v118
  %v545 = vunpack.c.l.b16 %v119
  %v546 = vunpack.c.l.b16 %v120
  %v547 = vunpack.c.h.b16 %v120
  %v548 = vunpack.c.l.b16 %v121
  %v549 = vunpack.c.h.b16 %v121
  %v550 = vunpack.c.l.b16 %v122
  %v551 = vunpack.c.h.b16 %v122
  %v552 = vunpack.c.l.b16 %v123
  %v553 = vunpack.c.h.b16 %v123
  %v554 = vunpack.c.l.b16 %v124
  %v555 = vunpack.c.h.b16 %v124
  %v556 = vunpack.c.l.b16 %v125
  %v557 = vunpack.c.h.b16 %v125
  %v558 = vunpack.c.l.b16 %v126
  %v559 = vunpack.c.h.b16 %v126
  %v560 = vunpack.c.l.b16 %v127
  %v561 = vunpack.c.l.b16 %v128
  %v562 = vunpack.c.h.b16 %v128
  %v563 = vunpack.c.l.b16 %v129
  %v564 = vunpack.c.h.b16 %v129
  %v565 = vunpack.c.l.b16 %v130
  %v566 = vunpack.c.h.b16 %v130
  %v567 = vunpack.c.l.b16 %v131
  %v568 = vunpack.c.h.b16 %v131
  %v569 = vunpack.c.l.b16 %v132
  %v570 = vunpack.c.h.b16 %v132
  %v571 = vunpack.c.l.b16 %v133
  %v572 = vunpack.c.h.b16 %v133
  %v573 = vunpack.c.l.b16 %v134
  %v574 = vunpack.c.h.b16 %v134
  %v575 = vunpack.c.l.b16 %v135
  %v576 = vunpack.c.l.b16 %v136
  %v577 = vunpack.c.h.b16 %v136
  %v578 = vunpack.c.l.b16 %v137
  %v579 = vunpack.c.h.b16 %v137
  %v580 = vunpack.c.l.b16 %v138
  %v581 = vunpack.c.h.b16 %v138
  %v582 = vunpack.c.l.b16 %v139
  %v583 = vunpack.c.h.b16 %v139
  %v584 = vunpack.c.l.b16 %v140
  %v585 = vunpack.c.h.b16 %v140
  %v586 = vunpack.c.l.b16 %v141
  %v587 = vunpack.c.h.b16 %v141
  %v588 = vunpack.c.l.b16 %v142
  %v589 = vunpack.c.h.b16 %v142
  %v590 = vunpack.c.l.b16 %v143
  %v591 = vpack.c.b16 %v366, %v351
  %v592 = vpack.c.b16 %v367, %v352
  %v593 = vpack.c.b16 %v368, %v353
  %v594 = vpack.c.b16 %v369, %v354
  %v595 = vpack.c.b16 %v370, %v355
  %v596 = vpack.c.b16 %v371, %v356
  %v597 = vpack.c.b16 %v372, %v357
  %v598 = vpack.c.b16 %v373, %v358
  %v599 = vpack.c.b16 %v374, %v359
  %v600 = vpack.c.b16 %v375, %v360
  %v601 = vpack.c.b16 %v376, %v361
  %v602 = vpack.c.b16 %v377, %v362
  %v603 = vpack.c.b16 %v378, %v363
  %v604 = vpack.c.b16 %v379, %v364
  %v605 = vpack.c.b16 %v380, %v365
  %v606 = vpack.c.b16 %v396, %v381
  %v607 = vpack.c.b16 %v397, %v382
  %v608 = vpack.c.b16 %v398, %v383
  %v609 = vpack.c.b16 %v399, %v384
  %v610 = vpack.c.b16 %v400, %v385
  %v611 = vpack.c.b16 %v401, %v386
  %v612 = vpack.c.b16 %v402, %v387
  %v613 = vpack.c.b16 %v403, %v388
  %v614 = vpack.c.b16 %v404, %v389
  %v615 = vpack.c.b16 %v405, %v390
  %v616 = vpack.c.b16 %v406, %v391
  %v617 = vpack.c.b16 %v407, %v392
  %v618 = vpack.c.b16 %v408, %v393
  %v619 = vpack.c.b16 %v409, %v394
  %v620 = vpack.c.b16 %v410, %v395
  %v621 = vpack.c.b16 %v426, %v411
  %v622 = vpack.c.b16 %v427, %v412
  %v623 = vpack.c.b16 %v428, %v413
  %v624 = vpack.c.b16 %v429, %v414
  %v625 = vpack.c.b16 %v430, %v415
  %v626 = vpack.c.b16 %v431, %v416
  %v627 = vpack.c.b16 %v432, %v417
  %v628 = vpack.c.b16 %v433, %v418
  %v629 = vpack.c.b16 %v434, %v419
  %v630 = vpack.c.b16 %v435, %v420
  %v631 = vpack.c.b16 %v436, %v421
  %v632 = vpack.c.b16 %v437, %v422
  %v633 = vpack.c.b16 %v438, %v423
  %v634 = vpack.c.b16 %v439, %v424
  %v635 = vpack.c.b16 %v440, %v425
  %v636 = vpack.c.b16 %v456, %v441
  %v637 = vpack.c.b16 %v457, %v442
  %v638 = vpack.c.b16 %v458, %v443
  %v639 = vpack.c.b16 %v459, %v444
  %v640 = vpack.c.b16 %v460, %v445
  %v641 = vpack.c.b16 %v461, %v446
  %v642 = vpack.c.b16 %v462, %v447
  %v643 = vpack.c.b16 %v463, %v448
  %v644 = vpack.c.b16 %v464, %v449
  %v645 = vpack.c.b16 %v465, %v450
  %v646 = vpack.c.b16 %v466, %v451
  %v647 = vpack.c.b16 %v467, %v452
  %v648 = vpack.c.b16 %v468, %v453
  %v649 = vpack.c.b16 %v469, %v454
  %v650 = vpack.c.b16 %v470, %v455
  %v651 = vpack.c.b16 %v486, %v471
  %v652 = vpack.c.b16 %v487, %v472
  %v653 = vpack.c.b16 %v488, %v473
  %v654 = vpack.c.b16 %v489, %v474
  %v655 = vpack.c.b16 %v490, %v475
  %v656 = vpack.c.b16 %v491, %v476
  %v657 = vpack.c.b16 %v492, %v477
  %v658 = vpack.c.b16 %v493, %v478
  %v659 = vpack.c.b16 %v494, %v479
  %v660 = vpack.c.b16 %v495, %v480
  %v661 = vpack.c.b16 %v496, %v481
  %v662 = vpack.c.b16 %v497, %v482
  %v663 = vpack.c.b16 %v498, %v483
  %v664 = vpack.c.b16 %v499, %v484
  %v665 = vpack.c.b16 %v500, %v485
  %v666 = vpack.c.b16 %v516, %v501
  %v667 = vpack.c.b16 %v517, %v502
  %v668 = vpack.c.b16 %v518, %v503
  %v669 = vpack.c.b16 %v519, %v504
  %v670 = vpack.c.b16 %v520, %v505
  %v671 = vpack.c.b16 %v521, %v506
  %v672 = vpack.c.b16 %v522, %v507
  %v673 = vpack.c.b16 %v523, %v508
  %v674 = vpack.c.b16 %v524, %v509
  %v675 = vpack.c.b16 %v525, %v510
  %v676 = vpack.c.b16 %v526, %v511
  %v677 = vpack.c.b16 %v527, %v512
  %v678 = vpack.c.b16 %v528, %v513
  %v679 = vpack.c.b16 %v529, %v514
  %v680 = vpack.c.b16 %v530, %v515
  %v681 = vpack.c.b16 %v546, %v531
  %v682 = vpack.c.b16 %v547, %v532
  %v683 = vpack.c.b16 %v548, %v533
  %v684 = vpack.c.b16 %v549, %v534
  %v685 = vpack.c.b16 %v550, %v535
  %v686 = vpack.c.b16 %v551, %v536
  %v687 = vpack.c.b16 %v552, %v537
  %v688 = vpack.c.b16 %v553, %v538
  %v689 = vpack.c.b16 %v554, %v539
  %v690 = vpack.c.b16 %v555, %v540
  %v691 = vpack.c.b16 %v556, %v541
  %v692 = vpack.c.b16 %v557, %v542
  %v693 = vpack.c.b16 %v558, %v543
  %v694 = vpack.c.b16 %v559, %v544
  %v695 = vpack.c.b16 %v560, %v545
  %v696 = vpack.c.b16 %v576, %v561
  %v697 = vpack.c.b16 %v577, %v562
  %v698 = vpack.c.b16 %v578, %v563
  %v699 = vpack.c.b16 %v579, %v564
  %v700 = vpack.c.b16 %v580, %v565
  %v701 = vpack.c.b16 %v581, %v566
  %v702 = vpack.c.b16 %v582, %v567
  %v703 = vpack.c.b16 %v583, %v568
  %v704 = vpack.c.b16 %v584, %v569
  %v705 = vpack.c.b16 %v585, %v570
  %v706 = vpack.c.b16 %v586, %v571
  %v707 = vpack.c.b16 %v587, %v572
  %v708 = vpack.c.b16 %v588, %v573
  %v709 = vpack.c.b16 %v589, %v574
  %v710 = vpack.c.b16 %v590, %v575
  %831 = vmatprep.subr.bf16.mxu0 %v697
  %832 = vmatpush1.bf16.msra.mxu0 %v696
  %833 = vmatprep.subr.bf16.mxu0 %v682
  %834 = vmatpush1.bf16.msra.mxu0 %v681
  %835 = vmatprep.subr.bf16.mxu0 %v667
  %836 = vmatpush1.bf16.msra.mxu0 %v666
  %837 = vmatprep.subr.bf16.mxu0 %v652
  %838 = vmatpush1.bf16.msra.mxu0 %v651
  %839 = vmatprep.subr.bf16.mxu0 %v637
  %840 = vmatpush1.bf16.msra.mxu0 %v636
  %841 = vmatprep.subr.bf16.mxu0 %v622
  %842 = vmatpush1.bf16.msra.mxu0 %v621
  %843 = vmatprep.subr.bf16.mxu0 %v607
  %844 = vmatpush1.bf16.msra.mxu0 %v606
  %845 = vmatprep.subr.bf16.mxu0 %v592
  %846 = vmatpush1.bf16.msra.mxu0 %v591
  %847 = vmatprep.subr.bf16.mxu0 0
  %848 = vmatpush2.bf16.msra.mxu0 0
  %849 = vmatprep.subr.bf16.mxu0 0
  %850 = vmatpush2.bf16.msra.mxu0 0
  %851 = vmatprep.subr.bf16.mxu0 0
  %852 = vmatpush2.bf16.msra.mxu0 0
  %853 = vmatprep.subr.bf16.mxu0 0
  %854 = vmatpush2.bf16.msra.mxu0 0
  %855 = vmatprep.subr.bf16.mxu0 0
  %856 = vmatpush2.bf16.msra.mxu0 0
  %857 = vmatprep.subr.bf16.mxu0 0
  %858 = vmatpush2.bf16.msra.mxu0 0
  %859 = vmatprep.subr.bf16.mxu0 0
  %860 = vmatpush2.bf16.msra.mxu0 0
  %861 = vmatprep.subr.bf16.mxu0 0
  %862 = vmatpush2.bf16.msra.mxu0 0
  %863 = vmatprep.mubr.bf16.mxu0 0
  %864 = vmatmul.mubr.bf16.gmra.mxu0 %v15
  %v865 = vpop.f32.mrf.mxu0
  %v866 = vadd.f32 %v151, %v865
  %v867 = vpop.f32.mrf.mxu0
  %v868 = vadd.f32 %v155, %v867
  %v869 = vpop.f32.mrf.mxu0
  %v870 = vpop.f32.mrf.mxu0
  %871 = vdwg.mxu0
  %872 = vmatprep.subr.bf16.mxu0 %v699
  %873 = vmatpush1.bf16.msra.mxu0 %v698
  %874 = vmatprep.subr.bf16.mxu0 %v684
  %875 = vmatpush1.bf16.msra.mxu0 %v683
  %876 = vmatprep.subr.bf16.mxu0 %v669
  %877 = vmatpush1.bf16.msra.mxu0 %v668
  %878 = vmatprep.subr.bf16.mxu0 %v654
  %879 = vmatpush1.bf16.msra.mxu0 %v653
  %880 = vmatprep.subr.bf16.mxu0 %v639
  %881 = vmatpush1.bf16.msra.mxu0 %v638
  %882 = vmatprep.subr.bf16.mxu0 %v624
  %883 = vmatpush1.bf16.msra.mxu0 %v623
  %884 = vmatprep.subr.bf16.mxu0 %v609
  %885 = vmatpush1.bf16.msra.mxu0 %v608
  %886 = vmatprep.subr.bf16.mxu0 %v594
  %887 = vmatpush1.bf16.msra.mxu0 %v593
  %888 = vmatprep.subr.bf16.mxu0 0
  %889 = vmatpush2.bf16.msra.mxu0 0
  %890 = vmatprep.subr.bf16.mxu0 0
  %891 = vmatpush2.bf16.msra.mxu0 0
  %892 = vmatprep.subr.bf16.mxu0 0
  %893 = vmatpush2.bf16.msra.mxu0 0
  %894 = vmatprep.subr.bf16.mxu0 0
  %895 = vmatpush2.bf16.msra.mxu0 0
  %896 = vmatprep.subr.bf16.mxu0 0
  %897 = vmatpush2.bf16.msra.mxu0 0
  %898 = vmatprep.subr.bf16.mxu0 0
  %899 = vmatpush2.bf16.msra.mxu0 0
  %900 = vmatprep.subr.bf16.mxu0 0
  %901 = vmatpush2.bf16.msra.mxu0 0
  %902 = vmatprep.subr.bf16.mxu0 0
  %903 = vmatpush2.bf16.msra.mxu0 0
  %904 = vmatprep.mubr.bf16.mxu0 0
  %905 = vmatmul.mubr.bf16.gmra.mxu0 %v15
  %v906 = vpop.f32.mrf.mxu0
  %v907 = vadd.f32 %v159, %v906
  %v908 = vpop.f32.mrf.mxu0
  %v909 = vadd.f32 %v163, %v908
  %v910 = vpop.f32.mrf.mxu0
  %v911 = vpop.f32.mrf.mxu0
  %912 = vdwg.mxu0
  %913 = vmatprep.subr.bf16.mxu0 %v701
  %914 = vmatpush1.bf16.msra.mxu0 %v700
  %915 = vmatprep.subr.bf16.mxu0 %v686
  %916 = vmatpush1.bf16.msra.mxu0 %v685
  %917 = vmatprep.subr.bf16.mxu0 %v671
  %918 = vmatpush1.bf16.msra.mxu0 %v670
  %919 = vmatprep.subr.bf16.mxu0 %v656
  %920 = vmatpush1.bf16.msra.mxu0 %v655
  %921 = vmatprep.subr.bf16.mxu0 %v641
  %922 = vmatpush1.bf16.msra.mxu0 %v640
  %923 = vmatprep.subr.bf16.mxu0 %v626
  %924 = vmatpush1.bf16.msra.mxu0 %v625
  %925 = vmatprep.subr.bf16.mxu0 %v611
  %926 = vmatpush1.bf16.msra.mxu0 %v610
  %927 = vmatprep.subr.bf16.mxu0 %v596
  %928 = vmatpush1.bf16.msra.mxu0 %v595
  %929 = vmatprep.subr.bf16.mxu0 0
  %930 = vmatpush2.bf16.msra.mxu0 0
  %931 = vmatprep.subr.bf16.mxu0 0
  %932 = vmatpush2.bf16.msra.mxu0 0
  %933 = vmatprep.subr.bf16.mxu0 0
  %934 = vmatpush2.bf16.msra.mxu0 0
  %935 = vmatprep.subr.bf16.mxu0 0
  %936 = vmatpush2.bf16.msra.mxu0 0
  %937 = vmatprep.subr.bf16.mxu0 0
  %938 = vmatpush2.bf16.msra.mxu0 0
  %939 = vmatprep.subr.bf16.mxu0 0
  %940 = vmatpush2.bf16.msra.mxu0 0
  %941 = vmatprep.subr.bf16.mxu0 0
  %942 = vmatpush2.bf16.msra.mxu0 0
  %943 = vmatprep.subr.bf16.mxu0 0
  %944 = vmatpush2.bf16.msra.mxu0 0
  %945 = vmatprep.mubr.bf16.mxu0 0
  %946 = vmatmul.mubr.bf16.gmra.mxu0 %v15
  %v947 = vpop.f32.mrf.mxu0
  %v948 = vadd.f32 %v167, %v947
  %v949 = vpop.f32.mrf.mxu0
  %v950 = vadd.f32 %v171, %v949
  %v951 = vpop.f32.mrf.mxu0
  %v952 = vpop.f32.mrf.mxu0
  %953 = vdwg.mxu0
  %954 = vmatprep.subr.bf16.mxu0 %v703
  %955 = vmatpush1.bf16.msra.mxu0 %v702
  %956 = vmatprep.subr.bf16.mxu0 %v688
  %957 = vmatpush1.bf16.msra.mxu0 %v687
  %958 = vmatprep.subr.bf16.mxu0 %v673
  %959 = vmatpush1.bf16.msra.mxu0 %v672
  %960 = vmatprep.subr.bf16.mxu0 %v658
  %961 = vmatpush1.bf16.msra.mxu0 %v657
  %962 = vmatprep.subr.bf16.mxu0 %v643
  %963 = vmatpush1.bf16.msra.mxu0 %v642
  %964 = vmatprep.subr.bf16.mxu0 %v628
  %965 = vmatpush1.bf16.msra.mxu0 %v627
  %966 = vmatprep.subr.bf16.mxu0 %v613
  %967 = vmatpush1.bf16.msra.mxu0 %v612
  %968 = vmatprep.subr.bf16.mxu0 %v598
  %969 = vmatpush1.bf16.msra.mxu0 %v597
  %970 = vmatprep.subr.bf16.mxu0 0
  %971 = vmatpush2.bf16.msra.mxu0 0
  %972 = vmatprep.subr.bf16.mxu0 0
  %973 = vmatpush2.bf16.msra.mxu0 0
  %974 = vmatprep.subr.bf16.mxu0 0
  %975 = vmatpush2.bf16.msra.mxu0 0
  %976 = vmatprep.subr.bf16.mxu0 0
  %977 = vmatpush2.bf16.msra.mxu0 0
  %978 = vmatprep.subr.bf16.mxu0 0
  %979 = vmatpush2.bf16.msra.mxu0 0
  %980 = vmatprep.subr.bf16.mxu0 0
  %981 = vmatpush2.bf16.msra.mxu0 0
  %982 = vmatprep.subr.bf16.mxu0 0
  %983 = vmatpush2.bf16.msra.mxu0 0
  %984 = vmatprep.subr.bf16.mxu0 0
  %985 = vmatpush2.bf16.msra.mxu0 0
  %986 = vmatprep.mubr.bf16.mxu0 0
  %987 = vmatmul.mubr.bf16.gmra.mxu0 %v15
  %v988 = vpop.f32.mrf.mxu0
  %v989 = vadd.f32 %v175, %v988
  %v990 = vpop.f32.mrf.mxu0
  %v991 = vadd.f32 %v179, %v990
  %v992 = vpop.f32.mrf.mxu0
  %v993 = vpop.f32.mrf.mxu0
  %994 = vdwg.mxu0
  %995 = vmatprep.subr.bf16.mxu0 %v705
  %996 = vmatpush1.bf16.msra.mxu0 %v704
  %997 = vmatprep.subr.bf16.mxu0 %v690
  %998 = vmatpush1.bf16.msra.mxu0 %v689
  %999 = vmatprep.subr.bf16.mxu0 %v675
  %1000 = vmatpush1.bf16.msra.mxu0 %v674
  %1001 = vmatprep.subr.bf16.mxu0 %v660
  %1002 = vmatpush1.bf16.msra.mxu0 %v659
  %1003 = vmatprep.subr.bf16.mxu0 %v645
  %1004 = vmatpush1.bf16.msra.mxu0 %v644
  %1005 = vmatprep.subr.bf16.mxu0 %v630
  %1006 = vmatpush1.bf16.msra.mxu0 %v629
  %1007 = vmatprep.subr.bf16.mxu0 %v615
  %1008 = vmatpush1.bf16.msra.mxu0 %v614
  %1009 = vmatprep.subr.bf16.mxu0 %v600
  %1010 = vmatpush1.bf16.msra.mxu0 %v599
  %1011 = vmatprep.subr.bf16.mxu0 0
  %1012 = vmatpush2.bf16.msra.mxu0 0
  %1013 = vmatprep.subr.bf16.mxu0 0
  %1014 = vmatpush2.bf16.msra.mxu0 0
  %1015 = vmatprep.subr.bf16.mxu0 0
  %1016 = vmatpush2.bf16.msra.mxu0 0
  %1017 = vmatprep.subr.bf16.mxu0 0
  %1018 = vmatpush2.bf16.msra.mxu0 0
  %1019 = vmatprep.subr.bf16.mxu0 0
  %1020 = vmatpush2.bf16.msra.mxu0 0
  %1021 = vmatprep.subr.bf16.mxu0 0
  %1022 = vmatpush2.bf16.msra.mxu0 0
  %1023 = vmatprep.subr.bf16.mxu0 0
  %1024 = vmatpush2.bf16.msra.mxu0 0
  %1025 = vmatprep.subr.bf16.mxu0 0
  %1026 = vmatpush2.bf16.msra.mxu0 0
  %1027 = vmatprep.mubr.bf16.mxu0 0
  %1028 = vmatmul.mubr.bf16.gmra.mxu0 %v15
  %v1029 = vpop.f32.mrf.mxu0
  %v1030 = vadd.f32 %v183, %v1029
  %v1031 = vpop.f32.mrf.mxu0
  %v1032 = vadd.f32 %v187, %v1031
  %v1033 = vpop.f32.mrf.mxu0
  %v1034 = vpop.f32.mrf.mxu0
  %1035 = vdwg.mxu0
  %1036 = vmatprep.subr.bf16.mxu0 %v707
  %1037 = vmatpush1.bf16.msra.mxu0 %v706
  %1038 = vmatprep.subr.bf16.mxu0 %v692
  %1039 = vmatpush1.bf16.msra.mxu0 %v691
  %1040 = vmatprep.subr.bf16.mxu0 %v677
  %1041 = vmatpush1.bf16.msra.mxu0 %v676
  %1042 = vmatprep.subr.bf16.mxu0 %v662
  %1043 = vmatpush1.bf16.msra.mxu0 %v661
  %1044 = vmatprep.subr.bf16.mxu0 %v647
  %1045 = vmatpush1.bf16.msra.mxu0 %v646
  %1046 = vmatprep.subr.bf16.mxu0 %v632
  %1047 = vmatpush1.bf16.msra.mxu0 %v631
  %1048 = vmatprep.subr.bf16.mxu0 %v617
  %1049 = vmatpush1.bf16.msra.mxu0 %v616
  %1050 = vmatprep.subr.bf16.mxu0 %v602
  %1051 = vmatpush1.bf16.msra.mxu0 %v601
  %1052 = vmatprep.subr.bf16.mxu0 0
  %1053 = vmatpush2.bf16.msra.mxu0 0
  %1054 = vmatprep.subr.bf16.mxu0 0
  %1055 = vmatpush2.bf16.msra.mxu0 0
  %1056 = vmatprep.subr.bf16.mxu0 0
  %1057 = vmatpush2.bf16.msra.mxu0 0
  %1058 = vmatprep.subr.bf16.mxu0 0
  %1059 = vmatpush2.bf16.msra.mxu0 0
  %1060 = vmatprep.subr.bf16.mxu0 0
  %1061 = vmatpush2.bf16.msra.mxu0 0
  %1062 = vmatprep.subr.bf16.mxu0 0
  %1063 = vmatpush2.bf16.msra.mxu0 0
  %1064 = vmatprep.subr.bf16.mxu0 0
  %1065 = vmatpush2.bf16.msra.mxu0 0
  %1066 = vmatprep.subr.bf16.mxu0 0
  %1067 = vmatpush2.bf16.msra.mxu0 0
  %1068 = vmatprep.mubr.bf16.mxu0 0
  %1069 = vmatmul.mubr.bf16.gmra.mxu0 %v15
  %v1070 = vpop.f32.mrf.mxu0
  %v1071 = vadd.f32 %v191, %v1070
  %v1072 = vpop.f32.mrf.mxu0
  %v1073 = vadd.f32 %v195, %v1072
  %v1074 = vpop.f32.mrf.mxu0
  %v1075 = vpop.f32.mrf.mxu0
  %1076 = vdwg.mxu0
  %1077 = vmatprep.subr.bf16.mxu0 %v709
  %1078 = vmatpush1.bf16.msra.mxu0 %v708
  %1079 = vmatprep.subr.bf16.mxu0 %v694
  %1080 = vmatpush1.bf16.msra.mxu0 %v693
  %1081 = vmatprep.subr.bf16.mxu0 %v679
  %1082 = vmatpush1.bf16.msra.mxu0 %v678
  %1083 = vmatprep.subr.bf16.mxu0 %v664
  %1084 = vmatpush1.bf16.msra.mxu0 %v663
  %1085 = vmatprep.subr.bf16.mxu0 %v649
  %1086 = vmatpush1.bf16.msra.mxu0 %v648
  %1087 = vmatprep.subr.bf16.mxu0 %v634
  %1088 = vmatpush1.bf16.msra.mxu0 %v633
  %1089 = vmatprep.subr.bf16.mxu0 %v619
  %1090 = vmatpush1.bf16.msra.mxu0 %v618
  %1091 = vmatprep.subr.bf16.mxu0 %v604
  %1092 = vmatpush1.bf16.msra.mxu0 %v603
  %1093 = vmatprep.subr.bf16.mxu0 0
  %1094 = vmatpush2.bf16.msra.mxu0 0
  %1095 = vmatprep.subr.bf16.mxu0 0
  %1096 = vmatpush2.bf16.msra.mxu0 0
  %1097 = vmatprep.subr.bf16.mxu0 0
  %1098 = vmatpush2.bf16.msra.mxu0 0
  %1099 = vmatprep.subr.bf16.mxu0 0
  %1100 = vmatpush2.bf16.msra.mxu0 0
  %1101 = vmatprep.subr.bf16.mxu0 0
  %1102 = vmatpush2.bf16.msra.mxu0 0
  %1103 = vmatprep.subr.bf16.mxu0 0
  %1104 = vmatpush2.bf16.msra.mxu0 0
  %1105 = vmatprep.subr.bf16.mxu0 0
  %1106 = vmatpush2.bf16.msra.mxu0 0
  %1107 = vmatprep.subr.bf16.mxu0 0
  %1108 = vmatpush2.bf16.msra.mxu0 0
  %1109 = vmatprep.mubr.bf16.mxu0 0
  %1110 = vmatmul.mubr.bf16.gmra.mxu0 %v15
  %v1111 = vpop.f32.mrf.mxu0
  %v1112 = vadd.f32 %v199, %v1111
  %v1113 = vpop.f32.mrf.mxu0
  %v1114 = vadd.f32 %v203, %v1113
  %v1115 = vpop.f32.mrf.mxu0
  %v1116 = vpop.f32.mrf.mxu0
  %1117 = vdwg.mxu0
  %1118 = vmatprep.subr.bf16.mxu0 0
  %1119 = vmatpush1.bf16.msra.mxu0 %v710
  %1120 = vmatprep.subr.bf16.mxu0 0
  %1121 = vmatpush1.bf16.msra.mxu0 %v695
  %1122 = vmatprep.subr.bf16.mxu0 0
  %1123 = vmatpush1.bf16.msra.mxu0 %v680
  %1124 = vmatprep.subr.bf16.mxu0 0
  %1125 = vmatpush1.bf16.msra.mxu0 %v665
  %1126 = vmatprep.subr.bf16.mxu0 0
  %1127 = vmatpush1.bf16.msra.mxu0 %v650
  %1128 = vmatprep.subr.bf16.mxu0 0
  %1129 = vmatpush1.bf16.msra.mxu0 %v635
  %1130 = vmatprep.subr.bf16.mxu0 0
  %1131 = vmatpush1.bf16.msra.mxu0 %v620
  %1132 = vmatprep.subr.bf16.mxu0 0
  %1133 = vmatpush1.bf16.msra.mxu0 %v605
  %1134 = vmatprep.subr.bf16.mxu0 0
  %1135 = vmatpush2.bf16.msra.mxu0 0
  %1136 = vmatprep.subr.bf16.mxu0 0
  %1137 = vmatpush2.bf16.msra.mxu0 0
  %1138 = vmatprep.subr.bf16.mxu0 0
  %1139 = vmatpush2.bf16.msra.mxu0 0
  %1140 = vmatprep.subr.bf16.mxu0 0
  %1141 = vmatpush2.bf16.msra.mxu0 0
  %1142 = vmatprep.subr.bf16.mxu0 0
  %1143 = vmatpush2.bf16.msra.mxu0 0
  %1144 = vmatprep.subr.bf16.mxu0 0
  %1145 = vmatpush2.bf16.msra.mxu0 0
  %1146 = vmatprep.subr.bf16.mxu0 0
  %1147 = vmatpush2.bf16.msra.mxu0 0
  %1148 = vmatprep.subr.bf16.mxu0 0
  %1149 = vmatpush2.bf16.msra.mxu0 0
  %1150 = vmatprep.mubr.bf16.mxu0 0
  %1151 = vmatmul.mubr.bf16.gmra.mxu0 %v15
  %v1152 = vpop.f32.mrf.mxu0
  %v1153 = vadd.f32 %v207, %v1152
  %v1154 = vpop.f32.mrf.mxu0
  %v1155 = vpop.f32.mrf.mxu0
  %v1156 = vpop.f32.mrf.mxu0
  %1157 = vdwg.mxu0
  %v1158 = vmax.f32 %v866, 0.0
  %v1159 = vmax.f32 %v868, 0.0
  %v1160 = vmax.f32 %v907, 0.0
  %v1161 = vmax.f32 %v909, 0.0
  %v1162 = vmax.f32 %v948, 0.0
  %v1163 = vmax.f32 %v950, 0.0
  %v1164 = vmax.f32 %v989, 0.0
  %v1165 = vmax.f32 %v991, 0.0
  %v1166 = vmax.f32 %v1030, 0.0
  %v1167 = vmax.f32 %v1032, 0.0
  %v1168 = vmax.f32 %v1071, 0.0
  %v1169 = vmax.f32 %v1073, 0.0
  %v1170 = vmax.f32 %v1112, 0.0
  %v1171 = vmax.f32 %v1114, 0.0
  %v1172 = vmax.f32 %v1153, 0.0
  %1173 = vst [vmem:[%s3] sm:$0xff] %v1158
  %1174 = vst [vmem:[%s3 + $0x8] sm:$0xff] %v1159
  %1175 = vst [vmem:[%s3 + $0x10] sm:$0xff] %v1160
  %1176 = vst [vmem:[%s3 + $0x18] sm:$0xff] %v1161
  %1177 = vst [vmem:[%s3 + $0x20] sm:$0xff] %v1162
  %1178 = vst [vmem:[%s3 + $0x28] sm:$0xff] %v1163
  %1179 = vst [vmem:[%s3 + $0x30] sm:$0xff] %v1164
  %1180 = vst [vmem:[%s3 + $0x38] sm:$0xff] %v1165
  %1181 = vst [vmem:[%s3 + $0x40] sm:$0xff] %v1166
  %1182 = vst [vmem:[%s3 + $0x48] sm:$0xff] %v1167
  %1183 = vst [vmem:[%s3 + $0x50] sm:$0xff] %v1168
  %1184 = vst [vmem:[%s3 + $0x58] sm:$0xff] %v1169
  %1185 = vst [vmem:[%s3 + $0x60] sm:$0xff] %v1170
  %1186 = vst [vmem:[%s3 + $0x68] sm:$0xff] %v1171
  %vm1187 = vcmask 523264
  %1188 = vst.msk [vmem:[%s3 + $0x70] sm:$0xff] %vm1187, %v1172
  // Predicated region
  $region14: #{forward.12} parent=0 // pred_check
    _
  $region15: #{forward.12} parent=0 // pred_check_branch
    %1190 = sbr.rel (0) target = $region17
  $region16: #{forward.12} parent=0 // pred_region
    _
  $region17: #{forward.12} parent=0 // pred_fallthru
    _
  // Predicated region
  $region18: #{forward.12} parent=0 // pred_check
    _
  $region19: #{forward.12} parent=0 // pred_check_branch
    %1192 = sbr.rel (0) target = $region21
  $region20: #{forward.12} parent=0 // pred_region
    _
  $region21: #{forward.12} parent=0 // pred_fallthru
    _

// kernel: forward.13
$region0: #{forward.13}
  #allocation0 [shape = 'u32[]', space=smem, size = 0x4, offset = 0x4, fixed_abs, tag = 'smem constant byte address 0x4 - core index']
  #allocation1 [shape = 'u32[144,128]{1,0:T(1,128)}', space=vmem, size = 0x12000, scoped, tag = 'internal scratch']
  %s0 = inlined_call_operand.vmem [shape: bf16[64,288], index: 0, kind: input, shape index: {}]
  %s1 = inlined_call_operand.vmem [shape: bf16[288,768], index: 1, kind: input, shape index: {}]
  %s2 = inlined_call_operand.vmem [shape: f32[64,1], index: 2, kind: input, shape index: {}]
  %s3 = inlined_call_operand.vmem [shape: f32[64,768], index: 3, kind: output, shape index: {}]
  %s4 = sld [smem:[#allocation0]]
  $region22: #{forward.13} parent=0
    _
  %s6 = ssub.s32 1, %s4
  %s7 = scalar_select 0, %s6, %s4
  // Predicated region
  $region2: #{forward.13} parent=0 // pred_check
    _
  $region3: #{forward.13} parent=0 // pred_check_branch
    %9 = sbr.rel (0) target = $region5
  $region4: #{forward.13} parent=0 // pred_region
    _
  $region5: #{forward.13} parent=0 // pred_fallthru
    _
  // Predicated region
  $region6: #{forward.13} parent=0 // pred_check
    _
  $region7: #{forward.13} parent=0 // pred_check_branch
    %11 = sbr.rel (0) target = $region9
  $region8: #{forward.13} parent=0 // pred_region
    _
  $region9: #{forward.13} parent=0 // pred_fallthru
    _
  // Predicated region
  $region10: #{forward.13} parent=0 // pred_check
    _
  $region11: #{forward.13} parent=0 // pred_check_branch
    %13 = sbr.rel (0) target = $region13
  $region12: #{forward.13} parent=0 // pred_region
    _
  $region13: #{forward.13} parent=0 // pred_fallthru
    _
  %v15 = vld [vmem:[%s0] sm:$0xff]
  %v16 = vld [vmem:[%s0 + $0x8] sm:$0xf]
  %v17 = vld [vmem:[%s0 + $0xc] sm:$0xff]
  %v18 = vld [vmem:[%s0 + $0x14] sm:$0xf]
  %v19 = vld [vmem:[%s0 + $0x18] sm:$0xff]
  %v20 = vld [vmem:[%s0 + $0x20] sm:$0xf]
  %v21 = vld [vmem:[%s0 + $0x24] sm:$0xff]
  %v22 = vld [vmem:[%s0 + $0x2c] sm:$0xf]
  %v23 = vld [vmem:[%s0 + $0x30] sm:$0xff]
  %v24 = vld [vmem:[%s0 + $0x38] sm:$0xf]
  %v25 = vld [vmem:[%s0 + $0x3c] sm:$0xff]
  %v26 = vld [vmem:[%s0 + $0x44] sm:$0xf]
  %v27 = vld [vmem:[%s0 + $0x48] sm:$0xff]
  %v28 = vld [vmem:[%s0 + $0x50] sm:$0xf]
  %v29 = vld [vmem:[%s0 + $0x54] sm:$0xff]
  %v30 = vld [vmem:[%s0 + $0x5c] sm:$0xf]
  %v31 = vld [vmem:[%s1] sm:$0xff]
  %v32 = vld [vmem:[%s1 + $0x8] sm:$0xff]
  %v33 = vld [vmem:[%s1 + $0x10] sm:$0xff]
  %v34 = vld [vmem:[%s1 + $0x18] sm:$0xff]
  %v35 = vld [vmem:[%s1 + $0x20] sm:$0xff]
  %v36 = vld [vmem:[%s1 + $0x28] sm:$0xff]
  %v37 = vld [vmem:[%s1 + $0x30] sm:$0xff]
  %v38 = vld [vmem:[%s1 + $0x38] sm:$0xff]
  %v39 = vld [vmem:[%s1 + $0x40] sm:$0xff]
  %v40 = vld [vmem:[%s1 + $0x48] sm:$0xff]
  %v41 = vld [vmem:[%s1 + $0x50] sm:$0xff]
  %v42 = vld [vmem:[%s1 + $0x58] sm:$0xff]
  %v43 = vld [vmem:[%s1 + $0x60] sm:$0xff]
  %v44 = vld [vmem:[%s1 + $0x68] sm:$0xff]
  %v45 = vld [vmem:[%s1 + $0x70] sm:$0xff]
  %v46 = vld [vmem:[%s1 + $0x78] sm:$0xff]
  %v47 = vld [vmem:[%s1 + $0x80] sm:$0xff]
  %v48 = vld [vmem:[%s1 + $0x88] sm:$0xff]
  %v49 = vld [vmem:[%s1 + $0x90] sm:$0xff]
  %v50 = vld [vmem:[%s1 + $0x98] sm:$0xff]
  %v51 = vld [vmem:[%s1 + $0xa0] sm:$0xff]
  %v52 = vld [vmem:[%s1 + $0xa8] sm:$0xff]
  %v53 = vld [vmem:[%s1 + $0xb0] sm:$0xff]
  %v54 = vld [vmem:[%s1 + $0xb8] sm:$0xff]
  %v55 = vld [vmem:[%s1 + $0xc0] sm:$0xff]
  %v56 = vld [vmem:[%s1 + $0xc8] sm:$0xff]
  %v57 = vld [vmem:[%s1 + $0xd0] sm:$0xff]
  %v58 = vld [vmem:[%s1 + $0xd8] sm:$0xff]
  %v59 = vld [vmem:[%s1 + $0xe0] sm:$0xff]
  %v60 = vld [vmem:[%s1 + $0xe8] sm:$0xff]
  %v61 = vld [vmem:[%s1 + $0xf0] sm:$0xff]
  %v62 = vld [vmem:[%s1 + $0xf8] sm:$0xff]
  %v63 = vld [vmem:[%s1 + $0x100] sm:$0xff]
  %v64 = vld [vmem:[%s1 + $0x108] sm:$0xff]
  %v65 = vld [vmem:[%s1 + $0x110] sm:$0xff]
  %v66 = vld [vmem:[%s1 + $0x118] sm:$0xff]
  %v67 = vld [vmem:[%s1 + $0x120] sm:$0xff]
  %v68 = vld [vmem:[%s1 + $0x128] sm:$0xff]
  %v69 = vld [vmem:[%s1 + $0x130] sm:$0xff]
  %v70 = vld [vmem:[%s1 + $0x138] sm:$0xff]
  %v71 = vld [vmem:[%s1 + $0x140] sm:$0xff]
  %v72 = vld [vmem:[%s1 + $0x148] sm:$0xff]
  %v73 = vld [vmem:[%s1 + $0x150] sm:$0xff]
  %v74 = vld [vmem:[%s1 + $0x158] sm:$0xff]
  %v75 = vld [vmem:[%s1 + $0x160] sm:$0xff]
  %v76 = vld [vmem:[%s1 + $0x168] sm:$0xff]
  %v77 = vld [vmem:[%s1 + $0x170] sm:$0xff]
  %v78 = vld [vmem:[%s1 + $0x178] sm:$0xff]
  %v79 = vld [vmem:[%s1 + $0x180] sm:$0xff]
  %v80 = vld [vmem:[%s1 + $0x188] sm:$0xff]
  %v81 = vld [vmem:[%s1 + $0x190] sm:$0xff]
  %v82 = vld [vmem:[%s1 + $0x198] sm:$0xff]
  %v83 = vld [vmem:[%s1 + $0x1a0] sm:$0xff]
  %v84 = vld [vmem:[%s1 + $0x1a8] sm:$0xff]
  %v85 = vld [vmem:[%s1 + $0x1b0] sm:$0xff]
  %v86 = vld [vmem:[%s1 + $0x1b8] sm:$0xff]
  %v87 = vld [vmem:[%s1 + $0x1c0] sm:$0xff]
  %v88 = vld [vmem:[%s1 + $0x1c8] sm:$0xff]
  %v89 = vld [vmem:[%s1 + $0x1d0] sm:$0xff]
  %v90 = vld [vmem:[%s1 + $0x1d8] sm:$0xff]
  %v91 = vld [vmem:[%s1 + $0x1e0] sm:$0xff]
  %v92 = vld [vmem:[%s1 + $0x1e8] sm:$0xff]
  %v93 = vld [vmem:[%s1 + $0x1f0] sm:$0xff]
  %v94 = vld [vmem:[%s1 + $0x1f8] sm:$0xff]
  %v95 = vld [vmem:[%s1 + $0x200] sm:$0xff]
  %v96 = vld [vmem:[%s1 + $0x208] sm:$0xff]
  %v97 = vld [vmem:[%s1 + $0x210] sm:$0xff]
  %v98 = vld [vmem:[%s1 + $0x218] sm:$0xff]
  %v99 = vld [vmem:[%s1 + $0x220] sm:$0xff]
  %v100 = vld [vmem:[%s1 + $0x228] sm:$0xff]
  %v101 = vld [vmem:[%s1 + $0x230] sm:$0xff]
  %v102 = vld [vmem:[%s1 + $0x238] sm:$0xff]
  %v103 = vld [vmem:[%s1 + $0x240] sm:$0xff]
  %v104 = vld [vmem:[%s1 + $0x248] sm:$0xff]
  %v105 = vld [vmem:[%s1 + $0x250] sm:$0xff]
  %v106 = vld [vmem:[%s1 + $0x258] sm:$0xff]
  %v107 = vld [vmem:[%s1 + $0x260] sm:$0xff]
  %v108 = vld [vmem:[%s1 + $0x268] sm:$0xff]
  %v109 = vld [vmem:[%s1 + $0x270] sm:$0xff]
  %v110 = vld [vmem:[%s1 + $0x278] sm:$0xff]
  %v111 = vld [vmem:[%s1 + $0x280] sm:$0xff]
  %v112 = vld [vmem:[%s1 + $0x288] sm:$0xff]
  %v113 = vld [vmem:[%s1 + $0x290] sm:$0xff]
  %v114 = vld [vmem:[%s1 + $0x298] sm:$0xff]
  %v115 = vld [vmem:[%s1 + $0x2a0] sm:$0xff]
  %v116 = vld [vmem:[%s1 + $0x2a8] sm:$0xff]
  %v117 = vld [vmem:[%s1 + $0x2b0] sm:$0xff]
  %v118 = vld [vmem:[%s1 + $0x2b8] sm:$0xff]
  %v119 = vld [vmem:[%s1 + $0x2c0] sm:$0xff]
  %v120 = vld [vmem:[%s1 + $0x2c8] sm:$0xff]
  %v121 = vld [vmem:[%s1 + $0x2d0] sm:$0xff]
  %v122 = vld [vmem:[%s1 + $0x2d8] sm:$0xff]
  %v123 = vld [vmem:[%s1 + $0x2e0] sm:$0xff]
  %v124 = vld [vmem:[%s1 + $0x2e8] sm:$0xff]
  %v125 = vld [vmem:[%s1 + $0x2f0] sm:$0xff]
  %v126 = vld [vmem:[%s1 + $0x2f8] sm:$0xff]
  %v127 = vld [vmem:[%s1 + $0x300] sm:$0xff]
  %v128 = vld [vmem:[%s1 + $0x308] sm:$0xff]
  %v129 = vld [vmem:[%s1 + $0x310] sm:$0xff]
  %v130 = vld [vmem:[%s1 + $0x318] sm:$0xff]
  %v131 = vld [vmem:[%s1 + $0x320] sm:$0xff]
  %v132 = vld [vmem:[%s1 + $0x328] sm:$0xff]
  %v133 = vld [vmem:[%s1 + $0x330] sm:$0xff]
  %v134 = vld [vmem:[%s1 + $0x338] sm:$0xff]
  %v135 = vld [vmem:[%s1 + $0x340] sm:$0xff]
  %v136 = vld [vmem:[%s1 + $0x348] sm:$0xff]
  %v137 = vld [vmem:[%s1 + $0x350] sm:$0xff]
  %v138 = vld [vmem:[%s1 + $0x358] sm:$0xff]
  %v139 = vld [vmem:[%s2] sm:$0xff]
  %v140 = vld [vmem:[%s2 + $0x8] sm:$0xff]
  %v141 = vld [vmem:[%s2 + $0x10] sm:$0xff]
  %v142 = vld [vmem:[%s2 + $0x18] sm:$0xff]
  %v143 = vld [vmem:[%s2 + $0x20] sm:$0xff]
  %v144 = vld [vmem:[%s2 + $0x28] sm:$0xff]
  %v145 = vld [vmem:[%s2 + $0x30] sm:$0xff]
  %v146 = vld [vmem:[%s2 + $0x38] sm:$0xff]
  %148 = vset.pattern.permute.xlu0 0
  %149 = vperm.xlu0 %148, %v139
  %v150 = vpop.permute.xlu0 %149
  %153 = vset.pattern.permute.xlu0 0
  %154 = vperm.xlu0 %153, %v140
  %v155 = vpop.permute.xlu0 %154
  %158 = vset.pattern.permute.xlu0 0
  %159 = vperm.xlu0 %158, %v141
  %v160 = vpop.permute.xlu0 %159
  %163 = vset.pattern.permute.xlu0 0
  %164 = vperm.xlu0 %163, %v142
  %v165 = vpop.permute.xlu0 %164
  %168 = vset.pattern.permute.xlu0 0
  %169 = vperm.xlu0 %168, %v143
  %v170 = vpop.permute.xlu0 %169
  %173 = vset.pattern.permute.xlu0 0
  %174 = vperm.xlu0 %173, %v144
  %v175 = vpop.permute.xlu0 %174
  %178 = vset.pattern.permute.xlu0 0
  %179 = vperm.xlu0 %178, %v145
  %v180 = vpop.permute.xlu0 %179
  %183 = vset.pattern.permute.xlu0 0
  %184 = vperm.xlu0 %183, %v146
  %v185 = vpop.permute.xlu0 %184
  %v203 = vunpack.c.l.b16 %v15
  %v204 = vunpack.c.h.b16 %v15
  %v205 = vunpack.c.l.b16 %v16
  %v206 = vunpack.c.l.b16 %v17
  %v207 = vunpack.c.h.b16 %v17
  %v208 = vunpack.c.l.b16 %v18
  %v209 = vunpack.c.l.b16 %v19
  %v210 = vunpack.c.h.b16 %v19
  %v211 = vunpack.c.l.b16 %v20
  %v212 = vunpack.c.l.b16 %v21
  %v213 = vunpack.c.h.b16 %v21
  %v214 = vunpack.c.l.b16 %v22
  %v215 = vunpack.c.l.b16 %v23
  %v216 = vunpack.c.h.b16 %v23
  %v217 = vunpack.c.l.b16 %v24
  %v218 = vunpack.c.l.b16 %v25
  %v219 = vunpack.c.h.b16 %v25
  %v220 = vunpack.c.l.b16 %v26
  %v221 = vunpack.c.l.b16 %v27
  %v222 = vunpack.c.h.b16 %v27
  %v223 = vunpack.c.l.b16 %v28
  %v224 = vunpack.c.l.b16 %v29
  %v225 = vunpack.c.h.b16 %v29
  %v226 = vunpack.c.l.b16 %v30
  %v227 = vpack.c.b16 %v206, %v203
  %v228 = vpack.c.b16 %v207, %v204
  %v229 = vpack.c.b16 %v208, %v205
  %v230 = vpack.c.b16 %v212, %v209
  %v231 = vpack.c.b16 %v213, %v210
  %v232 = vpack.c.b16 %v214, %v211
  %v233 = vpack.c.b16 %v218, %v215
  %v234 = vpack.c.b16 %v219, %v216
  %v235 = vpack.c.b16 %v220, %v217
  %v236 = vpack.c.b16 %v224, %v221
  %v237 = vpack.c.b16 %v225, %v222
  %v238 = vpack.c.b16 %v226, %v223
  %v355 = vunpack.c.l.b16 %v31
  %v356 = vunpack.c.h.b16 %v31
  %v357 = vunpack.c.l.b16 %v32
  %v358 = vunpack.c.h.b16 %v32
  %v359 = vunpack.c.l.b16 %v33
  %v360 = vunpack.c.h.b16 %v33
  %v361 = vunpack.c.l.b16 %v34
  %v362 = vunpack.c.h.b16 %v34
  %v363 = vunpack.c.l.b16 %v35
  %v364 = vunpack.c.h.b16 %v35
  %v365 = vunpack.c.l.b16 %v36
  %v366 = vunpack.c.h.b16 %v36
  %v367 = vunpack.c.l.b16 %v37
  %v368 = vunpack.c.h.b16 %v37
  %v369 = vunpack.c.l.b16 %v38
  %v370 = vunpack.c.h.b16 %v38
  %v371 = vunpack.c.l.b16 %v39
  %v372 = vunpack.c.h.b16 %v39
  %v373 = vunpack.c.l.b16 %v40
  %v374 = vunpack.c.h.b16 %v40
  %v375 = vunpack.c.l.b16 %v41
  %v376 = vunpack.c.h.b16 %v41
  %v377 = vunpack.c.l.b16 %v42
  %v378 = vunpack.c.h.b16 %v42
  %v379 = vunpack.c.l.b16 %v43
  %v380 = vunpack.c.h.b16 %v43
  %v381 = vunpack.c.l.b16 %v44
  %v382 = vunpack.c.h.b16 %v44
  %v383 = vunpack.c.l.b16 %v45
  %v384 = vunpack.c.h.b16 %v45
  %v385 = vunpack.c.l.b16 %v46
  %v386 = vunpack.c.h.b16 %v46
  %v387 = vunpack.c.l.b16 %v47
  %v388 = vunpack.c.h.b16 %v47
  %v389 = vunpack.c.l.b16 %v48
  %v390 = vunpack.c.h.b16 %v48
  %v391 = vunpack.c.l.b16 %v49
  %v392 = vunpack.c.h.b16 %v49
  %v393 = vunpack.c.l.b16 %v50
  %v394 = vunpack.c.h.b16 %v50
  %v395 = vunpack.c.l.b16 %v51
  %v396 = vunpack.c.h.b16 %v51
  %v397 = vunpack.c.l.b16 %v52
  %v398 = vunpack.c.h.b16 %v52
  %v399 = vunpack.c.l.b16 %v53
  %v400 = vunpack.c.h.b16 %v53
  %v401 = vunpack.c.l.b16 %v54
  %v402 = vunpack.c.h.b16 %v54
  %v403 = vunpack.c.l.b16 %v55
  %v404 = vunpack.c.h.b16 %v55
  %v405 = vunpack.c.l.b16 %v56
  %v406 = vunpack.c.h.b16 %v56
  %v407 = vunpack.c.l.b16 %v57
  %v408 = vunpack.c.h.b16 %v57
  %v409 = vunpack.c.l.b16 %v58
  %v410 = vunpack.c.h.b16 %v58
  %v411 = vunpack.c.l.b16 %v59
  %v412 = vunpack.c.h.b16 %v59
  %v413 = vunpack.c.l.b16 %v60
  %v414 = vunpack.c.h.b16 %v60
  %v415 = vunpack.c.l.b16 %v61
  %v416 = vunpack.c.h.b16 %v61
  %v417 = vunpack.c.l.b16 %v62
  %v418 = vunpack.c.h.b16 %v62
  %v419 = vunpack.c.l.b16 %v63
  %v420 = vunpack.c.h.b16 %v63
  %v421 = vunpack.c.l.b16 %v64
  %v422 = vunpack.c.h.b16 %v64
  %v423 = vunpack.c.l.b16 %v65
  %v424 = vunpack.c.h.b16 %v65
  %v425 = vunpack.c.l.b16 %v66
  %v426 = vunpack.c.h.b16 %v66
  %v427 = vunpack.c.l.b16 %v67
  %v428 = vunpack.c.h.b16 %v67
  %v429 = vunpack.c.l.b16 %v68
  %v430 = vunpack.c.h.b16 %v68
  %v431 = vunpack.c.l.b16 %v69
  %v432 = vunpack.c.h.b16 %v69
  %v433 = vunpack.c.l.b16 %v70
  %v434 = vunpack.c.h.b16 %v70
  %v435 = vunpack.c.l.b16 %v71
  %v436 = vunpack.c.h.b16 %v71
  %v437 = vunpack.c.l.b16 %v72
  %v438 = vunpack.c.h.b16 %v72
  %v439 = vunpack.c.l.b16 %v73
  %v440 = vunpack.c.h.b16 %v73
  %v441 = vunpack.c.l.b16 %v74
  %v442 = vunpack.c.h.b16 %v74
  %v443 = vunpack.c.l.b16 %v75
  %v444 = vunpack.c.h.b16 %v75
  %v445 = vunpack.c.l.b16 %v76
  %v446 = vunpack.c.h.b16 %v76
  %v447 = vunpack.c.l.b16 %v77
  %v448 = vunpack.c.h.b16 %v77
  %v449 = vunpack.c.l.b16 %v78
  %v450 = vunpack.c.h.b16 %v78
  %v451 = vunpack.c.l.b16 %v79
  %v452 = vunpack.c.h.b16 %v79
  %v453 = vunpack.c.l.b16 %v80
  %v454 = vunpack.c.h.b16 %v80
  %v455 = vunpack.c.l.b16 %v81
  %v456 = vunpack.c.h.b16 %v81
  %v457 = vunpack.c.l.b16 %v82
  %v458 = vunpack.c.h.b16 %v82
  %v459 = vunpack.c.l.b16 %v83
  %v460 = vunpack.c.h.b16 %v83
  %v461 = vunpack.c.l.b16 %v84
  %v462 = vunpack.c.h.b16 %v84
  %v463 = vunpack.c.l.b16 %v85
  %v464 = vunpack.c.h.b16 %v85
  %v465 = vunpack.c.l.b16 %v86
  %v466 = vunpack.c.h.b16 %v86
  %v467 = vunpack.c.l.b16 %v87
  %v468 = vunpack.c.h.b16 %v87
  %v469 = vunpack.c.l.b16 %v88
  %v470 = vunpack.c.h.b16 %v88
  %v471 = vunpack.c.l.b16 %v89
  %v472 = vunpack.c.h.b16 %v89
  %v473 = vunpack.c.l.b16 %v90
  %v474 = vunpack.c.h.b16 %v90
  %v475 = vunpack.c.l.b16 %v91
  %v476 = vunpack.c.h.b16 %v91
  %v477 = vunpack.c.l.b16 %v92
  %v478 = vunpack.c.h.b16 %v92
  %v479 = vunpack.c.l.b16 %v93
  %v480 = vunpack.c.h.b16 %v93
  %v481 = vunpack.c.l.b16 %v94
  %v482 = vunpack.c.h.b16 %v94
  %v483 = vunpack.c.l.b16 %v95
  %v484 = vunpack.c.h.b16 %v95
  %v485 = vunpack.c.l.b16 %v96
  %v486 = vunpack.c.h.b16 %v96
  %v487 = vunpack.c.l.b16 %v97
  %v488 = vunpack.c.h.b16 %v97
  %v489 = vunpack.c.l.b16 %v98
  %v490 = vunpack.c.h.b16 %v98
  %v491 = vunpack.c.l.b16 %v99
  %v492 = vunpack.c.h.b16 %v99
  %v493 = vunpack.c.l.b16 %v100
  %v494 = vunpack.c.h.b16 %v100
  %v495 = vunpack.c.l.b16 %v101
  %v496 = vunpack.c.h.b16 %v101
  %v497 = vunpack.c.l.b16 %v102
  %v498 = vunpack.c.h.b16 %v102
  %v499 = vunpack.c.l.b16 %v103
  %v500 = vunpack.c.h.b16 %v103
  %v501 = vunpack.c.l.b16 %v104
  %v502 = vunpack.c.h.b16 %v104
  %v503 = vunpack.c.l.b16 %v105
  %v504 = vunpack.c.h.b16 %v105
  %v505 = vunpack.c.l.b16 %v106
  %v506 = vunpack.c.h.b16 %v106
  %v507 = vunpack.c.l.b16 %v107
  %v508 = vunpack.c.h.b16 %v107
  %v509 = vunpack.c.l.b16 %v108
  %v510 = vunpack.c.h.b16 %v108
  %v511 = vunpack.c.l.b16 %v109
  %v512 = vunpack.c.h.b16 %v109
  %v513 = vunpack.c.l.b16 %v110
  %v514 = vunpack.c.h.b16 %v110
  %v515 = vunpack.c.l.b16 %v111
  %v516 = vunpack.c.h.b16 %v111
  %v517 = vunpack.c.l.b16 %v112
  %v518 = vunpack.c.h.b16 %v112
  %v519 = vunpack.c.l.b16 %v113
  %v520 = vunpack.c.h.b16 %v113
  %v521 = vunpack.c.l.b16 %v114
  %v522 = vunpack.c.h.b16 %v114
  %v523 = vunpack.c.l.b16 %v115
  %v524 = vunpack.c.h.b16 %v115
  %v525 = vunpack.c.l.b16 %v116
  %v526 = vunpack.c.h.b16 %v116
  %v527 = vunpack.c.l.b16 %v117
  %v528 = vunpack.c.h.b16 %v117
  %v529 = vunpack.c.l.b16 %v118
  %v530 = vunpack.c.h.b16 %v118
  %v531 = vunpack.c.l.b16 %v119
  %v532 = vunpack.c.h.b16 %v119
  %v533 = vunpack.c.l.b16 %v120
  %v534 = vunpack.c.h.b16 %v120
  %v535 = vunpack.c.l.b16 %v121
  %v536 = vunpack.c.h.b16 %v121
  %v537 = vunpack.c.l.b16 %v122
  %v538 = vunpack.c.h.b16 %v122
  %v539 = vunpack.c.l.b16 %v123
  %v540 = vunpack.c.h.b16 %v123
  %v541 = vunpack.c.l.b16 %v124
  %v542 = vunpack.c.h.b16 %v124
  %v543 = vunpack.c.l.b16 %v125
  %v544 = vunpack.c.h.b16 %v125
  %v545 = vunpack.c.l.b16 %v126
  %v546 = vunpack.c.h.b16 %v126
  %v547 = vunpack.c.l.b16 %v127
  %v548 = vunpack.c.h.b16 %v127
  %v549 = vunpack.c.l.b16 %v128
  %v550 = vunpack.c.h.b16 %v128
  %v551 = vunpack.c.l.b16 %v129
  %v552 = vunpack.c.h.b16 %v129
  %v553 = vunpack.c.l.b16 %v130
  %v554 = vunpack.c.h.b16 %v130
  %v555 = vunpack.c.l.b16 %v131
  %v556 = vunpack.c.h.b16 %v131
  %v557 = vunpack.c.l.b16 %v132
  %v558 = vunpack.c.h.b16 %v132
  %v559 = vunpack.c.l.b16 %v133
  %v560 = vunpack.c.h.b16 %v133
  %v561 = vunpack.c.l.b16 %v134
  %v562 = vunpack.c.h.b16 %v134
  %v563 = vunpack.c.l.b16 %v135
  %v564 = vunpack.c.h.b16 %v135
  %v565 = vunpack.c.l.b16 %v136
  %v566 = vunpack.c.h.b16 %v136
  %v567 = vunpack.c.l.b16 %v137
  %v568 = vunpack.c.h.b16 %v137
  %v569 = vunpack.c.l.b16 %v138
  %v570 = vunpack.c.h.b16 %v138
  %v571 = vpack.c.b16 %v361, %v355
  %v572 = vpack.c.b16 %v362, %v356
  %v573 = vpack.c.b16 %v363, %v357
  %v574 = vpack.c.b16 %v364, %v358
  %v575 = vpack.c.b16 %v365, %v359
  %v576 = vpack.c.b16 %v366, %v360
  %v577 = vpack.c.b16 %v373, %v367
  %v578 = vpack.c.b16 %v374, %v368
  %v579 = vpack.c.b16 %v375, %v369
  %v580 = vpack.c.b16 %v376, %v370
  %v581 = vpack.c.b16 %v377, %v371
  %v582 = vpack.c.b16 %v378, %v372
  %v583 = vpack.c.b16 %v385, %v379
  %v584 = vpack.c.b16 %v386, %v380
  %v585 = vpack.c.b16 %v387, %v381
  %v586 = vpack.c.b16 %v388, %v382
  %v587 = vpack.c.b16 %v389, %v383
  %v588 = vpack.c.b16 %v390, %v384
  %v589 = vpack.c.b16 %v397, %v391
  %v590 = vpack.c.b16 %v398, %v392
  %v591 = vpack.c.b16 %v399, %v393
  %v592 = vpack.c.b16 %v400, %v394
  %v593 = vpack.c.b16 %v401, %v395
  %v594 = vpack.c.b16 %v402, %v396
  %v595 = vpack.c.b16 %v409, %v403
  %v596 = vpack.c.b16 %v410, %v404
  %v597 = vpack.c.b16 %v411, %v405
  %v598 = vpack.c.b16 %v412, %v406
  %v599 = vpack.c.b16 %v413, %v407
  %v600 = vpack.c.b16 %v414, %v408
  %v601 = vpack.c.b16 %v421, %v415
  %v602 = vpack.c.b16 %v422, %v416
  %v603 = vpack.c.b16 %v423, %v417
  %v604 = vpack.c.b16 %v424, %v418
  %v605 = vpack.c.b16 %v425, %v419
  %v606 = vpack.c.b16 %v426, %v420
  %v607 = vpack.c.b16 %v433, %v427
  %v608 = vpack.c.b16 %v434, %v428
  %v609 = vpack.c.b16 %v435, %v429
  %v610 = vpack.c.b16 %v436, %v430
  %v611 = vpack.c.b16 %v437, %v431
  %v612 = vpack.c.b16 %v438, %v432
  %v613 = vpack.c.b16 %v445, %v439
  %v614 = vpack.c.b16 %v446, %v440
  %v615 = vpack.c.b16 %v447, %v441
  %v616 = vpack.c.b16 %v448, %v442
  %v617 = vpack.c.b16 %v449, %v443
  %v618 = vpack.c.b16 %v450, %v444
  %v619 = vpack.c.b16 %v457, %v451
  %v620 = vpack.c.b16 %v458, %v452
  %v621 = vpack.c.b16 %v459, %v453
  %v622 = vpack.c.b16 %v460, %v454
  %v623 = vpack.c.b16 %v461, %v455
  %v624 = vpack.c.b16 %v462, %v456
  %v625 = vpack.c.b16 %v469, %v463
  %v626 = vpack.c.b16 %v470, %v464
  %v627 = vpack.c.b16 %v471, %v465
  %v628 = vpack.c.b16 %v472, %v466
  %v629 = vpack.c.b16 %v473, %v467
  %v630 = vpack.c.b16 %v474, %v468
  %v631 = vpack.c.b16 %v481, %v475
  %v632 = vpack.c.b16 %v482, %v476
  %v633 = vpack.c.b16 %v483, %v477
  %v634 = vpack.c.b16 %v484, %v478
  %v635 = vpack.c.b16 %v485, %v479
  %v636 = vpack.c.b16 %v486, %v480
  %v637 = vpack.c.b16 %v493, %v487
  %v638 = vpack.c.b16 %v494, %v488
  %v639 = vpack.c.b16 %v495, %v489
  %v640 = vpack.c.b16 %v496, %v490
  %v641 = vpack.c.b16 %v497, %v491
  %v642 = vpack.c.b16 %v498, %v492
  %v643 = vpack.c.b16 %v505, %v499
  %v644 = vpack.c.b16 %v506, %v500
  %v645 = vpack.c.b16 %v507, %v501
  %v646 = vpack.c.b16 %v508, %v502
  %v647 = vpack.c.b16 %v509, %v503
  %v648 = vpack.c.b16 %v510, %v504
  %v649 = vpack.c.b16 %v517, %v511
  %v650 = vpack.c.b16 %v518, %v512
  %v651 = vpack.c.b16 %v519, %v513
  %v652 = vpack.c.b16 %v520, %v514
  %v653 = vpack.c.b16 %v521, %v515
  %v654 = vpack.c.b16 %v522, %v516
  %v655 = vpack.c.b16 %v529, %v523
  %v656 = vpack.c.b16 %v530, %v524
  %v657 = vpack.c.b16 %v531, %v525
  %v658 = vpack.c.b16 %v532, %v526
  %v659 = vpack.c.b16 %v533, %v527
  %v660 = vpack.c.b16 %v534, %v528
  %v661 = vpack.c.b16 %v541, %v535
  %v662 = vpack.c.b16 %v542, %v536
  %v663 = vpack.c.b16 %v543, %v537
  %v664 = vpack.c.b16 %v544, %v538
  %v665 = vpack.c.b16 %v545, %v539
  %v666 = vpack.c.b16 %v546, %v540
  %v667 = vpack.c.b16 %v553, %v547
  %v668 = vpack.c.b16 %v554, %v548
  %v669 = vpack.c.b16 %v555, %v549
  %v670 = vpack.c.b16 %v556, %v550
  %v671 = vpack.c.b16 %v557, %v551
  %v672 = vpack.c.b16 %v558, %v552
  %v673 = vpack.c.b16 %v565, %v559
  %v674 = vpack.c.b16 %v566, %v560
  %v675 = vpack.c.b16 %v567, %v561
  %v676 = vpack.c.b16 %v568, %v562
  %v677 = vpack.c.b16 %v569, %v563
  %v678 = vpack.c.b16 %v570, %v564
  %vm787 = vcmask 261120
  %v789 = vsel %vm787, %v229, 0
  %v792 = vsel %vm787, %v232, 0
  %v795 = vsel %vm787, %v235, 0
  %v798 = vsel %vm787, %v238, 0
  %800 = vmatprep.subr.bf16.mxu0 %v614
  %801 = vmatpush1.bf16.msra.mxu0 %v613
  %802 = vmatprep.subr.bf16.mxu0 %v608
  %803 = vmatpush1.bf16.msra.mxu0 %v607
  %804 = vmatprep.subr.bf16.mxu0 %v602
  %805 = vmatpush1.bf16.msra.mxu0 %v601
  %806 = vmatprep.subr.bf16.mxu0 %v596
  %807 = vmatpush1.bf16.msra.mxu0 %v595
  %808 = vmatprep.subr.bf16.mxu0 %v590
  %809 = vmatpush1.bf16.msra.mxu0 %v589
  %810 = vmatprep.subr.bf16.mxu0 %v584
  %811 = vmatpush1.bf16.msra.mxu0 %v583
  %812 = vmatprep.subr.bf16.mxu0 %v578
  %813 = vmatpush1.bf16.msra.mxu0 %v577
  %814 = vmatprep.subr.bf16.mxu0 %v572
  %815 = vmatpush1.bf16.msra.mxu0 %v571
  %816 = vmatprep.subr.bf16.mxu0 %v662
  %817 = vmatpush2.bf16.msra.mxu0 %v661
  %818 = vmatprep.subr.bf16.mxu0 %v656
  %819 = vmatpush2.bf16.msra.mxu0 %v655
  %820 = vmatprep.subr.bf16.mxu0 %v650
  %821 = vmatpush2.bf16.msra.mxu0 %v649
  %822 = vmatprep.subr.bf16.mxu0 %v644
  %823 = vmatpush2.bf16.msra.mxu0 %v643
  %824 = vmatprep.subr.bf16.mxu0 %v638
  %825 = vmatpush2.bf16.msra.mxu0 %v637
  %826 = vmatprep.subr.bf16.mxu0 %v632
  %827 = vmatpush2.bf16.msra.mxu0 %v631
  %828 = vmatprep.subr.bf16.mxu0 %v626
  %829 = vmatpush2.bf16.msra.mxu0 %v625
  %830 = vmatprep.subr.bf16.mxu0 %v620
  %831 = vmatpush2.bf16.msra.mxu0 %v619
  %832 = vmatprep.mubr.bf16.mxu0 %v228
  %833 = vmatmul.mubr.bf16.gmra.mxu0 %v227
  %v834 = vpop.f32.mrf.mxu0
  %v835 = vadd.f32 %v150, %v834
  %v836 = vpop.f32.mrf.mxu0
  %v837 = vadd.f32 %v150, %v836
  %v838 = vpop.f32.mrf.mxu0
  %v839 = vadd.f32 %v155, %v838
  %v840 = vpop.f32.mrf.mxu0
  %v841 = vadd.f32 %v155, %v840
  %842 = vmatprep.mubr.bf16.mxu0 %v231
  %843 = vmatmul.mubr.bf16.gmra.mxu0 %v230
  %v844 = vpop.f32.mrf.mxu0
  %v845 = vadd.f32 %v160, %v844
  %v846 = vpop.f32.mrf.mxu0
  %v847 = vadd.f32 %v160, %v846
  %v848 = vpop.f32.mrf.mxu0
  %v849 = vadd.f32 %v165, %v848
  %v850 = vpop.f32.mrf.mxu0
  %v851 = vadd.f32 %v165, %v850
  %852 = vmatprep.mubr.bf16.mxu0 %v234
  %853 = vmatmul.mubr.bf16.gmra.mxu0 %v233
  %v854 = vpop.f32.mrf.mxu0
  %v855 = vadd.f32 %v170, %v854
  %v856 = vpop.f32.mrf.mxu0
  %v857 = vadd.f32 %v170, %v856
  %v858 = vpop.f32.mrf.mxu0
  %v859 = vadd.f32 %v175, %v858
  %v860 = vpop.f32.mrf.mxu0
  %v861 = vadd.f32 %v175, %v860
  %862 = vmatprep.mubr.bf16.mxu0 %v237
  %863 = vmatmul.mubr.bf16.gmra.mxu0 %v236
  %v864 = vpop.f32.mrf.mxu0
  %v865 = vadd.f32 %v180, %v864
  %v866 = vpop.f32.mrf.mxu0
  %v867 = vadd.f32 %v180, %v866
  %v868 = vpop.f32.mrf.mxu0
  %v869 = vadd.f32 %v185, %v868
  %v870 = vpop.f32.mrf.mxu0
  %v871 = vadd.f32 %v185, %v870
  %872 = vdwg.mxu0
  %873 = vmatprep.subr.bf16.mxu0 0
  %874 = vmatpush1.bf16.msra.mxu0 0
  %875 = vmatprep.subr.bf16.mxu0 0
  %876 = vmatpush1.bf16.msra.mxu0 0
  %877 = vmatprep.subr.bf16.mxu0 0
  %878 = vmatpush1.bf16.msra.mxu0 0
  %879 = vmatprep.subr.bf16.mxu0 0
  %880 = vmatpush1.bf16.msra.mxu0 0
  %881 = vmatprep.subr.bf16.mxu0 0
  %882 = vmatpush1.bf16.msra.mxu0 0
  %883 = vmatprep.subr.bf16.mxu0 0
  %884 = vmatpush1.bf16.msra.mxu0 0
  %885 = vmatprep.subr.bf16.mxu0 %v674
  %886 = vmatpush1.bf16.msra.mxu0 %v673
  %887 = vmatprep.subr.bf16.mxu0 %v668
  %888 = vmatpush1.bf16.msra.mxu0 %v667
  %889 = vmatprep.subr.bf16.mxu0 0
  %890 = vmatpush2.bf16.msra.mxu0 0
  %891 = vmatprep.subr.bf16.mxu0 0
  %892 = vmatpush2.bf16.msra.mxu0 0
  %893 = vmatprep.subr.bf16.mxu0 0
  %894 = vmatpush2.bf16.msra.mxu0 0
  %895 = vmatprep.subr.bf16.mxu0 0
  %896 = vmatpush2.bf16.msra.mxu0 0
  %897 = vmatprep.subr.bf16.mxu0 0
  %898 = vmatpush2.bf16.msra.mxu0 0
  %899 = vmatprep.subr.bf16.mxu0 0
  %900 = vmatpush2.bf16.msra.mxu0 0
  %901 = vmatprep.subr.bf16.mxu0 0
  %902 = vmatpush2.bf16.msra.mxu0 0
  %903 = vmatprep.subr.bf16.mxu0 0
  %904 = vmatpush2.bf16.msra.mxu0 0
  %905 = vmatprep.mubr.bf16.mxu0 0
  %906 = vmatmul.mubr.bf16.gmra.mxu0 %v789
  %v907 = vpop.f32.mrf.mxu0
  %v908 = vadd.f32 %v835, %v907
  %v909 = vpop.f32.mrf.mxu0
  %v910 = vadd.f32 %v837, %v909
  %v911 = vpop.f32.mrf.mxu0
  %v912 = vadd.f32 %v839, %v911
  %v913 = vpop.f32.mrf.mxu0
  %v914 = vadd.f32 %v841, %v913
  %915 = vmatprep.mubr.bf16.mxu0 0
  %916 = vmatmul.mubr.bf16.gmra.mxu0 %v792
  %v917 = vpop.f32.mrf.mxu0
  %v918 = vadd.f32 %v845, %v917
  %v919 = vpop.f32.mrf.mxu0
  %v920 = vadd.f32 %v847, %v919
  %v921 = vpop.f32.mrf.mxu0
  %v922 = vadd.f32 %v849, %v921
  %v923 = vpop.f32.mrf.mxu0
  %v924 = vadd.f32 %v851, %v923
  %925 = vmatprep.mubr.bf16.mxu0 0
  %926 = vmatmul.mubr.bf16.gmra.mxu0 %v795
  %v927 = vpop.f32.mrf.mxu0
  %v928 = vadd.f32 %v855, %v927
  %v929 = vpop.f32.mrf.mxu0
  %v930 = vadd.f32 %v857, %v929
  %v931 = vpop.f32.mrf.mxu0
  %v932 = vadd.f32 %v859, %v931
  %v933 = vpop.f32.mrf.mxu0
  %v934 = vadd.f32 %v861, %v933
  %935 = vmatprep.mubr.bf16.mxu0 0
  %936 = vmatmul.mubr.bf16.gmra.mxu0 %v798
  %v937 = vpop.f32.mrf.mxu0
  %v938 = vadd.f32 %v865, %v937
  %v939 = vpop.f32.mrf.mxu0
  %v940 = vadd.f32 %v867, %v939
  %v941 = vpop.f32.mrf.mxu0
  %v942 = vadd.f32 %v869, %v941
  %v943 = vpop.f32.mrf.mxu0
  %v944 = vadd.f32 %v871, %v943
  %945 = vdwg.mxu0
  %946 = vmatprep.subr.bf16.mxu0 %v616
  %947 = vmatpush1.bf16.msra.mxu0 %v615
  %948 = vmatprep.subr.bf16.mxu0 %v610
  %949 = vmatpush1.bf16.msra.mxu0 %v609
  %950 = vmatprep.subr.bf16.mxu0 %v604
  %951 = vmatpush1.bf16.msra.mxu0 %v603
  %952 = vmatprep.subr.bf16.mxu0 %v598
  %953 = vmatpush1.bf16.msra.mxu0 %v597
  %954 = vmatprep.subr.bf16.mxu0 %v592
  %955 = vmatpush1.bf16.msra.mxu0 %v591
  %956 = vmatprep.subr.bf16.mxu0 %v586
  %957 = vmatpush1.bf16.msra.mxu0 %v585
  %958 = vmatprep.subr.bf16.mxu0 %v580
  %959 = vmatpush1.bf16.msra.mxu0 %v579
  %960 = vmatprep.subr.bf16.mxu0 %v574
  %961 = vmatpush1.bf16.msra.mxu0 %v573
  %962 = vmatprep.subr.bf16.mxu0 %v664
  %963 = vmatpush2.bf16.msra.mxu0 %v663
  %964 = vmatprep.subr.bf16.mxu0 %v658
  %965 = vmatpush2.bf16.msra.mxu0 %v657
  %966 = vmatprep.subr.bf16.mxu0 %v652
  %967 = vmatpush2.bf16.msra.mxu0 %v651
  %968 = vmatprep.subr.bf16.mxu0 %v646
  %969 = vmatpush2.bf16.msra.mxu0 %v645
  %970 = vmatprep.subr.bf16.mxu0 %v640
  %971 = vmatpush2.bf16.msra.mxu0 %v639
  %972 = vmatprep.subr.bf16.mxu0 %v634
  %973 = vmatpush2.bf16.msra.mxu0 %v633
  %974 = vmatprep.subr.bf16.mxu0 %v628
  %975 = vmatpush2.bf16.msra.mxu0 %v627
  %976 = vmatprep.subr.bf16.mxu0 %v622
  %977 = vmatpush2.bf16.msra.mxu0 %v621
  %978 = vmatprep.mubr.bf16.mxu0 %v228
  %979 = vmatmul.mubr.bf16.gmra.mxu0 %v227
  %v980 = vpop.f32.mrf.mxu0
  %v981 = vadd.f32 %v150, %v980
  %v982 = vpop.f32.mrf.mxu0
  %v983 = vadd.f32 %v150, %v982
  %v984 = vpop.f32.mrf.mxu0
  %v985 = vadd.f32 %v155, %v984
  %v986 = vpop.f32.mrf.mxu0
  %v987 = vadd.f32 %v155, %v986
  %988 = vmatprep.mubr.bf16.mxu0 %v231
  %989 = vmatmul.mubr.bf16.gmra.mxu0 %v230
  %v990 = vpop.f32.mrf.mxu0
  %v991 = vadd.f32 %v160, %v990
  %v992 = vpop.f32.mrf.mxu0
  %v993 = vadd.f32 %v160, %v992
  %v994 = vpop.f32.mrf.mxu0
  %v995 = vadd.f32 %v165, %v994
  %v996 = vpop.f32.mrf.mxu0
  %v997 = vadd.f32 %v165, %v996
  %998 = vmatprep.mubr.bf16.mxu0 %v234
  %999 = vmatmul.mubr.bf16.gmra.mxu0 %v233
  %v1000 = vpop.f32.mrf.mxu0
  %v1001 = vadd.f32 %v170, %v1000
  %v1002 = vpop.f32.mrf.mxu0
  %v1003 = vadd.f32 %v170, %v1002
  %v1004 = vpop.f32.mrf.mxu0
  %v1005 = vadd.f32 %v175, %v1004
  %v1006 = vpop.f32.mrf.mxu0
  %v1007 = vadd.f32 %v175, %v1006
  %1008 = vmatprep.mubr.bf16.mxu0 %v237
  %1009 = vmatmul.mubr.bf16.gmra.mxu0 %v236
  %v1010 = vpop.f32.mrf.mxu0
  %v1011 = vadd.f32 %v180, %v1010
  %v1012 = vpop.f32.mrf.mxu0
  %v1013 = vadd.f32 %v180, %v1012
  %v1014 = vpop.f32.mrf.mxu0
  %v1015 = vadd.f32 %v185, %v1014
  %v1016 = vpop.f32.mrf.mxu0
  %v1017 = vadd.f32 %v185, %v1016
  %1018 = vdwg.mxu0
  %1019 = vmatprep.subr.bf16.mxu0 0
  %1020 = vmatpush1.bf16.msra.mxu0 0
  %1021 = vmatprep.subr.bf16.mxu0 0
  %1022 = vmatpush1.bf16.msra.mxu0 0
  %1023 = vmatprep.subr.bf16.mxu0 0
  %1024 = vmatpush1.bf16.msra.mxu0 0
  %1025 = vmatprep.subr.bf16.mxu0 0
  %1026 = vmatpush1.bf16.msra.mxu0 0
  %1027 = vmatprep.subr.bf16.mxu0 0
  %1028 = vmatpush1.bf16.msra.mxu0 0
  %1029 = vmatprep.subr.bf16.mxu0 0
  %1030 = vmatpush1.bf16.msra.mxu0 0
  %1031 = vmatprep.subr.bf16.mxu0 %v676
  %1032 = vmatpush1.bf16.msra.mxu0 %v675
  %1033 = vmatprep.subr.bf16.mxu0 %v670
  %1034 = vmatpush1.bf16.msra.mxu0 %v669
  %1035 = vmatprep.subr.bf16.mxu0 0
  %1036 = vmatpush2.bf16.msra.mxu0 0
  %1037 = vmatprep.subr.bf16.mxu0 0
  %1038 = vmatpush2.bf16.msra.mxu0 0
  %1039 = vmatprep.subr.bf16.mxu0 0
  %1040 = vmatpush2.bf16.msra.mxu0 0
  %1041 = vmatprep.subr.bf16.mxu0 0
  %1042 = vmatpush2.bf16.msra.mxu0 0
  %1043 = vmatprep.subr.bf16.mxu0 0
  %1044 = vmatpush2.bf16.msra.mxu0 0
  %1045 = vmatprep.subr.bf16.mxu0 0
  %1046 = vmatpush2.bf16.msra.mxu0 0
  %1047 = vmatprep.subr.bf16.mxu0 0
  %1048 = vmatpush2.bf16.msra.mxu0 0
  %1049 = vmatprep.subr.bf16.mxu0 0
  %1050 = vmatpush2.bf16.msra.mxu0 0
  %1051 = vmatprep.mubr.bf16.mxu0 0
  %1052 = vmatmul.mubr.bf16.gmra.mxu0 %v789
  %v1053 = vpop.f32.mrf.mxu0
  %v1054 = vadd.f32 %v981, %v1053
  %v1055 = vpop.f32.mrf.mxu0
  %v1056 = vadd.f32 %v983, %v1055
  %v1057 = vpop.f32.mrf.mxu0
  %v1058 = vadd.f32 %v985, %v1057
  %v1059 = vpop.f32.mrf.mxu0
  %v1060 = vadd.f32 %v987, %v1059
  %1061 = vmatprep.mubr.bf16.mxu0 0
  %1062 = vmatmul.mubr.bf16.gmra.mxu0 %v792
  %v1063 = vpop.f32.mrf.mxu0
  %v1064 = vadd.f32 %v991, %v1063
  %v1065 = vpop.f32.mrf.mxu0
  %v1066 = vadd.f32 %v993, %v1065
  %v1067 = vpop.f32.mrf.mxu0
  %v1068 = vadd.f32 %v995, %v1067
  %v1069 = vpop.f32.mrf.mxu0
  %v1070 = vadd.f32 %v997, %v1069
  %1071 = vmatprep.mubr.bf16.mxu0 0
  %1072 = vmatmul.mubr.bf16.gmra.mxu0 %v795
  %v1073 = vpop.f32.mrf.mxu0
  %v1074 = vadd.f32 %v1001, %v1073
  %v1075 = vpop.f32.mrf.mxu0
  %v1076 = vadd.f32 %v1003, %v1075
  %v1077 = vpop.f32.mrf.mxu0
  %v1078 = vadd.f32 %v1005, %v1077
  %v1079 = vpop.f32.mrf.mxu0
  %v1080 = vadd.f32 %v1007, %v1079
  %1081 = vmatprep.mubr.bf16.mxu0 0
  %1082 = vmatmul.mubr.bf16.gmra.mxu0 %v798
  %v1083 = vpop.f32.mrf.mxu0
  %v1084 = vadd.f32 %v1011, %v1083
  %v1085 = vpop.f32.mrf.mxu0
  %v1086 = vadd.f32 %v1013, %v1085
  %v1087 = vpop.f32.mrf.mxu0
  %v1088 = vadd.f32 %v1015, %v1087
  %v1089 = vpop.f32.mrf.mxu0
  %v1090 = vadd.f32 %v1017, %v1089
  %1091 = vdwg.mxu0
  %1092 = vmatprep.subr.bf16.mxu0 %v618
  %1093 = vmatpush1.bf16.msra.mxu0 %v617
  %1094 = vmatprep.subr.bf16.mxu0 %v612
  %1095 = vmatpush1.bf16.msra.mxu0 %v611
  %1096 = vmatprep.subr.bf16.mxu0 %v606
  %1097 = vmatpush1.bf16.msra.mxu0 %v605
  %1098 = vmatprep.subr.bf16.mxu0 %v600
  %1099 = vmatpush1.bf16.msra.mxu0 %v599
  %1100 = vmatprep.subr.bf16.mxu0 %v594
  %1101 = vmatpush1.bf16.msra.mxu0 %v593
  %1102 = vmatprep.subr.bf16.mxu0 %v588
  %1103 = vmatpush1.bf16.msra.mxu0 %v587
  %1104 = vmatprep.subr.bf16.mxu0 %v582
  %1105 = vmatpush1.bf16.msra.mxu0 %v581
  %1106 = vmatprep.subr.bf16.mxu0 %v576
  %1107 = vmatpush1.bf16.msra.mxu0 %v575
  %1108 = vmatprep.subr.bf16.mxu0 %v666
  %1109 = vmatpush2.bf16.msra.mxu0 %v665
  %1110 = vmatprep.subr.bf16.mxu0 %v660
  %1111 = vmatpush2.bf16.msra.mxu0 %v659
  %1112 = vmatprep.subr.bf16.mxu0 %v654
  %1113 = vmatpush2.bf16.msra.mxu0 %v653
  %1114 = vmatprep.subr.bf16.mxu0 %v648
  %1115 = vmatpush2.bf16.msra.mxu0 %v647
  %1116 = vmatprep.subr.bf16.mxu0 %v642
  %1117 = vmatpush2.bf16.msra.mxu0 %v641
  %1118 = vmatprep.subr.bf16.mxu0 %v636
  %1119 = vmatpush2.bf16.msra.mxu0 %v635
  %1120 = vmatprep.subr.bf16.mxu0 %v630
  %1121 = vmatpush2.bf16.msra.mxu0 %v629
  %1122 = vmatprep.subr.bf16.mxu0 %v624
  %1123 = vmatpush2.bf16.msra.mxu0 %v623
  %1124 = vmatprep.mubr.bf16.mxu0 %v228
  %1125 = vmatmul.mubr.bf16.gmra.mxu0 %v227
  %v1126 = vpop.f32.mrf.mxu0
  %v1127 = vadd.f32 %v150, %v1126
  %v1128 = vpop.f32.mrf.mxu0
  %v1129 = vadd.f32 %v150, %v1128
  %v1130 = vpop.f32.mrf.mxu0
  %v1131 = vadd.f32 %v155, %v1130
  %v1132 = vpop.f32.mrf.mxu0
  %v1133 = vadd.f32 %v155, %v1132
  %1134 = vmatprep.mubr.bf16.mxu0 %v231
  %1135 = vmatmul.mubr.bf16.gmra.mxu0 %v230
  %v1136 = vpop.f32.mrf.mxu0
  %v1137 = vadd.f32 %v160, %v1136
  %v1138 = vpop.f32.mrf.mxu0
  %v1139 = vadd.f32 %v160, %v1138
  %v1140 = vpop.f32.mrf.mxu0
  %v1141 = vadd.f32 %v165, %v1140
  %v1142 = vpop.f32.mrf.mxu0
  %v1143 = vadd.f32 %v165, %v1142
  %1144 = vmatprep.mubr.bf16.mxu0 %v234
  %1145 = vmatmul.mubr.bf16.gmra.mxu0 %v233
  %v1146 = vpop.f32.mrf.mxu0
  %v1147 = vadd.f32 %v170, %v1146
  %v1148 = vpop.f32.mrf.mxu0
  %v1149 = vadd.f32 %v170, %v1148
  %v1150 = vpop.f32.mrf.mxu0
  %v1151 = vadd.f32 %v175, %v1150
  %v1152 = vpop.f32.mrf.mxu0
  %v1153 = vadd.f32 %v175, %v1152
  %1154 = vmatprep.mubr.bf16.mxu0 %v237
  %1155 = vmatmul.mubr.bf16.gmra.mxu0 %v236
  %v1156 = vpop.f32.mrf.mxu0
  %v1157 = vadd.f32 %v180, %v1156
  %v1158 = vpop.f32.mrf.mxu0
  %v1159 = vadd.f32 %v180, %v1158
  %v1160 = vpop.f32.mrf.mxu0
  %v1161 = vadd.f32 %v185, %v1160
  %v1162 = vpop.f32.mrf.mxu0
  %v1163 = vadd.f32 %v185, %v1162
  %1164 = vdwg.mxu0
  %1165 = vmatprep.subr.bf16.mxu0 0
  %1166 = vmatpush1.bf16.msra.mxu0 0
  %1167 = vmatprep.subr.bf16.mxu0 0
  %1168 = vmatpush1.bf16.msra.mxu0 0
  %1169 = vmatprep.subr.bf16.mxu0 0
  %1170 = vmatpush1.bf16.msra.mxu0 0
  %1171 = vmatprep.subr.bf16.mxu0 0
  %1172 = vmatpush1.bf16.msra.mxu0 0
  %1173 = vmatprep.subr.bf16.mxu0 0
  %1174 = vmatpush1.bf16.msra.mxu0 0
  %1175 = vmatprep.subr.bf16.mxu0 0
  %1176 = vmatpush1.bf16.msra.mxu0 0
  %1177 = vmatprep.subr.bf16.mxu0 %v678
  %1178 = vmatpush1.bf16.msra.mxu0 %v677
  %1179 = vmatprep.subr.bf16.mxu0 %v672
  %1180 = vmatpush1.bf16.msra.mxu0 %v671
  %1181 = vmatprep.subr.bf16.mxu0 0
  %1182 = vmatpush2.bf16.msra.mxu0 0
  %1183 = vmatprep.subr.bf16.mxu0 0
  %1184 = vmatpush2.bf16.msra.mxu0 0
  %1185 = vmatprep.subr.bf16.mxu0 0
  %1186 = vmatpush2.bf16.msra.mxu0 0
  %1187 = vmatprep.subr.bf16.mxu0 0
  %1188 = vmatpush2.bf16.msra.mxu0 0
  %1189 = vmatprep.subr.bf16.mxu0 0
  %1190 = vmatpush2.bf16.msra.mxu0 0
  %1191 = vmatprep.subr.bf16.mxu0 0
  %1192 = vmatpush2.bf16.msra.mxu0 0
  %1193 = vmatprep.subr.bf16.mxu0 0
  %1194 = vmatpush2.bf16.msra.mxu0 0
  %1195 = vmatprep.subr.bf16.mxu0 0
  %1196 = vmatpush2.bf16.msra.mxu0 0
  %1197 = vmatprep.mubr.bf16.mxu0 0
  %1198 = vmatmul.mubr.bf16.gmra.mxu0 %v789
  %v1199 = vpop.f32.mrf.mxu0
  %v1200 = vadd.f32 %v1127, %v1199
  %v1201 = vpop.f32.mrf.mxu0
  %v1202 = vadd.f32 %v1129, %v1201
  %v1203 = vpop.f32.mrf.mxu0
  %v1204 = vadd.f32 %v1131, %v1203
  %v1205 = vpop.f32.mrf.mxu0
  %v1206 = vadd.f32 %v1133, %v1205
  %1207 = vmatprep.mubr.bf16.mxu0 0
  %1208 = vmatmul.mubr.bf16.gmra.mxu0 %v792
  %v1209 = vpop.f32.mrf.mxu0
  %v1210 = vadd.f32 %v1137, %v1209
  %v1211 = vpop.f32.mrf.mxu0
  %v1212 = vadd.f32 %v1139, %v1211
  %v1213 = vpop.f32.mrf.mxu0
  %v1214 = vadd.f32 %v1141, %v1213
  %v1215 = vpop.f32.mrf.mxu0
  %v1216 = vadd.f32 %v1143, %v1215
  %1217 = vmatprep.mubr.bf16.mxu0 0
  %1218 = vmatmul.mubr.bf16.gmra.mxu0 %v795
  %v1219 = vpop.f32.mrf.mxu0
  %v1220 = vadd.f32 %v1147, %v1219
  %v1221 = vpop.f32.mrf.mxu0
  %v1222 = vadd.f32 %v1149, %v1221
  %v1223 = vpop.f32.mrf.mxu0
  %v1224 = vadd.f32 %v1151, %v1223
  %v1225 = vpop.f32.mrf.mxu0
  %v1226 = vadd.f32 %v1153, %v1225
  %1227 = vmatprep.mubr.bf16.mxu0 0
  %1228 = vmatmul.mubr.bf16.gmra.mxu0 %v798
  %v1229 = vpop.f32.mrf.mxu0
  %v1230 = vadd.f32 %v1157, %v1229
  %v1231 = vpop.f32.mrf.mxu0
  %v1232 = vadd.f32 %v1159, %v1231
  %v1233 = vpop.f32.mrf.mxu0
  %v1234 = vadd.f32 %v1161, %v1233
  %v1235 = vpop.f32.mrf.mxu0
  %v1236 = vadd.f32 %v1163, %v1235
  %1237 = vdwg.mxu0
  %v1238 = vmax.f32 %v908, 0.0
  %v1239 = vmax.f32 %v910, 0.0
  %v1240 = vmax.f32 %v1054, 0.0
  %v1241 = vmax.f32 %v1056, 0.0
  %v1242 = vmax.f32 %v1200, 0.0
  %v1243 = vmax.f32 %v1202, 0.0
  %v1244 = vmax.f32 %v912, 0.0
  %v1245 = vmax.f32 %v914, 0.0
  %v1246 = vmax.f32 %v1058, 0.0
  %v1247 = vmax.f32 %v1060, 0.0
  %v1248 = vmax.f32 %v1204, 0.0
  %v1249 = vmax.f32 %v1206, 0.0
  %v1250 = vmax.f32 %v918, 0.0
  %v1251 = vmax.f32 %v920, 0.0
  %v1252 = vmax.f32 %v1064, 0.0
  %v1253 = vmax.f32 %v1066, 0.0
  %v1254 = vmax.f32 %v1210, 0.0
  %v1255 = vmax.f32 %v1212, 0.0
  %v1256 = vmax.f32 %v922, 0.0
  %v1257 = vmax.f32 %v924, 0.0
  %v1258 = vmax.f32 %v1068, 0.0
  %v1259 = vmax.f32 %v1070, 0.0
  %v1260 = vmax.f32 %v1214, 0.0
  %v1261 = vmax.f32 %v1216, 0.0
  %v1262 = vmax.f32 %v928, 0.0
  %v1263 = vmax.f32 %v930, 0.0
  %v1264 = vmax.f32 %v1074, 0.0
  %v1265 = vmax.f32 %v1076, 0.0
  %v1266 = vmax.f32 %v1220, 0.0
  %v1267 = vmax.f32 %v1222, 0.0
  %v1268 = vmax.f32 %v932, 0.0
  %v1269 = vmax.f32 %v934, 0.0
  %v1270 = vmax.f32 %v1078, 0.0
  %v1271 = vmax.f32 %v1080, 0.0
  %v1272 = vmax.f32 %v1224, 0.0
  %v1273 = vmax.f32 %v1226, 0.0
  %v1274 = vmax.f32 %v938, 0.0
  %v1275 = vmax.f32 %v940, 0.0
  %v1276 = vmax.f32 %v1084, 0.0
  %v1277 = vmax.f32 %v1086, 0.0
  %v1278 = vmax.f32 %v1230, 0.0
  %v1279 = vmax.f32 %v1232, 0.0
  %v1280 = vmax.f32 %v942, 0.0
  %v1281 = vmax.f32 %v944, 0.0
  %v1282 = vmax.f32 %v1088, 0.0
  %v1283 = vmax.f32 %v1090, 0.0
  %v1284 = vmax.f32 %v1234, 0.0
  %v1285 = vmax.f32 %v1236, 0.0
  %1286 = vst [vmem:[%s3] sm:$0xff] %v1238
  %1287 = vst [vmem:[%s3 + $0x8] sm:$0xff] %v1239
  %1288 = vst [vmem:[%s3 + $0x10] sm:$0xff] %v1240
  %1289 = vst [vmem:[%s3 + $0x18] sm:$0xff] %v1241
  %1290 = vst [vmem:[%s3 + $0x20] sm:$0xff] %v1242
  %1291 = vst [vmem:[%s3 + $0x28] sm:$0xff] %v1243
  %1292 = vst [vmem:[%s3 + $0x30] sm:$0xff] %v1244
  %1293 = vst [vmem:[%s3 + $0x38] sm:$0xff] %v1245
  %1294 = vst [vmem:[%s3 + $0x40] sm:$0xff] %v1246
  %1295 = vst [vmem:[%s3 + $0x48] sm:$0xff] %v1247
  %1296 = vst [vmem:[%s3 + $0x50] sm:$0xff] %v1248
  %1297 = vst [vmem:[%s3 + $0x58] sm:$0xff] %v1249
  %1298 = vst [vmem:[%s3 + $0x60] sm:$0xff] %v1250
  %1299 = vst [vmem:[%s3 + $0x68] sm:$0xff] %v1251
  %1300 = vst [vmem:[%s3 + $0x70] sm:$0xff] %v1252
  %1301 = vst [vmem:[%s3 + $0x78] sm:$0xff] %v1253
  %1302 = vst [vmem:[%s3 + $0x80] sm:$0xff] %v1254
  %1303 = vst [vmem:[%s3 + $0x88] sm:$0xff] %v1255
  %1304 = vst [vmem:[%s3 + $0x90] sm:$0xff] %v1256
  %1305 = vst [vmem:[%s3 + $0x98] sm:$0xff] %v1257
  %1306 = vst [vmem:[%s3 + $0xa0] sm:$0xff] %v1258
  %1307 = vst [vmem:[%s3 + $0xa8] sm:$0xff] %v1259
  %1308 = vst [vmem:[%s3 + $0xb0] sm:$0xff] %v1260
  %1309 = vst [vmem:[%s3 + $0xb8] sm:$0xff] %v1261
  %1310 = vst [vmem:[%s3 + $0xc0] sm:$0xff] %v1262
  %1311 = vst [vmem:[%s3 + $0xc8] sm:$0xff] %v1263
  %1312 = vst [vmem:[%s3 + $0xd0] sm:$0xff] %v1264
  %1313 = vst [vmem:[%s3 + $0xd8] sm:$0xff] %v1265
  %1314 = vst [vmem:[%s3 + $0xe0] sm:$0xff] %v1266
  %1315 = vst [vmem:[%s3 + $0xe8] sm:$0xff] %v1267
  %1316 = vst [vmem:[%s3 + $0xf0] sm:$0xff] %v1268
  %1317 = vst [vmem:[%s3 + $0xf8] sm:$0xff] %v1269
  %1318 = vst [vmem:[%s3 + $0x100] sm:$0xff] %v1270
  %1319 = vst [vmem:[%s3 + $0x108] sm:$0xff] %v1271
  %1320 = vst [vmem:[%s3 + $0x110] sm:$0xff] %v1272
  %1321 = vst [vmem:[%s3 + $0x118] sm:$0xff] %v1273
  %1322 = vst [vmem:[%s3 + $0x120] sm:$0xff] %v1274
  %1323 = vst [vmem:[%s3 + $0x128] sm:$0xff] %v1275
  %1324 = vst [vmem:[%s3 + $0x130] sm:$0xff] %v1276
  %1325 = vst [vmem:[%s3 + $0x138] sm:$0xff] %v1277
  %1326 = vst [vmem:[%s3 + $0x140] sm:$0xff] %v1278
  %1327 = vst [vmem:[%s3 + $0x148] sm:$0xff] %v1279
  %1328 = vst [vmem:[%s3 + $0x150] sm:$0xff] %v1280
  %1329 = vst [vmem:[%s3 + $0x158] sm:$0xff] %v1281
  %1330 = vst [vmem:[%s3 + $0x160] sm:$0xff] %v1282
  %1331 = vst [vmem:[%s3 + $0x168] sm:$0xff] %v1283
  %1332 = vst [vmem:[%s3 + $0x170] sm:$0xff] %v1284
  %1333 = vst [vmem:[%s3 + $0x178] sm:$0xff] %v1285
  // Predicated region
  $region14: #{forward.13} parent=0 // pred_check
    _
  $region15: #{forward.13} parent=0 // pred_check_branch
    %1335 = sbr.rel (0) target = $region17
  $region16: #{forward.13} parent=0 // pred_region
    _
  $region17: #{forward.13} parent=0 // pred_fallthru
    _
  // Predicated region
  $region18: #{forward.13} parent=0 // pred_check
    _
  $region19: #{forward.13} parent=0 // pred_check_branch
    %1337 = sbr.rel (0) target = $region21
  $region20: #{forward.13} parent=0 // pred_region
    _
  $region21: #{forward.13} parent=0 // pred_fallthru
    _

// kernel: forward.14
$region0: #{forward.14}
  #allocation0 [shape = 'u32[]', space=smem, size = 0x4, offset = 0x4, fixed_abs, tag = 'smem constant byte address 0x4 - core index']
  #allocation1 [shape = 'u32[144,128]{1,0:T(1,128)}', space=vmem, size = 0x12000, scoped, tag = 'internal scratch']
  %s0 = inlined_call_operand.vmem [shape: bf16[16,1600], index: 0, kind: input, shape index: {}]
  %s1 = inlined_call_operand.vmem [shape: bf16[1600,3584], index: 1, kind: input, shape index: {}]
  %s2 = inlined_call_operand.vmem [shape: f32[16,1], index: 2, kind: input, shape index: {}]
  %s3 = inlined_call_operand.vmem [shape: f32[16,3584], index: 3, kind: output, shape index: {}]
  %s4 = sld [smem:[#allocation0]]
  $region87: #{forward.14} parent=0
    _
  %s6 = ssub.s32 1, %s4
  %s7 = scalar_select 0, %s6, %s4
  $region1: #{forward.14} parent=0
    #allocation2 [shape = 'u8[3276800]{0}', space=vmem, size = 0x320000, scoped, tag = 'input window, operand 1']
    #allocation3 [shape = 'u8[65536]{0}', space=vmem, size = 0x10000, scoped, tag = 'output window, operand 0']
    loop: start=0, step=1, limit=9
    $region2: #{forward.14} parent=1 // loop_pre_header
      _
    $region3: #{forward.14} parent=1 // loop_header
      %s9 = sphi 0, %s13
      %p10 = scmp.ge.s32.totalorder %s9, 9
      %s17 = sphi 0, %s17
      %s19 = sphi 0, %s17
      %s20 = sphi 0, %s19
      %s34 = sphi 0, %s20
      %s40 = sphi 0, %s42
      %s43 = sphi 0, %s40
      %s44 = sphi 0, %s43
      %s60 = sphi 0, %s44
      %s64 = sphi 0, %s64
      %s66 = sphi 0, %s64
      %s67 = sphi 0, %s66
      %s81 = sphi 0, %s67
      %s87 = sphi 0, %s89
      %s90 = sphi 0, %s87
      %s91 = sphi 0, %s90
      %s107 = sphi 0, %s91
    $region4: #{forward.14} parent=1 // loop_header_branch
      %12 = sbr.rel (%p10) target = $region8
    $region5: #{forward.14} parent=1 // loop_body
      %s14 = ssub.s32 %s9, 1
      %s15 = ssub.s32 %s9, 2
      %s16 = sadd.s32 %s9, 1
      %s18 = sadd.s32 %s17, 1
      %p21 = scmp.eq.s32.totalorder %s9, 6
      %p22 = scmp.ne.s32.totalorder %s17, %s19
      %p23 = scmp.eq.s32.totalorder %s9, 0
      %p24 = por %p22, %p23
      %p25 = scmp.ne.s32.totalorder %s17, %s19
      %p26 = scmp.eq.s32.totalorder %s14, 6
      %p27 = por %p25, %p26
      %p28 = scmp.ne.s32.totalorder %s19, %s20
      %p29 = scmp.eq.s32.totalorder %s14, 0
      %p30 = por %p28, %p29
      %p31 = scmp.ne.s32.totalorder %s19, %s20
      %p32 = scmp.eq.s32.totalorder %s15, 6
      %p33 = por %p31, %p32
      %p35 = scmp.ne.s32.totalorder %s20, %s34
      %p36 = scmp.eq.s32.totalorder %s15, 0
      %p37 = por %p35, %p36
      %s38 = ssub.s32 %s9, %s16
      %p39 = scmp.eq.s32.totalorder %s38, 0
      %s41 = sadd.s32 %s40, 1
      %s42 = scalar_select %p39, %s40, %s41
      %p45 = pneg %p39
      %p46 = scmp.eq.s32.totalorder %s9, 6
      %p47 = por %p45, %p46
      %p48 = scmp.ne.s32.totalorder %s40, %s43
      %p49 = scmp.eq.s32.totalorder %s9, 0
      %p50 = por %p48, %p49
      %p51 = scmp.ne.s32.totalorder %s40, %s43
      %p52 = scmp.eq.s32.totalorder %s14, 6
      %p53 = por %p51, %p52
      %p54 = scmp.ne.s32.totalorder %s43, %s44
      %p55 = scmp.eq.s32.totalorder %s14, 0
      %p56 = por %p54, %p55
      %p57 = scmp.ne.s32.totalorder %s43, %s44
      %p58 = scmp.eq.s32.totalorder %s15, 6
      %p59 = por %p57, %p58
      %p61 = scmp.ne.s32.totalorder %s44, %s60
      %p62 = scmp.eq.s32.totalorder %s15, 0
      %p63 = por %p61, %p62
      %s65 = sadd.s32 %s64, 1
      %p68 = scmp.eq.s32.totalorder %s9, 6
      %p69 = scmp.ne.s32.totalorder %s64, %s66
      %p70 = scmp.eq.s32.totalorder %s9, 0
      %p71 = por %p69, %p70
      %p72 = scmp.ne.s32.totalorder %s64, %s66
      %p73 = scmp.eq.s32.totalorder %s14, 6
      %p74 = por %p72, %p73
      %p75 = scmp.ne.s32.totalorder %s66, %s67
      %p76 = scmp.eq.s32.totalorder %s14, 0
      %p77 = por %p75, %p76
      %p78 = scmp.ne.s32.totalorder %s66, %s67
      %p79 = scmp.eq.s32.totalorder %s15, 6
      %p80 = por %p78, %p79
      %p82 = scmp.ne.s32.totalorder %s67, %s81
      %p83 = scmp.eq.s32.totalorder %s15, 0
      %p84 = por %p82, %p83
      %s85 = ssub.s32 %s9, %s16
      %p86 = scmp.eq.s32.totalorder %s85, 0
      %s88 = sadd.s32 %s87, 1
      %s89 = scalar_select %p86, %s87, %s88
      %p92 = pneg %p86
      %p93 = scmp.eq.s32.totalorder %s9, 6
      %p94 = por %p92, %p93
      %p95 = scmp.ne.s32.totalorder %s87, %s90
      %p96 = scmp.eq.s32.totalorder %s9, 0
      %p97 = por %p95, %p96
      %p98 = scmp.ne.s32.totalorder %s87, %s90
      %p99 = scmp.eq.s32.totalorder %s14, 6
      %p100 = por %p98, %p99
      %p101 = scmp.ne.s32.totalorder %s90, %s91
      %p102 = scmp.eq.s32.totalorder %s14, 0
      %p103 = por %p101, %p102
      %p104 = scmp.ne.s32.totalorder %s90, %s91
      %p105 = scmp.eq.s32.totalorder %s15, 6
      %p106 = por %p104, %p105
      %p108 = scmp.ne.s32.totalorder %s91, %s107
      %p109 = scmp.eq.s32.totalorder %s15, 0
      %p110 = por %p108, %p109
      %p111 = scmp.le.s32.totalorder 1, %s9
      %p112 = scmp.lt.s32.totalorder %s9, 8
      %p113 = pnand %p111, %p112
      %p114 = pneg %p113
      // Predicated region
      $region9: #{forward.14} parent=5 // pred_check
        _
      $region10: #{forward.14} parent=5 // pred_check_branch
        %116 = sbr.rel (%p113) target = $region12
      $region11: #{forward.14} parent=5 // pred_region
        %s117 = ssub.s32 %s9, 1
        // Predicated region
        $region13: #{forward.14} parent=11 // pred_check
          %p118 = pneg %p30
        $region14: #{forward.14} parent=11 // pred_check_branch
          %120 = sbr.rel (%p118) target = $region16
        $region15: #{forward.14} parent=11 // pred_region
          _
        $region16: #{forward.14} parent=11 // pred_fallthru
          _
        // Predicated region
        $region17: #{forward.14} parent=11 // pred_check
          %p121 = pneg %p77
        $region18: #{forward.14} parent=11 // pred_check_branch
          %123 = sbr.rel (%p121) target = $region20
        $region19: #{forward.14} parent=11 // pred_region
          _
        $region20: #{forward.14} parent=11 // pred_fallthru
          _
      $region12: #{forward.14} parent=5 // pred_fallthru
        _
      %p124 = scmp.lt.s32.totalorder %s9, 7
      // Predicated region
      $region21: #{forward.14} parent=5 // pred_check
        %p125 = pneg %p124
      $region22: #{forward.14} parent=5 // pred_check_branch
        %127 = sbr.rel (%p125) target = $region24
      $region23: #{forward.14} parent=5 // pred_region
        // Predicated region
        $region25: #{forward.14} parent=23 // pred_check
          %p128 = pneg %p50
        $region26: #{forward.14} parent=23 // pred_check_branch
          %130 = sbr.rel (%p128) target = $region28
        $region27: #{forward.14} parent=23 // pred_region
          %s131 = sand.u32 %s40, 1
          %s132 = sand.u32 %s40, 1
          %s133 = smul.addr %s132, 3200
          %s134 = scalar_lea.vmem [#allocation2], %s133
          %s135 = smul.u32 4, %s9
          %s136 = smul.addr %s135, 4
          %s137 = scalar_lea.vmem %s1, %s136
          // Predicated region
          $region29: #{forward.14} parent=27 // pred_check
            _
          $region30: #{forward.14} parent=27 // pred_check_branch
            %139 = sbr.rel (0) target = $region32
          $region31: #{forward.14} parent=27 // pred_region
            // Predicated region
            $region33: #{forward.14} parent=31 // pred_check
              _
            $region34: #{forward.14} parent=31 // pred_check_branch
              %141 = sbr.rel (0) target = $region36
            $region35: #{forward.14} parent=31 // pred_region
              loop: start=0, step=1, limit=1
              $region37: #{forward.14} parent=35 // loop_pre_header
                _
              $region38: #{forward.14} parent=35 // loop_header
                %s143 = sphi 0, %s147
                %p144 = scmp.ge.s32.totalorder %s143, 1
                %s148 = sphi %s137, %s137
                %s149 = sphi %s134, %s134
              $region39: #{forward.14} parent=35 // loop_header_branch
                %146 = sbr.rel (%p144) target = $region43
              $region40: #{forward.14} parent=35 // loop_body
                %v150 = vld [vmem:[%s148] sm:$0xff]
                %151 = vst [vmem:[%s149] sm:$0xff] %v150
                %v152 = vld [vmem:[%s148 + $0x8] sm:$0xff]
                %153 = vst [vmem:[%s149 + $0x8] sm:$0xff] %v152
                %v154 = vld [vmem:[%s148 + $0x70] sm:$0xff]
                %155 = vst [vmem:[%s149 + $0x10] sm:$0xff] %v154
                %v156 = vld [vmem:[%s148 + $0x78] sm:$0xff]
                %157 = vst [vmem:[%s149 + $0x18] sm:$0xff] %v156
                %v158 = vld [vmem:[%s148 + $0xe0] sm:$0xff]
                %159 = vst [vmem:[%s149 + $0x20] sm:$0xff] %v158
                %v160 = vld [vmem:[%s148 + $0xe8] sm:$0xff]
                %161 = vst [vmem:[%s149 + $0x28] sm:$0xff] %v160
                %v162 = vld [vmem:[%s148 + $0x150] sm:$0xff]
                %163 = vst [vmem:[%s149 + $0x30] sm:$0xff] %v162
                %v164 = vld [vmem:[%s148 + $0x158] sm:$0xff]
                %165 = vst [vmem:[%s149 + $0x38] sm:$0xff] %v164
                %v166 = vld [vmem:[%s148 + $0x1c0] sm:$0xff]
                %167 = vst [vmem:[%s149 + $0x40] sm:$0xff] %v166
                %v168 = vld [vmem:[%s148 + $0x1c8] sm:$0xff]
                %169 = vst [vmem:[%s149 + $0x48] sm:$0xff] %v168
                %v170 = vld [vmem:[%s148 + $0x230] sm:$0xff]
                %171 = vst [vmem:[%s149 + $0x50] sm:$0xff] %v170
                %v172 = vld [vmem:[%s148 + $0x238] sm:$0xff]
                %173 = vst [vmem:[%s149 + $0x58] sm:$0xff] %v172
                %v174 = vld [vmem:[%s148 + $0x2a0] sm:$0xff]
                %175 = vst [vmem:[%s149 + $0x60] sm:$0xff] %v174
                %v176 = vld [vmem:[%s148 + $0x2a8] sm:$0xff]
                %177 = vst [vmem:[%s149 + $0x68] sm:$0xff] %v176
                %v178 = vld [vmem:[%s148 + $0x310] sm:$0xff]
                %179 = vst [vmem:[%s149 + $0x70] sm:$0xff] %v178
                %v180 = vld [vmem:[%s148 + $0x318] sm:$0xff]
                %181 = vst [vmem:[%s149 + $0x78] sm:$0xff] %v180
                %v182 = vld [vmem:[%s148 + $0x380] sm:$0xff]
                %183 = vst [vmem:[%s149 + $0x80] sm:$0xff] %v182
                %v184 = vld [vmem:[%s148 + $0x388] sm:$0xff]
                %185 = vst [vmem:[%s149 + $0x88] sm:$0xff] %v184
                %v186 = vld [vmem:[%s148 + $0x3f0] sm:$0xff]
                %187 = vst [vmem:[%s149 + $0x90] sm:$0xff] %v186
                %v188 = vld [vmem:[%s148 + $0x3f8] sm:$0xff]
                %189 = vst [vmem:[%s149 + $0x98] sm:$0xff] %v188
                %v190 = vld [vmem:[%s148 + $0x460] sm:$0xff]
                %191 = vst [vmem:[%s149 + $0xa0] sm:$0xff] %v190
                %v192 = vld [vmem:[%s148 + $0x468] sm:$0xff]
                %193 = vst [vmem:[%s149 + $0xa8] sm:$0xff] %v192
                %v194 = vld [vmem:[%s148 + $0x4d0] sm:$0xff]
                %195 = vst [vmem:[%s149 + $0xb0] sm:$0xff] %v194
                %v196 = vld [vmem:[%s148 + $0x4d8] sm:$0xff]
                %197 = vst [vmem:[%s149 + $0xb8] sm:$0xff] %v196
                %v198 = vld [vmem:[%s148 + $0x540] sm:$0xff]
                %199 = vst [vmem:[%s149 + $0xc0] sm:$0xff] %v198
                %v200 = vld [vmem:[%s148 + $0x548] sm:$0xff]
                %201 = vst [vmem:[%s149 + $0xc8] sm:$0xff] %v200
                %v202 = vld [vmem:[%s148 + $0x5b0] sm:$0xff]
                %203 = vst [vmem:[%s149 + $0xd0] sm:$0xff] %v202
                %v204 = vld [vmem:[%s148 + $0x5b8] sm:$0xff]
                %205 = vst [vmem:[%s149 + $0xd8] sm:$0xff] %v204
                %v206 = vld [vmem:[%s148 + $0x620] sm:$0xff]
                %207 = vst [vmem:[%s149 + $0xe0] sm:$0xff] %v206
                %v208 = vld [vmem:[%s148 + $0x628] sm:$0xff]
                %209 = vst [vmem:[%s149 + $0xe8] sm:$0xff] %v208
                %v210 = vld [vmem:[%s148 + $0x690] sm:$0xff]
                %211 = vst [vmem:[%s149 + $0xf0] sm:$0xff] %v210
                %v212 = vld [vmem:[%s148 + $0x698] sm:$0xff]
                %213 = vst [vmem:[%s149 + $0xf8] sm:$0xff] %v212
                %v214 = vld [vmem:[%s148 + $0x700] sm:$0xff]
                %215 = vst [vmem:[%s149 + $0x100] sm:$0xff] %v214
                %v216 = vld [vmem:[%s148 + $0x708] sm:$0xff]
                %217 = vst [vmem:[%s149 + $0x108] sm:$0xff] %v216
                %v218 = vld [vmem:[%s148 + $0x770] sm:$0xff]
                %219 = vst [vmem:[%s149 + $0x110] sm:$0xff] %v218
                %v220 = vld [vmem:[%s148 + $0x778] sm:$0xff]
                %221 = vst [vmem:[%s149 + $0x118] sm:$0xff] %v220
                %v222 = vld [vmem:[%s148 + $0x7e0] sm:$0xff]
                %223 = vst [vmem:[%s149 + $0x120] sm:$0xff] %v222
                %v224 = vld [vmem:[%s148 + $0x7e8] sm:$0xff]
                %225 = vst [vmem:[%s149 + $0x128] sm:$0xff] %v224
                %v226 = vld [vmem:[%s148 + $0x850] sm:$0xff]
                %227 = vst [vmem:[%s149 + $0x130] sm:$0xff] %v226
                %v228 = vld [vmem:[%s148 + $0x858] sm:$0xff]
                %229 = vst [vmem:[%s149 + $0x138] sm:$0xff] %v228
                %v230 = vld [vmem:[%s148 + $0x8c0] sm:$0xff]
                %231 = vst [vmem:[%s149 + $0x140] sm:$0xff] %v230
                %v232 = vld [vmem:[%s148 + $0x8c8] sm:$0xff]
                %233 = vst [vmem:[%s149 + $0x148] sm:$0xff] %v232
                %v234 = vld [vmem:[%s148 + $0x930] sm:$0xff]
                %235 = vst [vmem:[%s149 + $0x150] sm:$0xff] %v234
                %v236 = vld [vmem:[%s148 + $0x938] sm:$0xff]
                %237 = vst [vmem:[%s149 + $0x158] sm:$0xff] %v236
                %v238 = vld [vmem:[%s148 + $0x9a0] sm:$0xff]
                %239 = vst [vmem:[%s149 + $0x160] sm:$0xff] %v238
                %v240 = vld [vmem:[%s148 + $0x9a8] sm:$0xff]
                %241 = vst [vmem:[%s149 + $0x168] sm:$0xff] %v240
                %v242 = vld [vmem:[%s148 + $0xa10] sm:$0xff]
                %243 = vst [vmem:[%s149 + $0x170] sm:$0xff] %v242
                %v244 = vld [vmem:[%s148 + $0xa18] sm:$0xff]
                %245 = vst [vmem:[%s149 + $0x178] sm:$0xff] %v244
                %v246 = vld [vmem:[%s148 + $0xa80] sm:$0xff]
                %247 = vst [vmem:[%s149 + $0x180] sm:$0xff] %v246
                %v248 = vld [vmem:[%s148 + $0xa88] sm:$0xff]
                %249 = vst [vmem:[%s149 + $0x188] sm:$0xff] %v248
                %v250 = vld [vmem:[%s148 + $0xaf0] sm:$0xff]
                %251 = vst [vmem:[%s149 + $0x190] sm:$0xff] %v250
                %v252 = vld [vmem:[%s148 + $0xaf8] sm:$0xff]
                %253 = vst [vmem:[%s149 + $0x198] sm:$0xff] %v252
                %v254 = vld [vmem:[%s148 + $0xb60] sm:$0xff]
                %255 = vst [vmem:[%s149 + $0x1a0] sm:$0xff] %v254
                %v256 = vld [vmem:[%s148 + $0xb68] sm:$0xff]
                %257 = vst [vmem:[%s149 + $0x1a8] sm:$0xff] %v256
                %v258 = vld [vmem:[%s148 + $0xbd0] sm:$0xff]
                %259 = vst [vmem:[%s149 + $0x1b0] sm:$0xff] %v258
                %v260 = vld [vmem:[%s148 + $0xbd8] sm:$0xff]
                %261 = vst [vmem:[%s149 + $0x1b8] sm:$0xff] %v260
                %v262 = vld [vmem:[%s148 + $0xc40] sm:$0xff]
                %263 = vst [vmem:[%s149 + $0x1c0] sm:$0xff] %v262
                %v264 = vld [vmem:[%s148 + $0xc48] sm:$0xff]
                %265 = vst [vmem:[%s149 + $0x1c8] sm:$0xff] %v264
                %v266 = vld [vmem:[%s148 + $0xcb0] sm:$0xff]
                %267 = vst [vmem:[%s149 + $0x1d0] sm:$0xff] %v266
                %v268 = vld [vmem:[%s148 + $0xcb8] sm:$0xff]
                %269 = vst [vmem:[%s149 + $0x1d8] sm:$0xff] %v268
                %v270 = vld [vmem:[%s148 + $0xd20] sm:$0xff]
                %271 = vst [vmem:[%s149 + $0x1e0] sm:$0xff] %v270
                %v272 = vld [vmem:[%s148 + $0xd28] sm:$0xff]
                %273 = vst [vmem:[%s149 + $0x1e8] sm:$0xff] %v272
                %v274 = vld [vmem:[%s148 + $0xd90] sm:$0xff]
                %275 = vst [vmem:[%s149 + $0x1f0] sm:$0xff] %v274
                %v276 = vld [vmem:[%s148 + $0xd98] sm:$0xff]
                %277 = vst [vmem:[%s149 + $0x1f8] sm:$0xff] %v276
                %v278 = vld [vmem:[%s148 + $0xe00] sm:$0xff]
                %279 = vst [vmem:[%s149 + $0x200] sm:$0xff] %v278
                %v280 = vld [vmem:[%s148 + $0xe08] sm:$0xff]
                %281 = vst [vmem:[%s149 + $0x208] sm:$0xff] %v280
                %v282 = vld [vmem:[%s148 + $0xe70] sm:$0xff]
                %283 = vst [vmem:[%s149 + $0x210] sm:$0xff] %v282
                %v284 = vld [vmem:[%s148 + $0xe78] sm:$0xff]
                %285 = vst [vmem:[%s149 + $0x218] sm:$0xff] %v284
                %v286 = vld [vmem:[%s148 + $0xee0] sm:$0xff]
                %287 = vst [vmem:[%s149 + $0x220] sm:$0xff] %v286
                %v288 = vld [vmem:[%s148 + $0xee8] sm:$0xff]
                %289 = vst [vmem:[%s149 + $0x228] sm:$0xff] %v288
                %v290 = vld [vmem:[%s148 + $0xf50] sm:$0xff]
                %291 = vst [vmem:[%s149 + $0x230] sm:$0xff] %v290
                %v292 = vld [vmem:[%s148 + $0xf58] sm:$0xff]
                %293 = vst [vmem:[%s149 + $0x238] sm:$0xff] %v292
                %v294 = vld [vmem:[%s148 + $0xfc0] sm:$0xff]
                %295 = vst [vmem:[%s149 + $0x240] sm:$0xff] %v294
                %v296 = vld [vmem:[%s148 + $0xfc8] sm:$0xff]
                %297 = vst [vmem:[%s149 + $0x248] sm:$0xff] %v296
                %v298 = vld [vmem:[%s148 + $0x1030] sm:$0xff]
                %299 = vst [vmem:[%s149 + $0x250] sm:$0xff] %v298
                %v300 = vld [vmem:[%s148 + $0x1038] sm:$0xff]
                %301 = vst [vmem:[%s149 + $0x258] sm:$0xff] %v300
                %v302 = vld [vmem:[%s148 + $0x10a0] sm:$0xff]
                %303 = vst [vmem:[%s149 + $0x260] sm:$0xff] %v302
                %v304 = vld [vmem:[%s148 + $0x10a8] sm:$0xff]
                %305 = vst [vmem:[%s149 + $0x268] sm:$0xff] %v304
                %v306 = vld [vmem:[%s148 + $0x1110] sm:$0xff]
                %307 = vst [vmem:[%s149 + $0x270] sm:$0xff] %v306
                %v308 = vld [vmem:[%s148 + $0x1118] sm:$0xff]
                %309 = vst [vmem:[%s149 + $0x278] sm:$0xff] %v308
                %v310 = vld [vmem:[%s148 + $0x1180] sm:$0xff]
                %311 = vst [vmem:[%s149 + $0x280] sm:$0xff] %v310
                %v312 = vld [vmem:[%s148 + $0x1188] sm:$0xff]
                %313 = vst [vmem:[%s149 + $0x288] sm:$0xff] %v312
                %v314 = vld [vmem:[%s148 + $0x11f0] sm:$0xff]
                %315 = vst [vmem:[%s149 + $0x290] sm:$0xff] %v314
                %v316 = vld [vmem:[%s148 + $0x11f8] sm:$0xff]
                %317 = vst [vmem:[%s149 + $0x298] sm:$0xff] %v316
                %v318 = vld [vmem:[%s148 + $0x1260] sm:$0xff]
                %319 = vst [vmem:[%s149 + $0x2a0] sm:$0xff] %v318
                %v320 = vld [vmem:[%s148 + $0x1268] sm:$0xff]
                %321 = vst [vmem:[%s149 + $0x2a8] sm:$0xff] %v320
                %v322 = vld [vmem:[%s148 + $0x12d0] sm:$0xff]
                %323 = vst [vmem:[%s149 + $0x2b0] sm:$0xff] %v322
                %v324 = vld [vmem:[%s148 + $0x12d8] sm:$0xff]
                %325 = vst [vmem:[%s149 + $0x2b8] sm:$0xff] %v324
                %v326 = vld [vmem:[%s148 + $0x1340] sm:$0xff]
                %327 = vst [vmem:[%s149 + $0x2c0] sm:$0xff] %v326
                %v328 = vld [vmem:[%s148 + $0x1348] sm:$0xff]
                %329 = vst [vmem:[%s149 + $0x2c8] sm:$0xff] %v328
                %v330 = vld [vmem:[%s148 + $0x13b0] sm:$0xff]
                %331 = vst [vmem:[%s149 + $0x2d0] sm:$0xff] %v330
                %v332 = vld [vmem:[%s148 + $0x13b8] sm:$0xff]
                %333 = vst [vmem:[%s149 + $0x2d8] sm:$0xff] %v332
                %v334 = vld [vmem:[%s148 + $0x1420] sm:$0xff]
                %335 = vst [vmem:[%s149 + $0x2e0] sm:$0xff] %v334
                %v336 = vld [vmem:[%s148 + $0x1428] sm:$0xff]
                %337 = vst [vmem:[%s149 + $0x2e8] sm:$0xff] %v336
                %v338 = vld [vmem:[%s148 + $0x1490] sm:$0xff]
                %339 = vst [vmem:[%s149 + $0x2f0] sm:$0xff] %v338
                %v340 = vld [vmem:[%s148 + $0x1498] sm:$0xff]
                %341 = vst [vmem:[%s149 + $0x2f8] sm:$0xff] %v340
                %v342 = vld [vmem:[%s148 + $0x1500] sm:$0xff]
                %343 = vst [vmem:[%s149 + $0x300] sm:$0xff] %v342
                %v344 = vld [vmem:[%s148 + $0x1508] sm:$0xff]
                %345 = vst [vmem:[%s149 + $0x308] sm:$0xff] %v344
                %v346 = vld [vmem:[%s148 + $0x1570] sm:$0xff]
                %347 = vst [vmem:[%s149 + $0x310] sm:$0xff] %v346
                %v348 = vld [vmem:[%s148 + $0x1578] sm:$0xff]
                %349 = vst [vmem:[%s149 + $0x318] sm:$0xff] %v348
                %v350 = vld [vmem:[%s148 + $0x15e0] sm:$0xff]
                %351 = vst [vmem:[%s149 + $0x320] sm:$0xff] %v350
                %v352 = vld [vmem:[%s148 + $0x15e8] sm:$0xff]
                %353 = vst [vmem:[%s149 + $0x328] sm:$0xff] %v352
                %v354 = vld [vmem:[%s148 + $0x1650] sm:$0xff]
                %355 = vst [vmem:[%s149 + $0x330] sm:$0xff] %v354
                %v356 = vld [vmem:[%s148 + $0x1658] sm:$0xff]
                %357 = vst [vmem:[%s149 + $0x338] sm:$0xff] %v356
                %v358 = vld [vmem:[%s148 + $0x16c0] sm:$0xff]
                %359 = vst [vmem:[%s149 + $0x340] sm:$0xff] %v358
                %v360 = vld [vmem:[%s148 + $0x16c8] sm:$0xff]
                %361 = vst [vmem:[%s149 + $0x348] sm:$0xff] %v360
                %v362 = vld [vmem:[%s148 + $0x1730] sm:$0xff]
                %363 = vst [vmem:[%s149 + $0x350] sm:$0xff] %v362
                %v364 = vld [vmem:[%s148 + $0x1738] sm:$0xff]
                %365 = vst [vmem:[%s149 + $0x358] sm:$0xff] %v364
                %v366 = vld [vmem:[%s148 + $0x17a0] sm:$0xff]
                %367 = vst [vmem:[%s149 + $0x360] sm:$0xff] %v366
                %v368 = vld [vmem:[%s148 + $0x17a8] sm:$0xff]
                %369 = vst [vmem:[%s149 + $0x368] sm:$0xff] %v368
                %v370 = vld [vmem:[%s148 + $0x1810] sm:$0xff]
                %371 = vst [vmem:[%s149 + $0x370] sm:$0xff] %v370
                %v372 = vld [vmem:[%s148 + $0x1818] sm:$0xff]
                %373 = vst [vmem:[%s149 + $0x378] sm:$0xff] %v372
                %v374 = vld [vmem:[%s148 + $0x1880] sm:$0xff]
                %375 = vst [vmem:[%s149 + $0x380] sm:$0xff] %v374
                %v376 = vld [vmem:[%s148 + $0x1888] sm:$0xff]
                %377 = vst [vmem:[%s149 + $0x388] sm:$0xff] %v376
                %v378 = vld [vmem:[%s148 + $0x18f0] sm:$0xff]
                %379 = vst [vmem:[%s149 + $0x390] sm:$0xff] %v378
                %v380 = vld [vmem:[%s148 + $0x18f8] sm:$0xff]
                %381 = vst [vmem:[%s149 + $0x398] sm:$0xff] %v380
                %v382 = vld [vmem:[%s148 + $0x1960] sm:$0xff]
                %383 = vst [vmem:[%s149 + $0x3a0] sm:$0xff] %v382
                %v384 = vld [vmem:[%s148 + $0x1968] sm:$0xff]
                %385 = vst [vmem:[%s149 + $0x3a8] sm:$0xff] %v384
                %v386 = vld [vmem:[%s148 + $0x19d0] sm:$0xff]
                %387 = vst [vmem:[%s149 + $0x3b0] sm:$0xff] %v386
                %v388 = vld [vmem:[%s148 + $0x19d8] sm:$0xff]
                %389 = vst [vmem:[%s149 + $0x3b8] sm:$0xff] %v388
                %v390 = vld [vmem:[%s148 + $0x1a40] sm:$0xff]
                %391 = vst [vmem:[%s149 + $0x3c0] sm:$0xff] %v390
                %v392 = vld [vmem:[%s148 + $0x1a48] sm:$0xff]
                %393 = vst [vmem:[%s149 + $0x3c8] sm:$0xff] %v392
                %v394 = vld [vmem:[%s148 + $0x1ab0] sm:$0xff]
                %395 = vst [vmem:[%s149 + $0x3d0] sm:$0xff] %v394
                %v396 = vld [vmem:[%s148 + $0x1ab8] sm:$0xff]
                %397 = vst [vmem:[%s149 + $0x3d8] sm:$0xff] %v396
                %v398 = vld [vmem:[%s148 + $0x1b20] sm:$0xff]
                %399 = vst [vmem:[%s149 + $0x3e0] sm:$0xff] %v398
                %v400 = vld [vmem:[%s148 + $0x1b28] sm:$0xff]
                %401 = vst [vmem:[%s149 + $0x3e8] sm:$0xff] %v400
                %v402 = vld [vmem:[%s148 + $0x1b90] sm:$0xff]
                %403 = vst [vmem:[%s149 + $0x3f0] sm:$0xff] %v402
                %v404 = vld [vmem:[%s148 + $0x1b98] sm:$0xff]
                %405 = vst [vmem:[%s149 + $0x3f8] sm:$0xff] %v404
                %v406 = vld [vmem:[%s148 + $0x1c00] sm:$0xff]
                %407 = vst [vmem:[%s149 + $0x400] sm:$0xff] %v406
                %v408 = vld [vmem:[%s148 + $0x1c08] sm:$0xff]
                %409 = vst [vmem:[%s149 + $0x408] sm:$0xff] %v408
                %v410 = vld [vmem:[%s148 + $0x1c70] sm:$0xff]
                %411 = vst [vmem:[%s149 + $0x410] sm:$0xff] %v410
                %v412 = vld [vmem:[%s148 + $0x1c78] sm:$0xff]
                %413 = vst [vmem:[%s149 + $0x418] sm:$0xff] %v412
                %v414 = vld [vmem:[%s148 + $0x1ce0] sm:$0xff]
                %415 = vst [vmem:[%s149 + $0x420] sm:$0xff] %v414
                %v416 = vld [vmem:[%s148 + $0x1ce8] sm:$0xff]
                %417 = vst [vmem:[%s149 + $0x428] sm:$0xff] %v416
                %v418 = vld [vmem:[%s148 + $0x1d50] sm:$0xff]
                %419 = vst [vmem:[%s149 + $0x430] sm:$0xff] %v418
                %v420 = vld [vmem:[%s148 + $0x1d58] sm:$0xff]
                %421 = vst [vmem:[%s149 + $0x438] sm:$0xff] %v420
                %v422 = vld [vmem:[%s148 + $0x1dc0] sm:$0xff]
                %423 = vst [vmem:[%s149 + $0x440] sm:$0xff] %v422
                %v424 = vld [vmem:[%s148 + $0x1dc8] sm:$0xff]
                %425 = vst [vmem:[%s149 + $0x448] sm:$0xff] %v424
                %v426 = vld [vmem:[%s148 + $0x1e30] sm:$0xff]
                %427 = vst [vmem:[%s149 + $0x450] sm:$0xff] %v426
                %v428 = vld [vmem:[%s148 + $0x1e38] sm:$0xff]
                %429 = vst [vmem:[%s149 + $0x458] sm:$0xff] %v428
                %v430 = vld [vmem:[%s148 + $0x1ea0] sm:$0xff]
                %431 = vst [vmem:[%s149 + $0x460] sm:$0xff] %v430
                %v432 = vld [vmem:[%s148 + $0x1ea8] sm:$0xff]
                %433 = vst [vmem:[%s149 + $0x468] sm:$0xff] %v432
                %v434 = vld [vmem:[%s148 + $0x1f10] sm:$0xff]
                %435 = vst [vmem:[%s149 + $0x470] sm:$0xff] %v434
                %v436 = vld [vmem:[%s148 + $0x1f18] sm:$0xff]
                %437 = vst [vmem:[%s149 + $0x478] sm:$0xff] %v436
                %v438 = vld [vmem:[%s148 + $0x1f80] sm:$0xff]
                %439 = vst [vmem:[%s149 + $0x480] sm:$0xff] %v438
                %v440 = vld [vmem:[%s148 + $0x1f88] sm:$0xff]
                %441 = vst [vmem:[%s149 + $0x488] sm:$0xff] %v440
                %v442 = vld [vmem:[%s148 + $0x1ff0] sm:$0xff]
                %443 = vst [vmem:[%s149 + $0x490] sm:$0xff] %v442
                %v444 = vld [vmem:[%s148 + $0x1ff8] sm:$0xff]
                %445 = vst [vmem:[%s149 + $0x498] sm:$0xff] %v444
                %v446 = vld [vmem:[%s148 + $0x2060] sm:$0xff]
                %447 = vst [vmem:[%s149 + $0x4a0] sm:$0xff] %v446
                %v448 = vld [vmem:[%s148 + $0x2068] sm:$0xff]
                %449 = vst [vmem:[%s149 + $0x4a8] sm:$0xff] %v448
                %v450 = vld [vmem:[%s148 + $0x20d0] sm:$0xff]
                %451 = vst [vmem:[%s149 + $0x4b0] sm:$0xff] %v450
                %v452 = vld [vmem:[%s148 + $0x20d8] sm:$0xff]
                %453 = vst [vmem:[%s149 + $0x4b8] sm:$0xff] %v452
                %v454 = vld [vmem:[%s148 + $0x2140] sm:$0xff]
                %455 = vst [vmem:[%s149 + $0x4c0] sm:$0xff] %v454
                %v456 = vld [vmem:[%s148 + $0x2148] sm:$0xff]
                %457 = vst [vmem:[%s149 + $0x4c8] sm:$0xff] %v456
                %v458 = vld [vmem:[%s148 + $0x21b0] sm:$0xff]
                %459 = vst [vmem:[%s149 + $0x4d0] sm:$0xff] %v458
                %v460 = vld [vmem:[%s148 + $0x21b8] sm:$0xff]
                %461 = vst [vmem:[%s149 + $0x4d8] sm:$0xff] %v460
                %v462 = vld [vmem:[%s148 + $0x2220] sm:$0xff]
                %463 = vst [vmem:[%s149 + $0x4e0] sm:$0xff] %v462
                %v464 = vld [vmem:[%s148 + $0x2228] sm:$0xff]
                %465 = vst [vmem:[%s149 + $0x4e8] sm:$0xff] %v464
                %v466 = vld [vmem:[%s148 + $0x2290] sm:$0xff]
                %467 = vst [vmem:[%s149 + $0x4f0] sm:$0xff] %v466
                %v468 = vld [vmem:[%s148 + $0x2298] sm:$0xff]
                %469 = vst [vmem:[%s149 + $0x4f8] sm:$0xff] %v468
                %v470 = vld [vmem:[%s148 + $0x2300] sm:$0xff]
                %471 = vst [vmem:[%s149 + $0x500] sm:$0xff] %v470
                %v472 = vld [vmem:[%s148 + $0x2308] sm:$0xff]
                %473 = vst [vmem:[%s149 + $0x508] sm:$0xff] %v472
                %v474 = vld [vmem:[%s148 + $0x2370] sm:$0xff]
                %475 = vst [vmem:[%s149 + $0x510] sm:$0xff] %v474
                %v476 = vld [vmem:[%s148 + $0x2378] sm:$0xff]
                %477 = vst [vmem:[%s149 + $0x518] sm:$0xff] %v476
                %v478 = vld [vmem:[%s148 + $0x23e0] sm:$0xff]
                %479 = vst [vmem:[%s149 + $0x520] sm:$0xff] %v478
                %v480 = vld [vmem:[%s148 + $0x23e8] sm:$0xff]
                %481 = vst [vmem:[%s149 + $0x528] sm:$0xff] %v480
                %v482 = vld [vmem:[%s148 + $0x2450] sm:$0xff]
                %483 = vst [vmem:[%s149 + $0x530] sm:$0xff] %v482
                %v484 = vld [vmem:[%s148 + $0x2458] sm:$0xff]
                %485 = vst [vmem:[%s149 + $0x538] sm:$0xff] %v484
                %v486 = vld [vmem:[%s148 + $0x24c0] sm:$0xff]
                %487 = vst [vmem:[%s149 + $0x540] sm:$0xff] %v486
                %v488 = vld [vmem:[%s148 + $0x24c8] sm:$0xff]
                %489 = vst [vmem:[%s149 + $0x548] sm:$0xff] %v488
                %v490 = vld [vmem:[%s148 + $0x2530] sm:$0xff]
                %491 = vst [vmem:[%s149 + $0x550] sm:$0xff] %v490
                %v492 = vld [vmem:[%s148 + $0x2538] sm:$0xff]
                %493 = vst [vmem:[%s149 + $0x558] sm:$0xff] %v492
                %v494 = vld [vmem:[%s148 + $0x25a0] sm:$0xff]
                %495 = vst [vmem:[%s149 + $0x560] sm:$0xff] %v494
                %v496 = vld [vmem:[%s148 + $0x25a8] sm:$0xff]
                %497 = vst [vmem:[%s149 + $0x568] sm:$0xff] %v496
                %v498 = vld [vmem:[%s148 + $0x2610] sm:$0xff]
                %499 = vst [vmem:[%s149 + $0x570] sm:$0xff] %v498
                %v500 = vld [vmem:[%s148 + $0x2618] sm:$0xff]
                %501 = vst [vmem:[%s149 + $0x578] sm:$0xff] %v500
                %v502 = vld [vmem:[%s148 + $0x2680] sm:$0xff]
                %503 = vst [vmem:[%s149 + $0x580] sm:$0xff] %v502
                %v504 = vld [vmem:[%s148 + $0x2688] sm:$0xff]
                %505 = vst [vmem:[%s149 + $0x588] sm:$0xff] %v504
                %v506 = vld [vmem:[%s148 + $0x26f0] sm:$0xff]
                %507 = vst [vmem:[%s149 + $0x590] sm:$0xff] %v506
                %v508 = vld [vmem:[%s148 + $0x26f8] sm:$0xff]
                %509 = vst [vmem:[%s149 + $0x598] sm:$0xff] %v508
                %v510 = vld [vmem:[%s148 + $0x2760] sm:$0xff]
                %511 = vst [vmem:[%s149 + $0x5a0] sm:$0xff] %v510
                %v512 = vld [vmem:[%s148 + $0x2768] sm:$0xff]
                %513 = vst [vmem:[%s149 + $0x5a8] sm:$0xff] %v512
                %v514 = vld [vmem:[%s148 + $0x27d0] sm:$0xff]
                %515 = vst [vmem:[%s149 + $0x5b0] sm:$0xff] %v514
                %v516 = vld [vmem:[%s148 + $0x27d8] sm:$0xff]
                %517 = vst [vmem:[%s149 + $0x5b8] sm:$0xff] %v516
                %v518 = vld [vmem:[%s148 + $0x2840] sm:$0xff]
                %519 = vst [vmem:[%s149 + $0x5c0] sm:$0xff] %v518
                %v520 = vld [vmem:[%s148 + $0x2848] sm:$0xff]
                %521 = vst [vmem:[%s149 + $0x5c8] sm:$0xff] %v520
                %v522 = vld [vmem:[%s148 + $0x28b0] sm:$0xff]
                %523 = vst [vmem:[%s149 + $0x5d0] sm:$0xff] %v522
                %v524 = vld [vmem:[%s148 + $0x28b8] sm:$0xff]
                %525 = vst [vmem:[%s149 + $0x5d8] sm:$0xff] %v524
                %v526 = vld [vmem:[%s148 + $0x2920] sm:$0xff]
                %527 = vst [vmem:[%s149 + $0x5e0] sm:$0xff] %v526
                %v528 = vld [vmem:[%s148 + $0x2928] sm:$0xff]
                %529 = vst [vmem:[%s149 + $0x5e8] sm:$0xff] %v528
                %v530 = vld [vmem:[%s148 + $0x2990] sm:$0xff]
                %531 = vst [vmem:[%s149 + $0x5f0] sm:$0xff] %v530
                %v532 = vld [vmem:[%s148 + $0x2998] sm:$0xff]
                %533 = vst [vmem:[%s149 + $0x5f8] sm:$0xff] %v532
                %v534 = vld [vmem:[%s148 + $0x2a00] sm:$0xff]
                %535 = vst [vmem:[%s149 + $0x600] sm:$0xff] %v534
                %v536 = vld [vmem:[%s148 + $0x2a08] sm:$0xff]
                %537 = vst [vmem:[%s149 + $0x608] sm:$0xff] %v536
                %v538 = vld [vmem:[%s148 + $0x2a70] sm:$0xff]
                %539 = vst [vmem:[%s149 + $0x610] sm:$0xff] %v538
                %v540 = vld [vmem:[%s148 + $0x2a78] sm:$0xff]
                %541 = vst [vmem:[%s149 + $0x618] sm:$0xff] %v540
                %v542 = vld [vmem:[%s148 + $0x2ae0] sm:$0xff]
                %543 = vst [vmem:[%s149 + $0x620] sm:$0xff] %v542
                %v544 = vld [vmem:[%s148 + $0x2ae8] sm:$0xff]
                %545 = vst [vmem:[%s149 + $0x628] sm:$0xff] %v544
                %v546 = vld [vmem:[%s148 + $0x2b50] sm:$0xff]
                %547 = vst [vmem:[%s149 + $0x630] sm:$0xff] %v546
                %v548 = vld [vmem:[%s148 + $0x2b58] sm:$0xff]
                %549 = vst [vmem:[%s149 + $0x638] sm:$0xff] %v548
                %v550 = vld [vmem:[%s148 + $0x2bc0] sm:$0xff]
                %551 = vst [vmem:[%s149 + $0x640] sm:$0xff] %v550
                %v552 = vld [vmem:[%s148 + $0x2bc8] sm:$0xff]
                %553 = vst [vmem:[%s149 + $0x648] sm:$0xff] %v552
                %v554 = vld [vmem:[%s148 + $0x2c30] sm:$0xff]
                %555 = vst [vmem:[%s149 + $0x650] sm:$0xff] %v554
                %v556 = vld [vmem:[%s148 + $0x2c38] sm:$0xff]
                %557 = vst [vmem:[%s149 + $0x658] sm:$0xff] %v556
                %v558 = vld [vmem:[%s148 + $0x2ca0] sm:$0xff]
                %559 = vst [vmem:[%s149 + $0x660] sm:$0xff] %v558
                %v560 = vld [vmem:[%s148 + $0x2ca8] sm:$0xff]
                %561 = vst [vmem:[%s149 + $0x668] sm:$0xff] %v560
                %v562 = vld [vmem:[%s148 + $0x2d10] sm:$0xff]
                %563 = vst [vmem:[%s149 + $0x670] sm:$0xff] %v562
                %v564 = vld [vmem:[%s148 + $0x2d18] sm:$0xff]
                %565 = vst [vmem:[%s149 + $0x678] sm:$0xff] %v564
                %v566 = vld [vmem:[%s148 + $0x2d80] sm:$0xff]
                %567 = vst [vmem:[%s149 + $0x680] sm:$0xff] %v566
                %v568 = vld [vmem:[%s148 + $0x2d88] sm:$0xff]
                %569 = vst [vmem:[%s149 + $0x688] sm:$0xff] %v568
                %v570 = vld [vmem:[%s148 + $0x2df0] sm:$0xff]
                %571 = vst [vmem:[%s149 + $0x690] sm:$0xff] %v570
                %v572 = vld [vmem:[%s148 + $0x2df8] sm:$0xff]
                %573 = vst [vmem:[%s149 + $0x698] sm:$0xff] %v572
                %v574 = vld [vmem:[%s148 + $0x2e60] sm:$0xff]
                %575 = vst [vmem:[%s149 + $0x6a0] sm:$0xff] %v574
                %v576 = vld [vmem:[%s148 + $0x2e68] sm:$0xff]
                %577 = vst [vmem:[%s149 + $0x6a8] sm:$0xff] %v576
                %v578 = vld [vmem:[%s148 + $0x2ed0] sm:$0xff]
                %579 = vst [vmem:[%s149 + $0x6b0] sm:$0xff] %v578
                %v580 = vld [vmem:[%s148 + $0x2ed8] sm:$0xff]
                %581 = vst [vmem:[%s149 + $0x6b8] sm:$0xff] %v580
                %v582 = vld [vmem:[%s148 + $0x2f40] sm:$0xff]
                %583 = vst [vmem:[%s149 + $0x6c0] sm:$0xff] %v582
                %v584 = vld [vmem:[%s148 + $0x2f48] sm:$0xff]
                %585 = vst [vmem:[%s149 + $0x6c8] sm:$0xff] %v584
                %v586 = vld [vmem:[%s148 + $0x2fb0] sm:$0xff]
                %587 = vst [vmem:[%s149 + $0x6d0] sm:$0xff] %v586
                %v588 = vld [vmem:[%s148 + $0x2fb8] sm:$0xff]
                %589 = vst [vmem:[%s149 + $0x6d8] sm:$0xff] %v588
                %v590 = vld [vmem:[%s148 + $0x3020] sm:$0xff]
                %591 = vst [vmem:[%s149 + $0x6e0] sm:$0xff] %v590
                %v592 = vld [vmem:[%s148 + $0x3028] sm:$0xff]
                %593 = vst [vmem:[%s149 + $0x6e8] sm:$0xff] %v592
                %v594 = vld [vmem:[%s148 + $0x3090] sm:$0xff]
                %595 = vst [vmem:[%s149 + $0x6f0] sm:$0xff] %v594
                %v596 = vld [vmem:[%s148 + $0x3098] sm:$0xff]
                %597 = vst [vmem:[%s149 + $0x6f8] sm:$0xff] %v596
                %v598 = vld [vmem:[%s148 + $0x3100] sm:$0xff]
                %599 = vst [vmem:[%s149 + $0x700] sm:$0xff] %v598
                %v600 = vld [vmem:[%s148 + $0x3108] sm:$0xff]
                %601 = vst [vmem:[%s149 + $0x708] sm:$0xff] %v600
                %v602 = vld [vmem:[%s148 + $0x3170] sm:$0xff]
                %603 = vst [vmem:[%s149 + $0x710] sm:$0xff] %v602
                %v604 = vld [vmem:[%s148 + $0x3178] sm:$0xff]
                %605 = vst [vmem:[%s149 + $0x718] sm:$0xff] %v604
                %v606 = vld [vmem:[%s148 + $0x31e0] sm:$0xff]
                %607 = vst [vmem:[%s149 + $0x720] sm:$0xff] %v606
                %v608 = vld [vmem:[%s148 + $0x31e8] sm:$0xff]
                %609 = vst [vmem:[%s149 + $0x728] sm:$0xff] %v608
                %v610 = vld [vmem:[%s148 + $0x3250] sm:$0xff]
                %611 = vst [vmem:[%s149 + $0x730] sm:$0xff] %v610
                %v612 = vld [vmem:[%s148 + $0x3258] sm:$0xff]
                %613 = vst [vmem:[%s149 + $0x738] sm:$0xff] %v612
                %v614 = vld [vmem:[%s148 + $0x32c0] sm:$0xff]
                %615 = vst [vmem:[%s149 + $0x740] sm:$0xff] %v614
                %v616 = vld [vmem:[%s148 + $0x32c8] sm:$0xff]
                %617 = vst [vmem:[%s149 + $0x748] sm:$0xff] %v616
                %v618 = vld [vmem:[%s148 + $0x3330] sm:$0xff]
                %619 = vst [vmem:[%s149 + $0x750] sm:$0xff] %v618
                %v620 = vld [vmem:[%s148 + $0x3338] sm:$0xff]
                %621 = vst [vmem:[%s149 + $0x758] sm:$0xff] %v620
                %v622 = vld [vmem:[%s148 + $0x33a0] sm:$0xff]
                %623 = vst [vmem:[%s149 + $0x760] sm:$0xff] %v622
                %v624 = vld [vmem:[%s148 + $0x33a8] sm:$0xff]
                %625 = vst [vmem:[%s149 + $0x768] sm:$0xff] %v624
                %v626 = vld [vmem:[%s148 + $0x3410] sm:$0xff]
                %627 = vst [vmem:[%s149 + $0x770] sm:$0xff] %v626
                %v628 = vld [vmem:[%s148 + $0x3418] sm:$0xff]
                %629 = vst [vmem:[%s149 + $0x778] sm:$0xff] %v628
                %v630 = vld [vmem:[%s148 + $0x3480] sm:$0xff]
                %631 = vst [vmem:[%s149 + $0x780] sm:$0xff] %v630
                %v632 = vld [vmem:[%s148 + $0x3488] sm:$0xff]
                %633 = vst [vmem:[%s149 + $0x788] sm:$0xff] %v632
                %v634 = vld [vmem:[%s148 + $0x34f0] sm:$0xff]
                %635 = vst [vmem:[%s149 + $0x790] sm:$0xff] %v634
                %v636 = vld [vmem:[%s148 + $0x34f8] sm:$0xff]
                %637 = vst [vmem:[%s149 + $0x798] sm:$0xff] %v636
                %v638 = vld [vmem:[%s148 + $0x3560] sm:$0xff]
                %639 = vst [vmem:[%s149 + $0x7a0] sm:$0xff] %v638
                %v640 = vld [vmem:[%s148 + $0x3568] sm:$0xff]
                %641 = vst [vmem:[%s149 + $0x7a8] sm:$0xff] %v640
                %v642 = vld [vmem:[%s148 + $0x35d0] sm:$0xff]
                %643 = vst [vmem:[%s149 + $0x7b0] sm:$0xff] %v642
                %v644 = vld [vmem:[%s148 + $0x35d8] sm:$0xff]
                %645 = vst [vmem:[%s149 + $0x7b8] sm:$0xff] %v644
                %v646 = vld [vmem:[%s148 + $0x3640] sm:$0xff]
                %647 = vst [vmem:[%s149 + $0x7c0] sm:$0xff] %v646
                %v648 = vld [vmem:[%s148 + $0x3648] sm:$0xff]
                %649 = vst [vmem:[%s149 + $0x7c8] sm:$0xff] %v648
                %v650 = vld [vmem:[%s148 + $0x36b0] sm:$0xff]
                %651 = vst [vmem:[%s149 + $0x7d0] sm:$0xff] %v650
                %v652 = vld [vmem:[%s148 + $0x36b8] sm:$0xff]
                %653 = vst [vmem:[%s149 + $0x7d8] sm:$0xff] %v652
                %v654 = vld [vmem:[%s148 + $0x3720] sm:$0xff]
                %655 = vst [vmem:[%s149 + $0x7e0] sm:$0xff] %v654
                %v656 = vld [vmem:[%s148 + $0x3728] sm:$0xff]
                %657 = vst [vmem:[%s149 + $0x7e8] sm:$0xff] %v656
                %v658 = vld [vmem:[%s148 + $0x3790] sm:$0xff]
                %659 = vst [vmem:[%s149 + $0x7f0] sm:$0xff] %v658
                %v660 = vld [vmem:[%s148 + $0x3798] sm:$0xff]
                %661 = vst [vmem:[%s149 + $0x7f8] sm:$0xff] %v660
                %v662 = vld [vmem:[%s148 + $0x3800] sm:$0xff]
                %663 = vst [vmem:[%s149 + $0x800] sm:$0xff] %v662
                %v664 = vld [vmem:[%s148 + $0x3808] sm:$0xff]
                %665 = vst [vmem:[%s149 + $0x808] sm:$0xff] %v664
                %v666 = vld [vmem:[%s148 + $0x3870] sm:$0xff]
                %667 = vst [vmem:[%s149 + $0x810] sm:$0xff] %v666
                %v668 = vld [vmem:[%s148 + $0x3878] sm:$0xff]
                %669 = vst [vmem:[%s149 + $0x818] sm:$0xff] %v668
                %v670 = vld [vmem:[%s148 + $0x38e0] sm:$0xff]
                %671 = vst [vmem:[%s149 + $0x820] sm:$0xff] %v670
                %v672 = vld [vmem:[%s148 + $0x38e8] sm:$0xff]
                %673 = vst [vmem:[%s149 + $0x828] sm:$0xff] %v672
                %v674 = vld [vmem:[%s148 + $0x3950] sm:$0xff]
                %675 = vst [vmem:[%s149 + $0x830] sm:$0xff] %v674
                %v676 = vld [vmem:[%s148 + $0x3958] sm:$0xff]
                %677 = vst [vmem:[%s149 + $0x838] sm:$0xff] %v676
                %v678 = vld [vmem:[%s148 + $0x39c0] sm:$0xff]
                %679 = vst [vmem:[%s149 + $0x840] sm:$0xff] %v678
                %v680 = vld [vmem:[%s148 + $0x39c8] sm:$0xff]
                %681 = vst [vmem:[%s149 + $0x848] sm:$0xff] %v680
                %v682 = vld [vmem:[%s148 + $0x3a30] sm:$0xff]
                %683 = vst [vmem:[%s149 + $0x850] sm:$0xff] %v682
                %v684 = vld [vmem:[%s148 + $0x3a38] sm:$0xff]
                %685 = vst [vmem:[%s149 + $0x858] sm:$0xff] %v684
                %v686 = vld [vmem:[%s148 + $0x3aa0] sm:$0xff]
                %687 = vst [vmem:[%s149 + $0x860] sm:$0xff] %v686
                %v688 = vld [vmem:[%s148 + $0x3aa8] sm:$0xff]
                %689 = vst [vmem:[%s149 + $0x868] sm:$0xff] %v688
                %v690 = vld [vmem:[%s148 + $0x3b10] sm:$0xff]
                %691 = vst [vmem:[%s149 + $0x870] sm:$0xff] %v690
                %v692 = vld [vmem:[%s148 + $0x3b18] sm:$0xff]
                %693 = vst [vmem:[%s149 + $0x878] sm:$0xff] %v692
                %v694 = vld [vmem:[%s148 + $0x3b80] sm:$0xff]
                %695 = vst [vmem:[%s149 + $0x880] sm:$0xff] %v694
                %v696 = vld [vmem:[%s148 + $0x3b88] sm:$0xff]
                %697 = vst [vmem:[%s149 + $0x888] sm:$0xff] %v696
                %v698 = vld [vmem:[%s148 + $0x3bf0] sm:$0xff]
                %699 = vst [vmem:[%s149 + $0x890] sm:$0xff] %v698
                %v700 = vld [vmem:[%s148 + $0x3bf8] sm:$0xff]
                %701 = vst [vmem:[%s149 + $0x898] sm:$0xff] %v700
                %v702 = vld [vmem:[%s148 + $0x3c60] sm:$0xff]
                %703 = vst [vmem:[%s149 + $0x8a0] sm:$0xff] %v702
                %v704 = vld [vmem:[%s148 + $0x3c68] sm:$0xff]
                %705 = vst [vmem:[%s149 + $0x8a8] sm:$0xff] %v704
                %v706 = vld [vmem:[%s148 + $0x3cd0] sm:$0xff]
                %707 = vst [vmem:[%s149 + $0x8b0] sm:$0xff] %v706
                %v708 = vld [vmem:[%s148 + $0x3cd8] sm:$0xff]
                %709 = vst [vmem:[%s149 + $0x8b8] sm:$0xff] %v708
                %v710 = vld [vmem:[%s148 + $0x3d40] sm:$0xff]
                %711 = vst [vmem:[%s149 + $0x8c0] sm:$0xff] %v710
                %v712 = vld [vmem:[%s148 + $0x3d48] sm:$0xff]
                %713 = vst [vmem:[%s149 + $0x8c8] sm:$0xff] %v712
                %v714 = vld [vmem:[%s148 + $0x3db0] sm:$0xff]
                %715 = vst [vmem:[%s149 + $0x8d0] sm:$0xff] %v714
                %v716 = vld [vmem:[%s148 + $0x3db8] sm:$0xff]
                %717 = vst [vmem:[%s149 + $0x8d8] sm:$0xff] %v716
                %v718 = vld [vmem:[%s148 + $0x3e20] sm:$0xff]
                %719 = vst [vmem:[%s149 + $0x8e0] sm:$0xff] %v718
                %v720 = vld [vmem:[%s148 + $0x3e28] sm:$0xff]
                %721 = vst [vmem:[%s149 + $0x8e8] sm:$0xff] %v720
                %v722 = vld [vmem:[%s148 + $0x3e90] sm:$0xff]
                %723 = vst [vmem:[%s149 + $0x8f0] sm:$0xff] %v722
                %v724 = vld [vmem:[%s148 + $0x3e98] sm:$0xff]
                %725 = vst [vmem:[%s149 + $0x8f8] sm:$0xff] %v724
                %v726 = vld [vmem:[%s148 + $0x3f00] sm:$0xff]
                %727 = vst [vmem:[%s149 + $0x900] sm:$0xff] %v726
                %v728 = vld [vmem:[%s148 + $0x3f08] sm:$0xff]
                %729 = vst [vmem:[%s149 + $0x908] sm:$0xff] %v728
                %v730 = vld [vmem:[%s148 + $0x3f70] sm:$0xff]
                %731 = vst [vmem:[%s149 + $0x910] sm:$0xff] %v730
                %v732 = vld [vmem:[%s148 + $0x3f78] sm:$0xff]
                %733 = vst [vmem:[%s149 + $0x918] sm:$0xff] %v732
                %v734 = vld [vmem:[%s148 + $0x3fe0] sm:$0xff]
                %735 = vst [vmem:[%s149 + $0x920] sm:$0xff] %v734
                %v736 = vld [vmem:[%s148 + $0x3fe8] sm:$0xff]
                %737 = vst [vmem:[%s149 + $0x928] sm:$0xff] %v736
                %v738 = vld [vmem:[%s148 + $0x4050] sm:$0xff]
                %739 = vst [vmem:[%s149 + $0x930] sm:$0xff] %v738
                %v740 = vld [vmem:[%s148 + $0x4058] sm:$0xff]
                %741 = vst [vmem:[%s149 + $0x938] sm:$0xff] %v740
                %v742 = vld [vmem:[%s148 + $0x40c0] sm:$0xff]
                %743 = vst [vmem:[%s149 + $0x940] sm:$0xff] %v742
                %v744 = vld [vmem:[%s148 + $0x40c8] sm:$0xff]
                %745 = vst [vmem:[%s149 + $0x948] sm:$0xff] %v744
                %v746 = vld [vmem:[%s148 + $0x4130] sm:$0xff]
                %747 = vst [vmem:[%s149 + $0x950] sm:$0xff] %v746
                %v748 = vld [vmem:[%s148 + $0x4138] sm:$0xff]
                %749 = vst [vmem:[%s149 + $0x958] sm:$0xff] %v748
                %v750 = vld [vmem:[%s148 + $0x41a0] sm:$0xff]
                %751 = vst [vmem:[%s149 + $0x960] sm:$0xff] %v750
                %v752 = vld [vmem:[%s148 + $0x41a8] sm:$0xff]
                %753 = vst [vmem:[%s149 + $0x968] sm:$0xff] %v752
                %v754 = vld [vmem:[%s148 + $0x4210] sm:$0xff]
                %755 = vst [vmem:[%s149 + $0x970] sm:$0xff] %v754
                %v756 = vld [vmem:[%s148 + $0x4218] sm:$0xff]
                %757 = vst [vmem:[%s149 + $0x978] sm:$0xff] %v756
                %v758 = vld [vmem:[%s148 + $0x4280] sm:$0xff]
                %759 = vst [vmem:[%s149 + $0x980] sm:$0xff] %v758
                %v760 = vld [vmem:[%s148 + $0x4288] sm:$0xff]
                %761 = vst [vmem:[%s149 + $0x988] sm:$0xff] %v760
                %v762 = vld [vmem:[%s148 + $0x42f0] sm:$0xff]
                %763 = vst [vmem:[%s149 + $0x990] sm:$0xff] %v762
                %v764 = vld [vmem:[%s148 + $0x42f8] sm:$0xff]
                %765 = vst [vmem:[%s149 + $0x998] sm:$0xff] %v764
                %v766 = vld [vmem:[%s148 + $0x4360] sm:$0xff]
                %767 = vst [vmem:[%s149 + $0x9a0] sm:$0xff] %v766
                %v768 = vld [vmem:[%s148 + $0x4368] sm:$0xff]
                %769 = vst [vmem:[%s149 + $0x9a8] sm:$0xff] %v768
                %v770 = vld [vmem:[%s148 + $0x43d0] sm:$0xff]
                %771 = vst [vmem:[%s149 + $0x9b0] sm:$0xff] %v770
                %v772 = vld [vmem:[%s148 + $0x43d8] sm:$0xff]
                %773 = vst [vmem:[%s149 + $0x9b8] sm:$0xff] %v772
                %v774 = vld [vmem:[%s148 + $0x4440] sm:$0xff]
                %775 = vst [vmem:[%s149 + $0x9c0] sm:$0xff] %v774
                %v776 = vld [vmem:[%s148 + $0x4448] sm:$0xff]
                %777 = vst [vmem:[%s149 + $0x9c8] sm:$0xff] %v776
                %v778 = vld [vmem:[%s148 + $0x44b0] sm:$0xff]
                %779 = vst [vmem:[%s149 + $0x9d0] sm:$0xff] %v778
                %v780 = vld [vmem:[%s148 + $0x44b8] sm:$0xff]
                %781 = vst [vmem:[%s149 + $0x9d8] sm:$0xff] %v780
                %v782 = vld [vmem:[%s148 + $0x4520] sm:$0xff]
                %783 = vst [vmem:[%s149 + $0x9e0] sm:$0xff] %v782
                %v784 = vld [vmem:[%s148 + $0x4528] sm:$0xff]
                %785 = vst [vmem:[%s149 + $0x9e8] sm:$0xff] %v784
                %v786 = vld [vmem:[%s148 + $0x4590] sm:$0xff]
                %787 = vst [vmem:[%s149 + $0x9f0] sm:$0xff] %v786
                %v788 = vld [vmem:[%s148 + $0x4598] sm:$0xff]
                %789 = vst [vmem:[%s149 + $0x9f8] sm:$0xff] %v788
                %v790 = vld [vmem:[%s148 + $0x4600] sm:$0xff]
                %791 = vst [vmem:[%s149 + $0xa00] sm:$0xff] %v790
                %v792 = vld [vmem:[%s148 + $0x4608] sm:$0xff]
                %793 = vst [vmem:[%s149 + $0xa08] sm:$0xff] %v792
                %v794 = vld [vmem:[%s148 + $0x4670] sm:$0xff]
                %795 = vst [vmem:[%s149 + $0xa10] sm:$0xff] %v794
                %v796 = vld [vmem:[%s148 + $0x4678] sm:$0xff]
                %797 = vst [vmem:[%s149 + $0xa18] sm:$0xff] %v796
                %v798 = vld [vmem:[%s148 + $0x46e0] sm:$0xff]
                %799 = vst [vmem:[%s149 + $0xa20] sm:$0xff] %v798
                %v800 = vld [vmem:[%s148 + $0x46e8] sm:$0xff]
                %801 = vst [vmem:[%s149 + $0xa28] sm:$0xff] %v800
                %v802 = vld [vmem:[%s148 + $0x4750] sm:$0xff]
                %803 = vst [vmem:[%s149 + $0xa30] sm:$0xff] %v802
                %v804 = vld [vmem:[%s148 + $0x4758] sm:$0xff]
                %805 = vst [vmem:[%s149 + $0xa38] sm:$0xff] %v804
                %v806 = vld [vmem:[%s148 + $0x47c0] sm:$0xff]
                %807 = vst [vmem:[%s149 + $0xa40] sm:$0xff] %v806
                %v808 = vld [vmem:[%s148 + $0x47c8] sm:$0xff]
                %809 = vst [vmem:[%s149 + $0xa48] sm:$0xff] %v808
                %v810 = vld [vmem:[%s148 + $0x4830] sm:$0xff]
                %811 = vst [vmem:[%s149 + $0xa50] sm:$0xff] %v810
                %v812 = vld [vmem:[%s148 + $0x4838] sm:$0xff]
                %813 = vst [vmem:[%s149 + $0xa58] sm:$0xff] %v812
                %v814 = vld [vmem:[%s148 + $0x48a0] sm:$0xff]
                %815 = vst [vmem:[%s149 + $0xa60] sm:$0xff] %v814
                %v816 = vld [vmem:[%s148 + $0x48a8] sm:$0xff]
                %817 = vst [vmem:[%s149 + $0xa68] sm:$0xff] %v816
                %v818 = vld [vmem:[%s148 + $0x4910] sm:$0xff]
                %819 = vst [vmem:[%s149 + $0xa70] sm:$0xff] %v818
                %v820 = vld [vmem:[%s148 + $0x4918] sm:$0xff]
                %821 = vst [vmem:[%s149 + $0xa78] sm:$0xff] %v820
                %v822 = vld [vmem:[%s148 + $0x4980] sm:$0xff]
                %823 = vst [vmem:[%s149 + $0xa80] sm:$0xff] %v822
                %v824 = vld [vmem:[%s148 + $0x4988] sm:$0xff]
                %825 = vst [vmem:[%s149 + $0xa88] sm:$0xff] %v824
                %v826 = vld [vmem:[%s148 + $0x49f0] sm:$0xff]
                %827 = vst [vmem:[%s149 + $0xa90] sm:$0xff] %v826
                %v828 = vld [vmem:[%s148 + $0x49f8] sm:$0xff]
                %829 = vst [vmem:[%s149 + $0xa98] sm:$0xff] %v828
                %v830 = vld [vmem:[%s148 + $0x4a60] sm:$0xff]
                %831 = vst [vmem:[%s149 + $0xaa0] sm:$0xff] %v830
                %v832 = vld [vmem:[%s148 + $0x4a68] sm:$0xff]
                %833 = vst [vmem:[%s149 + $0xaa8] sm:$0xff] %v832
                %v834 = vld [vmem:[%s148 + $0x4ad0] sm:$0xff]
                %835 = vst [vmem:[%s149 + $0xab0] sm:$0xff] %v834
                %v836 = vld [vmem:[%s148 + $0x4ad8] sm:$0xff]
                %837 = vst [vmem:[%s149 + $0xab8] sm:$0xff] %v836
                %v838 = vld [vmem:[%s148 + $0x4b40] sm:$0xff]
                %839 = vst [vmem:[%s149 + $0xac0] sm:$0xff] %v838
                %v840 = vld [vmem:[%s148 + $0x4b48] sm:$0xff]
                %841 = vst [vmem:[%s149 + $0xac8] sm:$0xff] %v840
                %v842 = vld [vmem:[%s148 + $0x4bb0] sm:$0xff]
                %843 = vst [vmem:[%s149 + $0xad0] sm:$0xff] %v842
                %v844 = vld [vmem:[%s148 + $0x4bb8] sm:$0xff]
                %845 = vst [vmem:[%s149 + $0xad8] sm:$0xff] %v844
                %v846 = vld [vmem:[%s148 + $0x4c20] sm:$0xff]
                %847 = vst [vmem:[%s149 + $0xae0] sm:$0xff] %v846
                %v848 = vld [vmem:[%s148 + $0x4c28] sm:$0xff]
                %849 = vst [vmem:[%s149 + $0xae8] sm:$0xff] %v848
                %v850 = vld [vmem:[%s148 + $0x4c90] sm:$0xff]
                %851 = vst [vmem:[%s149 + $0xaf0] sm:$0xff] %v850
                %v852 = vld [vmem:[%s148 + $0x4c98] sm:$0xff]
                %853 = vst [vmem:[%s149 + $0xaf8] sm:$0xff] %v852
                %v854 = vld [vmem:[%s148 + $0x4d00] sm:$0xff]
                %855 = vst [vmem:[%s149 + $0xb00] sm:$0xff] %v854
                %v856 = vld [vmem:[%s148 + $0x4d08] sm:$0xff]
                %857 = vst [vmem:[%s149 + $0xb08] sm:$0xff] %v856
                %v858 = vld [vmem:[%s148 + $0x4d70] sm:$0xff]
                %859 = vst [vmem:[%s149 + $0xb10] sm:$0xff] %v858
                %v860 = vld [vmem:[%s148 + $0x4d78] sm:$0xff]
                %861 = vst [vmem:[%s149 + $0xb18] sm:$0xff] %v860
                %v862 = vld [vmem:[%s148 + $0x4de0] sm:$0xff]
                %863 = vst [vmem:[%s149 + $0xb20] sm:$0xff] %v862
                %v864 = vld [vmem:[%s148 + $0x4de8] sm:$0xff]
                %865 = vst [vmem:[%s149 + $0xb28] sm:$0xff] %v864
                %v866 = vld [vmem:[%s148 + $0x4e50] sm:$0xff]
                %867 = vst [vmem:[%s149 + $0xb30] sm:$0xff] %v866
                %v868 = vld [vmem:[%s148 + $0x4e58] sm:$0xff]
                %869 = vst [vmem:[%s149 + $0xb38] sm:$0xff] %v868
                %v870 = vld [vmem:[%s148 + $0x4ec0] sm:$0xff]
                %871 = vst [vmem:[%s149 + $0xb40] sm:$0xff] %v870
                %v872 = vld [vmem:[%s148 + $0x4ec8] sm:$0xff]
                %873 = vst [vmem:[%s149 + $0xb48] sm:$0xff] %v872
                %v874 = vld [vmem:[%s148 + $0x4f30] sm:$0xff]
                %875 = vst [vmem:[%s149 + $0xb50] sm:$0xff] %v874
                %v876 = vld [vmem:[%s148 + $0x4f38] sm:$0xff]
                %877 = vst [vmem:[%s149 + $0xb58] sm:$0xff] %v876
                %v878 = vld [vmem:[%s148 + $0x4fa0] sm:$0xff]
                %879 = vst [vmem:[%s149 + $0xb60] sm:$0xff] %v878
                %v880 = vld [vmem:[%s148 + $0x4fa8] sm:$0xff]
                %881 = vst [vmem:[%s149 + $0xb68] sm:$0xff] %v880
                %v882 = vld [vmem:[%s148 + $0x5010] sm:$0xff]
                %883 = vst [vmem:[%s149 + $0xb70] sm:$0xff] %v882
                %v884 = vld [vmem:[%s148 + $0x5018] sm:$0xff]
                %885 = vst [vmem:[%s149 + $0xb78] sm:$0xff] %v884
                %v886 = vld [vmem:[%s148 + $0x5080] sm:$0xff]
                %887 = vst [vmem:[%s149 + $0xb80] sm:$0xff] %v886
                %v888 = vld [vmem:[%s148 + $0x5088] sm:$0xff]
                %889 = vst [vmem:[%s149 + $0xb88] sm:$0xff] %v888
                %v890 = vld [vmem:[%s148 + $0x50f0] sm:$0xff]
                %891 = vst [vmem:[%s149 + $0xb90] sm:$0xff] %v890
                %v892 = vld [vmem:[%s148 + $0x50f8] sm:$0xff]
                %893 = vst [vmem:[%s149 + $0xb98] sm:$0xff] %v892
                %v894 = vld [vmem:[%s148 + $0x5160] sm:$0xff]
                %895 = vst [vmem:[%s149 + $0xba0] sm:$0xff] %v894
                %v896 = vld [vmem:[%s148 + $0x5168] sm:$0xff]
                %897 = vst [vmem:[%s149 + $0xba8] sm:$0xff] %v896
                %v898 = vld [vmem:[%s148 + $0x51d0] sm:$0xff]
                %899 = vst [vmem:[%s149 + $0xbb0] sm:$0xff] %v898
                %v900 = vld [vmem:[%s148 + $0x51d8] sm:$0xff]
                %901 = vst [vmem:[%s149 + $0xbb8] sm:$0xff] %v900
                %v902 = vld [vmem:[%s148 + $0x5240] sm:$0xff]
                %903 = vst [vmem:[%s149 + $0xbc0] sm:$0xff] %v902
                %v904 = vld [vmem:[%s148 + $0x5248] sm:$0xff]
                %905 = vst [vmem:[%s149 + $0xbc8] sm:$0xff] %v904
                %v906 = vld [vmem:[%s148 + $0x52b0] sm:$0xff]
                %907 = vst [vmem:[%s149 + $0xbd0] sm:$0xff] %v906
                %v908 = vld [vmem:[%s148 + $0x52b8] sm:$0xff]
                %909 = vst [vmem:[%s149 + $0xbd8] sm:$0xff] %v908
                %v910 = vld [vmem:[%s148 + $0x5320] sm:$0xff]
                %911 = vst [vmem:[%s149 + $0xbe0] sm:$0xff] %v910
                %v912 = vld [vmem:[%s148 + $0x5328] sm:$0xff]
                %913 = vst [vmem:[%s149 + $0xbe8] sm:$0xff] %v912
                %v914 = vld [vmem:[%s148 + $0x5390] sm:$0xff]
                %915 = vst [vmem:[%s149 + $0xbf0] sm:$0xff] %v914
                %v916 = vld [vmem:[%s148 + $0x5398] sm:$0xff]
                %917 = vst [vmem:[%s149 + $0xbf8] sm:$0xff] %v916
                %v918 = vld [vmem:[%s148 + $0x5400] sm:$0xff]
                %919 = vst [vmem:[%s149 + $0xc00] sm:$0xff] %v918
                %v920 = vld [vmem:[%s148 + $0x5408] sm:$0xff]
                %921 = vst [vmem:[%s149 + $0xc08] sm:$0xff] %v920
                %v922 = vld [vmem:[%s148 + $0x5470] sm:$0xff]
                %923 = vst [vmem:[%s149 + $0xc10] sm:$0xff] %v922
                %v924 = vld [vmem:[%s148 + $0x5478] sm:$0xff]
                %925 = vst [vmem:[%s149 + $0xc18] sm:$0xff] %v924
                %v926 = vld [vmem:[%s148 + $0x54e0] sm:$0xff]
                %927 = vst [vmem:[%s149 + $0xc20] sm:$0xff] %v926
                %v928 = vld [vmem:[%s148 + $0x54e8] sm:$0xff]
                %929 = vst [vmem:[%s149 + $0xc28] sm:$0xff] %v928
                %v930 = vld [vmem:[%s148 + $0x5550] sm:$0xff]
                %931 = vst [vmem:[%s149 + $0xc30] sm:$0xff] %v930
                %v932 = vld [vmem:[%s148 + $0x5558] sm:$0xff]
                %933 = vst [vmem:[%s149 + $0xc38] sm:$0xff] %v932
                %v934 = vld [vmem:[%s148 + $0x55c0] sm:$0xff]
                %935 = vst [vmem:[%s149 + $0xc40] sm:$0xff] %v934
                %v936 = vld [vmem:[%s148 + $0x55c8] sm:$0xff]
                %937 = vst [vmem:[%s149 + $0xc48] sm:$0xff] %v936
                %v938 = vld [vmem:[%s148 + $0x5630] sm:$0xff]
                %939 = vst [vmem:[%s149 + $0xc50] sm:$0xff] %v938
                %v940 = vld [vmem:[%s148 + $0x5638] sm:$0xff]
                %941 = vst [vmem:[%s149 + $0xc58] sm:$0xff] %v940
                %v942 = vld [vmem:[%s148 + $0x56a0] sm:$0xff]
                %943 = vst [vmem:[%s149 + $0xc60] sm:$0xff] %v942
                %v944 = vld [vmem:[%s148 + $0x56a8] sm:$0xff]
                %945 = vst [vmem:[%s149 + $0xc68] sm:$0xff] %v944
                %v946 = vld [vmem:[%s148 + $0x5710] sm:$0xff]
                %947 = vst [vmem:[%s149 + $0xc70] sm:$0xff] %v946
                %v948 = vld [vmem:[%s148 + $0x5718] sm:$0xff]
                %949 = vst [vmem:[%s149 + $0xc78] sm:$0xff] %v948
              $region41: #{forward.14} parent=35 // loop_footer
                %s147 = sadd.s32 1, %s143
              $region42: #{forward.14} parent=35 // loop_footer_branch
                %142 = sbr.rel target = $region38
              $region43: #{forward.14} parent=35 // loop_exit
                _
            $region36: #{forward.14} parent=31 // pred_fallthru
              _
            // Predicated region
            $region44: #{forward.14} parent=31 // pred_check
              _
            $region45: #{forward.14} parent=31 // pred_check_branch
              %951 = sbr.rel target = $region47
            $region46: #{forward.14} parent=31 // pred_region
              _
            $region47: #{forward.14} parent=31 // pred_fallthru
              _
          $region32: #{forward.14} parent=27 // pred_fallthru
            _
          %952 = vnop
        $region28: #{forward.14} parent=23 // pred_fallthru
          _
      $region24: #{forward.14} parent=5 // pred_fallthru
        _
      %p953 = scmp.le.s32.totalorder 1, %s9
      %p954 = scmp.lt.s32.totalorder %s9, 8
      %p955 = pnand %p953, %p954
      %p956 = pneg %p955
      // Predicated region
      $region48: #{forward.14} parent=5 // pred_check
        _
      $region49: #{forward.14} parent=5 // pred_check_branch
        %958 = sbr.rel (%p955) target = $region51
      $region50: #{forward.14} parent=5 // pred_region
        %s959 = ssub.s32 %s9, 1
        %s960 = sand.u32 %s43, 1
        %s961 = sand.u32 %s43, 1
        %s962 = smul.addr %s961, 3200
        %s963 = scalar_lea.vmem [#allocation2], %s962
        // Predicated region
        $region52: #{forward.14} parent=50 // pred_check
          %p964 = pneg %p56
        $region53: #{forward.14} parent=50 // pred_check_branch
          %966 = sbr.rel (%p964) target = $region55
        $region54: #{forward.14} parent=50 // pred_region
          _
        $region55: #{forward.14} parent=50 // pred_fallthru
          _
        %p967 = pneg %p30
        %p968 = pneg %p27
        %s969 = sand.u32 %s43, 1
        %s970 = sand.u32 %s43, 1
        %s971 = smul.addr %s970, 3200
        %s972 = scalar_lea.vmem [#allocation2], %s971
        %p973 = pneg %p56
        %p974 = pneg %p53
        %p975 = pneg %p77
        %p976 = pneg %p74
        %p977 = pneg %p103
        %p978 = pneg %p100
        %s979 = sand.u32 %s90, 1
        %s980 = sand.u32 %s90, 1
        %s981 = smul.addr %s980, 64
        %s982 = scalar_lea.vmem [#allocation3], %s981
        %s983 = smul.u32 4, %s14
        %s984 = smul.u32 4, %s14
        %v986 = vld [vmem:[%s0] sm:$0xff]
        %v987 = vld [vmem:[%s0 + $0x8] sm:$0xff]
        %v988 = vld [vmem:[%s0 + $0x10] sm:$0xff]
        %v989 = vld [vmem:[%s0 + $0x18] sm:$0xff]
        %v990 = vld [vmem:[%s0 + $0x20] sm:$0xff]
        %v991 = vld [vmem:[%s0 + $0x28] sm:$0xff]
        %v992 = vld [vmem:[%s0 + $0x30] sm:$0xf]
        %v993 = vld [vmem:[%s0 + $0x34] sm:$0xff]
        %v994 = vld [vmem:[%s0 + $0x3c] sm:$0xff]
        %v995 = vld [vmem:[%s0 + $0x44] sm:$0xff]
        %v996 = vld [vmem:[%s0 + $0x4c] sm:$0xff]
        %v997 = vld [vmem:[%s0 + $0x54] sm:$0xff]
        %v998 = vld [vmem:[%s0 + $0x5c] sm:$0xff]
        %v999 = vld [vmem:[%s0 + $0x64] sm:$0xf]
        %v1000 = vld [vmem:[%s963] sm:$0xff]
        %v1001 = vld [vmem:[%s963 + $0x8] sm:$0xff]
        %v1002 = vld [vmem:[%s963 + $0x10] sm:$0xff]
        %v1003 = vld [vmem:[%s963 + $0x18] sm:$0xff]
        %v1004 = vld [vmem:[%s963 + $0x20] sm:$0xff]
        %v1005 = vld [vmem:[%s963 + $0x28] sm:$0xff]
        %v1006 = vld [vmem:[%s963 + $0x30] sm:$0xff]
        %v1007 = vld [vmem:[%s963 + $0x38] sm:$0xff]
        %v1008 = vld [vmem:[%s963 + $0x40] sm:$0xff]
        %v1009 = vld [vmem:[%s963 + $0x48] sm:$0xff]
        %v1010 = vld [vmem:[%s963 + $0x50] sm:$0xff]
        %v1011 = vld [vmem:[%s963 + $0x58] sm:$0xff]
        %v1012 = vld [vmem:[%s963 + $0x60] sm:$0xff]
        %v1013 = vld [vmem:[%s963 + $0x68] sm:$0xff]
        %v1014 = vld [vmem:[%s963 + $0x70] sm:$0xff]
        %v1015 = vld [vmem:[%s963 + $0x78] sm:$0xff]
        %v1016 = vld [vmem:[%s963 + $0x80] sm:$0xff]
        %v1017 = vld [vmem:[%s963 + $0x88] sm:$0xff]
        %v1018 = vld [vmem:[%s963 + $0x90] sm:$0xff]
        %v1019 = vld [vmem:[%s963 + $0x98] sm:$0xff]
        %v1020 = vld [vmem:[%s963 + $0xa0] sm:$0xff]
        %v1021 = vld [vmem:[%s963 + $0xa8] sm:$0xff]
        %v1022 = vld [vmem:[%s963 + $0xb0] sm:$0xff]
        %v1023 = vld [vmem:[%s963 + $0xb8] sm:$0xff]
        %v1024 = vld [vmem:[%s963 + $0xc0] sm:$0xff]
        %v1025 = vld [vmem:[%s963 + $0xc8] sm:$0xff]
        %v1026 = vld [vmem:[%s963 + $0xd0] sm:$0xff]
        %v1027 = vld [vmem:[%s963 + $0xd8] sm:$0xff]
        %v1028 = vld [vmem:[%s963 + $0xe0] sm:$0xff]
        %v1029 = vld [vmem:[%s963 + $0xe8] sm:$0xff]
        %v1030 = vld [vmem:[%s963 + $0xf0] sm:$0xff]
        %v1031 = vld [vmem:[%s963 + $0xf8] sm:$0xff]
        %v1032 = vld [vmem:[%s963 + $0x100] sm:$0xff]
        %v1033 = vld [vmem:[%s963 + $0x108] sm:$0xff]
        %v1034 = vld [vmem:[%s963 + $0x110] sm:$0xff]
        %v1035 = vld [vmem:[%s963 + $0x118] sm:$0xff]
        %v1036 = vld [vmem:[%s963 + $0x120] sm:$0xff]
        %v1037 = vld [vmem:[%s963 + $0x128] sm:$0xff]
        %v1038 = vld [vmem:[%s963 + $0x130] sm:$0xff]
        %v1039 = vld [vmem:[%s963 + $0x138] sm:$0xff]
        %v1040 = vld [vmem:[%s963 + $0x140] sm:$0xff]
        %v1041 = vld [vmem:[%s963 + $0x148] sm:$0xff]
        %v1042 = vld [vmem:[%s963 + $0x150] sm:$0xff]
        %v1043 = vld [vmem:[%s963 + $0x158] sm:$0xff]
        %v1044 = vld [vmem:[%s963 + $0x160] sm:$0xff]
        %v1045 = vld [vmem:[%s963 + $0x168] sm:$0xff]
        %v1046 = vld [vmem:[%s963 + $0x170] sm:$0xff]
        %v1047 = vld [vmem:[%s963 + $0x178] sm:$0xff]
        %v1048 = vld [vmem:[%s963 + $0x180] sm:$0xff]
        %v1049 = vld [vmem:[%s963 + $0x188] sm:$0xff]
        %v1050 = vld [vmem:[%s963 + $0x190] sm:$0xff]
        %v1051 = vld [vmem:[%s963 + $0x198] sm:$0xff]
        %v1052 = vld [vmem:[%s963 + $0x1a0] sm:$0xff]
        %v1053 = vld [vmem:[%s963 + $0x1a8] sm:$0xff]
        %v1054 = vld [vmem:[%s963 + $0x1b0] sm:$0xff]
        %v1055 = vld [vmem:[%s963 + $0x1b8] sm:$0xff]
        %v1056 = vld [vmem:[%s963 + $0x1c0] sm:$0xff]
        %v1057 = vld [vmem:[%s963 + $0x1c8] sm:$0xff]
        %v1058 = vld [vmem:[%s963 + $0x1d0] sm:$0xff]
        %v1059 = vld [vmem:[%s963 + $0x1d8] sm:$0xff]
        %v1060 = vld [vmem:[%s963 + $0x1e0] sm:$0xff]
        %v1061 = vld [vmem:[%s963 + $0x1e8] sm:$0xff]
        %v1062 = vld [vmem:[%s963 + $0x1f0] sm:$0xff]
        %v1063 = vld [vmem:[%s963 + $0x1f8] sm:$0xff]
        %v1064 = vld [vmem:[%s963 + $0x200] sm:$0xff]
        %v1065 = vld [vmem:[%s963 + $0x208] sm:$0xff]
        %v1066 = vld [vmem:[%s963 + $0x210] sm:$0xff]
        %v1067 = vld [vmem:[%s963 + $0x218] sm:$0xff]
        %v1068 = vld [vmem:[%s963 + $0x220] sm:$0xff]
        %v1069 = vld [vmem:[%s963 + $0x228] sm:$0xff]
        %v1070 = vld [vmem:[%s963 + $0x230] sm:$0xff]
        %v1071 = vld [vmem:[%s963 + $0x238] sm:$0xff]
        %v1072 = vld [vmem:[%s963 + $0x240] sm:$0xff]
        %v1073 = vld [vmem:[%s963 + $0x248] sm:$0xff]
        %v1074 = vld [vmem:[%s963 + $0x250] sm:$0xff]
        %v1075 = vld [vmem:[%s963 + $0x258] sm:$0xff]
        %v1076 = vld [vmem:[%s963 + $0x260] sm:$0xff]
        %v1077 = vld [vmem:[%s963 + $0x268] sm:$0xff]
        %v1078 = vld [vmem:[%s963 + $0x270] sm:$0xff]
        %v1079 = vld [vmem:[%s963 + $0x278] sm:$0xff]
        %v1080 = vld [vmem:[%s963 + $0x280] sm:$0xff]
        %v1081 = vld [vmem:[%s963 + $0x288] sm:$0xff]
        %v1082 = vld [vmem:[%s963 + $0x290] sm:$0xff]
        %v1083 = vld [vmem:[%s963 + $0x298] sm:$0xff]
        %v1084 = vld [vmem:[%s963 + $0x2a0] sm:$0xff]
        %v1085 = vld [vmem:[%s963 + $0x2a8] sm:$0xff]
        %v1086 = vld [vmem:[%s963 + $0x2b0] sm:$0xff]
        %v1087 = vld [vmem:[%s963 + $0x2b8] sm:$0xff]
        %v1088 = vld [vmem:[%s963 + $0x2c0] sm:$0xff]
        %v1089 = vld [vmem:[%s963 + $0x2c8] sm:$0xff]
        %v1090 = vld [vmem:[%s963 + $0x2d0] sm:$0xff]
        %v1091 = vld [vmem:[%s963 + $0x2d8] sm:$0xff]
        %v1092 = vld [vmem:[%s963 + $0x2e0] sm:$0xff]
        %v1093 = vld [vmem:[%s963 + $0x2e8] sm:$0xff]
        %v1094 = vld [vmem:[%s963 + $0x2f0] sm:$0xff]
        %v1095 = vld [vmem:[%s963 + $0x2f8] sm:$0xff]
        %v1096 = vld [vmem:[%s963 + $0x300] sm:$0xff]
        %v1097 = vld [vmem:[%s963 + $0x308] sm:$0xff]
        %v1098 = vld [vmem:[%s963 + $0x310] sm:$0xff]
        %v1099 = vld [vmem:[%s963 + $0x318] sm:$0xff]
        %v1100 = vld [vmem:[%s963 + $0x320] sm:$0xff]
        %v1101 = vld [vmem:[%s963 + $0x328] sm:$0xff]
        %v1102 = vld [vmem:[%s963 + $0x330] sm:$0xff]
        %v1103 = vld [vmem:[%s963 + $0x338] sm:$0xff]
        %v1104 = vld [vmem:[%s963 + $0x340] sm:$0xff]
        %v1105 = vld [vmem:[%s963 + $0x348] sm:$0xff]
        %v1106 = vld [vmem:[%s963 + $0x350] sm:$0xff]
        %v1107 = vld [vmem:[%s963 + $0x358] sm:$0xff]
        %v1108 = vld [vmem:[%s963 + $0x360] sm:$0xff]
        %v1109 = vld [vmem:[%s963 + $0x368] sm:$0xff]
        %v1110 = vld [vmem:[%s963 + $0x370] sm:$0xff]
        %v1111 = vld [vmem:[%s963 + $0x378] sm:$0xff]
        %v1112 = vld [vmem:[%s963 + $0x380] sm:$0xff]
        %v1113 = vld [vmem:[%s963 + $0x388] sm:$0xff]
        %v1114 = vld [vmem:[%s963 + $0x390] sm:$0xff]
        %v1115 = vld [vmem:[%s963 + $0x398] sm:$0xff]
        %v1116 = vld [vmem:[%s963 + $0x3a0] sm:$0xff]
        %v1117 = vld [vmem:[%s963 + $0x3a8] sm:$0xff]
        %v1118 = vld [vmem:[%s963 + $0x3b0] sm:$0xff]
        %v1119 = vld [vmem:[%s963 + $0x3b8] sm:$0xff]
        %v1120 = vld [vmem:[%s963 + $0x3c0] sm:$0xff]
        %v1121 = vld [vmem:[%s963 + $0x3c8] sm:$0xff]
        %v1122 = vld [vmem:[%s963 + $0x3d0] sm:$0xff]
        %v1123 = vld [vmem:[%s963 + $0x3d8] sm:$0xff]
        %v1124 = vld [vmem:[%s963 + $0x3e0] sm:$0xff]
        %v1125 = vld [vmem:[%s963 + $0x3e8] sm:$0xff]
        %v1126 = vld [vmem:[%s963 + $0x3f0] sm:$0xff]
        %v1127 = vld [vmem:[%s963 + $0x3f8] sm:$0xff]
        %v1128 = vld [vmem:[%s963 + $0x400] sm:$0xff]
        %v1129 = vld [vmem:[%s963 + $0x408] sm:$0xff]
        %v1130 = vld [vmem:[%s963 + $0x410] sm:$0xff]
        %v1131 = vld [vmem:[%s963 + $0x418] sm:$0xff]
        %v1132 = vld [vmem:[%s963 + $0x420] sm:$0xff]
        %v1133 = vld [vmem:[%s963 + $0x428] sm:$0xff]
        %v1134 = vld [vmem:[%s963 + $0x430] sm:$0xff]
        %v1135 = vld [vmem:[%s963 + $0x438] sm:$0xff]
        %v1136 = vld [vmem:[%s963 + $0x440] sm:$0xff]
        %v1137 = vld [vmem:[%s963 + $0x448] sm:$0xff]
        %v1138 = vld [vmem:[%s963 + $0x450] sm:$0xff]
        %v1139 = vld [vmem:[%s963 + $0x458] sm:$0xff]
        %v1140 = vld [vmem:[%s963 + $0x460] sm:$0xff]
        %v1141 = vld [vmem:[%s963 + $0x468] sm:$0xff]
        %v1142 = vld [vmem:[%s963 + $0x470] sm:$0xff]
        %v1143 = vld [vmem:[%s963 + $0x478] sm:$0xff]
        %v1144 = vld [vmem:[%s963 + $0x480] sm:$0xff]
        %v1145 = vld [vmem:[%s963 + $0x488] sm:$0xff]
        %v1146 = vld [vmem:[%s963 + $0x490] sm:$0xff]
        %v1147 = vld [vmem:[%s963 + $0x498] sm:$0xff]
        %v1148 = vld [vmem:[%s963 + $0x4a0] sm:$0xff]
        %v1149 = vld [vmem:[%s963 + $0x4a8] sm:$0xff]
        %v1150 = vld [vmem:[%s963 + $0x4b0] sm:$0xff]
        %v1151 = vld [vmem:[%s963 + $0x4b8] sm:$0xff]
        %v1152 = vld [vmem:[%s963 + $0x4c0] sm:$0xff]
        %v1153 = vld [vmem:[%s963 + $0x4c8] sm:$0xff]
        %v1154 = vld [vmem:[%s963 + $0x4d0] sm:$0xff]
        %v1155 = vld [vmem:[%s963 + $0x4d8] sm:$0xff]
        %v1156 = vld [vmem:[%s963 + $0x4e0] sm:$0xff]
        %v1157 = vld [vmem:[%s963 + $0x4e8] sm:$0xff]
        %v1158 = vld [vmem:[%s963 + $0x4f0] sm:$0xff]
        %v1159 = vld [vmem:[%s963 + $0x4f8] sm:$0xff]
        %v1160 = vld [vmem:[%s963 + $0x500] sm:$0xff]
        %v1161 = vld [vmem:[%s963 + $0x508] sm:$0xff]
        %v1162 = vld [vmem:[%s963 + $0x510] sm:$0xff]
        %v1163 = vld [vmem:[%s963 + $0x518] sm:$0xff]
        %v1164 = vld [vmem:[%s963 + $0x520] sm:$0xff]
        %v1165 = vld [vmem:[%s963 + $0x528] sm:$0xff]
        %v1166 = vld [vmem:[%s963 + $0x530] sm:$0xff]
        %v1167 = vld [vmem:[%s963 + $0x538] sm:$0xff]
        %v1168 = vld [vmem:[%s963 + $0x540] sm:$0xff]
        %v1169 = vld [vmem:[%s963 + $0x548] sm:$0xff]
        %v1170 = vld [vmem:[%s963 + $0x550] sm:$0xff]
        %v1171 = vld [vmem:[%s963 + $0x558] sm:$0xff]
        %v1172 = vld [vmem:[%s963 + $0x560] sm:$0xff]
        %v1173 = vld [vmem:[%s963 + $0x568] sm:$0xff]
        %v1174 = vld [vmem:[%s963 + $0x570] sm:$0xff]
        %v1175 = vld [vmem:[%s963 + $0x578] sm:$0xff]
        %v1176 = vld [vmem:[%s963 + $0x580] sm:$0xff]
        %v1177 = vld [vmem:[%s963 + $0x588] sm:$0xff]
        %v1178 = vld [vmem:[%s963 + $0x590] sm:$0xff]
        %v1179 = vld [vmem:[%s963 + $0x598] sm:$0xff]
        %v1180 = vld [vmem:[%s963 + $0x5a0] sm:$0xff]
        %v1181 = vld [vmem:[%s963 + $0x5a8] sm:$0xff]
        %v1182 = vld [vmem:[%s963 + $0x5b0] sm:$0xff]
        %v1183 = vld [vmem:[%s963 + $0x5b8] sm:$0xff]
        %v1184 = vld [vmem:[%s963 + $0x5c0] sm:$0xff]
        %v1185 = vld [vmem:[%s963 + $0x5c8] sm:$0xff]
        %v1186 = vld [vmem:[%s963 + $0x5d0] sm:$0xff]
        %v1187 = vld [vmem:[%s963 + $0x5d8] sm:$0xff]
        %v1188 = vld [vmem:[%s963 + $0x5e0] sm:$0xff]
        %v1189 = vld [vmem:[%s963 + $0x5e8] sm:$0xff]
        %v1190 = vld [vmem:[%s963 + $0x5f0] sm:$0xff]
        %v1191 = vld [vmem:[%s963 + $0x5f8] sm:$0xff]
        %v1192 = vld [vmem:[%s963 + $0x600] sm:$0xff]
        %v1193 = vld [vmem:[%s963 + $0x608] sm:$0xff]
        %v1194 = vld [vmem:[%s963 + $0x610] sm:$0xff]
        %v1195 = vld [vmem:[%s963 + $0x618] sm:$0xff]
        %v1196 = vld [vmem:[%s963 + $0x620] sm:$0xff]
        %v1197 = vld [vmem:[%s963 + $0x628] sm:$0xff]
        %v1198 = vld [vmem:[%s963 + $0x630] sm:$0xff]
        %v1199 = vld [vmem:[%s963 + $0x638] sm:$0xff]
        %v1200 = vld [vmem:[%s963 + $0x640] sm:$0xff]
        %v1201 = vld [vmem:[%s963 + $0x648] sm:$0xff]
        %v1202 = vld [vmem:[%s963 + $0x650] sm:$0xff]
        %v1203 = vld [vmem:[%s963 + $0x658] sm:$0xff]
        %v1204 = vld [vmem:[%s963 + $0x660] sm:$0xff]
        %v1205 = vld [vmem:[%s963 + $0x668] sm:$0xff]
        %v1206 = vld [vmem:[%s963 + $0x670] sm:$0xff]
        %v1207 = vld [vmem:[%s963 + $0x678] sm:$0xff]
        %v1208 = vld [vmem:[%s963 + $0x680] sm:$0xff]
        %v1209 = vld [vmem:[%s963 + $0x688] sm:$0xff]
        %v1210 = vld [vmem:[%s963 + $0x690] sm:$0xff]
        %v1211 = vld [vmem:[%s963 + $0x698] sm:$0xff]
        %v1212 = vld [vmem:[%s963 + $0x6a0] sm:$0xff]
        %v1213 = vld [vmem:[%s963 + $0x6a8] sm:$0xff]
        %v1214 = vld [vmem:[%s963 + $0x6b0] sm:$0xff]
        %v1215 = vld [vmem:[%s963 + $0x6b8] sm:$0xff]
        %v1216 = vld [vmem:[%s963 + $0x6c0] sm:$0xff]
        %v1217 = vld [vmem:[%s963 + $0x6c8] sm:$0xff]
        %v1218 = vld [vmem:[%s963 + $0x6d0] sm:$0xff]
        %v1219 = vld [vmem:[%s963 + $0x6d8] sm:$0xff]
        %v1220 = vld [vmem:[%s963 + $0x6e0] sm:$0xff]
        %v1221 = vld [vmem:[%s963 + $0x6e8] sm:$0xff]
        %v1222 = vld [vmem:[%s963 + $0x6f0] sm:$0xff]
        %v1223 = vld [vmem:[%s963 + $0x6f8] sm:$0xff]
        %v1224 = vld [vmem:[%s963 + $0x700] sm:$0xff]
        %v1225 = vld [vmem:[%s963 + $0x708] sm:$0xff]
        %v1226 = vld [vmem:[%s963 + $0x710] sm:$0xff]
        %v1227 = vld [vmem:[%s963 + $0x718] sm:$0xff]
        %v1228 = vld [vmem:[%s963 + $0x720] sm:$0xff]
        %v1229 = vld [vmem:[%s963 + $0x728] sm:$0xff]
        %v1230 = vld [vmem:[%s963 + $0x730] sm:$0xff]
        %v1231 = vld [vmem:[%s963 + $0x738] sm:$0xff]
        %v1232 = vld [vmem:[%s963 + $0x740] sm:$0xff]
        %v1233 = vld [vmem:[%s963 + $0x748] sm:$0xff]
        %v1234 = vld [vmem:[%s963 + $0x750] sm:$0xff]
        %v1235 = vld [vmem:[%s963 + $0x758] sm:$0xff]
        %v1236 = vld [vmem:[%s963 + $0x760] sm:$0xff]
        %v1237 = vld [vmem:[%s963 + $0x768] sm:$0xff]
        %v1238 = vld [vmem:[%s963 + $0x770] sm:$0xff]
        %v1239 = vld [vmem:[%s963 + $0x778] sm:$0xff]
        %v1240 = vld [vmem:[%s963 + $0x780] sm:$0xff]
        %v1241 = vld [vmem:[%s963 + $0x788] sm:$0xff]
        %v1242 = vld [vmem:[%s963 + $0x790] sm:$0xff]
        %v1243 = vld [vmem:[%s963 + $0x798] sm:$0xff]
        %v1244 = vld [vmem:[%s963 + $0x7a0] sm:$0xff]
        %v1245 = vld [vmem:[%s963 + $0x7a8] sm:$0xff]
        %v1246 = vld [vmem:[%s963 + $0x7b0] sm:$0xff]
        %v1247 = vld [vmem:[%s963 + $0x7b8] sm:$0xff]
        %v1248 = vld [vmem:[%s963 + $0x7c0] sm:$0xff]
        %v1249 = vld [vmem:[%s963 + $0x7c8] sm:$0xff]
        %v1250 = vld [vmem:[%s963 + $0x7d0] sm:$0xff]
        %v1251 = vld [vmem:[%s963 + $0x7d8] sm:$0xff]
        %v1252 = vld [vmem:[%s963 + $0x7e0] sm:$0xff]
        %v1253 = vld [vmem:[%s963 + $0x7e8] sm:$0xff]
        %v1254 = vld [vmem:[%s963 + $0x7f0] sm:$0xff]
        %v1255 = vld [vmem:[%s963 + $0x7f8] sm:$0xff]
        %v1256 = vld [vmem:[%s963 + $0x800] sm:$0xff]
        %v1257 = vld [vmem:[%s963 + $0x808] sm:$0xff]
        %v1258 = vld [vmem:[%s963 + $0x810] sm:$0xff]
        %v1259 = vld [vmem:[%s963 + $0x818] sm:$0xff]
        %v1260 = vld [vmem:[%s963 + $0x820] sm:$0xff]
        %v1261 = vld [vmem:[%s963 + $0x828] sm:$0xff]
        %v1262 = vld [vmem:[%s963 + $0x830] sm:$0xff]
        %v1263 = vld [vmem:[%s963 + $0x838] sm:$0xff]
        %v1264 = vld [vmem:[%s963 + $0x840] sm:$0xff]
        %v1265 = vld [vmem:[%s963 + $0x848] sm:$0xff]
        %v1266 = vld [vmem:[%s963 + $0x850] sm:$0xff]
        %v1267 = vld [vmem:[%s963 + $0x858] sm:$0xff]
        %v1268 = vld [vmem:[%s963 + $0x860] sm:$0xff]
        %v1269 = vld [vmem:[%s963 + $0x868] sm:$0xff]
        %v1270 = vld [vmem:[%s963 + $0x870] sm:$0xff]
        %v1271 = vld [vmem:[%s963 + $0x878] sm:$0xff]
        %v1272 = vld [vmem:[%s963 + $0x880] sm:$0xff]
        %v1273 = vld [vmem:[%s963 + $0x888] sm:$0xff]
        %v1274 = vld [vmem:[%s963 + $0x890] sm:$0xff]
        %v1275 = vld [vmem:[%s963 + $0x898] sm:$0xff]
        %v1276 = vld [vmem:[%s963 + $0x8a0] sm:$0xff]
        %v1277 = vld [vmem:[%s963 + $0x8a8] sm:$0xff]
        %v1278 = vld [vmem:[%s963 + $0x8b0] sm:$0xff]
        %v1279 = vld [vmem:[%s963 + $0x8b8] sm:$0xff]
        %v1280 = vld [vmem:[%s963 + $0x8c0] sm:$0xff]
        %v1281 = vld [vmem:[%s963 + $0x8c8] sm:$0xff]
        %v1282 = vld [vmem:[%s963 + $0x8d0] sm:$0xff]
        %v1283 = vld [vmem:[%s963 + $0x8d8] sm:$0xff]
        %v1284 = vld [vmem:[%s963 + $0x8e0] sm:$0xff]
        %v1285 = vld [vmem:[%s963 + $0x8e8] sm:$0xff]
        %v1286 = vld [vmem:[%s963 + $0x8f0] sm:$0xff]
        %v1287 = vld [vmem:[%s963 + $0x8f8] sm:$0xff]
        %v1288 = vld [vmem:[%s963 + $0x900] sm:$0xff]
        %v1289 = vld [vmem:[%s963 + $0x908] sm:$0xff]
        %v1290 = vld [vmem:[%s963 + $0x910] sm:$0xff]
        %v1291 = vld [vmem:[%s963 + $0x918] sm:$0xff]
        %v1292 = vld [vmem:[%s963 + $0x920] sm:$0xff]
        %v1293 = vld [vmem:[%s963 + $0x928] sm:$0xff]
        %v1294 = vld [vmem:[%s963 + $0x930] sm:$0xff]
        %v1295 = vld [vmem:[%s963 + $0x938] sm:$0xff]
        %v1296 = vld [vmem:[%s963 + $0x940] sm:$0xff]
        %v1297 = vld [vmem:[%s963 + $0x948] sm:$0xff]
        %v1298 = vld [vmem:[%s963 + $0x950] sm:$0xff]
        %v1299 = vld [vmem:[%s963 + $0x958] sm:$0xff]
        %v1300 = vld [vmem:[%s963 + $0x960] sm:$0xff]
        %v1301 = vld [vmem:[%s963 + $0x968] sm:$0xff]
        %v1302 = vld [vmem:[%s963 + $0x970] sm:$0xff]
        %v1303 = vld [vmem:[%s963 + $0x978] sm:$0xff]
        %v1304 = vld [vmem:[%s963 + $0x980] sm:$0xff]
        %v1305 = vld [vmem:[%s963 + $0x988] sm:$0xff]
        %v1306 = vld [vmem:[%s963 + $0x990] sm:$0xff]
        %v1307 = vld [vmem:[%s963 + $0x998] sm:$0xff]
        %v1308 = vld [vmem:[%s963 + $0x9a0] sm:$0xff]
        %v1309 = vld [vmem:[%s963 + $0x9a8] sm:$0xff]
        %v1310 = vld [vmem:[%s963 + $0x9b0] sm:$0xff]
        %v1311 = vld [vmem:[%s963 + $0x9b8] sm:$0xff]
        %v1312 = vld [vmem:[%s963 + $0x9c0] sm:$0xff]
        %v1313 = vld [vmem:[%s963 + $0x9c8] sm:$0xff]
        %v1314 = vld [vmem:[%s963 + $0x9d0] sm:$0xff]
        %v1315 = vld [vmem:[%s963 + $0x9d8] sm:$0xff]
        %v1316 = vld [vmem:[%s963 + $0x9e0] sm:$0xff]
        %v1317 = vld [vmem:[%s963 + $0x9e8] sm:$0xff]
        %v1318 = vld [vmem:[%s963 + $0x9f0] sm:$0xff]
        %v1319 = vld [vmem:[%s963 + $0x9f8] sm:$0xff]
        %v1320 = vld [vmem:[%s963 + $0xa00] sm:$0xff]
        %v1321 = vld [vmem:[%s963 + $0xa08] sm:$0xff]
        %v1322 = vld [vmem:[%s963 + $0xa10] sm:$0xff]
        %v1323 = vld [vmem:[%s963 + $0xa18] sm:$0xff]
        %v1324 = vld [vmem:[%s963 + $0xa20] sm:$0xff]
        %v1325 = vld [vmem:[%s963 + $0xa28] sm:$0xff]
        %v1326 = vld [vmem:[%s963 + $0xa30] sm:$0xff]
        %v1327 = vld [vmem:[%s963 + $0xa38] sm:$0xff]
        %v1328 = vld [vmem:[%s963 + $0xa40] sm:$0xff]
        %v1329 = vld [vmem:[%s963 + $0xa48] sm:$0xff]
        %v1330 = vld [vmem:[%s963 + $0xa50] sm:$0xff]
        %v1331 = vld [vmem:[%s963 + $0xa58] sm:$0xff]
        %v1332 = vld [vmem:[%s963 + $0xa60] sm:$0xff]
        %v1333 = vld [vmem:[%s963 + $0xa68] sm:$0xff]
        %v1334 = vld [vmem:[%s963 + $0xa70] sm:$0xff]
        %v1335 = vld [vmem:[%s963 + $0xa78] sm:$0xff]
        %v1336 = vld [vmem:[%s963 + $0xa80] sm:$0xff]
        %v1337 = vld [vmem:[%s963 + $0xa88] sm:$0xff]
        %v1338 = vld [vmem:[%s963 + $0xa90] sm:$0xff]
        %v1339 = vld [vmem:[%s963 + $0xa98] sm:$0xff]
        %v1340 = vld [vmem:[%s963 + $0xaa0] sm:$0xff]
        %v1341 = vld [vmem:[%s963 + $0xaa8] sm:$0xff]
        %v1342 = vld [vmem:[%s963 + $0xab0] sm:$0xff]
        %v1343 = vld [vmem:[%s963 + $0xab8] sm:$0xff]
        %v1344 = vld [vmem:[%s963 + $0xac0] sm:$0xff]
        %v1345 = vld [vmem:[%s963 + $0xac8] sm:$0xff]
        %v1346 = vld [vmem:[%s963 + $0xad0] sm:$0xff]
        %v1347 = vld [vmem:[%s963 + $0xad8] sm:$0xff]
        %v1348 = vld [vmem:[%s963 + $0xae0] sm:$0xff]
        %v1349 = vld [vmem:[%s963 + $0xae8] sm:$0xff]
        %v1350 = vld [vmem:[%s963 + $0xaf0] sm:$0xff]
        %v1351 = vld [vmem:[%s963 + $0xaf8] sm:$0xff]
        %v1352 = vld [vmem:[%s963 + $0xb00] sm:$0xff]
        %v1353 = vld [vmem:[%s963 + $0xb08] sm:$0xff]
        %v1354 = vld [vmem:[%s963 + $0xb10] sm:$0xff]
        %v1355 = vld [vmem:[%s963 + $0xb18] sm:$0xff]
        %v1356 = vld [vmem:[%s963 + $0xb20] sm:$0xff]
        %v1357 = vld [vmem:[%s963 + $0xb28] sm:$0xff]
        %v1358 = vld [vmem:[%s963 + $0xb30] sm:$0xff]
        %v1359 = vld [vmem:[%s963 + $0xb38] sm:$0xff]
        %v1360 = vld [vmem:[%s963 + $0xb40] sm:$0xff]
        %v1361 = vld [vmem:[%s963 + $0xb48] sm:$0xff]
        %v1362 = vld [vmem:[%s963 + $0xb50] sm:$0xff]
        %v1363 = vld [vmem:[%s963 + $0xb58] sm:$0xff]
        %v1364 = vld [vmem:[%s963 + $0xb60] sm:$0xff]
        %v1365 = vld [vmem:[%s963 + $0xb68] sm:$0xff]
        %v1366 = vld [vmem:[%s963 + $0xb70] sm:$0xff]
        %v1367 = vld [vmem:[%s963 + $0xb78] sm:$0xff]
        %v1368 = vld [vmem:[%s963 + $0xb80] sm:$0xff]
        %v1369 = vld [vmem:[%s963 + $0xb88] sm:$0xff]
        %v1370 = vld [vmem:[%s963 + $0xb90] sm:$0xff]
        %v1371 = vld [vmem:[%s963 + $0xb98] sm:$0xff]
        %v1372 = vld [vmem:[%s963 + $0xba0] sm:$0xff]
        %v1373 = vld [vmem:[%s963 + $0xba8] sm:$0xff]
        %v1374 = vld [vmem:[%s963 + $0xbb0] sm:$0xff]
        %v1375 = vld [vmem:[%s963 + $0xbb8] sm:$0xff]
        %v1376 = vld [vmem:[%s963 + $0xbc0] sm:$0xff]
        %v1377 = vld [vmem:[%s963 + $0xbc8] sm:$0xff]
        %v1378 = vld [vmem:[%s963 + $0xbd0] sm:$0xff]
        %v1379 = vld [vmem:[%s963 + $0xbd8] sm:$0xff]
        %v1380 = vld [vmem:[%s963 + $0xbe0] sm:$0xff]
        %v1381 = vld [vmem:[%s963 + $0xbe8] sm:$0xff]
        %v1382 = vld [vmem:[%s963 + $0xbf0] sm:$0xff]
        %v1383 = vld [vmem:[%s963 + $0xbf8] sm:$0xff]
        %v1384 = vld [vmem:[%s963 + $0xc00] sm:$0xff]
        %v1385 = vld [vmem:[%s963 + $0xc08] sm:$0xff]
        %v1386 = vld [vmem:[%s963 + $0xc10] sm:$0xff]
        %v1387 = vld [vmem:[%s963 + $0xc18] sm:$0xff]
        %v1388 = vld [vmem:[%s963 + $0xc20] sm:$0xff]
        %v1389 = vld [vmem:[%s963 + $0xc28] sm:$0xff]
        %v1390 = vld [vmem:[%s963 + $0xc30] sm:$0xff]
        %v1391 = vld [vmem:[%s963 + $0xc38] sm:$0xff]
        %v1392 = vld [vmem:[%s963 + $0xc40] sm:$0xff]
        %v1393 = vld [vmem:[%s963 + $0xc48] sm:$0xff]
        %v1394 = vld [vmem:[%s963 + $0xc50] sm:$0xff]
        %v1395 = vld [vmem:[%s963 + $0xc58] sm:$0xff]
        %v1396 = vld [vmem:[%s963 + $0xc60] sm:$0xff]
        %v1397 = vld [vmem:[%s963 + $0xc68] sm:$0xff]
        %v1398 = vld [vmem:[%s963 + $0xc70] sm:$0xff]
        %v1399 = vld [vmem:[%s963 + $0xc78] sm:$0xff]
        %v1400 = vld [vmem:[%s2] sm:$0xff]
        %v1401 = vld [vmem:[%s2 + $0x8] sm:$0xff]
        %1403 = vset.pattern.permute.xlu0 0
        %1404 = vperm.xlu0 %1403, %v1400
        %v1405 = vpop.permute.xlu0 %1404
        %1408 = vset.pattern.permute.xlu0 0
        %1409 = vperm.xlu0 %1408, %v1401
        %v1410 = vpop.permute.xlu0 %1409
        %v1426 = vunpack.c.l.b16 %v986
        %v1427 = vunpack.c.h.b16 %v986
        %v1428 = vunpack.c.l.b16 %v987
        %v1429 = vunpack.c.h.b16 %v987
        %v1430 = vunpack.c.l.b16 %v988
        %v1431 = vunpack.c.h.b16 %v988
        %v1432 = vunpack.c.l.b16 %v989
        %v1433 = vunpack.c.h.b16 %v989
        %v1434 = vunpack.c.l.b16 %v990
        %v1435 = vunpack.c.h.b16 %v990
        %v1436 = vunpack.c.l.b16 %v991
        %v1437 = vunpack.c.h.b16 %v991
        %v1438 = vunpack.c.l.b16 %v992
        %v1439 = vunpack.c.l.b16 %v993
        %v1440 = vunpack.c.h.b16 %v993
        %v1441 = vunpack.c.l.b16 %v994
        %v1442 = vunpack.c.h.b16 %v994
        %v1443 = vunpack.c.l.b16 %v995
        %v1444 = vunpack.c.h.b16 %v995
        %v1445 = vunpack.c.l.b16 %v996
        %v1446 = vunpack.c.h.b16 %v996
        %v1447 = vunpack.c.l.b16 %v997
        %v1448 = vunpack.c.h.b16 %v997
        %v1449 = vunpack.c.l.b16 %v998
        %v1450 = vunpack.c.h.b16 %v998
        %v1451 = vunpack.c.l.b16 %v999
        %v1452 = vpack.c.b16 %v1439, %v1426
        %v1453 = vpack.c.b16 %v1440, %v1427
        %v1454 = vpack.c.b16 %v1441, %v1428
        %v1455 = vpack.c.b16 %v1442, %v1429
        %v1456 = vpack.c.b16 %v1443, %v1430
        %v1457 = vpack.c.b16 %v1444, %v1431
        %v1458 = vpack.c.b16 %v1445, %v1432
        %v1459 = vpack.c.b16 %v1446, %v1433
        %v1460 = vpack.c.b16 %v1447, %v1434
        %v1461 = vpack.c.b16 %v1448, %v1435
        %v1462 = vpack.c.b16 %v1449, %v1436
        %v1463 = vpack.c.b16 %v1450, %v1437
        %v1464 = vpack.c.b16 %v1451, %v1438
        %v1877 = vunpack.c.l.b16 %v1000
        %v1878 = vunpack.c.h.b16 %v1000
        %v1879 = vunpack.c.l.b16 %v1001
        %v1880 = vunpack.c.h.b16 %v1001
        %v1881 = vunpack.c.l.b16 %v1002
        %v1882 = vunpack.c.h.b16 %v1002
        %v1883 = vunpack.c.l.b16 %v1003
        %v1884 = vunpack.c.h.b16 %v1003
        %v1885 = vunpack.c.l.b16 %v1004
        %v1886 = vunpack.c.h.b16 %v1004
        %v1887 = vunpack.c.l.b16 %v1005
        %v1888 = vunpack.c.h.b16 %v1005
        %v1889 = vunpack.c.l.b16 %v1006
        %v1890 = vunpack.c.h.b16 %v1006
        %v1891 = vunpack.c.l.b16 %v1007
        %v1892 = vunpack.c.h.b16 %v1007
        %v1893 = vunpack.c.l.b16 %v1008
        %v1894 = vunpack.c.h.b16 %v1008
        %v1895 = vunpack.c.l.b16 %v1009
        %v1896 = vunpack.c.h.b16 %v1009
        %v1897 = vunpack.c.l.b16 %v1010
        %v1898 = vunpack.c.h.b16 %v1010
        %v1899 = vunpack.c.l.b16 %v1011
        %v1900 = vunpack.c.h.b16 %v1011
        %v1901 = vunpack.c.l.b16 %v1012
        %v1902 = vunpack.c.h.b16 %v1012
        %v1903 = vunpack.c.l.b16 %v1013
        %v1904 = vunpack.c.h.b16 %v1013
        %v1905 = vunpack.c.l.b16 %v1014
        %v1906 = vunpack.c.h.b16 %v1014
        %v1907 = vunpack.c.l.b16 %v1015
        %v1908 = vunpack.c.h.b16 %v1015
        %v1909 = vunpack.c.l.b16 %v1016
        %v1910 = vunpack.c.h.b16 %v1016
        %v1911 = vunpack.c.l.b16 %v1017
        %v1912 = vunpack.c.h.b16 %v1017
        %v1913 = vunpack.c.l.b16 %v1018
        %v1914 = vunpack.c.h.b16 %v1018
        %v1915 = vunpack.c.l.b16 %v1019
        %v1916 = vunpack.c.h.b16 %v1019
        %v1917 = vunpack.c.l.b16 %v1020
        %v1918 = vunpack.c.h.b16 %v1020
        %v1919 = vunpack.c.l.b16 %v1021
        %v1920 = vunpack.c.h.b16 %v1021
        %v1921 = vunpack.c.l.b16 %v1022
        %v1922 = vunpack.c.h.b16 %v1022
        %v1923 = vunpack.c.l.b16 %v1023
        %v1924 = vunpack.c.h.b16 %v1023
        %v1925 = vunpack.c.l.b16 %v1024
        %v1926 = vunpack.c.h.b16 %v1024
        %v1927 = vunpack.c.l.b16 %v1025
        %v1928 = vunpack.c.h.b16 %v1025
        %v1929 = vunpack.c.l.b16 %v1026
        %v1930 = vunpack.c.h.b16 %v1026
        %v1931 = vunpack.c.l.b16 %v1027
        %v1932 = vunpack.c.h.b16 %v1027
        %v1933 = vunpack.c.l.b16 %v1028
        %v1934 = vunpack.c.h.b16 %v1028
        %v1935 = vunpack.c.l.b16 %v1029
        %v1936 = vunpack.c.h.b16 %v1029
        %v1937 = vunpack.c.l.b16 %v1030
        %v1938 = vunpack.c.h.b16 %v1030
        %v1939 = vunpack.c.l.b16 %v1031
        %v1940 = vunpack.c.h.b16 %v1031
        %v1941 = vunpack.c.l.b16 %v1032
        %v1942 = vunpack.c.h.b16 %v1032
        %v1943 = vunpack.c.l.b16 %v1033
        %v1944 = vunpack.c.h.b16 %v1033
        %v1945 = vunpack.c.l.b16 %v1034
        %v1946 = vunpack.c.h.b16 %v1034
        %v1947 = vunpack.c.l.b16 %v1035
        %v1948 = vunpack.c.h.b16 %v1035
        %v1949 = vunpack.c.l.b16 %v1036
        %v1950 = vunpack.c.h.b16 %v1036
        %v1951 = vunpack.c.l.b16 %v1037
        %v1952 = vunpack.c.h.b16 %v1037
        %v1953 = vunpack.c.l.b16 %v1038
        %v1954 = vunpack.c.h.b16 %v1038
        %v1955 = vunpack.c.l.b16 %v1039
        %v1956 = vunpack.c.h.b16 %v1039
        %v1957 = vunpack.c.l.b16 %v1040
        %v1958 = vunpack.c.h.b16 %v1040
        %v1959 = vunpack.c.l.b16 %v1041
        %v1960 = vunpack.c.h.b16 %v1041
        %v1961 = vunpack.c.l.b16 %v1042
        %v1962 = vunpack.c.h.b16 %v1042
        %v1963 = vunpack.c.l.b16 %v1043
        %v1964 = vunpack.c.h.b16 %v1043
        %v1965 = vunpack.c.l.b16 %v1044
        %v1966 = vunpack.c.h.b16 %v1044
        %v1967 = vunpack.c.l.b16 %v1045
        %v1968 = vunpack.c.h.b16 %v1045
        %v1969 = vunpack.c.l.b16 %v1046
        %v1970 = vunpack.c.h.b16 %v1046
        %v1971 = vunpack.c.l.b16 %v1047
        %v1972 = vunpack.c.h.b16 %v1047
        %v1973 = vunpack.c.l.b16 %v1048
        %v1974 = vunpack.c.h.b16 %v1048
        %v1975 = vunpack.c.l.b16 %v1049
        %v1976 = vunpack.c.h.b16 %v1049
        %v1977 = vunpack.c.l.b16 %v1050
        %v1978 = vunpack.c.h.b16 %v1050
        %v1979 = vunpack.c.l.b16 %v1051
        %v1980 = vunpack.c.h.b16 %v1051
        %v1981 = vunpack.c.l.b16 %v1052
        %v1982 = vunpack.c.h.b16 %v1052
        %v1983 = vunpack.c.l.b16 %v1053
        %v1984 = vunpack.c.h.b16 %v1053
        %v1985 = vunpack.c.l.b16 %v1054
        %v1986 = vunpack.c.h.b16 %v1054
        %v1987 = vunpack.c.l.b16 %v1055
        %v1988 = vunpack.c.h.b16 %v1055
        %v1989 = vunpack.c.l.b16 %v1056
        %v1990 = vunpack.c.h.b16 %v1056
        %v1991 = vunpack.c.l.b16 %v1057
        %v1992 = vunpack.c.h.b16 %v1057
        %v1993 = vunpack.c.l.b16 %v1058
        %v1994 = vunpack.c.h.b16 %v1058
        %v1995 = vunpack.c.l.b16 %v1059
        %v1996 = vunpack.c.h.b16 %v1059
        %v1997 = vunpack.c.l.b16 %v1060
        %v1998 = vunpack.c.h.b16 %v1060
        %v1999 = vunpack.c.l.b16 %v1061
        %v2000 = vunpack.c.h.b16 %v1061
        %v2001 = vunpack.c.l.b16 %v1062
        %v2002 = vunpack.c.h.b16 %v1062
        %v2003 = vunpack.c.l.b16 %v1063
        %v2004 = vunpack.c.h.b16 %v1063
        %v2005 = vunpack.c.l.b16 %v1064
        %v2006 = vunpack.c.h.b16 %v1064
        %v2007 = vunpack.c.l.b16 %v1065
        %v2008 = vunpack.c.h.b16 %v1065
        %v2009 = vunpack.c.l.b16 %v1066
        %v2010 = vunpack.c.h.b16 %v1066
        %v2011 = vunpack.c.l.b16 %v1067
        %v2012 = vunpack.c.h.b16 %v1067
        %v2013 = vunpack.c.l.b16 %v1068
        %v2014 = vunpack.c.h.b16 %v1068
        %v2015 = vunpack.c.l.b16 %v1069
        %v2016 = vunpack.c.h.b16 %v1069
        %v2017 = vunpack.c.l.b16 %v1070
        %v2018 = vunpack.c.h.b16 %v1070
        %v2019 = vunpack.c.l.b16 %v1071
        %v2020 = vunpack.c.h.b16 %v1071
        %v2021 = vunpack.c.l.b16 %v1072
        %v2022 = vunpack.c.h.b16 %v1072
        %v2023 = vunpack.c.l.b16 %v1073
        %v2024 = vunpack.c.h.b16 %v1073
        %v2025 = vunpack.c.l.b16 %v1074
        %v2026 = vunpack.c.h.b16 %v1074
        %v2027 = vunpack.c.l.b16 %v1075
        %v2028 = vunpack.c.h.b16 %v1075
        %v2029 = vunpack.c.l.b16 %v1076
        %v2030 = vunpack.c.h.b16 %v1076
        %v2031 = vunpack.c.l.b16 %v1077
        %v2032 = vunpack.c.h.b16 %v1077
        %v2033 = vunpack.c.l.b16 %v1078
        %v2034 = vunpack.c.h.b16 %v1078
        %v2035 = vunpack.c.l.b16 %v1079
        %v2036 = vunpack.c.h.b16 %v1079
        %v2037 = vunpack.c.l.b16 %v1080
        %v2038 = vunpack.c.h.b16 %v1080
        %v2039 = vunpack.c.l.b16 %v1081
        %v2040 = vunpack.c.h.b16 %v1081
        %v2041 = vunpack.c.l.b16 %v1082
        %v2042 = vunpack.c.h.b16 %v1082
        %v2043 = vunpack.c.l.b16 %v1083
        %v2044 = vunpack.c.h.b16 %v1083
        %v2045 = vunpack.c.l.b16 %v1084
        %v2046 = vunpack.c.h.b16 %v1084
        %v2047 = vunpack.c.l.b16 %v1085
        %v2048 = vunpack.c.h.b16 %v1085
        %v2049 = vunpack.c.l.b16 %v1086
        %v2050 = vunpack.c.h.b16 %v1086
        %v2051 = vunpack.c.l.b16 %v1087
        %v2052 = vunpack.c.h.b16 %v1087
        %v2053 = vunpack.c.l.b16 %v1088
        %v2054 = vunpack.c.h.b16 %v1088
        %v2055 = vunpack.c.l.b16 %v1089
        %v2056 = vunpack.c.h.b16 %v1089
        %v2057 = vunpack.c.l.b16 %v1090
        %v2058 = vunpack.c.h.b16 %v1090
        %v2059 = vunpack.c.l.b16 %v1091
        %v2060 = vunpack.c.h.b16 %v1091
        %v2061 = vunpack.c.l.b16 %v1092
        %v2062 = vunpack.c.h.b16 %v1092
        %v2063 = vunpack.c.l.b16 %v1093
        %v2064 = vunpack.c.h.b16 %v1093
        %v2065 = vunpack.c.l.b16 %v1094
        %v2066 = vunpack.c.h.b16 %v1094
        %v2067 = vunpack.c.l.b16 %v1095
        %v2068 = vunpack.c.h.b16 %v1095
        %v2069 = vunpack.c.l.b16 %v1096
        %v2070 = vunpack.c.h.b16 %v1096
        %v2071 = vunpack.c.l.b16 %v1097
        %v2072 = vunpack.c.h.b16 %v1097
        %v2073 = vunpack.c.l.b16 %v1098
        %v2074 = vunpack.c.h.b16 %v1098
        %v2075 = vunpack.c.l.b16 %v1099
        %v2076 = vunpack.c.h.b16 %v1099
        %v2077 = vunpack.c.l.b16 %v1100
        %v2078 = vunpack.c.h.b16 %v1100
        %v2079 = vunpack.c.l.b16 %v1101
        %v2080 = vunpack.c.h.b16 %v1101
        %v2081 = vunpack.c.l.b16 %v1102
        %v2082 = vunpack.c.h.b16 %v1102
        %v2083 = vunpack.c.l.b16 %v1103
        %v2084 = vunpack.c.h.b16 %v1103
        %v2085 = vunpack.c.l.b16 %v1104
        %v2086 = vunpack.c.h.b16 %v1104
        %v2087 = vunpack.c.l.b16 %v1105
        %v2088 = vunpack.c.h.b16 %v1105
        %v2089 = vunpack.c.l.b16 %v1106
        %v2090 = vunpack.c.h.b16 %v1106
        %v2091 = vunpack.c.l.b16 %v1107
        %v2092 = vunpack.c.h.b16 %v1107
        %v2093 = vunpack.c.l.b16 %v1108
        %v2094 = vunpack.c.h.b16 %v1108
        %v2095 = vunpack.c.l.b16 %v1109
        %v2096 = vunpack.c.h.b16 %v1109
        %v2097 = vunpack.c.l.b16 %v1110
        %v2098 = vunpack.c.h.b16 %v1110
        %v2099 = vunpack.c.l.b16 %v1111
        %v2100 = vunpack.c.h.b16 %v1111
        %v2101 = vunpack.c.l.b16 %v1112
        %v2102 = vunpack.c.h.b16 %v1112
        %v2103 = vunpack.c.l.b16 %v1113
        %v2104 = vunpack.c.h.b16 %v1113
        %v2105 = vunpack.c.l.b16 %v1114
        %v2106 = vunpack.c.h.b16 %v1114
        %v2107 = vunpack.c.l.b16 %v1115
        %v2108 = vunpack.c.h.b16 %v1115
        %v2109 = vunpack.c.l.b16 %v1116
        %v2110 = vunpack.c.h.b16 %v1116
        %v2111 = vunpack.c.l.b16 %v1117
        %v2112 = vunpack.c.h.b16 %v1117
        %v2113 = vunpack.c.l.b16 %v1118
        %v2114 = vunpack.c.h.b16 %v1118
        %v2115 = vunpack.c.l.b16 %v1119
        %v2116 = vunpack.c.h.b16 %v1119
        %v2117 = vunpack.c.l.b16 %v1120
        %v2118 = vunpack.c.h.b16 %v1120
        %v2119 = vunpack.c.l.b16 %v1121
        %v2120 = vunpack.c.h.b16 %v1121
        %v2121 = vunpack.c.l.b16 %v1122
        %v2122 = vunpack.c.h.b16 %v1122
        %v2123 = vunpack.c.l.b16 %v1123
        %v2124 = vunpack.c.h.b16 %v1123
        %v2125 = vunpack.c.l.b16 %v1124
        %v2126 = vunpack.c.h.b16 %v1124
        %v2127 = vunpack.c.l.b16 %v1125
        %v2128 = vunpack.c.h.b16 %v1125
        %v2129 = vunpack.c.l.b16 %v1126
        %v2130 = vunpack.c.h.b16 %v1126
        %v2131 = vunpack.c.l.b16 %v1127
        %v2132 = vunpack.c.h.b16 %v1127
        %v2133 = vunpack.c.l.b16 %v1128
        %v2134 = vunpack.c.h.b16 %v1128
        %v2135 = vunpack.c.l.b16 %v1129
        %v2136 = vunpack.c.h.b16 %v1129
        %v2137 = vunpack.c.l.b16 %v1130
        %v2138 = vunpack.c.h.b16 %v1130
        %v2139 = vunpack.c.l.b16 %v1131
        %v2140 = vunpack.c.h.b16 %v1131
        %v2141 = vunpack.c.l.b16 %v1132
        %v2142 = vunpack.c.h.b16 %v1132
        %v2143 = vunpack.c.l.b16 %v1133
        %v2144 = vunpack.c.h.b16 %v1133
        %v2145 = vunpack.c.l.b16 %v1134
        %v2146 = vunpack.c.h.b16 %v1134
        %v2147 = vunpack.c.l.b16 %v1135
        %v2148 = vunpack.c.h.b16 %v1135
        %v2149 = vunpack.c.l.b16 %v1136
        %v2150 = vunpack.c.h.b16 %v1136
        %v2151 = vunpack.c.l.b16 %v1137
        %v2152 = vunpack.c.h.b16 %v1137
        %v2153 = vunpack.c.l.b16 %v1138
        %v2154 = vunpack.c.h.b16 %v1138
        %v2155 = vunpack.c.l.b16 %v1139
        %v2156 = vunpack.c.h.b16 %v1139
        %v2157 = vunpack.c.l.b16 %v1140
        %v2158 = vunpack.c.h.b16 %v1140
        %v2159 = vunpack.c.l.b16 %v1141
        %v2160 = vunpack.c.h.b16 %v1141
        %v2161 = vunpack.c.l.b16 %v1142
        %v2162 = vunpack.c.h.b16 %v1142
        %v2163 = vunpack.c.l.b16 %v1143
        %v2164 = vunpack.c.h.b16 %v1143
        %v2165 = vunpack.c.l.b16 %v1144
        %v2166 = vunpack.c.h.b16 %v1144
        %v2167 = vunpack.c.l.b16 %v1145
        %v2168 = vunpack.c.h.b16 %v1145
        %v2169 = vunpack.c.l.b16 %v1146
        %v2170 = vunpack.c.h.b16 %v1146
        %v2171 = vunpack.c.l.b16 %v1147
        %v2172 = vunpack.c.h.b16 %v1147
        %v2173 = vunpack.c.l.b16 %v1148
        %v2174 = vunpack.c.h.b16 %v1148
        %v2175 = vunpack.c.l.b16 %v1149
        %v2176 = vunpack.c.h.b16 %v1149
        %v2177 = vunpack.c.l.b16 %v1150
        %v2178 = vunpack.c.h.b16 %v1150
        %v2179 = vunpack.c.l.b16 %v1151
        %v2180 = vunpack.c.h.b16 %v1151
        %v2181 = vunpack.c.l.b16 %v1152
        %v2182 = vunpack.c.h.b16 %v1152
        %v2183 = vunpack.c.l.b16 %v1153
        %v2184 = vunpack.c.h.b16 %v1153
        %v2185 = vunpack.c.l.b16 %v1154
        %v2186 = vunpack.c.h.b16 %v1154
        %v2187 = vunpack.c.l.b16 %v1155
        %v2188 = vunpack.c.h.b16 %v1155
        %v2189 = vunpack.c.l.b16 %v1156
        %v2190 = vunpack.c.h.b16 %v1156
        %v2191 = vunpack.c.l.b16 %v1157
        %v2192 = vunpack.c.h.b16 %v1157
        %v2193 = vunpack.c.l.b16 %v1158
        %v2194 = vunpack.c.h.b16 %v1158
        %v2195 = vunpack.c.l.b16 %v1159
        %v2196 = vunpack.c.h.b16 %v1159
        %v2197 = vunpack.c.l.b16 %v1160
        %v2198 = vunpack.c.h.b16 %v1160
        %v2199 = vunpack.c.l.b16 %v1161
        %v2200 = vunpack.c.h.b16 %v1161
        %v2201 = vunpack.c.l.b16 %v1162
        %v2202 = vunpack.c.h.b16 %v1162
        %v2203 = vunpack.c.l.b16 %v1163
        %v2204 = vunpack.c.h.b16 %v1163
        %v2205 = vunpack.c.l.b16 %v1164
        %v2206 = vunpack.c.h.b16 %v1164
        %v2207 = vunpack.c.l.b16 %v1165
        %v2208 = vunpack.c.h.b16 %v1165
        %v2209 = vunpack.c.l.b16 %v1166
        %v2210 = vunpack.c.h.b16 %v1166
        %v2211 = vunpack.c.l.b16 %v1167
        %v2212 = vunpack.c.h.b16 %v1167
        %v2213 = vunpack.c.l.b16 %v1168
        %v2214 = vunpack.c.h.b16 %v1168
        %v2215 = vunpack.c.l.b16 %v1169
        %v2216 = vunpack.c.h.b16 %v1169
        %v2217 = vunpack.c.l.b16 %v1170
        %v2218 = vunpack.c.h.b16 %v1170
        %v2219 = vunpack.c.l.b16 %v1171
        %v2220 = vunpack.c.h.b16 %v1171
        %v2221 = vunpack.c.l.b16 %v1172
        %v2222 = vunpack.c.h.b16 %v1172
        %v2223 = vunpack.c.l.b16 %v1173
        %v2224 = vunpack.c.h.b16 %v1173
        %v2225 = vunpack.c.l.b16 %v1174
        %v2226 = vunpack.c.h.b16 %v1174
        %v2227 = vunpack.c.l.b16 %v1175
        %v2228 = vunpack.c.h.b16 %v1175
        %v2229 = vunpack.c.l.b16 %v1176
        %v2230 = vunpack.c.h.b16 %v1176
        %v2231 = vunpack.c.l.b16 %v1177
        %v2232 = vunpack.c.h.b16 %v1177
        %v2233 = vunpack.c.l.b16 %v1178
        %v2234 = vunpack.c.h.b16 %v1178
        %v2235 = vunpack.c.l.b16 %v1179
        %v2236 = vunpack.c.h.b16 %v1179
        %v2237 = vunpack.c.l.b16 %v1180
        %v2238 = vunpack.c.h.b16 %v1180
        %v2239 = vunpack.c.l.b16 %v1181
        %v2240 = vunpack.c.h.b16 %v1181
        %v2241 = vunpack.c.l.b16 %v1182
        %v2242 = vunpack.c.h.b16 %v1182
        %v2243 = vunpack.c.l.b16 %v1183
        %v2244 = vunpack.c.h.b16 %v1183
        %v2245 = vunpack.c.l.b16 %v1184
        %v2246 = vunpack.c.h.b16 %v1184
        %v2247 = vunpack.c.l.b16 %v1185
        %v2248 = vunpack.c.h.b16 %v1185
        %v2249 = vunpack.c.l.b16 %v1186
        %v2250 = vunpack.c.h.b16 %v1186
        %v2251 = vunpack.c.l.b16 %v1187
        %v2252 = vunpack.c.h.b16 %v1187
        %v2253 = vunpack.c.l.b16 %v1188
        %v2254 = vunpack.c.h.b16 %v1188
        %v2255 = vunpack.c.l.b16 %v1189
        %v2256 = vunpack.c.h.b16 %v1189
        %v2257 = vunpack.c.l.b16 %v1190
        %v2258 = vunpack.c.h.b16 %v1190
        %v2259 = vunpack.c.l.b16 %v1191
        %v2260 = vunpack.c.h.b16 %v1191
        %v2261 = vunpack.c.l.b16 %v1192
        %v2262 = vunpack.c.h.b16 %v1192
        %v2263 = vunpack.c.l.b16 %v1193
        %v2264 = vunpack.c.h.b16 %v1193
        %v2265 = vunpack.c.l.b16 %v1194
        %v2266 = vunpack.c.h.b16 %v1194
        %v2267 = vunpack.c.l.b16 %v1195
        %v2268 = vunpack.c.h.b16 %v1195
        %v2269 = vunpack.c.l.b16 %v1196
        %v2270 = vunpack.c.h.b16 %v1196
        %v2271 = vunpack.c.l.b16 %v1197
        %v2272 = vunpack.c.h.b16 %v1197
        %v2273 = vunpack.c.l.b16 %v1198
        %v2274 = vunpack.c.h.b16 %v1198
        %v2275 = vunpack.c.l.b16 %v1199
        %v2276 = vunpack.c.h.b16 %v1199
        %v2277 = vunpack.c.l.b16 %v1200
        %v2278 = vunpack.c.h.b16 %v1200
        %v2279 = vunpack.c.l.b16 %v1201
        %v2280 = vunpack.c.h.b16 %v1201
        %v2281 = vunpack.c.l.b16 %v1202
        %v2282 = vunpack.c.h.b16 %v1202
        %v2283 = vunpack.c.l.b16 %v1203
        %v2284 = vunpack.c.h.b16 %v1203
        %v2285 = vunpack.c.l.b16 %v1204
        %v2286 = vunpack.c.h.b16 %v1204
        %v2287 = vunpack.c.l.b16 %v1205
        %v2288 = vunpack.c.h.b16 %v1205
        %v2289 = vunpack.c.l.b16 %v1206
        %v2290 = vunpack.c.h.b16 %v1206
        %v2291 = vunpack.c.l.b16 %v1207
        %v2292 = vunpack.c.h.b16 %v1207
        %v2293 = vunpack.c.l.b16 %v1208
        %v2294 = vunpack.c.h.b16 %v1208
        %v2295 = vunpack.c.l.b16 %v1209
        %v2296 = vunpack.c.h.b16 %v1209
        %v2297 = vunpack.c.l.b16 %v1210
        %v2298 = vunpack.c.h.b16 %v1210
        %v2299 = vunpack.c.l.b16 %v1211
        %v2300 = vunpack.c.h.b16 %v1211
        %v2301 = vunpack.c.l.b16 %v1212
        %v2302 = vunpack.c.h.b16 %v1212
        %v2303 = vunpack.c.l.b16 %v1213
        %v2304 = vunpack.c.h.b16 %v1213
        %v2305 = vunpack.c.l.b16 %v1214
        %v2306 = vunpack.c.h.b16 %v1214
        %v2307 = vunpack.c.l.b16 %v1215
        %v2308 = vunpack.c.h.b16 %v1215
        %v2309 = vunpack.c.l.b16 %v1216
        %v2310 = vunpack.c.h.b16 %v1216
        %v2311 = vunpack.c.l.b16 %v1217
        %v2312 = vunpack.c.h.b16 %v1217
        %v2313 = vunpack.c.l.b16 %v1218
        %v2314 = vunpack.c.h.b16 %v1218
        %v2315 = vunpack.c.l.b16 %v1219
        %v2316 = vunpack.c.h.b16 %v1219
        %v2317 = vunpack.c.l.b16 %v1220
        %v2318 = vunpack.c.h.b16 %v1220
        %v2319 = vunpack.c.l.b16 %v1221
        %v2320 = vunpack.c.h.b16 %v1221
        %v2321 = vunpack.c.l.b16 %v1222
        %v2322 = vunpack.c.h.b16 %v1222
        %v2323 = vunpack.c.l.b16 %v1223
        %v2324 = vunpack.c.h.b16 %v1223
        %v2325 = vunpack.c.l.b16 %v1224
        %v2326 = vunpack.c.h.b16 %v1224
        %v2327 = vunpack.c.l.b16 %v1225
        %v2328 = vunpack.c.h.b16 %v1225
        %v2329 = vunpack.c.l.b16 %v1226
        %v2330 = vunpack.c.h.b16 %v1226
        %v2331 = vunpack.c.l.b16 %v1227
        %v2332 = vunpack.c.h.b16 %v1227
        %v2333 = vunpack.c.l.b16 %v1228
        %v2334 = vunpack.c.h.b16 %v1228
        %v2335 = vunpack.c.l.b16 %v1229
        %v2336 = vunpack.c.h.b16 %v1229
        %v2337 = vunpack.c.l.b16 %v1230
        %v2338 = vunpack.c.h.b16 %v1230
        %v2339 = vunpack.c.l.b16 %v1231
        %v2340 = vunpack.c.h.b16 %v1231
        %v2341 = vunpack.c.l.b16 %v1232
        %v2342 = vunpack.c.h.b16 %v1232
        %v2343 = vunpack.c.l.b16 %v1233
        %v2344 = vunpack.c.h.b16 %v1233
        %v2345 = vunpack.c.l.b16 %v1234
        %v2346 = vunpack.c.h.b16 %v1234
        %v2347 = vunpack.c.l.b16 %v1235
        %v2348 = vunpack.c.h.b16 %v1235
        %v2349 = vunpack.c.l.b16 %v1236
        %v2350 = vunpack.c.h.b16 %v1236
        %v2351 = vunpack.c.l.b16 %v1237
        %v2352 = vunpack.c.h.b16 %v1237
        %v2353 = vunpack.c.l.b16 %v1238
        %v2354 = vunpack.c.h.b16 %v1238
        %v2355 = vunpack.c.l.b16 %v1239
        %v2356 = vunpack.c.h.b16 %v1239
        %v2357 = vunpack.c.l.b16 %v1240
        %v2358 = vunpack.c.h.b16 %v1240
        %v2359 = vunpack.c.l.b16 %v1241
        %v2360 = vunpack.c.h.b16 %v1241
        %v2361 = vunpack.c.l.b16 %v1242
        %v2362 = vunpack.c.h.b16 %v1242
        %v2363 = vunpack.c.l.b16 %v1243
        %v2364 = vunpack.c.h.b16 %v1243
        %v2365 = vunpack.c.l.b16 %v1244
        %v2366 = vunpack.c.h.b16 %v1244
        %v2367 = vunpack.c.l.b16 %v1245
        %v2368 = vunpack.c.h.b16 %v1245
        %v2369 = vunpack.c.l.b16 %v1246
        %v2370 = vunpack.c.h.b16 %v1246
        %v2371 = vunpack.c.l.b16 %v1247
        %v2372 = vunpack.c.h.b16 %v1247
        %v2373 = vunpack.c.l.b16 %v1248
        %v2374 = vunpack.c.h.b16 %v1248
        %v2375 = vunpack.c.l.b16 %v1249
        %v2376 = vunpack.c.h.b16 %v1249
        %v2377 = vunpack.c.l.b16 %v1250
        %v2378 = vunpack.c.h.b16 %v1250
        %v2379 = vunpack.c.l.b16 %v1251
        %v2380 = vunpack.c.h.b16 %v1251
        %v2381 = vunpack.c.l.b16 %v1252
        %v2382 = vunpack.c.h.b16 %v1252
        %v2383 = vunpack.c.l.b16 %v1253
        %v2384 = vunpack.c.h.b16 %v1253
        %v2385 = vunpack.c.l.b16 %v1254
        %v2386 = vunpack.c.h.b16 %v1254
        %v2387 = vunpack.c.l.b16 %v1255
        %v2388 = vunpack.c.h.b16 %v1255
        %v2389 = vunpack.c.l.b16 %v1256
        %v2390 = vunpack.c.h.b16 %v1256
        %v2391 = vunpack.c.l.b16 %v1257
        %v2392 = vunpack.c.h.b16 %v1257
        %v2393 = vunpack.c.l.b16 %v1258
        %v2394 = vunpack.c.h.b16 %v1258
        %v2395 = vunpack.c.l.b16 %v1259
        %v2396 = vunpack.c.h.b16 %v1259
        %v2397 = vunpack.c.l.b16 %v1260
        %v2398 = vunpack.c.h.b16 %v1260
        %v2399 = vunpack.c.l.b16 %v1261
        %v2400 = vunpack.c.h.b16 %v1261
        %v2401 = vunpack.c.l.b16 %v1262
        %v2402 = vunpack.c.h.b16 %v1262
        %v2403 = vunpack.c.l.b16 %v1263
        %v2404 = vunpack.c.h.b16 %v1263
        %v2405 = vunpack.c.l.b16 %v1264
        %v2406 = vunpack.c.h.b16 %v1264
        %v2407 = vunpack.c.l.b16 %v1265
        %v2408 = vunpack.c.h.b16 %v1265
        %v2409 = vunpack.c.l.b16 %v1266
        %v2410 = vunpack.c.h.b16 %v1266
        %v2411 = vunpack.c.l.b16 %v1267
        %v2412 = vunpack.c.h.b16 %v1267
        %v2413 = vunpack.c.l.b16 %v1268
        %v2414 = vunpack.c.h.b16 %v1268
        %v2415 = vunpack.c.l.b16 %v1269
        %v2416 = vunpack.c.h.b16 %v1269
        %v2417 = vunpack.c.l.b16 %v1270
        %v2418 = vunpack.c.h.b16 %v1270
        %v2419 = vunpack.c.l.b16 %v1271
        %v2420 = vunpack.c.h.b16 %v1271
        %v2421 = vunpack.c.l.b16 %v1272
        %v2422 = vunpack.c.h.b16 %v1272
        %v2423 = vunpack.c.l.b16 %v1273
        %v2424 = vunpack.c.h.b16 %v1273
        %v2425 = vunpack.c.l.b16 %v1274
        %v2426 = vunpack.c.h.b16 %v1274
        %v2427 = vunpack.c.l.b16 %v1275
        %v2428 = vunpack.c.h.b16 %v1275
        %v2429 = vunpack.c.l.b16 %v1276
        %v2430 = vunpack.c.h.b16 %v1276
        %v2431 = vunpack.c.l.b16 %v1277
        %v2432 = vunpack.c.h.b16 %v1277
        %v2433 = vunpack.c.l.b16 %v1278
        %v2434 = vunpack.c.h.b16 %v1278
        %v2435 = vunpack.c.l.b16 %v1279
        %v2436 = vunpack.c.h.b16 %v1279
        %v2437 = vunpack.c.l.b16 %v1280
        %v2438 = vunpack.c.h.b16 %v1280
        %v2439 = vunpack.c.l.b16 %v1281
        %v2440 = vunpack.c.h.b16 %v1281
        %v2441 = vunpack.c.l.b16 %v1282
        %v2442 = vunpack.c.h.b16 %v1282
        %v2443 = vunpack.c.l.b16 %v1283
        %v2444 = vunpack.c.h.b16 %v1283
        %v2445 = vunpack.c.l.b16 %v1284
        %v2446 = vunpack.c.h.b16 %v1284
        %v2447 = vunpack.c.l.b16 %v1285
        %v2448 = vunpack.c.h.b16 %v1285
        %v2449 = vunpack.c.l.b16 %v1286
        %v2450 = vunpack.c.h.b16 %v1286
        %v2451 = vunpack.c.l.b16 %v1287
        %v2452 = vunpack.c.h.b16 %v1287
        %v2453 = vunpack.c.l.b16 %v1288
        %v2454 = vunpack.c.h.b16 %v1288
        %v2455 = vunpack.c.l.b16 %v1289
        %v2456 = vunpack.c.h.b16 %v1289
        %v2457 = vunpack.c.l.b16 %v1290
        %v2458 = vunpack.c.h.b16 %v1290
        %v2459 = vunpack.c.l.b16 %v1291
        %v2460 = vunpack.c.h.b16 %v1291
        %v2461 = vunpack.c.l.b16 %v1292
        %v2462 = vunpack.c.h.b16 %v1292
        %v2463 = vunpack.c.l.b16 %v1293
        %v2464 = vunpack.c.h.b16 %v1293
        %v2465 = vunpack.c.l.b16 %v1294
        %v2466 = vunpack.c.h.b16 %v1294
        %v2467 = vunpack.c.l.b16 %v1295
        %v2468 = vunpack.c.h.b16 %v1295
        %v2469 = vunpack.c.l.b16 %v1296
        %v2470 = vunpack.c.h.b16 %v1296
        %v2471 = vunpack.c.l.b16 %v1297
        %v2472 = vunpack.c.h.b16 %v1297
        %v2473 = vunpack.c.l.b16 %v1298
        %v2474 = vunpack.c.h.b16 %v1298
        %v2475 = vunpack.c.l.b16 %v1299
        %v2476 = vunpack.c.h.b16 %v1299
        %v2477 = vunpack.c.l.b16 %v1300
        %v2478 = vunpack.c.h.b16 %v1300
        %v2479 = vunpack.c.l.b16 %v1301
        %v2480 = vunpack.c.h.b16 %v1301
        %v2481 = vunpack.c.l.b16 %v1302
        %v2482 = vunpack.c.h.b16 %v1302
        %v2483 = vunpack.c.l.b16 %v1303
        %v2484 = vunpack.c.h.b16 %v1303
        %v2485 = vunpack.c.l.b16 %v1304
        %v2486 = vunpack.c.h.b16 %v1304
        %v2487 = vunpack.c.l.b16 %v1305
        %v2488 = vunpack.c.h.b16 %v1305
        %v2489 = vunpack.c.l.b16 %v1306
        %v2490 = vunpack.c.h.b16 %v1306
        %v2491 = vunpack.c.l.b16 %v1307
        %v2492 = vunpack.c.h.b16 %v1307
        %v2493 = vunpack.c.l.b16 %v1308
        %v2494 = vunpack.c.h.b16 %v1308
        %v2495 = vunpack.c.l.b16 %v1309
        %v2496 = vunpack.c.h.b16 %v1309
        %v2497 = vunpack.c.l.b16 %v1310
        %v2498 = vunpack.c.h.b16 %v1310
        %v2499 = vunpack.c.l.b16 %v1311
        %v2500 = vunpack.c.h.b16 %v1311
        %v2501 = vunpack.c.l.b16 %v1312
        %v2502 = vunpack.c.h.b16 %v1312
        %v2503 = vunpack.c.l.b16 %v1313
        %v2504 = vunpack.c.h.b16 %v1313
        %v2505 = vunpack.c.l.b16 %v1314
        %v2506 = vunpack.c.h.b16 %v1314
        %v2507 = vunpack.c.l.b16 %v1315
        %v2508 = vunpack.c.h.b16 %v1315
        %v2509 = vunpack.c.l.b16 %v1316
        %v2510 = vunpack.c.h.b16 %v1316
        %v2511 = vunpack.c.l.b16 %v1317
        %v2512 = vunpack.c.h.b16 %v1317
        %v2513 = vunpack.c.l.b16 %v1318
        %v2514 = vunpack.c.h.b16 %v1318
        %v2515 = vunpack.c.l.b16 %v1319
        %v2516 = vunpack.c.h.b16 %v1319
        %v2517 = vunpack.c.l.b16 %v1320
        %v2518 = vunpack.c.h.b16 %v1320
        %v2519 = vunpack.c.l.b16 %v1321
        %v2520 = vunpack.c.h.b16 %v1321
        %v2521 = vunpack.c.l.b16 %v1322
        %v2522 = vunpack.c.h.b16 %v1322
        %v2523 = vunpack.c.l.b16 %v1323
        %v2524 = vunpack.c.h.b16 %v1323
        %v2525 = vunpack.c.l.b16 %v1324
        %v2526 = vunpack.c.h.b16 %v1324
        %v2527 = vunpack.c.l.b16 %v1325
        %v2528 = vunpack.c.h.b16 %v1325
        %v2529 = vunpack.c.l.b16 %v1326
        %v2530 = vunpack.c.h.b16 %v1326
        %v2531 = vunpack.c.l.b16 %v1327
        %v2532 = vunpack.c.h.b16 %v1327
        %v2533 = vunpack.c.l.b16 %v1328
        %v2534 = vunpack.c.h.b16 %v1328
        %v2535 = vunpack.c.l.b16 %v1329
        %v2536 = vunpack.c.h.b16 %v1329
        %v2537 = vunpack.c.l.b16 %v1330
        %v2538 = vunpack.c.h.b16 %v1330
        %v2539 = vunpack.c.l.b16 %v1331
        %v2540 = vunpack.c.h.b16 %v1331
        %v2541 = vunpack.c.l.b16 %v1332
        %v2542 = vunpack.c.h.b16 %v1332
        %v2543 = vunpack.c.l.b16 %v1333
        %v2544 = vunpack.c.h.b16 %v1333
        %v2545 = vunpack.c.l.b16 %v1334
        %v2546 = vunpack.c.h.b16 %v1334
        %v2547 = vunpack.c.l.b16 %v1335
        %v2548 = vunpack.c.h.b16 %v1335
        %v2549 = vunpack.c.l.b16 %v1336
        %v2550 = vunpack.c.h.b16 %v1336
        %v2551 = vunpack.c.l.b16 %v1337
        %v2552 = vunpack.c.h.b16 %v1337
        %v2553 = vunpack.c.l.b16 %v1338
        %v2554 = vunpack.c.h.b16 %v1338
        %v2555 = vunpack.c.l.b16 %v1339
        %v2556 = vunpack.c.h.b16 %v1339
        %v2557 = vunpack.c.l.b16 %v1340
        %v2558 = vunpack.c.h.b16 %v1340
        %v2559 = vunpack.c.l.b16 %v1341
        %v2560 = vunpack.c.h.b16 %v1341
        %v2561 = vunpack.c.l.b16 %v1342
        %v2562 = vunpack.c.h.b16 %v1342
        %v2563 = vunpack.c.l.b16 %v1343
        %v2564 = vunpack.c.h.b16 %v1343
        %v2565 = vunpack.c.l.b16 %v1344
        %v2566 = vunpack.c.h.b16 %v1344
        %v2567 = vunpack.c.l.b16 %v1345
        %v2568 = vunpack.c.h.b16 %v1345
        %v2569 = vunpack.c.l.b16 %v1346
        %v2570 = vunpack.c.h.b16 %v1346
        %v2571 = vunpack.c.l.b16 %v1347
        %v2572 = vunpack.c.h.b16 %v1347
        %v2573 = vunpack.c.l.b16 %v1348
        %v2574 = vunpack.c.h.b16 %v1348
        %v2575 = vunpack.c.l.b16 %v1349
        %v2576 = vunpack.c.h.b16 %v1349
        %v2577 = vunpack.c.l.b16 %v1350
        %v2578 = vunpack.c.h.b16 %v1350
        %v2579 = vunpack.c.l.b16 %v1351
        %v2580 = vunpack.c.h.b16 %v1351
        %v2581 = vunpack.c.l.b16 %v1352
        %v2582 = vunpack.c.h.b16 %v1352
        %v2583 = vunpack.c.l.b16 %v1353
        %v2584 = vunpack.c.h.b16 %v1353
        %v2585 = vunpack.c.l.b16 %v1354
        %v2586 = vunpack.c.h.b16 %v1354
        %v2587 = vunpack.c.l.b16 %v1355
        %v2588 = vunpack.c.h.b16 %v1355
        %v2589 = vunpack.c.l.b16 %v1356
        %v2590 = vunpack.c.h.b16 %v1356
        %v2591 = vunpack.c.l.b16 %v1357
        %v2592 = vunpack.c.h.b16 %v1357
        %v2593 = vunpack.c.l.b16 %v1358
        %v2594 = vunpack.c.h.b16 %v1358
        %v2595 = vunpack.c.l.b16 %v1359
        %v2596 = vunpack.c.h.b16 %v1359
        %v2597 = vunpack.c.l.b16 %v1360
        %v2598 = vunpack.c.h.b16 %v1360
        %v2599 = vunpack.c.l.b16 %v1361
        %v2600 = vunpack.c.h.b16 %v1361
        %v2601 = vunpack.c.l.b16 %v1362
        %v2602 = vunpack.c.h.b16 %v1362
        %v2603 = vunpack.c.l.b16 %v1363
        %v2604 = vunpack.c.h.b16 %v1363
        %v2605 = vunpack.c.l.b16 %v1364
        %v2606 = vunpack.c.h.b16 %v1364
        %v2607 = vunpack.c.l.b16 %v1365
        %v2608 = vunpack.c.h.b16 %v1365
        %v2609 = vunpack.c.l.b16 %v1366
        %v2610 = vunpack.c.h.b16 %v1366
        %v2611 = vunpack.c.l.b16 %v1367
        %v2612 = vunpack.c.h.b16 %v1367
        %v2613 = vunpack.c.l.b16 %v1368
        %v2614 = vunpack.c.h.b16 %v1368
        %v2615 = vunpack.c.l.b16 %v1369
        %v2616 = vunpack.c.h.b16 %v1369
        %v2617 = vunpack.c.l.b16 %v1370
        %v2618 = vunpack.c.h.b16 %v1370
        %v2619 = vunpack.c.l.b16 %v1371
        %v2620 = vunpack.c.h.b16 %v1371
        %v2621 = vunpack.c.l.b16 %v1372
        %v2622 = vunpack.c.h.b16 %v1372
        %v2623 = vunpack.c.l.b16 %v1373
        %v2624 = vunpack.c.h.b16 %v1373
        %v2625 = vunpack.c.l.b16 %v1374
        %v2626 = vunpack.c.h.b16 %v1374
        %v2627 = vunpack.c.l.b16 %v1375
        %v2628 = vunpack.c.h.b16 %v1375
        %v2629 = vunpack.c.l.b16 %v1376
        %v2630 = vunpack.c.h.b16 %v1376
        %v2631 = vunpack.c.l.b16 %v1377
        %v2632 = vunpack.c.h.b16 %v1377
        %v2633 = vunpack.c.l.b16 %v1378
        %v2634 = vunpack.c.h.b16 %v1378
        %v2635 = vunpack.c.l.b16 %v1379
        %v2636 = vunpack.c.h.b16 %v1379
        %v2637 = vunpack.c.l.b16 %v1380
        %v2638 = vunpack.c.h.b16 %v1380
        %v2639 = vunpack.c.l.b16 %v1381
        %v2640 = vunpack.c.h.b16 %v1381
        %v2641 = vunpack.c.l.b16 %v1382
        %v2642 = vunpack.c.h.b16 %v1382
        %v2643 = vunpack.c.l.b16 %v1383
        %v2644 = vunpack.c.h.b16 %v1383
        %v2645 = vunpack.c.l.b16 %v1384
        %v2646 = vunpack.c.h.b16 %v1384
        %v2647 = vunpack.c.l.b16 %v1385
        %v2648 = vunpack.c.h.b16 %v1385
        %v2649 = vunpack.c.l.b16 %v1386
        %v2650 = vunpack.c.h.b16 %v1386
        %v2651 = vunpack.c.l.b16 %v1387
        %v2652 = vunpack.c.h.b16 %v1387
        %v2653 = vunpack.c.l.b16 %v1388
        %v2654 = vunpack.c.h.b16 %v1388
        %v2655 = vunpack.c.l.b16 %v1389
        %v2656 = vunpack.c.h.b16 %v1389
        %v2657 = vunpack.c.l.b16 %v1390
        %v2658 = vunpack.c.h.b16 %v1390
        %v2659 = vunpack.c.l.b16 %v1391
        %v2660 = vunpack.c.h.b16 %v1391
        %v2661 = vunpack.c.l.b16 %v1392
        %v2662 = vunpack.c.h.b16 %v1392
        %v2663 = vunpack.c.l.b16 %v1393
        %v2664 = vunpack.c.h.b16 %v1393
        %v2665 = vunpack.c.l.b16 %v1394
        %v2666 = vunpack.c.h.b16 %v1394
        %v2667 = vunpack.c.l.b16 %v1395
        %v2668 = vunpack.c.h.b16 %v1395
        %v2669 = vunpack.c.l.b16 %v1396
        %v2670 = vunpack.c.h.b16 %v1396
        %v2671 = vunpack.c.l.b16 %v1397
        %v2672 = vunpack.c.h.b16 %v1397
        %v2673 = vunpack.c.l.b16 %v1398
        %v2674 = vunpack.c.h.b16 %v1398
        %v2675 = vunpack.c.l.b16 %v1399
        %v2676 = vunpack.c.h.b16 %v1399
        %v2677 = vpack.c.b16 %v1881, %v1877
        %v2678 = vpack.c.b16 %v1882, %v1878
        %v2679 = vpack.c.b16 %v1883, %v1879
        %v2680 = vpack.c.b16 %v1884, %v1880
        %v2681 = vpack.c.b16 %v1889, %v1885
        %v2682 = vpack.c.b16 %v1890, %v1886
        %v2683 = vpack.c.b16 %v1891, %v1887
        %v2684 = vpack.c.b16 %v1892, %v1888
        %v2685 = vpack.c.b16 %v1897, %v1893
        %v2686 = vpack.c.b16 %v1898, %v1894
        %v2687 = vpack.c.b16 %v1899, %v1895
        %v2688 = vpack.c.b16 %v1900, %v1896
        %v2689 = vpack.c.b16 %v1905, %v1901
        %v2690 = vpack.c.b16 %v1906, %v1902
        %v2691 = vpack.c.b16 %v1907, %v1903
        %v2692 = vpack.c.b16 %v1908, %v1904
        %v2693 = vpack.c.b16 %v1913, %v1909
        %v2694 = vpack.c.b16 %v1914, %v1910
        %v2695 = vpack.c.b16 %v1915, %v1911
        %v2696 = vpack.c.b16 %v1916, %v1912
        %v2697 = vpack.c.b16 %v1921, %v1917
        %v2698 = vpack.c.b16 %v1922, %v1918
        %v2699 = vpack.c.b16 %v1923, %v1919
        %v2700 = vpack.c.b16 %v1924, %v1920
        %v2701 = vpack.c.b16 %v1929, %v1925
        %v2702 = vpack.c.b16 %v1930, %v1926
        %v2703 = vpack.c.b16 %v1931, %v1927
        %v2704 = vpack.c.b16 %v1932, %v1928
        %v2705 = vpack.c.b16 %v1937, %v1933
        %v2706 = vpack.c.b16 %v1938, %v1934
        %v2707 = vpack.c.b16 %v1939, %v1935
        %v2708 = vpack.c.b16 %v1940, %v1936
        %v2709 = vpack.c.b16 %v1945, %v1941
        %v2710 = vpack.c.b16 %v1946, %v1942
        %v2711 = vpack.c.b16 %v1947, %v1943
        %v2712 = vpack.c.b16 %v1948, %v1944
        %v2713 = vpack.c.b16 %v1953, %v1949
        %v2714 = vpack.c.b16 %v1954, %v1950
        %v2715 = vpack.c.b16 %v1955, %v1951
        %v2716 = vpack.c.b16 %v1956, %v1952
        %v2717 = vpack.c.b16 %v1961, %v1957
        %v2718 = vpack.c.b16 %v1962, %v1958
        %v2719 = vpack.c.b16 %v1963, %v1959
        %v2720 = vpack.c.b16 %v1964, %v1960
        %v2721 = vpack.c.b16 %v1969, %v1965
        %v2722 = vpack.c.b16 %v1970, %v1966
        %v2723 = vpack.c.b16 %v1971, %v1967
        %v2724 = vpack.c.b16 %v1972, %v1968
        %v2725 = vpack.c.b16 %v1977, %v1973
        %v2726 = vpack.c.b16 %v1978, %v1974
        %v2727 = vpack.c.b16 %v1979, %v1975
        %v2728 = vpack.c.b16 %v1980, %v1976
        %v2729 = vpack.c.b16 %v1985, %v1981
        %v2730 = vpack.c.b16 %v1986, %v1982
        %v2731 = vpack.c.b16 %v1987, %v1983
        %v2732 = vpack.c.b16 %v1988, %v1984
        %v2733 = vpack.c.b16 %v1993, %v1989
        %v2734 = vpack.c.b16 %v1994, %v1990
        %v2735 = vpack.c.b16 %v1995, %v1991
        %v2736 = vpack.c.b16 %v1996, %v1992
        %v2737 = vpack.c.b16 %v2001, %v1997
        %v2738 = vpack.c.b16 %v2002, %v1998
        %v2739 = vpack.c.b16 %v2003, %v1999
        %v2740 = vpack.c.b16 %v2004, %v2000
        %v2741 = vpack.c.b16 %v2009, %v2005
        %v2742 = vpack.c.b16 %v2010, %v2006
        %v2743 = vpack.c.b16 %v2011, %v2007
        %v2744 = vpack.c.b16 %v2012, %v2008
        %v2745 = vpack.c.b16 %v2017, %v2013
        %v2746 = vpack.c.b16 %v2018, %v2014
        %v2747 = vpack.c.b16 %v2019, %v2015
        %v2748 = vpack.c.b16 %v2020, %v2016
        %v2749 = vpack.c.b16 %v2025, %v2021
        %v2750 = vpack.c.b16 %v2026, %v2022
        %v2751 = vpack.c.b16 %v2027, %v2023
        %v2752 = vpack.c.b16 %v2028, %v2024
        %v2753 = vpack.c.b16 %v2033, %v2029
        %v2754 = vpack.c.b16 %v2034, %v2030
        %v2755 = vpack.c.b16 %v2035, %v2031
        %v2756 = vpack.c.b16 %v2036, %v2032
        %v2757 = vpack.c.b16 %v2041, %v2037
        %v2758 = vpack.c.b16 %v2042, %v2038
        %v2759 = vpack.c.b16 %v2043, %v2039
        %v2760 = vpack.c.b16 %v2044, %v2040
        %v2761 = vpack.c.b16 %v2049, %v2045
        %v2762 = vpack.c.b16 %v2050, %v2046
        %v2763 = vpack.c.b16 %v2051, %v2047
        %v2764 = vpack.c.b16 %v2052, %v2048
        %v2765 = vpack.c.b16 %v2057, %v2053
        %v2766 = vpack.c.b16 %v2058, %v2054
        %v2767 = vpack.c.b16 %v2059, %v2055
        %v2768 = vpack.c.b16 %v2060, %v2056
        %v2769 = vpack.c.b16 %v2065, %v2061
        %v2770 = vpack.c.b16 %v2066, %v2062
        %v2771 = vpack.c.b16 %v2067, %v2063
        %v2772 = vpack.c.b16 %v2068, %v2064
        %v2773 = vpack.c.b16 %v2073, %v2069
        %v2774 = vpack.c.b16 %v2074, %v2070
        %v2775 = vpack.c.b16 %v2075, %v2071
        %v2776 = vpack.c.b16 %v2076, %v2072
        %v2777 = vpack.c.b16 %v2081, %v2077
        %v2778 = vpack.c.b16 %v2082, %v2078
        %v2779 = vpack.c.b16 %v2083, %v2079
        %v2780 = vpack.c.b16 %v2084, %v2080
        %v2781 = vpack.c.b16 %v2089, %v2085
        %v2782 = vpack.c.b16 %v2090, %v2086
        %v2783 = vpack.c.b16 %v2091, %v2087
        %v2784 = vpack.c.b16 %v2092, %v2088
        %v2785 = vpack.c.b16 %v2097, %v2093
        %v2786 = vpack.c.b16 %v2098, %v2094
        %v2787 = vpack.c.b16 %v2099, %v2095
        %v2788 = vpack.c.b16 %v2100, %v2096
        %v2789 = vpack.c.b16 %v2105, %v2101
        %v2790 = vpack.c.b16 %v2106, %v2102
        %v2791 = vpack.c.b16 %v2107, %v2103
        %v2792 = vpack.c.b16 %v2108, %v2104
        %v2793 = vpack.c.b16 %v2113, %v2109
        %v2794 = vpack.c.b16 %v2114, %v2110
        %v2795 = vpack.c.b16 %v2115, %v2111
        %v2796 = vpack.c.b16 %v2116, %v2112
        %v2797 = vpack.c.b16 %v2121, %v2117
        %v2798 = vpack.c.b16 %v2122, %v2118
        %v2799 = vpack.c.b16 %v2123, %v2119
        %v2800 = vpack.c.b16 %v2124, %v2120
        %v2801 = vpack.c.b16 %v2129, %v2125
        %v2802 = vpack.c.b16 %v2130, %v2126
        %v2803 = vpack.c.b16 %v2131, %v2127
        %v2804 = vpack.c.b16 %v2132, %v2128
        %v2805 = vpack.c.b16 %v2137, %v2133
        %v2806 = vpack.c.b16 %v2138, %v2134
        %v2807 = vpack.c.b16 %v2139, %v2135
        %v2808 = vpack.c.b16 %v2140, %v2136
        %v2809 = vpack.c.b16 %v2145, %v2141
        %v2810 = vpack.c.b16 %v2146, %v2142
        %v2811 = vpack.c.b16 %v2147, %v2143
        %v2812 = vpack.c.b16 %v2148, %v2144
        %v2813 = vpack.c.b16 %v2153, %v2149
        %v2814 = vpack.c.b16 %v2154, %v2150
        %v2815 = vpack.c.b16 %v2155, %v2151
        %v2816 = vpack.c.b16 %v2156, %v2152
        %v2817 = vpack.c.b16 %v2161, %v2157
        %v2818 = vpack.c.b16 %v2162, %v2158
        %v2819 = vpack.c.b16 %v2163, %v2159
        %v2820 = vpack.c.b16 %v2164, %v2160
        %v2821 = vpack.c.b16 %v2169, %v2165
        %v2822 = vpack.c.b16 %v2170, %v2166
        %v2823 = vpack.c.b16 %v2171, %v2167
        %v2824 = vpack.c.b16 %v2172, %v2168
        %v2825 = vpack.c.b16 %v2177, %v2173
        %v2826 = vpack.c.b16 %v2178, %v2174
        %v2827 = vpack.c.b16 %v2179, %v2175
        %v2828 = vpack.c.b16 %v2180, %v2176
        %v2829 = vpack.c.b16 %v2185, %v2181
        %v2830 = vpack.c.b16 %v2186, %v2182
        %v2831 = vpack.c.b16 %v2187, %v2183
        %v2832 = vpack.c.b16 %v2188, %v2184
        %v2833 = vpack.c.b16 %v2193, %v2189
        %v2834 = vpack.c.b16 %v2194, %v2190
        %v2835 = vpack.c.b16 %v2195, %v2191
        %v2836 = vpack.c.b16 %v2196, %v2192
        %v2837 = vpack.c.b16 %v2201, %v2197
        %v2838 = vpack.c.b16 %v2202, %v2198
        %v2839 = vpack.c.b16 %v2203, %v2199
        %v2840 = vpack.c.b16 %v2204, %v2200
        %v2841 = vpack.c.b16 %v2209, %v2205
        %v2842 = vpack.c.b16 %v2210, %v2206
        %v2843 = vpack.c.b16 %v2211, %v2207
        %v2844 = vpack.c.b16 %v2212, %v2208
        %v2845 = vpack.c.b16 %v2217, %v2213
        %v2846 = vpack.c.b16 %v2218, %v2214
        %v2847 = vpack.c.b16 %v2219, %v2215
        %v2848 = vpack.c.b16 %v2220, %v2216
        %v2849 = vpack.c.b16 %v2225, %v2221
        %v2850 = vpack.c.b16 %v2226, %v2222
        %v2851 = vpack.c.b16 %v2227, %v2223
        %v2852 = vpack.c.b16 %v2228, %v2224
        %v2853 = vpack.c.b16 %v2233, %v2229
        %v2854 = vpack.c.b16 %v2234, %v2230
        %v2855 = vpack.c.b16 %v2235, %v2231
        %v2856 = vpack.c.b16 %v2236, %v2232
        %v2857 = vpack.c.b16 %v2241, %v2237
        %v2858 = vpack.c.b16 %v2242, %v2238
        %v2859 = vpack.c.b16 %v2243, %v2239
        %v2860 = vpack.c.b16 %v2244, %v2240
        %v2861 = vpack.c.b16 %v2249, %v2245
        %v2862 = vpack.c.b16 %v2250, %v2246
        %v2863 = vpack.c.b16 %v2251, %v2247
        %v2864 = vpack.c.b16 %v2252, %v2248
        %v2865 = vpack.c.b16 %v2257, %v2253
        %v2866 = vpack.c.b16 %v2258, %v2254
        %v2867 = vpack.c.b16 %v2259, %v2255
        %v2868 = vpack.c.b16 %v2260, %v2256
        %v2869 = vpack.c.b16 %v2265, %v2261
        %v2870 = vpack.c.b16 %v2266, %v2262
        %v2871 = vpack.c.b16 %v2267, %v2263
        %v2872 = vpack.c.b16 %v2268, %v2264
        %v2873 = vpack.c.b16 %v2273, %v2269
        %v2874 = vpack.c.b16 %v2274, %v2270
        %v2875 = vpack.c.b16 %v2275, %v2271
        %v2876 = vpack.c.b16 %v2276, %v2272
        %v2877 = vpack.c.b16 %v2281, %v2277
        %v2878 = vpack.c.b16 %v2282, %v2278
        %v2879 = vpack.c.b16 %v2283, %v2279
        %v2880 = vpack.c.b16 %v2284, %v2280
        %v2881 = vpack.c.b16 %v2289, %v2285
        %v2882 = vpack.c.b16 %v2290, %v2286
        %v2883 = vpack.c.b16 %v2291, %v2287
        %v2884 = vpack.c.b16 %v2292, %v2288
        %v2885 = vpack.c.b16 %v2297, %v2293
        %v2886 = vpack.c.b16 %v2298, %v2294
        %v2887 = vpack.c.b16 %v2299, %v2295
        %v2888 = vpack.c.b16 %v2300, %v2296
        %v2889 = vpack.c.b16 %v2305, %v2301
        %v2890 = vpack.c.b16 %v2306, %v2302
        %v2891 = vpack.c.b16 %v2307, %v2303
        %v2892 = vpack.c.b16 %v2308, %v2304
        %v2893 = vpack.c.b16 %v2313, %v2309
        %v2894 = vpack.c.b16 %v2314, %v2310
        %v2895 = vpack.c.b16 %v2315, %v2311
        %v2896 = vpack.c.b16 %v2316, %v2312
        %v2897 = vpack.c.b16 %v2321, %v2317
        %v2898 = vpack.c.b16 %v2322, %v2318
        %v2899 = vpack.c.b16 %v2323, %v2319
        %v2900 = vpack.c.b16 %v2324, %v2320
        %v2901 = vpack.c.b16 %v2329, %v2325
        %v2902 = vpack.c.b16 %v2330, %v2326
        %v2903 = vpack.c.b16 %v2331, %v2327
        %v2904 = vpack.c.b16 %v2332, %v2328
        %v2905 = vpack.c.b16 %v2337, %v2333
        %v2906 = vpack.c.b16 %v2338, %v2334
        %v2907 = vpack.c.b16 %v2339, %v2335
        %v2908 = vpack.c.b16 %v2340, %v2336
        %v2909 = vpack.c.b16 %v2345, %v2341
        %v2910 = vpack.c.b16 %v2346, %v2342
        %v2911 = vpack.c.b16 %v2347, %v2343
        %v2912 = vpack.c.b16 %v2348, %v2344
        %v2913 = vpack.c.b16 %v2353, %v2349
        %v2914 = vpack.c.b16 %v2354, %v2350
        %v2915 = vpack.c.b16 %v2355, %v2351
        %v2916 = vpack.c.b16 %v2356, %v2352
        %v2917 = vpack.c.b16 %v2361, %v2357
        %v2918 = vpack.c.b16 %v2362, %v2358
        %v2919 = vpack.c.b16 %v2363, %v2359
        %v2920 = vpack.c.b16 %v2364, %v2360
        %v2921 = vpack.c.b16 %v2369, %v2365
        %v2922 = vpack.c.b16 %v2370, %v2366
        %v2923 = vpack.c.b16 %v2371, %v2367
        %v2924 = vpack.c.b16 %v2372, %v2368
        %v2925 = vpack.c.b16 %v2377, %v2373
        %v2926 = vpack.c.b16 %v2378, %v2374
        %v2927 = vpack.c.b16 %v2379, %v2375
        %v2928 = vpack.c.b16 %v2380, %v2376
        %v2929 = vpack.c.b16 %v2385, %v2381
        %v2930 = vpack.c.b16 %v2386, %v2382
        %v2931 = vpack.c.b16 %v2387, %v2383
        %v2932 = vpack.c.b16 %v2388, %v2384
        %v2933 = vpack.c.b16 %v2393, %v2389
        %v2934 = vpack.c.b16 %v2394, %v2390
        %v2935 = vpack.c.b16 %v2395, %v2391
        %v2936 = vpack.c.b16 %v2396, %v2392
        %v2937 = vpack.c.b16 %v2401, %v2397
        %v2938 = vpack.c.b16 %v2402, %v2398
        %v2939 = vpack.c.b16 %v2403, %v2399
        %v2940 = vpack.c.b16 %v2404, %v2400
        %v2941 = vpack.c.b16 %v2409, %v2405
        %v2942 = vpack.c.b16 %v2410, %v2406
        %v2943 = vpack.c.b16 %v2411, %v2407
        %v2944 = vpack.c.b16 %v2412, %v2408
        %v2945 = vpack.c.b16 %v2417, %v2413
        %v2946 = vpack.c.b16 %v2418, %v2414
        %v2947 = vpack.c.b16 %v2419, %v2415
        %v2948 = vpack.c.b16 %v2420, %v2416
        %v2949 = vpack.c.b16 %v2425, %v2421
        %v2950 = vpack.c.b16 %v2426, %v2422
        %v2951 = vpack.c.b16 %v2427, %v2423
        %v2952 = vpack.c.b16 %v2428, %v2424
        %v2953 = vpack.c.b16 %v2433, %v2429
        %v2954 = vpack.c.b16 %v2434, %v2430
        %v2955 = vpack.c.b16 %v2435, %v2431
        %v2956 = vpack.c.b16 %v2436, %v2432
        %v2957 = vpack.c.b16 %v2441, %v2437
        %v2958 = vpack.c.b16 %v2442, %v2438
        %v2959 = vpack.c.b16 %v2443, %v2439
        %v2960 = vpack.c.b16 %v2444, %v2440
        %v2961 = vpack.c.b16 %v2449, %v2445
        %v2962 = vpack.c.b16 %v2450, %v2446
        %v2963 = vpack.c.b16 %v2451, %v2447
        %v2964 = vpack.c.b16 %v2452, %v2448
        %v2965 = vpack.c.b16 %v2457, %v2453
        %v2966 = vpack.c.b16 %v2458, %v2454
        %v2967 = vpack.c.b16 %v2459, %v2455
        %v2968 = vpack.c.b16 %v2460, %v2456
        %v2969 = vpack.c.b16 %v2465, %v2461
        %v2970 = vpack.c.b16 %v2466, %v2462
        %v2971 = vpack.c.b16 %v2467, %v2463
        %v2972 = vpack.c.b16 %v2468, %v2464
        %v2973 = vpack.c.b16 %v2473, %v2469
        %v2974 = vpack.c.b16 %v2474, %v2470
        %v2975 = vpack.c.b16 %v2475, %v2471
        %v2976 = vpack.c.b16 %v2476, %v2472
        %v2977 = vpack.c.b16 %v2481, %v2477
        %v2978 = vpack.c.b16 %v2482, %v2478
        %v2979 = vpack.c.b16 %v2483, %v2479
        %v2980 = vpack.c.b16 %v2484, %v2480
        %v2981 = vpack.c.b16 %v2489, %v2485
        %v2982 = vpack.c.b16 %v2490, %v2486
        %v2983 = vpack.c.b16 %v2491, %v2487
        %v2984 = vpack.c.b16 %v2492, %v2488
        %v2985 = vpack.c.b16 %v2497, %v2493
        %v2986 = vpack.c.b16 %v2498, %v2494
        %v2987 = vpack.c.b16 %v2499, %v2495
        %v2988 = vpack.c.b16 %v2500, %v2496
        %v2989 = vpack.c.b16 %v2505, %v2501
        %v2990 = vpack.c.b16 %v2506, %v2502
        %v2991 = vpack.c.b16 %v2507, %v2503
        %v2992 = vpack.c.b16 %v2508, %v2504
        %v2993 = vpack.c.b16 %v2513, %v2509
        %v2994 = vpack.c.b16 %v2514, %v2510
        %v2995 = vpack.c.b16 %v2515, %v2511
        %v2996 = vpack.c.b16 %v2516, %v2512
        %v2997 = vpack.c.b16 %v2521, %v2517
        %v2998 = vpack.c.b16 %v2522, %v2518
        %v2999 = vpack.c.b16 %v2523, %v2519
        %v3000 = vpack.c.b16 %v2524, %v2520
        %v3001 = vpack.c.b16 %v2529, %v2525
        %v3002 = vpack.c.b16 %v2530, %v2526
        %v3003 = vpack.c.b16 %v2531, %v2527
        %v3004 = vpack.c.b16 %v2532, %v2528
        %v3005 = vpack.c.b16 %v2537, %v2533
        %v3006 = vpack.c.b16 %v2538, %v2534
        %v3007 = vpack.c.b16 %v2539, %v2535
        %v3008 = vpack.c.b16 %v2540, %v2536
        %v3009 = vpack.c.b16 %v2545, %v2541
        %v3010 = vpack.c.b16 %v2546, %v2542
        %v3011 = vpack.c.b16 %v2547, %v2543
        %v3012 = vpack.c.b16 %v2548, %v2544
        %v3013 = vpack.c.b16 %v2553, %v2549
        %v3014 = vpack.c.b16 %v2554, %v2550
        %v3015 = vpack.c.b16 %v2555, %v2551
        %v3016 = vpack.c.b16 %v2556, %v2552
        %v3017 = vpack.c.b16 %v2561, %v2557
        %v3018 = vpack.c.b16 %v2562, %v2558
        %v3019 = vpack.c.b16 %v2563, %v2559
        %v3020 = vpack.c.b16 %v2564, %v2560
        %v3021 = vpack.c.b16 %v2569, %v2565
        %v3022 = vpack.c.b16 %v2570, %v2566
        %v3023 = vpack.c.b16 %v2571, %v2567
        %v3024 = vpack.c.b16 %v2572, %v2568
        %v3025 = vpack.c.b16 %v2577, %v2573
        %v3026 = vpack.c.b16 %v2578, %v2574
        %v3027 = vpack.c.b16 %v2579, %v2575
        %v3028 = vpack.c.b16 %v2580, %v2576
        %v3029 = vpack.c.b16 %v2585, %v2581
        %v3030 = vpack.c.b16 %v2586, %v2582
        %v3031 = vpack.c.b16 %v2587, %v2583
        %v3032 = vpack.c.b16 %v2588, %v2584
        %v3033 = vpack.c.b16 %v2593, %v2589
        %v3034 = vpack.c.b16 %v2594, %v2590
        %v3035 = vpack.c.b16 %v2595, %v2591
        %v3036 = vpack.c.b16 %v2596, %v2592
        %v3037 = vpack.c.b16 %v2601, %v2597
        %v3038 = vpack.c.b16 %v2602, %v2598
        %v3039 = vpack.c.b16 %v2603, %v2599
        %v3040 = vpack.c.b16 %v2604, %v2600
        %v3041 = vpack.c.b16 %v2609, %v2605
        %v3042 = vpack.c.b16 %v2610, %v2606
        %v3043 = vpack.c.b16 %v2611, %v2607
        %v3044 = vpack.c.b16 %v2612, %v2608
        %v3045 = vpack.c.b16 %v2617, %v2613
        %v3046 = vpack.c.b16 %v2618, %v2614
        %v3047 = vpack.c.b16 %v2619, %v2615
        %v3048 = vpack.c.b16 %v2620, %v2616
        %v3049 = vpack.c.b16 %v2625, %v2621
        %v3050 = vpack.c.b16 %v2626, %v2622
        %v3051 = vpack.c.b16 %v2627, %v2623
        %v3052 = vpack.c.b16 %v2628, %v2624
        %v3053 = vpack.c.b16 %v2633, %v2629
        %v3054 = vpack.c.b16 %v2634, %v2630
        %v3055 = vpack.c.b16 %v2635, %v2631
        %v3056 = vpack.c.b16 %v2636, %v2632
        %v3057 = vpack.c.b16 %v2641, %v2637
        %v3058 = vpack.c.b16 %v2642, %v2638
        %v3059 = vpack.c.b16 %v2643, %v2639
        %v3060 = vpack.c.b16 %v2644, %v2640
        %v3061 = vpack.c.b16 %v2649, %v2645
        %v3062 = vpack.c.b16 %v2650, %v2646
        %v3063 = vpack.c.b16 %v2651, %v2647
        %v3064 = vpack.c.b16 %v2652, %v2648
        %v3065 = vpack.c.b16 %v2657, %v2653
        %v3066 = vpack.c.b16 %v2658, %v2654
        %v3067 = vpack.c.b16 %v2659, %v2655
        %v3068 = vpack.c.b16 %v2660, %v2656
        %v3069 = vpack.c.b16 %v2665, %v2661
        %v3070 = vpack.c.b16 %v2666, %v2662
        %v3071 = vpack.c.b16 %v2667, %v2663
        %v3072 = vpack.c.b16 %v2668, %v2664
        %v3073 = vpack.c.b16 %v2673, %v2669
        %v3074 = vpack.c.b16 %v2674, %v2670
        %v3075 = vpack.c.b16 %v2675, %v2671
        %v3076 = vpack.c.b16 %v2676, %v2672
        %vm3477 = vcmask 523264
        %v3479 = vsel %vm3477, %v1464, 0
        %3481 = vmatprep.subr.bf16.mxu0 %v2706
        %3482 = vmatpush1.bf16.msra.mxu0 %v2705
        %3483 = vmatprep.subr.bf16.mxu0 %v2702
        %3484 = vmatpush1.bf16.msra.mxu0 %v2701
        %3485 = vmatprep.subr.bf16.mxu0 %v2698
        %3486 = vmatpush1.bf16.msra.mxu0 %v2697
        %3487 = vmatprep.subr.bf16.mxu0 %v2694
        %3488 = vmatpush1.bf16.msra.mxu0 %v2693
        %3489 = vmatprep.subr.bf16.mxu0 %v2690
        %3490 = vmatpush1.bf16.msra.mxu0 %v2689
        %3491 = vmatprep.subr.bf16.mxu0 %v2686
        %3492 = vmatpush1.bf16.msra.mxu0 %v2685
        %3493 = vmatprep.subr.bf16.mxu0 %v2682
        %3494 = vmatpush1.bf16.msra.mxu0 %v2681
        %3495 = vmatprep.subr.bf16.mxu0 %v2678
        %3496 = vmatpush1.bf16.msra.mxu0 %v2677
        %3497 = vmatprep.subr.bf16.mxu0 %v2738
        %3498 = vmatpush2.bf16.msra.mxu0 %v2737
        %3499 = vmatprep.subr.bf16.mxu0 %v2734
        %3500 = vmatpush2.bf16.msra.mxu0 %v2733
        %3501 = vmatprep.subr.bf16.mxu0 %v2730
        %3502 = vmatpush2.bf16.msra.mxu0 %v2729
        %3503 = vmatprep.subr.bf16.mxu0 %v2726
        %3504 = vmatpush2.bf16.msra.mxu0 %v2725
        %3505 = vmatprep.subr.bf16.mxu0 %v2722
        %3506 = vmatpush2.bf16.msra.mxu0 %v2721
        %3507 = vmatprep.subr.bf16.mxu0 %v2718
        %3508 = vmatpush2.bf16.msra.mxu0 %v2717
        %3509 = vmatprep.subr.bf16.mxu0 %v2714
        %3510 = vmatpush2.bf16.msra.mxu0 %v2713
        %3511 = vmatprep.subr.bf16.mxu0 %v2710
        %3512 = vmatpush2.bf16.msra.mxu0 %v2709
        %3513 = vmatprep.mubr.bf16.mxu0 %v1453
        %3514 = vmatmul.mubr.bf16.gmra.mxu0 %v1452
        %v3515 = vpop.f32.mrf.mxu0
        %v3516 = vadd.f32 %v1405, %v3515
        %v3517 = vpop.f32.mrf.mxu0
        %v3518 = vadd.f32 %v1405, %v3517
        %v3519 = vpop.f32.mrf.mxu0
        %v3520 = vadd.f32 %v1410, %v3519
        %v3521 = vpop.f32.mrf.mxu0
        %v3522 = vadd.f32 %v1410, %v3521
        %3523 = vdwg.mxu0
        %3524 = vmatprep.subr.bf16.mxu0 %v2770
        %3525 = vmatpush1.bf16.msra.mxu0 %v2769
        %3526 = vmatprep.subr.bf16.mxu0 %v2766
        %3527 = vmatpush1.bf16.msra.mxu0 %v2765
        %3528 = vmatprep.subr.bf16.mxu0 %v2762
        %3529 = vmatpush1.bf16.msra.mxu0 %v2761
        %3530 = vmatprep.subr.bf16.mxu0 %v2758
        %3531 = vmatpush1.bf16.msra.mxu0 %v2757
        %3532 = vmatprep.subr.bf16.mxu0 %v2754
        %3533 = vmatpush1.bf16.msra.mxu0 %v2753
        %3534 = vmatprep.subr.bf16.mxu0 %v2750
        %3535 = vmatpush1.bf16.msra.mxu0 %v2749
        %3536 = vmatprep.subr.bf16.mxu0 %v2746
        %3537 = vmatpush1.bf16.msra.mxu0 %v2745
        %3538 = vmatprep.subr.bf16.mxu0 %v2742
        %3539 = vmatpush1.bf16.msra.mxu0 %v2741
        %3540 = vmatprep.subr.bf16.mxu0 %v2802
        %3541 = vmatpush2.bf16.msra.mxu0 %v2801
        %3542 = vmatprep.subr.bf16.mxu0 %v2798
        %3543 = vmatpush2.bf16.msra.mxu0 %v2797
        %3544 = vmatprep.subr.bf16.mxu0 %v2794
        %3545 = vmatpush2.bf16.msra.mxu0 %v2793
        %3546 = vmatprep.subr.bf16.mxu0 %v2790
        %3547 = vmatpush2.bf16.msra.mxu0 %v2789
        %3548 = vmatprep.subr.bf16.mxu0 %v2786
        %3549 = vmatpush2.bf16.msra.mxu0 %v2785
        %3550 = vmatprep.subr.bf16.mxu0 %v2782
        %3551 = vmatpush2.bf16.msra.mxu0 %v2781
        %3552 = vmatprep.subr.bf16.mxu0 %v2778
        %3553 = vmatpush2.bf16.msra.mxu0 %v2777
        %3554 = vmatprep.subr.bf16.mxu0 %v2774
        %3555 = vmatpush2.bf16.msra.mxu0 %v2773
        %3556 = vmatprep.mubr.bf16.mxu0 %v1455
        %3557 = vmatmul.mubr.bf16.gmra.mxu0 %v1454
        %v3558 = vpop.f32.mrf.mxu0
        %v3559 = vadd.f32 %v3516, %v3558
        %v3560 = vpop.f32.mrf.mxu0
        %v3561 = vadd.f32 %v3518, %v3560
        %v3562 = vpop.f32.mrf.mxu0
        %v3563 = vadd.f32 %v3520, %v3562
        %v3564 = vpop.f32.mrf.mxu0
        %v3565 = vadd.f32 %v3522, %v3564
        %3566 = vdwg.mxu0
        %3567 = vmatprep.subr.bf16.mxu0 %v2834
        %3568 = vmatpush1.bf16.msra.mxu0 %v2833
        %3569 = vmatprep.subr.bf16.mxu0 %v2830
        %3570 = vmatpush1.bf16.msra.mxu0 %v2829
        %3571 = vmatprep.subr.bf16.mxu0 %v2826
        %3572 = vmatpush1.bf16.msra.mxu0 %v2825
        %3573 = vmatprep.subr.bf16.mxu0 %v2822
        %3574 = vmatpush1.bf16.msra.mxu0 %v2821
        %3575 = vmatprep.subr.bf16.mxu0 %v2818
        %3576 = vmatpush1.bf16.msra.mxu0 %v2817
        %3577 = vmatprep.subr.bf16.mxu0 %v2814
        %3578 = vmatpush1.bf16.msra.mxu0 %v2813
        %3579 = vmatprep.subr.bf16.mxu0 %v2810
        %3580 = vmatpush1.bf16.msra.mxu0 %v2809
        %3581 = vmatprep.subr.bf16.mxu0 %v2806
        %3582 = vmatpush1.bf16.msra.mxu0 %v2805
        %3583 = vmatprep.subr.bf16.mxu0 %v2866
        %3584 = vmatpush2.bf16.msra.mxu0 %v2865
        %3585 = vmatprep.subr.bf16.mxu0 %v2862
        %3586 = vmatpush2.bf16.msra.mxu0 %v2861
        %3587 = vmatprep.subr.bf16.mxu0 %v2858
        %3588 = vmatpush2.bf16.msra.mxu0 %v2857
        %3589 = vmatprep.subr.bf16.mxu0 %v2854
        %3590 = vmatpush2.bf16.msra.mxu0 %v2853
        %3591 = vmatprep.subr.bf16.mxu0 %v2850
        %3592 = vmatpush2.bf16.msra.mxu0 %v2849
        %3593 = vmatprep.subr.bf16.mxu0 %v2846
        %3594 = vmatpush2.bf16.msra.mxu0 %v2845
        %3595 = vmatprep.subr.bf16.mxu0 %v2842
        %3596 = vmatpush2.bf16.msra.mxu0 %v2841
        %3597 = vmatprep.subr.bf16.mxu0 %v2838
        %3598 = vmatpush2.bf16.msra.mxu0 %v2837
        %3599 = vmatprep.mubr.bf16.mxu0 %v1457
        %3600 = vmatmul.mubr.bf16.gmra.mxu0 %v1456
        %v3601 = vpop.f32.mrf.mxu0
        %v3602 = vadd.f32 %v3559, %v3601
        %v3603 = vpop.f32.mrf.mxu0
        %v3604 = vadd.f32 %v3561, %v3603
        %v3605 = vpop.f32.mrf.mxu0
        %v3606 = vadd.f32 %v3563, %v3605
        %v3607 = vpop.f32.mrf.mxu0
        %v3608 = vadd.f32 %v3565, %v3607
        %3609 = vdwg.mxu0
        %3610 = vmatprep.subr.bf16.mxu0 %v2898
        %3611 = vmatpush1.bf16.msra.mxu0 %v2897
        %3612 = vmatprep.subr.bf16.mxu0 %v2894
        %3613 = vmatpush1.bf16.msra.mxu0 %v2893
        %3614 = vmatprep.subr.bf16.mxu0 %v2890
        %3615 = vmatpush1.bf16.msra.mxu0 %v2889
        %3616 = vmatprep.subr.bf16.mxu0 %v2886
        %3617 = vmatpush1.bf16.msra.mxu0 %v2885
        %3618 = vmatprep.subr.bf16.mxu0 %v2882
        %3619 = vmatpush1.bf16.msra.mxu0 %v2881
        %3620 = vmatprep.subr.bf16.mxu0 %v2878
        %3621 = vmatpush1.bf16.msra.mxu0 %v2877
        %3622 = vmatprep.subr.bf16.mxu0 %v2874
        %3623 = vmatpush1.bf16.msra.mxu0 %v2873
        %3624 = vmatprep.subr.bf16.mxu0 %v2870
        %3625 = vmatpush1.bf16.msra.mxu0 %v2869
        %3626 = vmatprep.subr.bf16.mxu0 %v2930
        %3627 = vmatpush2.bf16.msra.mxu0 %v2929
        %3628 = vmatprep.subr.bf16.mxu0 %v2926
        %3629 = vmatpush2.bf16.msra.mxu0 %v2925
        %3630 = vmatprep.subr.bf16.mxu0 %v2922
        %3631 = vmatpush2.bf16.msra.mxu0 %v2921
        %3632 = vmatprep.subr.bf16.mxu0 %v2918
        %3633 = vmatpush2.bf16.msra.mxu0 %v2917
        %3634 = vmatprep.subr.bf16.mxu0 %v2914
        %3635 = vmatpush2.bf16.msra.mxu0 %v2913
        %3636 = vmatprep.subr.bf16.mxu0 %v2910
        %3637 = vmatpush2.bf16.msra.mxu0 %v2909
        %3638 = vmatprep.subr.bf16.mxu0 %v2906
        %3639 = vmatpush2.bf16.msra.mxu0 %v2905
        %3640 = vmatprep.subr.bf16.mxu0 %v2902
        %3641 = vmatpush2.bf16.msra.mxu0 %v2901
        %3642 = vmatprep.mubr.bf16.mxu0 %v1459
        %3643 = vmatmul.mubr.bf16.gmra.mxu0 %v1458
        %v3644 = vpop.f32.mrf.mxu0
        %v3645 = vadd.f32 %v3602, %v3644
        %v3646 = vpop.f32.mrf.mxu0
        %v3647 = vadd.f32 %v3604, %v3646
        %v3648 = vpop.f32.mrf.mxu0
        %v3649 = vadd.f32 %v3606, %v3648
        %v3650 = vpop.f32.mrf.mxu0
        %v3651 = vadd.f32 %v3608, %v3650
        %3652 = vdwg.mxu0
        %3653 = vmatprep.subr.bf16.mxu0 %v2962
        %3654 = vmatpush1.bf16.msra.mxu0 %v2961
        %3655 = vmatprep.subr.bf16.mxu0 %v2958
        %3656 = vmatpush1.bf16.msra.mxu0 %v2957
        %3657 = vmatprep.subr.bf16.mxu0 %v2954
        %3658 = vmatpush1.bf16.msra.mxu0 %v2953
        %3659 = vmatprep.subr.bf16.mxu0 %v2950
        %3660 = vmatpush1.bf16.msra.mxu0 %v2949
        %3661 = vmatprep.subr.bf16.mxu0 %v2946
        %3662 = vmatpush1.bf16.msra.mxu0 %v2945
        %3663 = vmatprep.subr.bf16.mxu0 %v2942
        %3664 = vmatpush1.bf16.msra.mxu0 %v2941
        %3665 = vmatprep.subr.bf16.mxu0 %v2938
        %3666 = vmatpush1.bf16.msra.mxu0 %v2937
        %3667 = vmatprep.subr.bf16.mxu0 %v2934
        %3668 = vmatpush1.bf16.msra.mxu0 %v2933
        %3669 = vmatprep.subr.bf16.mxu0 %v2994
        %3670 = vmatpush2.bf16.msra.mxu0 %v2993
        %3671 = vmatprep.subr.bf16.mxu0 %v2990
        %3672 = vmatpush2.bf16.msra.mxu0 %v2989
        %3673 = vmatprep.subr.bf16.mxu0 %v2986
        %3674 = vmatpush2.bf16.msra.mxu0 %v2985
        %3675 = vmatprep.subr.bf16.mxu0 %v2982
        %3676 = vmatpush2.bf16.msra.mxu0 %v2981
        %3677 = vmatprep.subr.bf16.mxu0 %v2978
        %3678 = vmatpush2.bf16.msra.mxu0 %v2977
        %3679 = vmatprep.subr.bf16.mxu0 %v2974
        %3680 = vmatpush2.bf16.msra.mxu0 %v2973
        %3681 = vmatprep.subr.bf16.mxu0 %v2970
        %3682 = vmatpush2.bf16.msra.mxu0 %v2969
        %3683 = vmatprep.subr.bf16.mxu0 %v2966
        %3684 = vmatpush2.bf16.msra.mxu0 %v2965
        %3685 = vmatprep.mubr.bf16.mxu0 %v1461
        %3686 = vmatmul.mubr.bf16.gmra.mxu0 %v1460
        %v3687 = vpop.f32.mrf.mxu0
        %v3688 = vadd.f32 %v3645, %v3687
        %v3689 = vpop.f32.mrf.mxu0
        %v3690 = vadd.f32 %v3647, %v3689
        %v3691 = vpop.f32.mrf.mxu0
        %v3692 = vadd.f32 %v3649, %v3691
        %v3693 = vpop.f32.mrf.mxu0
        %v3694 = vadd.f32 %v3651, %v3693
        %3695 = vdwg.mxu0
        %3696 = vmatprep.subr.bf16.mxu0 %v3026
        %3697 = vmatpush1.bf16.msra.mxu0 %v3025
        %3698 = vmatprep.subr.bf16.mxu0 %v3022
        %3699 = vmatpush1.bf16.msra.mxu0 %v3021
        %3700 = vmatprep.subr.bf16.mxu0 %v3018
        %3701 = vmatpush1.bf16.msra.mxu0 %v3017
        %3702 = vmatprep.subr.bf16.mxu0 %v3014
        %3703 = vmatpush1.bf16.msra.mxu0 %v3013
        %3704 = vmatprep.subr.bf16.mxu0 %v3010
        %3705 = vmatpush1.bf16.msra.mxu0 %v3009
        %3706 = vmatprep.subr.bf16.mxu0 %v3006
        %3707 = vmatpush1.bf16.msra.mxu0 %v3005
        %3708 = vmatprep.subr.bf16.mxu0 %v3002
        %3709 = vmatpush1.bf16.msra.mxu0 %v3001
        %3710 = vmatprep.subr.bf16.mxu0 %v2998
        %3711 = vmatpush1.bf16.msra.mxu0 %v2997
        %3712 = vmatprep.subr.bf16.mxu0 %v3058
        %3713 = vmatpush2.bf16.msra.mxu0 %v3057
        %3714 = vmatprep.subr.bf16.mxu0 %v3054
        %3715 = vmatpush2.bf16.msra.mxu0 %v3053
        %3716 = vmatprep.subr.bf16.mxu0 %v3050
        %3717 = vmatpush2.bf16.msra.mxu0 %v3049
        %3718 = vmatprep.subr.bf16.mxu0 %v3046
        %3719 = vmatpush2.bf16.msra.mxu0 %v3045
        %3720 = vmatprep.subr.bf16.mxu0 %v3042
        %3721 = vmatpush2.bf16.msra.mxu0 %v3041
        %3722 = vmatprep.subr.bf16.mxu0 %v3038
        %3723 = vmatpush2.bf16.msra.mxu0 %v3037
        %3724 = vmatprep.subr.bf16.mxu0 %v3034
        %3725 = vmatpush2.bf16.msra.mxu0 %v3033
        %3726 = vmatprep.subr.bf16.mxu0 %v3030
        %3727 = vmatpush2.bf16.msra.mxu0 %v3029
        %3728 = vmatprep.mubr.bf16.mxu0 %v1463
        %3729 = vmatmul.mubr.bf16.gmra.mxu0 %v1462
        %v3730 = vpop.f32.mrf.mxu0
        %v3731 = vadd.f32 %v3688, %v3730
        %v3732 = vpop.f32.mrf.mxu0
        %v3733 = vadd.f32 %v3690, %v3732
        %v3734 = vpop.f32.mrf.mxu0
        %v3735 = vadd.f32 %v3692, %v3734
        %v3736 = vpop.f32.mrf.mxu0
        %v3737 = vadd.f32 %v3694, %v3736
        %3738 = vdwg.mxu0
        %3739 = vmatprep.subr.bf16.mxu0 0
        %3740 = vmatpush1.bf16.msra.mxu0 0
        %3741 = vmatprep.subr.bf16.mxu0 0
        %3742 = vmatpush1.bf16.msra.mxu0 0
        %3743 = vmatprep.subr.bf16.mxu0 0
        %3744 = vmatpush1.bf16.msra.mxu0 0
        %3745 = vmatprep.subr.bf16.mxu0 0
        %3746 = vmatpush1.bf16.msra.mxu0 0
        %3747 = vmatprep.subr.bf16.mxu0 %v3074
        %3748 = vmatpush1.bf16.msra.mxu0 %v3073
        %3749 = vmatprep.subr.bf16.mxu0 %v3070
        %3750 = vmatpush1.bf16.msra.mxu0 %v3069
        %3751 = vmatprep.subr.bf16.mxu0 %v3066
        %3752 = vmatpush1.bf16.msra.mxu0 %v3065
        %3753 = vmatprep.subr.bf16.mxu0 %v3062
        %3754 = vmatpush1.bf16.msra.mxu0 %v3061
        %3755 = vmatprep.subr.bf16.mxu0 0
        %3756 = vmatpush2.bf16.msra.mxu0 0
        %3757 = vmatprep.subr.bf16.mxu0 0
        %3758 = vmatpush2.bf16.msra.mxu0 0
        %3759 = vmatprep.subr.bf16.mxu0 0
        %3760 = vmatpush2.bf16.msra.mxu0 0
        %3761 = vmatprep.subr.bf16.mxu0 0
        %3762 = vmatpush2.bf16.msra.mxu0 0
        %3763 = vmatprep.subr.bf16.mxu0 0
        %3764 = vmatpush2.bf16.msra.mxu0 0
        %3765 = vmatprep.subr.bf16.mxu0 0
        %3766 = vmatpush2.bf16.msra.mxu0 0
        %3767 = vmatprep.subr.bf16.mxu0 0
        %3768 = vmatpush2.bf16.msra.mxu0 0
        %3769 = vmatprep.subr.bf16.mxu0 0
        %3770 = vmatpush2.bf16.msra.mxu0 0
        %3771 = vmatprep.mubr.bf16.mxu0 0
        %3772 = vmatmul.mubr.bf16.gmra.mxu0 %v3479
        %v3773 = vpop.f32.mrf.mxu0
        %v3774 = vadd.f32 %v3731, %v3773
        %v3775 = vpop.f32.mrf.mxu0
        %v3776 = vadd.f32 %v3733, %v3775
        %v3777 = vpop.f32.mrf.mxu0
        %v3778 = vadd.f32 %v3735, %v3777
        %v3779 = vpop.f32.mrf.mxu0
        %v3780 = vadd.f32 %v3737, %v3779
        %3781 = vdwg.mxu0
        %3782 = vmatprep.subr.bf16.mxu0 %v2708
        %3783 = vmatpush1.bf16.msra.mxu0 %v2707
        %3784 = vmatprep.subr.bf16.mxu0 %v2704
        %3785 = vmatpush1.bf16.msra.mxu0 %v2703
        %3786 = vmatprep.subr.bf16.mxu0 %v2700
        %3787 = vmatpush1.bf16.msra.mxu0 %v2699
        %3788 = vmatprep.subr.bf16.mxu0 %v2696
        %3789 = vmatpush1.bf16.msra.mxu0 %v2695
        %3790 = vmatprep.subr.bf16.mxu0 %v2692
        %3791 = vmatpush1.bf16.msra.mxu0 %v2691
        %3792 = vmatprep.subr.bf16.mxu0 %v2688
        %3793 = vmatpush1.bf16.msra.mxu0 %v2687
        %3794 = vmatprep.subr.bf16.mxu0 %v2684
        %3795 = vmatpush1.bf16.msra.mxu0 %v2683
        %3796 = vmatprep.subr.bf16.mxu0 %v2680
        %3797 = vmatpush1.bf16.msra.mxu0 %v2679
        %3798 = vmatprep.subr.bf16.mxu0 %v2740
        %3799 = vmatpush2.bf16.msra.mxu0 %v2739
        %3800 = vmatprep.subr.bf16.mxu0 %v2736
        %3801 = vmatpush2.bf16.msra.mxu0 %v2735
        %3802 = vmatprep.subr.bf16.mxu0 %v2732
        %3803 = vmatpush2.bf16.msra.mxu0 %v2731
        %3804 = vmatprep.subr.bf16.mxu0 %v2728
        %3805 = vmatpush2.bf16.msra.mxu0 %v2727
        %3806 = vmatprep.subr.bf16.mxu0 %v2724
        %3807 = vmatpush2.bf16.msra.mxu0 %v2723
        %3808 = vmatprep.subr.bf16.mxu0 %v2720
        %3809 = vmatpush2.bf16.msra.mxu0 %v2719
        %3810 = vmatprep.subr.bf16.mxu0 %v2716
        %3811 = vmatpush2.bf16.msra.mxu0 %v2715
        %3812 = vmatprep.subr.bf16.mxu0 %v2712
        %3813 = vmatpush2.bf16.msra.mxu0 %v2711
        %3814 = vmatprep.mubr.bf16.mxu0 %v1453
        %3815 = vmatmul.mubr.bf16.gmra.mxu0 %v1452
        %v3816 = vpop.f32.mrf.mxu0
        %v3817 = vadd.f32 %v1405, %v3816
        %v3818 = vpop.f32.mrf.mxu0
        %v3819 = vadd.f32 %v1405, %v3818
        %v3820 = vpop.f32.mrf.mxu0
        %v3821 = vadd.f32 %v1410, %v3820
        %v3822 = vpop.f32.mrf.mxu0
        %v3823 = vadd.f32 %v1410, %v3822
        %3824 = vdwg.mxu0
        %3825 = vmatprep.subr.bf16.mxu0 %v2772
        %3826 = vmatpush1.bf16.msra.mxu0 %v2771
        %3827 = vmatprep.subr.bf16.mxu0 %v2768
        %3828 = vmatpush1.bf16.msra.mxu0 %v2767
        %3829 = vmatprep.subr.bf16.mxu0 %v2764
        %3830 = vmatpush1.bf16.msra.mxu0 %v2763
        %3831 = vmatprep.subr.bf16.mxu0 %v2760
        %3832 = vmatpush1.bf16.msra.mxu0 %v2759
        %3833 = vmatprep.subr.bf16.mxu0 %v2756
        %3834 = vmatpush1.bf16.msra.mxu0 %v2755
        %3835 = vmatprep.subr.bf16.mxu0 %v2752
        %3836 = vmatpush1.bf16.msra.mxu0 %v2751
        %3837 = vmatprep.subr.bf16.mxu0 %v2748
        %3838 = vmatpush1.bf16.msra.mxu0 %v2747
        %3839 = vmatprep.subr.bf16.mxu0 %v2744
        %3840 = vmatpush1.bf16.msra.mxu0 %v2743
        %3841 = vmatprep.subr.bf16.mxu0 %v2804
        %3842 = vmatpush2.bf16.msra.mxu0 %v2803
        %3843 = vmatprep.subr.bf16.mxu0 %v2800
        %3844 = vmatpush2.bf16.msra.mxu0 %v2799
        %3845 = vmatprep.subr.bf16.mxu0 %v2796
        %3846 = vmatpush2.bf16.msra.mxu0 %v2795
        %3847 = vmatprep.subr.bf16.mxu0 %v2792
        %3848 = vmatpush2.bf16.msra.mxu0 %v2791
        %3849 = vmatprep.subr.bf16.mxu0 %v2788
        %3850 = vmatpush2.bf16.msra.mxu0 %v2787
        %3851 = vmatprep.subr.bf16.mxu0 %v2784
        %3852 = vmatpush2.bf16.msra.mxu0 %v2783
        %3853 = vmatprep.subr.bf16.mxu0 %v2780
        %3854 = vmatpush2.bf16.msra.mxu0 %v2779
        %3855 = vmatprep.subr.bf16.mxu0 %v2776
        %3856 = vmatpush2.bf16.msra.mxu0 %v2775
        %3857 = vmatprep.mubr.bf16.mxu0 %v1455
        %3858 = vmatmul.mubr.bf16.gmra.mxu0 %v1454
        %v3859 = vpop.f32.mrf.mxu0
        %v3860 = vadd.f32 %v3817, %v3859
        %v3861 = vpop.f32.mrf.mxu0
        %v3862 = vadd.f32 %v3819, %v3861
        %v3863 = vpop.f32.mrf.mxu0
        %v3864 = vadd.f32 %v3821, %v3863
        %v3865 = vpop.f32.mrf.mxu0
        %v3866 = vadd.f32 %v3823, %v3865
        %3867 = vdwg.mxu0
        %3868 = vmatprep.subr.bf16.mxu0 %v2836
        %3869 = vmatpush1.bf16.msra.mxu0 %v2835
        %3870 = vmatprep.subr.bf16.mxu0 %v2832
        %3871 = vmatpush1.bf16.msra.mxu0 %v2831
        %3872 = vmatprep.subr.bf16.mxu0 %v2828
        %3873 = vmatpush1.bf16.msra.mxu0 %v2827
        %3874 = vmatprep.subr.bf16.mxu0 %v2824
        %3875 = vmatpush1.bf16.msra.mxu0 %v2823
        %3876 = vmatprep.subr.bf16.mxu0 %v2820
        %3877 = vmatpush1.bf16.msra.mxu0 %v2819
        %3878 = vmatprep.subr.bf16.mxu0 %v2816
        %3879 = vmatpush1.bf16.msra.mxu0 %v2815
        %3880 = vmatprep.subr.bf16.mxu0 %v2812
        %3881 = vmatpush1.bf16.msra.mxu0 %v2811
        %3882 = vmatprep.subr.bf16.mxu0 %v2808
        %3883 = vmatpush1.bf16.msra.mxu0 %v2807
        %3884 = vmatprep.subr.bf16.mxu0 %v2868
        %3885 = vmatpush2.bf16.msra.mxu0 %v2867
        %3886 = vmatprep.subr.bf16.mxu0 %v2864
        %3887 = vmatpush2.bf16.msra.mxu0 %v2863
        %3888 = vmatprep.subr.bf16.mxu0 %v2860
        %3889 = vmatpush2.bf16.msra.mxu0 %v2859
        %3890 = vmatprep.subr.bf16.mxu0 %v2856
        %3891 = vmatpush2.bf16.msra.mxu0 %v2855
        %3892 = vmatprep.subr.bf16.mxu0 %v2852
        %3893 = vmatpush2.bf16.msra.mxu0 %v2851
        %3894 = vmatprep.subr.bf16.mxu0 %v2848
        %3895 = vmatpush2.bf16.msra.mxu0 %v2847
        %3896 = vmatprep.subr.bf16.mxu0 %v2844
        %3897 = vmatpush2.bf16.msra.mxu0 %v2843
        %3898 = vmatprep.subr.bf16.mxu0 %v2840
        %3899 = vmatpush2.bf16.msra.mxu0 %v2839
        %3900 = vmatprep.mubr.bf16.mxu0 %v1457
        %3901 = vmatmul.mubr.bf16.gmra.mxu0 %v1456
        %v3902 = vpop.f32.mrf.mxu0
        %v3903 = vadd.f32 %v3860, %v3902
        %v3904 = vpop.f32.mrf.mxu0
        %v3905 = vadd.f32 %v3862, %v3904
        %v3906 = vpop.f32.mrf.mxu0
        %v3907 = vadd.f32 %v3864, %v3906
        %v3908 = vpop.f32.mrf.mxu0
        %v3909 = vadd.f32 %v3866, %v3908
        %3910 = vdwg.mxu0
        %3911 = vmatprep.subr.bf16.mxu0 %v2900
        %3912 = vmatpush1.bf16.msra.mxu0 %v2899
        %3913 = vmatprep.subr.bf16.mxu0 %v2896
        %3914 = vmatpush1.bf16.msra.mxu0 %v2895
        %3915 = vmatprep.subr.bf16.mxu0 %v2892
        %3916 = vmatpush1.bf16.msra.mxu0 %v2891
        %3917 = vmatprep.subr.bf16.mxu0 %v2888
        %3918 = vmatpush1.bf16.msra.mxu0 %v2887
        %3919 = vmatprep.subr.bf16.mxu0 %v2884
        %3920 = vmatpush1.bf16.msra.mxu0 %v2883
        %3921 = vmatprep.subr.bf16.mxu0 %v2880
        %3922 = vmatpush1.bf16.msra.mxu0 %v2879
        %3923 = vmatprep.subr.bf16.mxu0 %v2876
        %3924 = vmatpush1.bf16.msra.mxu0 %v2875
        %3925 = vmatprep.subr.bf16.mxu0 %v2872
        %3926 = vmatpush1.bf16.msra.mxu0 %v2871
        %3927 = vmatprep.subr.bf16.mxu0 %v2932
        %3928 = vmatpush2.bf16.msra.mxu0 %v2931
        %3929 = vmatprep.subr.bf16.mxu0 %v2928
        %3930 = vmatpush2.bf16.msra.mxu0 %v2927
        %3931 = vmatprep.subr.bf16.mxu0 %v2924
        %3932 = vmatpush2.bf16.msra.mxu0 %v2923
        %3933 = vmatprep.subr.bf16.mxu0 %v2920
        %3934 = vmatpush2.bf16.msra.mxu0 %v2919
        %3935 = vmatprep.subr.bf16.mxu0 %v2916
        %3936 = vmatpush2.bf16.msra.mxu0 %v2915
        %3937 = vmatprep.subr.bf16.mxu0 %v2912
        %3938 = vmatpush2.bf16.msra.mxu0 %v2911
        %3939 = vmatprep.subr.bf16.mxu0 %v2908
        %3940 = vmatpush2.bf16.msra.mxu0 %v2907
        %3941 = vmatprep.subr.bf16.mxu0 %v2904
        %3942 = vmatpush2.bf16.msra.mxu0 %v2903
        %3943 = vmatprep.mubr.bf16.mxu0 %v1459
        %3944 = vmatmul.mubr.bf16.gmra.mxu0 %v1458
        %v3945 = vpop.f32.mrf.mxu0
        %v3946 = vadd.f32 %v3903, %v3945
        %v3947 = vpop.f32.mrf.mxu0
        %v3948 = vadd.f32 %v3905, %v3947
        %v3949 = vpop.f32.mrf.mxu0
        %v3950 = vadd.f32 %v3907, %v3949
        %v3951 = vpop.f32.mrf.mxu0
        %v3952 = vadd.f32 %v3909, %v3951
        %3953 = vdwg.mxu0
        %3954 = vmatprep.subr.bf16.mxu0 %v2964
        %3955 = vmatpush1.bf16.msra.mxu0 %v2963
        %3956 = vmatprep.subr.bf16.mxu0 %v2960
        %3957 = vmatpush1.bf16.msra.mxu0 %v2959
        %3958 = vmatprep.subr.bf16.mxu0 %v2956
        %3959 = vmatpush1.bf16.msra.mxu0 %v2955
        %3960 = vmatprep.subr.bf16.mxu0 %v2952
        %3961 = vmatpush1.bf16.msra.mxu0 %v2951
        %3962 = vmatprep.subr.bf16.mxu0 %v2948
        %3963 = vmatpush1.bf16.msra.mxu0 %v2947
        %3964 = vmatprep.subr.bf16.mxu0 %v2944
        %3965 = vmatpush1.bf16.msra.mxu0 %v2943
        %3966 = vmatprep.subr.bf16.mxu0 %v2940
        %3967 = vmatpush1.bf16.msra.mxu0 %v2939
        %3968 = vmatprep.subr.bf16.mxu0 %v2936
        %3969 = vmatpush1.bf16.msra.mxu0 %v2935
        %3970 = vmatprep.subr.bf16.mxu0 %v2996
        %3971 = vmatpush2.bf16.msra.mxu0 %v2995
        %3972 = vmatprep.subr.bf16.mxu0 %v2992
        %3973 = vmatpush2.bf16.msra.mxu0 %v2991
        %3974 = vmatprep.subr.bf16.mxu0 %v2988
        %3975 = vmatpush2.bf16.msra.mxu0 %v2987
        %3976 = vmatprep.subr.bf16.mxu0 %v2984
        %3977 = vmatpush2.bf16.msra.mxu0 %v2983
        %3978 = vmatprep.subr.bf16.mxu0 %v2980
        %3979 = vmatpush2.bf16.msra.mxu0 %v2979
        %3980 = vmatprep.subr.bf16.mxu0 %v2976
        %3981 = vmatpush2.bf16.msra.mxu0 %v2975
        %3982 = vmatprep.subr.bf16.mxu0 %v2972
        %3983 = vmatpush2.bf16.msra.mxu0 %v2971
        %3984 = vmatprep.subr.bf16.mxu0 %v2968
        %3985 = vmatpush2.bf16.msra.mxu0 %v2967
        %3986 = vmatprep.mubr.bf16.mxu0 %v1461
        %3987 = vmatmul.mubr.bf16.gmra.mxu0 %v1460
        %v3988 = vpop.f32.mrf.mxu0
        %v3989 = vadd.f32 %v3946, %v3988
        %v3990 = vpop.f32.mrf.mxu0
        %v3991 = vadd.f32 %v3948, %v3990
        %v3992 = vpop.f32.mrf.mxu0
        %v3993 = vadd.f32 %v3950, %v3992
        %v3994 = vpop.f32.mrf.mxu0
        %v3995 = vadd.f32 %v3952, %v3994
        %3996 = vdwg.mxu0
        %3997 = vmatprep.subr.bf16.mxu0 %v3028
        %3998 = vmatpush1.bf16.msra.mxu0 %v3027
        %3999 = vmatprep.subr.bf16.mxu0 %v3024
        %4000 = vmatpush1.bf16.msra.mxu0 %v3023
        %4001 = vmatprep.subr.bf16.mxu0 %v3020
        %4002 = vmatpush1.bf16.msra.mxu0 %v3019
        %4003 = vmatprep.subr.bf16.mxu0 %v3016
        %4004 = vmatpush1.bf16.msra.mxu0 %v3015
        %4005 = vmatprep.subr.bf16.mxu0 %v3012
        %4006 = vmatpush1.bf16.msra.mxu0 %v3011
        %4007 = vmatprep.subr.bf16.mxu0 %v3008
        %4008 = vmatpush1.bf16.msra.mxu0 %v3007
        %4009 = vmatprep.subr.bf16.mxu0 %v3004
        %4010 = vmatpush1.bf16.msra.mxu0 %v3003
        %4011 = vmatprep.subr.bf16.mxu0 %v3000
        %4012 = vmatpush1.bf16.msra.mxu0 %v2999
        %4013 = vmatprep.subr.bf16.mxu0 %v3060
        %4014 = vmatpush2.bf16.msra.mxu0 %v3059
        %4015 = vmatprep.subr.bf16.mxu0 %v3056
        %4016 = vmatpush2.bf16.msra.mxu0 %v3055
        %4017 = vmatprep.subr.bf16.mxu0 %v3052
        %4018 = vmatpush2.bf16.msra.mxu0 %v3051
        %4019 = vmatprep.subr.bf16.mxu0 %v3048
        %4020 = vmatpush2.bf16.msra.mxu0 %v3047
        %4021 = vmatprep.subr.bf16.mxu0 %v3044
        %4022 = vmatpush2.bf16.msra.mxu0 %v3043
        %4023 = vmatprep.subr.bf16.mxu0 %v3040
        %4024 = vmatpush2.bf16.msra.mxu0 %v3039
        %4025 = vmatprep.subr.bf16.mxu0 %v3036
        %4026 = vmatpush2.bf16.msra.mxu0 %v3035
        %4027 = vmatprep.subr.bf16.mxu0 %v3032
        %4028 = vmatpush2.bf16.msra.mxu0 %v3031
        %4029 = vmatprep.mubr.bf16.mxu0 %v1463
        %4030 = vmatmul.mubr.bf16.gmra.mxu0 %v1462
        %v4031 = vpop.f32.mrf.mxu0
        %v4032 = vadd.f32 %v3989, %v4031
        %v4033 = vpop.f32.mrf.mxu0
        %v4034 = vadd.f32 %v3991, %v4033
        %v4035 = vpop.f32.mrf.mxu0
        %v4036 = vadd.f32 %v3993, %v4035
        %v4037 = vpop.f32.mrf.mxu0
        %v4038 = vadd.f32 %v3995, %v4037
        %4039 = vdwg.mxu0
        %4040 = vmatprep.subr.bf16.mxu0 0
        %4041 = vmatpush1.bf16.msra.mxu0 0
        %4042 = vmatprep.subr.bf16.mxu0 0
        %4043 = vmatpush1.bf16.msra.mxu0 0
        %4044 = vmatprep.subr.bf16.mxu0 0
        %4045 = vmatpush1.bf16.msra.mxu0 0
        %4046 = vmatprep.subr.bf16.mxu0 0
        %4047 = vmatpush1.bf16.msra.mxu0 0
        %4048 = vmatprep.subr.bf16.mxu0 %v3076
        %4049 = vmatpush1.bf16.msra.mxu0 %v3075
        %4050 = vmatprep.subr.bf16.mxu0 %v3072
        %4051 = vmatpush1.bf16.msra.mxu0 %v3071
        %4052 = vmatprep.subr.bf16.mxu0 %v3068
        %4053 = vmatpush1.bf16.msra.mxu0 %v3067
        %4054 = vmatprep.subr.bf16.mxu0 %v3064
        %4055 = vmatpush1.bf16.msra.mxu0 %v3063
        %4056 = vmatprep.subr.bf16.mxu0 0
        %4057 = vmatpush2.bf16.msra.mxu0 0
        %4058 = vmatprep.subr.bf16.mxu0 0
        %4059 = vmatpush2.bf16.msra.mxu0 0
        %4060 = vmatprep.subr.bf16.mxu0 0
        %4061 = vmatpush2.bf16.msra.mxu0 0
        %4062 = vmatprep.subr.bf16.mxu0 0
        %4063 = vmatpush2.bf16.msra.mxu0 0
        %4064 = vmatprep.subr.bf16.mxu0 0
        %4065 = vmatpush2.bf16.msra.mxu0 0
        %4066 = vmatprep.subr.bf16.mxu0 0
        %4067 = vmatpush2.bf16.msra.mxu0 0
        %4068 = vmatprep.subr.bf16.mxu0 0
        %4069 = vmatpush2.bf16.msra.mxu0 0
        %4070 = vmatprep.subr.bf16.mxu0 0
        %4071 = vmatpush2.bf16.msra.mxu0 0
        %4072 = vmatprep.mubr.bf16.mxu0 0
        %4073 = vmatmul.mubr.bf16.gmra.mxu0 %v3479
        %v4074 = vpop.f32.mrf.mxu0
        %v4075 = vadd.f32 %v4032, %v4074
        %v4076 = vpop.f32.mrf.mxu0
        %v4077 = vadd.f32 %v4034, %v4076
        %v4078 = vpop.f32.mrf.mxu0
        %v4079 = vadd.f32 %v4036, %v4078
        %v4080 = vpop.f32.mrf.mxu0
        %v4081 = vadd.f32 %v4038, %v4080
        %4082 = vdwg.mxu0
        %v4083 = vmax.f32 %v3774, 0.0
        %v4084 = vmax.f32 %v3776, 0.0
        %v4085 = vmax.f32 %v4075, 0.0
        %v4086 = vmax.f32 %v4077, 0.0
        %v4087 = vmax.f32 %v3778, 0.0
        %v4088 = vmax.f32 %v3780, 0.0
        %v4089 = vmax.f32 %v4079, 0.0
        %v4090 = vmax.f32 %v4081, 0.0
        %4091 = vst [vmem:[%s982] sm:$0xff] %v4083
        %4092 = vst [vmem:[%s982 + $0x8] sm:$0xff] %v4084
        %4093 = vst [vmem:[%s982 + $0x10] sm:$0xff] %v4085
        %4094 = vst [vmem:[%s982 + $0x18] sm:$0xff] %v4086
        %4095 = vst [vmem:[%s982 + $0x20] sm:$0xff] %v4087
        %4096 = vst [vmem:[%s982 + $0x28] sm:$0xff] %v4088
        %4097 = vst [vmem:[%s982 + $0x30] sm:$0xff] %v4089
        %4098 = vst [vmem:[%s982 + $0x38] sm:$0xff] %v4090
        %s4099 = sand.u32 %s90, 1
        %s4100 = sand.u32 %s90, 1
        %s4101 = smul.addr %s4100, 64
        %s4102 = scalar_lea.vmem [#allocation3], %s4101
        // Predicated region
        $region56: #{forward.14} parent=50 // pred_check
          %p4103 = pneg %p100
        $region57: #{forward.14} parent=50 // pred_check_branch
          %4105 = sbr.rel (%p4103) target = $region59
        $region58: #{forward.14} parent=50 // pred_region
          %s4106 = smul.u32 4, %s14
          %s4107 = smul.addr %s4106, 8
          %s4108 = scalar_lea.vmem %s3, %s4107
          // Predicated region
          $region60: #{forward.14} parent=58 // pred_check
            _
          $region61: #{forward.14} parent=58 // pred_check_branch
            %4110 = sbr.rel (0) target = $region63
          $region62: #{forward.14} parent=58 // pred_region
            // Predicated region
            $region64: #{forward.14} parent=62 // pred_check
              _
            $region65: #{forward.14} parent=62 // pred_check_branch
              %4112 = sbr.rel (0) target = $region67
            $region66: #{forward.14} parent=62 // pred_region
              loop: start=0, step=1, limit=1
              $region68: #{forward.14} parent=66 // loop_pre_header
                _
              $region69: #{forward.14} parent=66 // loop_header
                %s4114 = sphi 0, %s4118
                %p4115 = scmp.ge.s32.totalorder %s4114, 1
                %s4119 = sphi %s4102, %s4102
                %s4120 = sphi %s4108, %s4108
              $region70: #{forward.14} parent=66 // loop_header_branch
                %4117 = sbr.rel (%p4115) target = $region74
              $region71: #{forward.14} parent=66 // loop_body
                %v4121 = vld [vmem:[%s4119] sm:$0xff]
                %4122 = vst [vmem:[%s4120] sm:$0xff] %v4121
                %v4123 = vld [vmem:[%s4119 + $0x8] sm:$0xff]
                %4124 = vst [vmem:[%s4120 + $0x8] sm:$0xff] %v4123
                %v4125 = vld [vmem:[%s4119 + $0x10] sm:$0xff]
                %4126 = vst [vmem:[%s4120 + $0x10] sm:$0xff] %v4125
                %v4127 = vld [vmem:[%s4119 + $0x18] sm:$0xff]
                %4128 = vst [vmem:[%s4120 + $0x18] sm:$0xff] %v4127
                %v4129 = vld [vmem:[%s4119 + $0x20] sm:$0xff]
                %4130 = vst [vmem:[%s4120 + $0xe0] sm:$0xff] %v4129
                %v4131 = vld [vmem:[%s4119 + $0x28] sm:$0xff]
                %4132 = vst [vmem:[%s4120 + $0xe8] sm:$0xff] %v4131
                %v4133 = vld [vmem:[%s4119 + $0x30] sm:$0xff]
                %4134 = vst [vmem:[%s4120 + $0xf0] sm:$0xff] %v4133
                %v4135 = vld [vmem:[%s4119 + $0x38] sm:$0xff]
                %4136 = vst [vmem:[%s4120 + $0xf8] sm:$0xff] %v4135
              $region72: #{forward.14} parent=66 // loop_footer
                %s4118 = sadd.s32 1, %s4114
              $region73: #{forward.14} parent=66 // loop_footer_branch
                %4113 = sbr.rel target = $region69
              $region74: #{forward.14} parent=66 // loop_exit
                _
            $region67: #{forward.14} parent=62 // pred_fallthru
              _
            // Predicated region
            $region75: #{forward.14} parent=62 // pred_check
              _
            $region76: #{forward.14} parent=62 // pred_check_branch
              %4138 = sbr.rel target = $region78
            $region77: #{forward.14} parent=62 // pred_region
              _
            $region78: #{forward.14} parent=62 // pred_fallthru
              _
          $region63: #{forward.14} parent=58 // pred_fallthru
            _
          %4139 = vnop
        $region59: #{forward.14} parent=50 // pred_fallthru
          _
      $region51: #{forward.14} parent=5 // pred_fallthru
        _
      %p4140 = scmp.le.s32.totalorder 2, %s9
      // Predicated region
      $region79: #{forward.14} parent=5 // pred_check
        %p4141 = pneg %p4140
      $region80: #{forward.14} parent=5 // pred_check_branch
        %4143 = sbr.rel (%p4141) target = $region82
      $region81: #{forward.14} parent=5 // pred_region
        %s4144 = ssub.s32 %s9, 2
        // Predicated region
        $region83: #{forward.14} parent=81 // pred_check
          %p4145 = pneg %p106
        $region84: #{forward.14} parent=81 // pred_check_branch
          %4147 = sbr.rel (%p4145) target = $region86
        $region85: #{forward.14} parent=81 // pred_region
          %s4148 = sand.u32 %s91, 1
          %s4149 = sand.u32 %s91, 1
          %s4150 = smul.addr %s4149, 64
          %s4151 = scalar_lea.vmem [#allocation3], %s4150
        $region86: #{forward.14} parent=81 // pred_fallthru
          _
      $region82: #{forward.14} parent=5 // pred_fallthru
        _
    $region6: #{forward.14} parent=1 // loop_footer
      %s13 = sadd.s32 1, %s9
    $region7: #{forward.14} parent=1 // loop_footer_branch
      %8 = sbr.rel target = $region3
    $region8: #{forward.14} parent=1 // loop_exit
      _

// kernel: forward.15
$region0: #{forward.15}
  #allocation0 [shape = 'u32[]', space=smem, size = 0x4, offset = 0x4, fixed_abs, tag = 'smem constant byte address 0x4 - core index']
  #allocation1 [shape = 'u32[144,128]{1,0:T(1,128)}', space=vmem, size = 0x12000, scoped, tag = 'internal scratch']
  %s0 = inlined_call_operand.vmem [shape: bf16[8,256], index: 0, kind: input, shape index: {}]
  %s1 = inlined_call_operand.vmem [shape: bf16[256,13312], index: 1, kind: input, shape index: {}]
  %s2 = inlined_call_operand.vmem [shape: f32[8,1], index: 2, kind: input, shape index: {}]
  %s3 = inlined_call_operand.vmem [shape: f32[8,13312], index: 3, kind: output, shape index: {}]
  %s4 = sld [smem:[#allocation0]]
  $region68: #{forward.15} parent=0
    _
  %s6 = ssub.s32 1, %s4
  %s7 = scalar_select 0, %s6, %s4
  $region1: #{forward.15} parent=0
    #allocation2 [shape = 'u8[1048576]{0}', space=vmem, size = 0x100000, scoped, tag = 'input window, operand 1']
    loop: start=0, step=1, limit=15
    $region2: #{forward.15} parent=1 // loop_pre_header
      _
    $region3: #{forward.15} parent=1 // loop_header
      %s9 = sphi 0, %s13
      %p10 = scmp.ge.s32.totalorder %s9, 15
      %s17 = sphi 0, %s17
      %s19 = sphi 0, %s17
      %s20 = sphi 0, %s19
      %s34 = sphi 0, %s20
      %s40 = sphi 0, %s42
      %s43 = sphi 0, %s40
      %s44 = sphi 0, %s43
      %s60 = sphi 0, %s44
      %s64 = sphi 0, %s64
      %s66 = sphi 0, %s64
      %s67 = sphi 0, %s66
      %s81 = sphi 0, %s67
      %s87 = sphi 0, %s89
      %s90 = sphi 0, %s87
      %s91 = sphi 0, %s90
      %s107 = sphi 0, %s91
    $region4: #{forward.15} parent=1 // loop_header_branch
      %12 = sbr.rel (%p10) target = $region8
    $region5: #{forward.15} parent=1 // loop_body
      %s14 = ssub.s32 %s9, 1
      %s15 = ssub.s32 %s9, 2
      %s16 = sadd.s32 %s9, 1
      %s18 = sadd.s32 %s17, 1
      %p21 = scmp.eq.s32.totalorder %s9, 12
      %p22 = scmp.ne.s32.totalorder %s17, %s19
      %p23 = scmp.eq.s32.totalorder %s9, 0
      %p24 = por %p22, %p23
      %p25 = scmp.ne.s32.totalorder %s17, %s19
      %p26 = scmp.eq.s32.totalorder %s14, 12
      %p27 = por %p25, %p26
      %p28 = scmp.ne.s32.totalorder %s19, %s20
      %p29 = scmp.eq.s32.totalorder %s14, 0
      %p30 = por %p28, %p29
      %p31 = scmp.ne.s32.totalorder %s19, %s20
      %p32 = scmp.eq.s32.totalorder %s15, 12
      %p33 = por %p31, %p32
      %p35 = scmp.ne.s32.totalorder %s20, %s34
      %p36 = scmp.eq.s32.totalorder %s15, 0
      %p37 = por %p35, %p36
      %s38 = ssub.s32 %s9, %s16
      %p39 = scmp.eq.s32.totalorder %s38, 0
      %s41 = sadd.s32 %s40, 1
      %s42 = scalar_select %p39, %s40, %s41
      %p45 = pneg %p39
      %p46 = scmp.eq.s32.totalorder %s9, 12
      %p47 = por %p45, %p46
      %p48 = scmp.ne.s32.totalorder %s40, %s43
      %p49 = scmp.eq.s32.totalorder %s9, 0
      %p50 = por %p48, %p49
      %p51 = scmp.ne.s32.totalorder %s40, %s43
      %p52 = scmp.eq.s32.totalorder %s14, 12
      %p53 = por %p51, %p52
      %p54 = scmp.ne.s32.totalorder %s43, %s44
      %p55 = scmp.eq.s32.totalorder %s14, 0
      %p56 = por %p54, %p55
      %p57 = scmp.ne.s32.totalorder %s43, %s44
      %p58 = scmp.eq.s32.totalorder %s15, 12
      %p59 = por %p57, %p58
      %p61 = scmp.ne.s32.totalorder %s44, %s60
      %p62 = scmp.eq.s32.totalorder %s15, 0
      %p63 = por %p61, %p62
      %s65 = sadd.s32 %s64, 1
      %p68 = scmp.eq.s32.totalorder %s9, 12
      %p69 = scmp.ne.s32.totalorder %s64, %s66
      %p70 = scmp.eq.s32.totalorder %s9, 0
      %p71 = por %p69, %p70
      %p72 = scmp.ne.s32.totalorder %s64, %s66
      %p73 = scmp.eq.s32.totalorder %s14, 12
      %p74 = por %p72, %p73
      %p75 = scmp.ne.s32.totalorder %s66, %s67
      %p76 = scmp.eq.s32.totalorder %s14, 0
      %p77 = por %p75, %p76
      %p78 = scmp.ne.s32.totalorder %s66, %s67
      %p79 = scmp.eq.s32.totalorder %s15, 12
      %p80 = por %p78, %p79
      %p82 = scmp.ne.s32.totalorder %s67, %s81
      %p83 = scmp.eq.s32.totalorder %s15, 0
      %p84 = por %p82, %p83
      %s85 = ssub.s32 %s9, %s16
      %p86 = scmp.eq.s32.totalorder %s85, 0
      %s88 = sadd.s32 %s87, 1
      %s89 = scalar_select %p86, %s87, %s88
      %p92 = pneg %p86
      %p93 = scmp.eq.s32.totalorder %s9, 12
      %p94 = por %p92, %p93
      %p95 = scmp.ne.s32.totalorder %s87, %s90
      %p96 = scmp.eq.s32.totalorder %s9, 0
      %p97 = por %p95, %p96
      %p98 = scmp.ne.s32.totalorder %s87, %s90
      %p99 = scmp.eq.s32.totalorder %s14, 12
      %p100 = por %p98, %p99
      %p101 = scmp.ne.s32.totalorder %s90, %s91
      %p102 = scmp.eq.s32.totalorder %s14, 0
      %p103 = por %p101, %p102
      %p104 = scmp.ne.s32.totalorder %s90, %s91
      %p105 = scmp.eq.s32.totalorder %s15, 12
      %p106 = por %p104, %p105
      %p108 = scmp.ne.s32.totalorder %s91, %s107
      %p109 = scmp.eq.s32.totalorder %s15, 0
      %p110 = por %p108, %p109
      %p111 = scmp.le.s32.totalorder 1, %s9
      %p112 = scmp.lt.s32.totalorder %s9, 14
      %p113 = pnand %p111, %p112
      %p114 = pneg %p113
      // Predicated region
      $region9: #{forward.15} parent=5 // pred_check
        _
      $region10: #{forward.15} parent=5 // pred_check_branch
        %116 = sbr.rel (%p113) target = $region12
      $region11: #{forward.15} parent=5 // pred_region
        %s117 = ssub.s32 %s9, 1
        // Predicated region
        $region13: #{forward.15} parent=11 // pred_check
          %p118 = pneg %p30
        $region14: #{forward.15} parent=11 // pred_check_branch
          %120 = sbr.rel (%p118) target = $region16
        $region15: #{forward.15} parent=11 // pred_region
          _
        $region16: #{forward.15} parent=11 // pred_fallthru
          _
        // Predicated region
        $region17: #{forward.15} parent=11 // pred_check
          %p121 = pneg %p77
        $region18: #{forward.15} parent=11 // pred_check_branch
          %123 = sbr.rel (%p121) target = $region20
        $region19: #{forward.15} parent=11 // pred_region
          _
        $region20: #{forward.15} parent=11 // pred_fallthru
          _
      $region12: #{forward.15} parent=5 // pred_fallthru
        _
      %p124 = scmp.lt.s32.totalorder %s9, 13
      // Predicated region
      $region21: #{forward.15} parent=5 // pred_check
        %p125 = pneg %p124
      $region22: #{forward.15} parent=5 // pred_check_branch
        %127 = sbr.rel (%p125) target = $region24
      $region23: #{forward.15} parent=5 // pred_region
        // Predicated region
        $region25: #{forward.15} parent=23 // pred_check
          %p128 = pneg %p50
        $region26: #{forward.15} parent=23 // pred_check_branch
          %130 = sbr.rel (%p128) target = $region28
        $region27: #{forward.15} parent=23 // pred_region
          %s131 = sand.u32 %s40, 1
          %s132 = sand.u32 %s40, 1
          %s133 = smul.addr %s132, 1024
          %s134 = scalar_lea.vmem [#allocation2], %s133
          %s135 = smul.u32 8, %s9
          %s136 = smul.addr %s135, 4
          %s137 = scalar_lea.vmem %s1, %s136
          // Predicated region
          $region29: #{forward.15} parent=27 // pred_check
            _
          $region30: #{forward.15} parent=27 // pred_check_branch
            %139 = sbr.rel (0) target = $region32
          $region31: #{forward.15} parent=27 // pred_region
            // Predicated region
            $region33: #{forward.15} parent=31 // pred_check
              _
            $region34: #{forward.15} parent=31 // pred_check_branch
              %141 = sbr.rel (0) target = $region36
            $region35: #{forward.15} parent=31 // pred_region
              loop: start=0, step=1, limit=1
              $region37: #{forward.15} parent=35 // loop_pre_header
                _
              $region38: #{forward.15} parent=35 // loop_header
                %s143 = sphi 0, %s147
                %p144 = scmp.ge.s32.totalorder %s143, 1
                %s148 = sphi %s137, %s137
                %s149 = sphi %s134, %s134
              $region39: #{forward.15} parent=35 // loop_header_branch
                %146 = sbr.rel (%p144) target = $region43
              $region40: #{forward.15} parent=35 // loop_body
                %v150 = vld [vmem:[%s148] sm:$0xff]
                %151 = vst [vmem:[%s149] sm:$0xff] %v150
                %v152 = vld [vmem:[%s148 + $0x8] sm:$0xff]
                %153 = vst [vmem:[%s149 + $0x8] sm:$0xff] %v152
                %v154 = vld [vmem:[%s148 + $0x10] sm:$0xff]
                %155 = vst [vmem:[%s149 + $0x10] sm:$0xff] %v154
                %v156 = vld [vmem:[%s148 + $0x18] sm:$0xff]
                %157 = vst [vmem:[%s149 + $0x18] sm:$0xff] %v156
                %v158 = vld [vmem:[%s148 + $0x1a0] sm:$0xff]
                %159 = vst [vmem:[%s149 + $0x20] sm:$0xff] %v158
                %v160 = vld [vmem:[%s148 + $0x1a8] sm:$0xff]
                %161 = vst [vmem:[%s149 + $0x28] sm:$0xff] %v160
                %v162 = vld [vmem:[%s148 + $0x1b0] sm:$0xff]
                %163 = vst [vmem:[%s149 + $0x30] sm:$0xff] %v162
                %v164 = vld [vmem:[%s148 + $0x1b8] sm:$0xff]
                %165 = vst [vmem:[%s149 + $0x38] sm:$0xff] %v164
                %v166 = vld [vmem:[%s148 + $0x340] sm:$0xff]
                %167 = vst [vmem:[%s149 + $0x40] sm:$0xff] %v166
                %v168 = vld [vmem:[%s148 + $0x348] sm:$0xff]
                %169 = vst [vmem:[%s149 + $0x48] sm:$0xff] %v168
                %v170 = vld [vmem:[%s148 + $0x350] sm:$0xff]
                %171 = vst [vmem:[%s149 + $0x50] sm:$0xff] %v170
                %v172 = vld [vmem:[%s148 + $0x358] sm:$0xff]
                %173 = vst [vmem:[%s149 + $0x58] sm:$0xff] %v172
                %v174 = vld [vmem:[%s148 + $0x4e0] sm:$0xff]
                %175 = vst [vmem:[%s149 + $0x60] sm:$0xff] %v174
                %v176 = vld [vmem:[%s148 + $0x4e8] sm:$0xff]
                %177 = vst [vmem:[%s149 + $0x68] sm:$0xff] %v176
                %v178 = vld [vmem:[%s148 + $0x4f0] sm:$0xff]
                %179 = vst [vmem:[%s149 + $0x70] sm:$0xff] %v178
                %v180 = vld [vmem:[%s148 + $0x4f8] sm:$0xff]
                %181 = vst [vmem:[%s149 + $0x78] sm:$0xff] %v180
                %v182 = vld [vmem:[%s148 + $0x680] sm:$0xff]
                %183 = vst [vmem:[%s149 + $0x80] sm:$0xff] %v182
                %v184 = vld [vmem:[%s148 + $0x688] sm:$0xff]
                %185 = vst [vmem:[%s149 + $0x88] sm:$0xff] %v184
                %v186 = vld [vmem:[%s148 + $0x690] sm:$0xff]
                %187 = vst [vmem:[%s149 + $0x90] sm:$0xff] %v186
                %v188 = vld [vmem:[%s148 + $0x698] sm:$0xff]
                %189 = vst [vmem:[%s149 + $0x98] sm:$0xff] %v188
                %v190 = vld [vmem:[%s148 + $0x820] sm:$0xff]
                %191 = vst [vmem:[%s149 + $0xa0] sm:$0xff] %v190
                %v192 = vld [vmem:[%s148 + $0x828] sm:$0xff]
                %193 = vst [vmem:[%s149 + $0xa8] sm:$0xff] %v192
                %v194 = vld [vmem:[%s148 + $0x830] sm:$0xff]
                %195 = vst [vmem:[%s149 + $0xb0] sm:$0xff] %v194
                %v196 = vld [vmem:[%s148 + $0x838] sm:$0xff]
                %197 = vst [vmem:[%s149 + $0xb8] sm:$0xff] %v196
                %v198 = vld [vmem:[%s148 + $0x9c0] sm:$0xff]
                %199 = vst [vmem:[%s149 + $0xc0] sm:$0xff] %v198
                %v200 = vld [vmem:[%s148 + $0x9c8] sm:$0xff]
                %201 = vst [vmem:[%s149 + $0xc8] sm:$0xff] %v200
                %v202 = vld [vmem:[%s148 + $0x9d0] sm:$0xff]
                %203 = vst [vmem:[%s149 + $0xd0] sm:$0xff] %v202
                %v204 = vld [vmem:[%s148 + $0x9d8] sm:$0xff]
                %205 = vst [vmem:[%s149 + $0xd8] sm:$0xff] %v204
                %v206 = vld [vmem:[%s148 + $0xb60] sm:$0xff]
                %207 = vst [vmem:[%s149 + $0xe0] sm:$0xff] %v206
                %v208 = vld [vmem:[%s148 + $0xb68] sm:$0xff]
                %209 = vst [vmem:[%s149 + $0xe8] sm:$0xff] %v208
                %v210 = vld [vmem:[%s148 + $0xb70] sm:$0xff]
                %211 = vst [vmem:[%s149 + $0xf0] sm:$0xff] %v210
                %v212 = vld [vmem:[%s148 + $0xb78] sm:$0xff]
                %213 = vst [vmem:[%s149 + $0xf8] sm:$0xff] %v212
                %v214 = vld [vmem:[%s148 + $0xd00] sm:$0xff]
                %215 = vst [vmem:[%s149 + $0x100] sm:$0xff] %v214
                %v216 = vld [vmem:[%s148 + $0xd08] sm:$0xff]
                %217 = vst [vmem:[%s149 + $0x108] sm:$0xff] %v216
                %v218 = vld [vmem:[%s148 + $0xd10] sm:$0xff]
                %219 = vst [vmem:[%s149 + $0x110] sm:$0xff] %v218
                %v220 = vld [vmem:[%s148 + $0xd18] sm:$0xff]
                %221 = vst [vmem:[%s149 + $0x118] sm:$0xff] %v220
                %v222 = vld [vmem:[%s148 + $0xea0] sm:$0xff]
                %223 = vst [vmem:[%s149 + $0x120] sm:$0xff] %v222
                %v224 = vld [vmem:[%s148 + $0xea8] sm:$0xff]
                %225 = vst [vmem:[%s149 + $0x128] sm:$0xff] %v224
                %v226 = vld [vmem:[%s148 + $0xeb0] sm:$0xff]
                %227 = vst [vmem:[%s149 + $0x130] sm:$0xff] %v226
                %v228 = vld [vmem:[%s148 + $0xeb8] sm:$0xff]
                %229 = vst [vmem:[%s149 + $0x138] sm:$0xff] %v228
                %v230 = vld [vmem:[%s148 + $0x1040] sm:$0xff]
                %231 = vst [vmem:[%s149 + $0x140] sm:$0xff] %v230
                %v232 = vld [vmem:[%s148 + $0x1048] sm:$0xff]
                %233 = vst [vmem:[%s149 + $0x148] sm:$0xff] %v232
                %v234 = vld [vmem:[%s148 + $0x1050] sm:$0xff]
                %235 = vst [vmem:[%s149 + $0x150] sm:$0xff] %v234
                %v236 = vld [vmem:[%s148 + $0x1058] sm:$0xff]
                %237 = vst [vmem:[%s149 + $0x158] sm:$0xff] %v236
                %v238 = vld [vmem:[%s148 + $0x11e0] sm:$0xff]
                %239 = vst [vmem:[%s149 + $0x160] sm:$0xff] %v238
                %v240 = vld [vmem:[%s148 + $0x11e8] sm:$0xff]
                %241 = vst [vmem:[%s149 + $0x168] sm:$0xff] %v240
                %v242 = vld [vmem:[%s148 + $0x11f0] sm:$0xff]
                %243 = vst [vmem:[%s149 + $0x170] sm:$0xff] %v242
                %v244 = vld [vmem:[%s148 + $0x11f8] sm:$0xff]
                %245 = vst [vmem:[%s149 + $0x178] sm:$0xff] %v244
                %v246 = vld [vmem:[%s148 + $0x1380] sm:$0xff]
                %247 = vst [vmem:[%s149 + $0x180] sm:$0xff] %v246
                %v248 = vld [vmem:[%s148 + $0x1388] sm:$0xff]
                %249 = vst [vmem:[%s149 + $0x188] sm:$0xff] %v248
                %v250 = vld [vmem:[%s148 + $0x1390] sm:$0xff]
                %251 = vst [vmem:[%s149 + $0x190] sm:$0xff] %v250
                %v252 = vld [vmem:[%s148 + $0x1398] sm:$0xff]
                %253 = vst [vmem:[%s149 + $0x198] sm:$0xff] %v252
                %v254 = vld [vmem:[%s148 + $0x1520] sm:$0xff]
                %255 = vst [vmem:[%s149 + $0x1a0] sm:$0xff] %v254
                %v256 = vld [vmem:[%s148 + $0x1528] sm:$0xff]
                %257 = vst [vmem:[%s149 + $0x1a8] sm:$0xff] %v256
                %v258 = vld [vmem:[%s148 + $0x1530] sm:$0xff]
                %259 = vst [vmem:[%s149 + $0x1b0] sm:$0xff] %v258
                %v260 = vld [vmem:[%s148 + $0x1538] sm:$0xff]
                %261 = vst [vmem:[%s149 + $0x1b8] sm:$0xff] %v260
                %v262 = vld [vmem:[%s148 + $0x16c0] sm:$0xff]
                %263 = vst [vmem:[%s149 + $0x1c0] sm:$0xff] %v262
                %v264 = vld [vmem:[%s148 + $0x16c8] sm:$0xff]
                %265 = vst [vmem:[%s149 + $0x1c8] sm:$0xff] %v264
                %v266 = vld [vmem:[%s148 + $0x16d0] sm:$0xff]
                %267 = vst [vmem:[%s149 + $0x1d0] sm:$0xff] %v266
                %v268 = vld [vmem:[%s148 + $0x16d8] sm:$0xff]
                %269 = vst [vmem:[%s149 + $0x1d8] sm:$0xff] %v268
                %v270 = vld [vmem:[%s148 + $0x1860] sm:$0xff]
                %271 = vst [vmem:[%s149 + $0x1e0] sm:$0xff] %v270
                %v272 = vld [vmem:[%s148 + $0x1868] sm:$0xff]
                %273 = vst [vmem:[%s149 + $0x1e8] sm:$0xff] %v272
                %v274 = vld [vmem:[%s148 + $0x1870] sm:$0xff]
                %275 = vst [vmem:[%s149 + $0x1f0] sm:$0xff] %v274
                %v276 = vld [vmem:[%s148 + $0x1878] sm:$0xff]
                %277 = vst [vmem:[%s149 + $0x1f8] sm:$0xff] %v276
                %v278 = vld [vmem:[%s148 + $0x1a00] sm:$0xff]
                %279 = vst [vmem:[%s149 + $0x200] sm:$0xff] %v278
                %v280 = vld [vmem:[%s148 + $0x1a08] sm:$0xff]
                %281 = vst [vmem:[%s149 + $0x208] sm:$0xff] %v280
                %v282 = vld [vmem:[%s148 + $0x1a10] sm:$0xff]
                %283 = vst [vmem:[%s149 + $0x210] sm:$0xff] %v282
                %v284 = vld [vmem:[%s148 + $0x1a18] sm:$0xff]
                %285 = vst [vmem:[%s149 + $0x218] sm:$0xff] %v284
                %v286 = vld [vmem:[%s148 + $0x1ba0] sm:$0xff]
                %287 = vst [vmem:[%s149 + $0x220] sm:$0xff] %v286
                %v288 = vld [vmem:[%s148 + $0x1ba8] sm:$0xff]
                %289 = vst [vmem:[%s149 + $0x228] sm:$0xff] %v288
                %v290 = vld [vmem:[%s148 + $0x1bb0] sm:$0xff]
                %291 = vst [vmem:[%s149 + $0x230] sm:$0xff] %v290
                %v292 = vld [vmem:[%s148 + $0x1bb8] sm:$0xff]
                %293 = vst [vmem:[%s149 + $0x238] sm:$0xff] %v292
                %v294 = vld [vmem:[%s148 + $0x1d40] sm:$0xff]
                %295 = vst [vmem:[%s149 + $0x240] sm:$0xff] %v294
                %v296 = vld [vmem:[%s148 + $0x1d48] sm:$0xff]
                %297 = vst [vmem:[%s149 + $0x248] sm:$0xff] %v296
                %v298 = vld [vmem:[%s148 + $0x1d50] sm:$0xff]
                %299 = vst [vmem:[%s149 + $0x250] sm:$0xff] %v298
                %v300 = vld [vmem:[%s148 + $0x1d58] sm:$0xff]
                %301 = vst [vmem:[%s149 + $0x258] sm:$0xff] %v300
                %v302 = vld [vmem:[%s148 + $0x1ee0] sm:$0xff]
                %303 = vst [vmem:[%s149 + $0x260] sm:$0xff] %v302
                %v304 = vld [vmem:[%s148 + $0x1ee8] sm:$0xff]
                %305 = vst [vmem:[%s149 + $0x268] sm:$0xff] %v304
                %v306 = vld [vmem:[%s148 + $0x1ef0] sm:$0xff]
                %307 = vst [vmem:[%s149 + $0x270] sm:$0xff] %v306
                %v308 = vld [vmem:[%s148 + $0x1ef8] sm:$0xff]
                %309 = vst [vmem:[%s149 + $0x278] sm:$0xff] %v308
                %v310 = vld [vmem:[%s148 + $0x2080] sm:$0xff]
                %311 = vst [vmem:[%s149 + $0x280] sm:$0xff] %v310
                %v312 = vld [vmem:[%s148 + $0x2088] sm:$0xff]
                %313 = vst [vmem:[%s149 + $0x288] sm:$0xff] %v312
                %v314 = vld [vmem:[%s148 + $0x2090] sm:$0xff]
                %315 = vst [vmem:[%s149 + $0x290] sm:$0xff] %v314
                %v316 = vld [vmem:[%s148 + $0x2098] sm:$0xff]
                %317 = vst [vmem:[%s149 + $0x298] sm:$0xff] %v316
                %v318 = vld [vmem:[%s148 + $0x2220] sm:$0xff]
                %319 = vst [vmem:[%s149 + $0x2a0] sm:$0xff] %v318
                %v320 = vld [vmem:[%s148 + $0x2228] sm:$0xff]
                %321 = vst [vmem:[%s149 + $0x2a8] sm:$0xff] %v320
                %v322 = vld [vmem:[%s148 + $0x2230] sm:$0xff]
                %323 = vst [vmem:[%s149 + $0x2b0] sm:$0xff] %v322
                %v324 = vld [vmem:[%s148 + $0x2238] sm:$0xff]
                %325 = vst [vmem:[%s149 + $0x2b8] sm:$0xff] %v324
                %v326 = vld [vmem:[%s148 + $0x23c0] sm:$0xff]
                %327 = vst [vmem:[%s149 + $0x2c0] sm:$0xff] %v326
                %v328 = vld [vmem:[%s148 + $0x23c8] sm:$0xff]
                %329 = vst [vmem:[%s149 + $0x2c8] sm:$0xff] %v328
                %v330 = vld [vmem:[%s148 + $0x23d0] sm:$0xff]
                %331 = vst [vmem:[%s149 + $0x2d0] sm:$0xff] %v330
                %v332 = vld [vmem:[%s148 + $0x23d8] sm:$0xff]
                %333 = vst [vmem:[%s149 + $0x2d8] sm:$0xff] %v332
                %v334 = vld [vmem:[%s148 + $0x2560] sm:$0xff]
                %335 = vst [vmem:[%s149 + $0x2e0] sm:$0xff] %v334
                %v336 = vld [vmem:[%s148 + $0x2568] sm:$0xff]
                %337 = vst [vmem:[%s149 + $0x2e8] sm:$0xff] %v336
                %v338 = vld [vmem:[%s148 + $0x2570] sm:$0xff]
                %339 = vst [vmem:[%s149 + $0x2f0] sm:$0xff] %v338
                %v340 = vld [vmem:[%s148 + $0x2578] sm:$0xff]
                %341 = vst [vmem:[%s149 + $0x2f8] sm:$0xff] %v340
                %v342 = vld [vmem:[%s148 + $0x2700] sm:$0xff]
                %343 = vst [vmem:[%s149 + $0x300] sm:$0xff] %v342
                %v344 = vld [vmem:[%s148 + $0x2708] sm:$0xff]
                %345 = vst [vmem:[%s149 + $0x308] sm:$0xff] %v344
                %v346 = vld [vmem:[%s148 + $0x2710] sm:$0xff]
                %347 = vst [vmem:[%s149 + $0x310] sm:$0xff] %v346
                %v348 = vld [vmem:[%s148 + $0x2718] sm:$0xff]
                %349 = vst [vmem:[%s149 + $0x318] sm:$0xff] %v348
                %v350 = vld [vmem:[%s148 + $0x28a0] sm:$0xff]
                %351 = vst [vmem:[%s149 + $0x320] sm:$0xff] %v350
                %v352 = vld [vmem:[%s148 + $0x28a8] sm:$0xff]
                %353 = vst [vmem:[%s149 + $0x328] sm:$0xff] %v352
                %v354 = vld [vmem:[%s148 + $0x28b0] sm:$0xff]
                %355 = vst [vmem:[%s149 + $0x330] sm:$0xff] %v354
                %v356 = vld [vmem:[%s148 + $0x28b8] sm:$0xff]
                %357 = vst [vmem:[%s149 + $0x338] sm:$0xff] %v356
                %v358 = vld [vmem:[%s148 + $0x2a40] sm:$0xff]
                %359 = vst [vmem:[%s149 + $0x340] sm:$0xff] %v358
                %v360 = vld [vmem:[%s148 + $0x2a48] sm:$0xff]
                %361 = vst [vmem:[%s149 + $0x348] sm:$0xff] %v360
                %v362 = vld [vmem:[%s148 + $0x2a50] sm:$0xff]
                %363 = vst [vmem:[%s149 + $0x350] sm:$0xff] %v362
                %v364 = vld [vmem:[%s148 + $0x2a58] sm:$0xff]
                %365 = vst [vmem:[%s149 + $0x358] sm:$0xff] %v364
                %v366 = vld [vmem:[%s148 + $0x2be0] sm:$0xff]
                %367 = vst [vmem:[%s149 + $0x360] sm:$0xff] %v366
                %v368 = vld [vmem:[%s148 + $0x2be8] sm:$0xff]
                %369 = vst [vmem:[%s149 + $0x368] sm:$0xff] %v368
                %v370 = vld [vmem:[%s148 + $0x2bf0] sm:$0xff]
                %371 = vst [vmem:[%s149 + $0x370] sm:$0xff] %v370
                %v372 = vld [vmem:[%s148 + $0x2bf8] sm:$0xff]
                %373 = vst [vmem:[%s149 + $0x378] sm:$0xff] %v372
                %v374 = vld [vmem:[%s148 + $0x2d80] sm:$0xff]
                %375 = vst [vmem:[%s149 + $0x380] sm:$0xff] %v374
                %v376 = vld [vmem:[%s148 + $0x2d88] sm:$0xff]
                %377 = vst [vmem:[%s149 + $0x388] sm:$0xff] %v376
                %v378 = vld [vmem:[%s148 + $0x2d90] sm:$0xff]
                %379 = vst [vmem:[%s149 + $0x390] sm:$0xff] %v378
                %v380 = vld [vmem:[%s148 + $0x2d98] sm:$0xff]
                %381 = vst [vmem:[%s149 + $0x398] sm:$0xff] %v380
                %v382 = vld [vmem:[%s148 + $0x2f20] sm:$0xff]
                %383 = vst [vmem:[%s149 + $0x3a0] sm:$0xff] %v382
                %v384 = vld [vmem:[%s148 + $0x2f28] sm:$0xff]
                %385 = vst [vmem:[%s149 + $0x3a8] sm:$0xff] %v384
                %v386 = vld [vmem:[%s148 + $0x2f30] sm:$0xff]
                %387 = vst [vmem:[%s149 + $0x3b0] sm:$0xff] %v386
                %v388 = vld [vmem:[%s148 + $0x2f38] sm:$0xff]
                %389 = vst [vmem:[%s149 + $0x3b8] sm:$0xff] %v388
                %v390 = vld [vmem:[%s148 + $0x30c0] sm:$0xff]
                %391 = vst [vmem:[%s149 + $0x3c0] sm:$0xff] %v390
                %v392 = vld [vmem:[%s148 + $0x30c8] sm:$0xff]
                %393 = vst [vmem:[%s149 + $0x3c8] sm:$0xff] %v392
                %v394 = vld [vmem:[%s148 + $0x30d0] sm:$0xff]
                %395 = vst [vmem:[%s149 + $0x3d0] sm:$0xff] %v394
                %v396 = vld [vmem:[%s148 + $0x30d8] sm:$0xff]
                %397 = vst [vmem:[%s149 + $0x3d8] sm:$0xff] %v396
                %v398 = vld [vmem:[%s148 + $0x3260] sm:$0xff]
                %399 = vst [vmem:[%s149 + $0x3e0] sm:$0xff] %v398
                %v400 = vld [vmem:[%s148 + $0x3268] sm:$0xff]
                %401 = vst [vmem:[%s149 + $0x3e8] sm:$0xff] %v400
                %v402 = vld [vmem:[%s148 + $0x3270] sm:$0xff]
                %403 = vst [vmem:[%s149 + $0x3f0] sm:$0xff] %v402
                %v404 = vld [vmem:[%s148 + $0x3278] sm:$0xff]
                %405 = vst [vmem:[%s149 + $0x3f8] sm:$0xff] %v404
              $region41: #{forward.15} parent=35 // loop_footer
                %s147 = sadd.s32 1, %s143
              $region42: #{forward.15} parent=35 // loop_footer_branch
                %142 = sbr.rel target = $region38
              $region43: #{forward.15} parent=35 // loop_exit
                _
            $region36: #{forward.15} parent=31 // pred_fallthru
              _
            // Predicated region
            $region44: #{forward.15} parent=31 // pred_check
              _
            $region45: #{forward.15} parent=31 // pred_check_branch
              %407 = sbr.rel target = $region47
            $region46: #{forward.15} parent=31 // pred_region
              _
            $region47: #{forward.15} parent=31 // pred_fallthru
              _
          $region32: #{forward.15} parent=27 // pred_fallthru
            _
          %408 = vnop
        $region28: #{forward.15} parent=23 // pred_fallthru
          _
      $region24: #{forward.15} parent=5 // pred_fallthru
        _
      %p409 = scmp.le.s32.totalorder 1, %s9
      %p410 = scmp.lt.s32.totalorder %s9, 14
      %p411 = pnand %p409, %p410
      %p412 = pneg %p411
      // Predicated region
      $region48: #{forward.15} parent=5 // pred_check
        _
      $region49: #{forward.15} parent=5 // pred_check_branch
        %414 = sbr.rel (%p411) target = $region51
      $region50: #{forward.15} parent=5 // pred_region
        %s415 = ssub.s32 %s9, 1
        %s416 = sand.u32 %s43, 1
        %s417 = sand.u32 %s43, 1
        %s418 = smul.addr %s417, 1024
        %s419 = scalar_lea.vmem [#allocation2], %s418
        // Predicated region
        $region52: #{forward.15} parent=50 // pred_check
          %p420 = pneg %p56
        $region53: #{forward.15} parent=50 // pred_check_branch
          %422 = sbr.rel (%p420) target = $region55
        $region54: #{forward.15} parent=50 // pred_region
          _
        $region55: #{forward.15} parent=50 // pred_fallthru
          _
        %p423 = pneg %p30
        %p424 = pneg %p27
        %s425 = sand.u32 %s43, 1
        %s426 = sand.u32 %s43, 1
        %s427 = smul.addr %s426, 1024
        %s428 = scalar_lea.vmem [#allocation2], %s427
        %p429 = pneg %p56
        %p430 = pneg %p53
        %p431 = pneg %p77
        %p432 = pneg %p74
        %p433 = pneg %p103
        %p434 = pneg %p100
        %s435 = smul.u32 8, %s14
        %p436 = scmp.lt.s32.totalorder %s435, 103
        %s437 = scalar_select %p436, %s435, 103
        %s438 = smul.addr %s437, 8
        %s439 = scalar_lea.vmem %s3, %s438
        %s440 = smul.u32 8, %s14
        %s441 = smul.u32 8, %s14
        %p442 = scmp.lt.s32.totalorder %s441, 103
        %s443 = scalar_select %p442, %s441, 103
        %s444 = smul.addr %s443, 8
        %s445 = scalar_lea.vmem %s3, %s444
        %s446 = smul.u32 8, %s14
        %v447 = vld [vmem:[%s0] sm:$0xff]
        %v448 = vld [vmem:[%s419] sm:$0xff]
        %v449 = vld [vmem:[%s419 + $0x8] sm:$0xff]
        %v450 = vld [vmem:[%s419 + $0x10] sm:$0xff]
        %v451 = vld [vmem:[%s419 + $0x18] sm:$0xff]
        %v452 = vld [vmem:[%s419 + $0x20] sm:$0xff]
        %v453 = vld [vmem:[%s419 + $0x28] sm:$0xff]
        %v454 = vld [vmem:[%s419 + $0x30] sm:$0xff]
        %v455 = vld [vmem:[%s419 + $0x38] sm:$0xff]
        %v456 = vld [vmem:[%s419 + $0x40] sm:$0xff]
        %v457 = vld [vmem:[%s419 + $0x48] sm:$0xff]
        %v458 = vld [vmem:[%s419 + $0x50] sm:$0xff]
        %v459 = vld [vmem:[%s419 + $0x58] sm:$0xff]
        %v460 = vld [vmem:[%s419 + $0x60] sm:$0xff]
        %v461 = vld [vmem:[%s419 + $0x68] sm:$0xff]
        %v462 = vld [vmem:[%s419 + $0x70] sm:$0xff]
        %v463 = vld [vmem:[%s419 + $0x78] sm:$0xff]
        %v464 = vld [vmem:[%s419 + $0x80] sm:$0xff]
        %v465 = vld [vmem:[%s419 + $0x88] sm:$0xff]
        %v466 = vld [vmem:[%s419 + $0x90] sm:$0xff]
        %v467 = vld [vmem:[%s419 + $0x98] sm:$0xff]
        %v468 = vld [vmem:[%s419 + $0xa0] sm:$0xff]
        %v469 = vld [vmem:[%s419 + $0xa8] sm:$0xff]
        %v470 = vld [vmem:[%s419 + $0xb0] sm:$0xff]
        %v471 = vld [vmem:[%s419 + $0xb8] sm:$0xff]
        %v472 = vld [vmem:[%s419 + $0xc0] sm:$0xff]
        %v473 = vld [vmem:[%s419 + $0xc8] sm:$0xff]
        %v474 = vld [vmem:[%s419 + $0xd0] sm:$0xff]
        %v475 = vld [vmem:[%s419 + $0xd8] sm:$0xff]
        %v476 = vld [vmem:[%s419 + $0xe0] sm:$0xff]
        %v477 = vld [vmem:[%s419 + $0xe8] sm:$0xff]
        %v478 = vld [vmem:[%s419 + $0xf0] sm:$0xff]
        %v479 = vld [vmem:[%s419 + $0xf8] sm:$0xff]
        %v480 = vld [vmem:[%s419 + $0x100] sm:$0xff]
        %v481 = vld [vmem:[%s419 + $0x108] sm:$0xff]
        %v482 = vld [vmem:[%s419 + $0x110] sm:$0xff]
        %v483 = vld [vmem:[%s419 + $0x118] sm:$0xff]
        %v484 = vld [vmem:[%s419 + $0x120] sm:$0xff]
        %v485 = vld [vmem:[%s419 + $0x128] sm:$0xff]
        %v486 = vld [vmem:[%s419 + $0x130] sm:$0xff]
        %v487 = vld [vmem:[%s419 + $0x138] sm:$0xff]
        %v488 = vld [vmem:[%s419 + $0x140] sm:$0xff]
        %v489 = vld [vmem:[%s419 + $0x148] sm:$0xff]
        %v490 = vld [vmem:[%s419 + $0x150] sm:$0xff]
        %v491 = vld [vmem:[%s419 + $0x158] sm:$0xff]
        %v492 = vld [vmem:[%s419 + $0x160] sm:$0xff]
        %v493 = vld [vmem:[%s419 + $0x168] sm:$0xff]
        %v494 = vld [vmem:[%s419 + $0x170] sm:$0xff]
        %v495 = vld [vmem:[%s419 + $0x178] sm:$0xff]
        %v496 = vld [vmem:[%s419 + $0x180] sm:$0xff]
        %v497 = vld [vmem:[%s419 + $0x188] sm:$0xff]
        %v498 = vld [vmem:[%s419 + $0x190] sm:$0xff]
        %v499 = vld [vmem:[%s419 + $0x198] sm:$0xff]
        %v500 = vld [vmem:[%s419 + $0x1a0] sm:$0xff]
        %v501 = vld [vmem:[%s419 + $0x1a8] sm:$0xff]
        %v502 = vld [vmem:[%s419 + $0x1b0] sm:$0xff]
        %v503 = vld [vmem:[%s419 + $0x1b8] sm:$0xff]
        %v504 = vld [vmem:[%s419 + $0x1c0] sm:$0xff]
        %v505 = vld [vmem:[%s419 + $0x1c8] sm:$0xff]
        %v506 = vld [vmem:[%s419 + $0x1d0] sm:$0xff]
        %v507 = vld [vmem:[%s419 + $0x1d8] sm:$0xff]
        %v508 = vld [vmem:[%s419 + $0x1e0] sm:$0xff]
        %v509 = vld [vmem:[%s419 + $0x1e8] sm:$0xff]
        %v510 = vld [vmem:[%s419 + $0x1f0] sm:$0xff]
        %v511 = vld [vmem:[%s419 + $0x1f8] sm:$0xff]
        %v512 = vld [vmem:[%s419 + $0x200] sm:$0xff]
        %v513 = vld [vmem:[%s419 + $0x208] sm:$0xff]
        %v514 = vld [vmem:[%s419 + $0x210] sm:$0xff]
        %v515 = vld [vmem:[%s419 + $0x218] sm:$0xff]
        %v516 = vld [vmem:[%s419 + $0x220] sm:$0xff]
        %v517 = vld [vmem:[%s419 + $0x228] sm:$0xff]
        %v518 = vld [vmem:[%s419 + $0x230] sm:$0xff]
        %v519 = vld [vmem:[%s419 + $0x238] sm:$0xff]
        %v520 = vld [vmem:[%s419 + $0x240] sm:$0xff]
        %v521 = vld [vmem:[%s419 + $0x248] sm:$0xff]
        %v522 = vld [vmem:[%s419 + $0x250] sm:$0xff]
        %v523 = vld [vmem:[%s419 + $0x258] sm:$0xff]
        %v524 = vld [vmem:[%s419 + $0x260] sm:$0xff]
        %v525 = vld [vmem:[%s419 + $0x268] sm:$0xff]
        %v526 = vld [vmem:[%s419 + $0x270] sm:$0xff]
        %v527 = vld [vmem:[%s419 + $0x278] sm:$0xff]
        %v528 = vld [vmem:[%s419 + $0x280] sm:$0xff]
        %v529 = vld [vmem:[%s419 + $0x288] sm:$0xff]
        %v530 = vld [vmem:[%s419 + $0x290] sm:$0xff]
        %v531 = vld [vmem:[%s419 + $0x298] sm:$0xff]
        %v532 = vld [vmem:[%s419 + $0x2a0] sm:$0xff]
        %v533 = vld [vmem:[%s419 + $0x2a8] sm:$0xff]
        %v534 = vld [vmem:[%s419 + $0x2b0] sm:$0xff]
        %v535 = vld [vmem:[%s419 + $0x2b8] sm:$0xff]
        %v536 = vld [vmem:[%s419 + $0x2c0] sm:$0xff]
        %v537 = vld [vmem:[%s419 + $0x2c8] sm:$0xff]
        %v538 = vld [vmem:[%s419 + $0x2d0] sm:$0xff]
        %v539 = vld [vmem:[%s419 + $0x2d8] sm:$0xff]
        %v540 = vld [vmem:[%s419 + $0x2e0] sm:$0xff]
        %v541 = vld [vmem:[%s419 + $0x2e8] sm:$0xff]
        %v542 = vld [vmem:[%s419 + $0x2f0] sm:$0xff]
        %v543 = vld [vmem:[%s419 + $0x2f8] sm:$0xff]
        %v544 = vld [vmem:[%s419 + $0x300] sm:$0xff]
        %v545 = vld [vmem:[%s419 + $0x308] sm:$0xff]
        %v546 = vld [vmem:[%s419 + $0x310] sm:$0xff]
        %v547 = vld [vmem:[%s419 + $0x318] sm:$0xff]
        %v548 = vld [vmem:[%s419 + $0x320] sm:$0xff]
        %v549 = vld [vmem:[%s419 + $0x328] sm:$0xff]
        %v550 = vld [vmem:[%s419 + $0x330] sm:$0xff]
        %v551 = vld [vmem:[%s419 + $0x338] sm:$0xff]
        %v552 = vld [vmem:[%s419 + $0x340] sm:$0xff]
        %v553 = vld [vmem:[%s419 + $0x348] sm:$0xff]
        %v554 = vld [vmem:[%s419 + $0x350] sm:$0xff]
        %v555 = vld [vmem:[%s419 + $0x358] sm:$0xff]
        %v556 = vld [vmem:[%s419 + $0x360] sm:$0xff]
        %v557 = vld [vmem:[%s419 + $0x368] sm:$0xff]
        %v558 = vld [vmem:[%s419 + $0x370] sm:$0xff]
        %v559 = vld [vmem:[%s419 + $0x378] sm:$0xff]
        %v560 = vld [vmem:[%s419 + $0x380] sm:$0xff]
        %v561 = vld [vmem:[%s419 + $0x388] sm:$0xff]
        %v562 = vld [vmem:[%s419 + $0x390] sm:$0xff]
        %v563 = vld [vmem:[%s419 + $0x398] sm:$0xff]
        %v564 = vld [vmem:[%s419 + $0x3a0] sm:$0xff]
        %v565 = vld [vmem:[%s419 + $0x3a8] sm:$0xff]
        %v566 = vld [vmem:[%s419 + $0x3b0] sm:$0xff]
        %v567 = vld [vmem:[%s419 + $0x3b8] sm:$0xff]
        %v568 = vld [vmem:[%s419 + $0x3c0] sm:$0xff]
        %v569 = vld [vmem:[%s419 + $0x3c8] sm:$0xff]
        %v570 = vld [vmem:[%s419 + $0x3d0] sm:$0xff]
        %v571 = vld [vmem:[%s419 + $0x3d8] sm:$0xff]
        %v572 = vld [vmem:[%s419 + $0x3e0] sm:$0xff]
        %v573 = vld [vmem:[%s419 + $0x3e8] sm:$0xff]
        %v574 = vld [vmem:[%s419 + $0x3f0] sm:$0xff]
        %v575 = vld [vmem:[%s419 + $0x3f8] sm:$0xff]
        %v576 = vld [vmem:[%s2] sm:$0xff]
        %578 = vset.pattern.permute.xlu0 0
        %579 = vperm.xlu0 %578, %v576
        %v580 = vpop.permute.xlu0 %579
        %v583 = vunpack.c.l.b16 %v447
        %v584 = vunpack.c.h.b16 %v447
        %v585 = vpack.c.b16 %v583, %v583
        %v586 = vpack.c.b16 %v584, %v584
        %v717 = vunpack.c.l.b16 %v448
        %v718 = vunpack.c.h.b16 %v448
        %v719 = vunpack.c.l.b16 %v449
        %v720 = vunpack.c.h.b16 %v449
        %v721 = vunpack.c.l.b16 %v450
        %v722 = vunpack.c.h.b16 %v450
        %v723 = vunpack.c.l.b16 %v451
        %v724 = vunpack.c.h.b16 %v451
        %v725 = vunpack.c.l.b16 %v452
        %v726 = vunpack.c.h.b16 %v452
        %v727 = vunpack.c.l.b16 %v453
        %v728 = vunpack.c.h.b16 %v453
        %v729 = vunpack.c.l.b16 %v454
        %v730 = vunpack.c.h.b16 %v454
        %v731 = vunpack.c.l.b16 %v455
        %v732 = vunpack.c.h.b16 %v455
        %v733 = vunpack.c.l.b16 %v456
        %v734 = vunpack.c.h.b16 %v456
        %v735 = vunpack.c.l.b16 %v457
        %v736 = vunpack.c.h.b16 %v457
        %v737 = vunpack.c.l.b16 %v458
        %v738 = vunpack.c.h.b16 %v458
        %v739 = vunpack.c.l.b16 %v459
        %v740 = vunpack.c.h.b16 %v459
        %v741 = vunpack.c.l.b16 %v460
        %v742 = vunpack.c.h.b16 %v460
        %v743 = vunpack.c.l.b16 %v461
        %v744 = vunpack.c.h.b16 %v461
        %v745 = vunpack.c.l.b16 %v462
        %v746 = vunpack.c.h.b16 %v462
        %v747 = vunpack.c.l.b16 %v463
        %v748 = vunpack.c.h.b16 %v463
        %v749 = vunpack.c.l.b16 %v464
        %v750 = vunpack.c.h.b16 %v464
        %v751 = vunpack.c.l.b16 %v465
        %v752 = vunpack.c.h.b16 %v465
        %v753 = vunpack.c.l.b16 %v466
        %v754 = vunpack.c.h.b16 %v466
        %v755 = vunpack.c.l.b16 %v467
        %v756 = vunpack.c.h.b16 %v467
        %v757 = vunpack.c.l.b16 %v468
        %v758 = vunpack.c.h.b16 %v468
        %v759 = vunpack.c.l.b16 %v469
        %v760 = vunpack.c.h.b16 %v469
        %v761 = vunpack.c.l.b16 %v470
        %v762 = vunpack.c.h.b16 %v470
        %v763 = vunpack.c.l.b16 %v471
        %v764 = vunpack.c.h.b16 %v471
        %v765 = vunpack.c.l.b16 %v472
        %v766 = vunpack.c.h.b16 %v472
        %v767 = vunpack.c.l.b16 %v473
        %v768 = vunpack.c.h.b16 %v473
        %v769 = vunpack.c.l.b16 %v474
        %v770 = vunpack.c.h.b16 %v474
        %v771 = vunpack.c.l.b16 %v475
        %v772 = vunpack.c.h.b16 %v475
        %v773 = vunpack.c.l.b16 %v476
        %v774 = vunpack.c.h.b16 %v476
        %v775 = vunpack.c.l.b16 %v477
        %v776 = vunpack.c.h.b16 %v477
        %v777 = vunpack.c.l.b16 %v478
        %v778 = vunpack.c.h.b16 %v478
        %v779 = vunpack.c.l.b16 %v479
        %v780 = vunpack.c.h.b16 %v479
        %v781 = vunpack.c.l.b16 %v480
        %v782 = vunpack.c.h.b16 %v480
        %v783 = vunpack.c.l.b16 %v481
        %v784 = vunpack.c.h.b16 %v481
        %v785 = vunpack.c.l.b16 %v482
        %v786 = vunpack.c.h.b16 %v482
        %v787 = vunpack.c.l.b16 %v483
        %v788 = vunpack.c.h.b16 %v483
        %v789 = vunpack.c.l.b16 %v484
        %v790 = vunpack.c.h.b16 %v484
        %v791 = vunpack.c.l.b16 %v485
        %v792 = vunpack.c.h.b16 %v485
        %v793 = vunpack.c.l.b16 %v486
        %v794 = vunpack.c.h.b16 %v486
        %v795 = vunpack.c.l.b16 %v487
        %v796 = vunpack.c.h.b16 %v487
        %v797 = vunpack.c.l.b16 %v488
        %v798 = vunpack.c.h.b16 %v488
        %v799 = vunpack.c.l.b16 %v489
        %v800 = vunpack.c.h.b16 %v489
        %v801 = vunpack.c.l.b16 %v490
        %v802 = vunpack.c.h.b16 %v490
        %v803 = vunpack.c.l.b16 %v491
        %v804 = vunpack.c.h.b16 %v491
        %v805 = vunpack.c.l.b16 %v492
        %v806 = vunpack.c.h.b16 %v492
        %v807 = vunpack.c.l.b16 %v493
        %v808 = vunpack.c.h.b16 %v493
        %v809 = vunpack.c.l.b16 %v494
        %v810 = vunpack.c.h.b16 %v494
        %v811 = vunpack.c.l.b16 %v495
        %v812 = vunpack.c.h.b16 %v495
        %v813 = vunpack.c.l.b16 %v496
        %v814 = vunpack.c.h.b16 %v496
        %v815 = vunpack.c.l.b16 %v497
        %v816 = vunpack.c.h.b16 %v497
        %v817 = vunpack.c.l.b16 %v498
        %v818 = vunpack.c.h.b16 %v498
        %v819 = vunpack.c.l.b16 %v499
        %v820 = vunpack.c.h.b16 %v499
        %v821 = vunpack.c.l.b16 %v500
        %v822 = vunpack.c.h.b16 %v500
        %v823 = vunpack.c.l.b16 %v501
        %v824 = vunpack.c.h.b16 %v501
        %v825 = vunpack.c.l.b16 %v502
        %v826 = vunpack.c.h.b16 %v502
        %v827 = vunpack.c.l.b16 %v503
        %v828 = vunpack.c.h.b16 %v503
        %v829 = vunpack.c.l.b16 %v504
        %v830 = vunpack.c.h.b16 %v504
        %v831 = vunpack.c.l.b16 %v505
        %v832 = vunpack.c.h.b16 %v505
        %v833 = vunpack.c.l.b16 %v506
        %v834 = vunpack.c.h.b16 %v506
        %v835 = vunpack.c.l.b16 %v507
        %v836 = vunpack.c.h.b16 %v507
        %v837 = vunpack.c.l.b16 %v508
        %v838 = vunpack.c.h.b16 %v508
        %v839 = vunpack.c.l.b16 %v509
        %v840 = vunpack.c.h.b16 %v509
        %v841 = vunpack.c.l.b16 %v510
        %v842 = vunpack.c.h.b16 %v510
        %v843 = vunpack.c.l.b16 %v511
        %v844 = vunpack.c.h.b16 %v511
        %v845 = vunpack.c.l.b16 %v512
        %v846 = vunpack.c.h.b16 %v512
        %v847 = vunpack.c.l.b16 %v513
        %v848 = vunpack.c.h.b16 %v513
        %v849 = vunpack.c.l.b16 %v514
        %v850 = vunpack.c.h.b16 %v514
        %v851 = vunpack.c.l.b16 %v515
        %v852 = vunpack.c.h.b16 %v515
        %v853 = vunpack.c.l.b16 %v516
        %v854 = vunpack.c.h.b16 %v516
        %v855 = vunpack.c.l.b16 %v517
        %v856 = vunpack.c.h.b16 %v517
        %v857 = vunpack.c.l.b16 %v518
        %v858 = vunpack.c.h.b16 %v518
        %v859 = vunpack.c.l.b16 %v519
        %v860 = vunpack.c.h.b16 %v519
        %v861 = vunpack.c.l.b16 %v520
        %v862 = vunpack.c.h.b16 %v520
        %v863 = vunpack.c.l.b16 %v521
        %v864 = vunpack.c.h.b16 %v521
        %v865 = vunpack.c.l.b16 %v522
        %v866 = vunpack.c.h.b16 %v522
        %v867 = vunpack.c.l.b16 %v523
        %v868 = vunpack.c.h.b16 %v523
        %v869 = vunpack.c.l.b16 %v524
        %v870 = vunpack.c.h.b16 %v524
        %v871 = vunpack.c.l.b16 %v525
        %v872 = vunpack.c.h.b16 %v525
        %v873 = vunpack.c.l.b16 %v526
        %v874 = vunpack.c.h.b16 %v526
        %v875 = vunpack.c.l.b16 %v527
        %v876 = vunpack.c.h.b16 %v527
        %v877 = vunpack.c.l.b16 %v528
        %v878 = vunpack.c.h.b16 %v528
        %v879 = vunpack.c.l.b16 %v529
        %v880 = vunpack.c.h.b16 %v529
        %v881 = vunpack.c.l.b16 %v530
        %v882 = vunpack.c.h.b16 %v530
        %v883 = vunpack.c.l.b16 %v531
        %v884 = vunpack.c.h.b16 %v531
        %v885 = vunpack.c.l.b16 %v532
        %v886 = vunpack.c.h.b16 %v532
        %v887 = vunpack.c.l.b16 %v533
        %v888 = vunpack.c.h.b16 %v533
        %v889 = vunpack.c.l.b16 %v534
        %v890 = vunpack.c.h.b16 %v534
        %v891 = vunpack.c.l.b16 %v535
        %v892 = vunpack.c.h.b16 %v535
        %v893 = vunpack.c.l.b16 %v536
        %v894 = vunpack.c.h.b16 %v536
        %v895 = vunpack.c.l.b16 %v537
        %v896 = vunpack.c.h.b16 %v537
        %v897 = vunpack.c.l.b16 %v538
        %v898 = vunpack.c.h.b16 %v538
        %v899 = vunpack.c.l.b16 %v539
        %v900 = vunpack.c.h.b16 %v539
        %v901 = vunpack.c.l.b16 %v540
        %v902 = vunpack.c.h.b16 %v540
        %v903 = vunpack.c.l.b16 %v541
        %v904 = vunpack.c.h.b16 %v541
        %v905 = vunpack.c.l.b16 %v542
        %v906 = vunpack.c.h.b16 %v542
        %v907 = vunpack.c.l.b16 %v543
        %v908 = vunpack.c.h.b16 %v543
        %v909 = vunpack.c.l.b16 %v544
        %v910 = vunpack.c.h.b16 %v544
        %v911 = vunpack.c.l.b16 %v545
        %v912 = vunpack.c.h.b16 %v545
        %v913 = vunpack.c.l.b16 %v546
        %v914 = vunpack.c.h.b16 %v546
        %v915 = vunpack.c.l.b16 %v547
        %v916 = vunpack.c.h.b16 %v547
        %v917 = vunpack.c.l.b16 %v548
        %v918 = vunpack.c.h.b16 %v548
        %v919 = vunpack.c.l.b16 %v549
        %v920 = vunpack.c.h.b16 %v549
        %v921 = vunpack.c.l.b16 %v550
        %v922 = vunpack.c.h.b16 %v550
        %v923 = vunpack.c.l.b16 %v551
        %v924 = vunpack.c.h.b16 %v551
        %v925 = vunpack.c.l.b16 %v552
        %v926 = vunpack.c.h.b16 %v552
        %v927 = vunpack.c.l.b16 %v553
        %v928 = vunpack.c.h.b16 %v553
        %v929 = vunpack.c.l.b16 %v554
        %v930 = vunpack.c.h.b16 %v554
        %v931 = vunpack.c.l.b16 %v555
        %v932 = vunpack.c.h.b16 %v555
        %v933 = vunpack.c.l.b16 %v556
        %v934 = vunpack.c.h.b16 %v556
        %v935 = vunpack.c.l.b16 %v557
        %v936 = vunpack.c.h.b16 %v557
        %v937 = vunpack.c.l.b16 %v558
        %v938 = vunpack.c.h.b16 %v558
        %v939 = vunpack.c.l.b16 %v559
        %v940 = vunpack.c.h.b16 %v559
        %v941 = vunpack.c.l.b16 %v560
        %v942 = vunpack.c.h.b16 %v560
        %v943 = vunpack.c.l.b16 %v561
        %v944 = vunpack.c.h.b16 %v561
        %v945 = vunpack.c.l.b16 %v562
        %v946 = vunpack.c.h.b16 %v562
        %v947 = vunpack.c.l.b16 %v563
        %v948 = vunpack.c.h.b16 %v563
        %v949 = vunpack.c.l.b16 %v564
        %v950 = vunpack.c.h.b16 %v564
        %v951 = vunpack.c.l.b16 %v565
        %v952 = vunpack.c.h.b16 %v565
        %v953 = vunpack.c.l.b16 %v566
        %v954 = vunpack.c.h.b16 %v566
        %v955 = vunpack.c.l.b16 %v567
        %v956 = vunpack.c.h.b16 %v567
        %v957 = vunpack.c.l.b16 %v568
        %v958 = vunpack.c.h.b16 %v568
        %v959 = vunpack.c.l.b16 %v569
        %v960 = vunpack.c.h.b16 %v569
        %v961 = vunpack.c.l.b16 %v570
        %v962 = vunpack.c.h.b16 %v570
        %v963 = vunpack.c.l.b16 %v571
        %v964 = vunpack.c.h.b16 %v571
        %v965 = vunpack.c.l.b16 %v572
        %v966 = vunpack.c.h.b16 %v572
        %v967 = vunpack.c.l.b16 %v573
        %v968 = vunpack.c.h.b16 %v573
        %v969 = vunpack.c.l.b16 %v574
        %v970 = vunpack.c.h.b16 %v574
        %v971 = vunpack.c.l.b16 %v575
        %v972 = vunpack.c.h.b16 %v575
        %v973 = vpack.c.b16 %v725, %v717
        %v974 = vpack.c.b16 %v726, %v718
        %v975 = vpack.c.b16 %v727, %v719
        %v976 = vpack.c.b16 %v728, %v720
        %v977 = vpack.c.b16 %v729, %v721
        %v978 = vpack.c.b16 %v730, %v722
        %v979 = vpack.c.b16 %v731, %v723
        %v980 = vpack.c.b16 %v732, %v724
        %v981 = vpack.c.b16 %v741, %v733
        %v982 = vpack.c.b16 %v742, %v734
        %v983 = vpack.c.b16 %v743, %v735
        %v984 = vpack.c.b16 %v744, %v736
        %v985 = vpack.c.b16 %v745, %v737
        %v986 = vpack.c.b16 %v746, %v738
        %v987 = vpack.c.b16 %v747, %v739
        %v988 = vpack.c.b16 %v748, %v740
        %v989 = vpack.c.b16 %v757, %v749
        %v990 = vpack.c.b16 %v758, %v750
        %v991 = vpack.c.b16 %v759, %v751
        %v992 = vpack.c.b16 %v760, %v752
        %v993 = vpack.c.b16 %v761, %v753
        %v994 = vpack.c.b16 %v762, %v754
        %v995 = vpack.c.b16 %v763, %v755
        %v996 = vpack.c.b16 %v764, %v756
        %v997 = vpack.c.b16 %v773, %v765
        %v998 = vpack.c.b16 %v774, %v766
        %v999 = vpack.c.b16 %v775, %v767
        %v1000 = vpack.c.b16 %v776, %v768
        %v1001 = vpack.c.b16 %v777, %v769
        %v1002 = vpack.c.b16 %v778, %v770
        %v1003 = vpack.c.b16 %v779, %v771
        %v1004 = vpack.c.b16 %v780, %v772
        %v1005 = vpack.c.b16 %v789, %v781
        %v1006 = vpack.c.b16 %v790, %v782
        %v1007 = vpack.c.b16 %v791, %v783
        %v1008 = vpack.c.b16 %v792, %v784
        %v1009 = vpack.c.b16 %v793, %v785
        %v1010 = vpack.c.b16 %v794, %v786
        %v1011 = vpack.c.b16 %v795, %v787
        %v1012 = vpack.c.b16 %v796, %v788
        %v1013 = vpack.c.b16 %v805, %v797
        %v1014 = vpack.c.b16 %v806, %v798
        %v1015 = vpack.c.b16 %v807, %v799
        %v1016 = vpack.c.b16 %v808, %v800
        %v1017 = vpack.c.b16 %v809, %v801
        %v1018 = vpack.c.b16 %v810, %v802
        %v1019 = vpack.c.b16 %v811, %v803
        %v1020 = vpack.c.b16 %v812, %v804
        %v1021 = vpack.c.b16 %v821, %v813
        %v1022 = vpack.c.b16 %v822, %v814
        %v1023 = vpack.c.b16 %v823, %v815
        %v1024 = vpack.c.b16 %v824, %v816
        %v1025 = vpack.c.b16 %v825, %v817
        %v1026 = vpack.c.b16 %v826, %v818
        %v1027 = vpack.c.b16 %v827, %v819
        %v1028 = vpack.c.b16 %v828, %v820
        %v1029 = vpack.c.b16 %v837, %v829
        %v1030 = vpack.c.b16 %v838, %v830
        %v1031 = vpack.c.b16 %v839, %v831
        %v1032 = vpack.c.b16 %v840, %v832
        %v1033 = vpack.c.b16 %v841, %v833
        %v1034 = vpack.c.b16 %v842, %v834
        %v1035 = vpack.c.b16 %v843, %v835
        %v1036 = vpack.c.b16 %v844, %v836
        %v1037 = vpack.c.b16 %v853, %v845
        %v1038 = vpack.c.b16 %v854, %v846
        %v1039 = vpack.c.b16 %v855, %v847
        %v1040 = vpack.c.b16 %v856, %v848
        %v1041 = vpack.c.b16 %v857, %v849
        %v1042 = vpack.c.b16 %v858, %v850
        %v1043 = vpack.c.b16 %v859, %v851
        %v1044 = vpack.c.b16 %v860, %v852
        %v1045 = vpack.c.b16 %v869, %v861
        %v1046 = vpack.c.b16 %v870, %v862
        %v1047 = vpack.c.b16 %v871, %v863
        %v1048 = vpack.c.b16 %v872, %v864
        %v1049 = vpack.c.b16 %v873, %v865
        %v1050 = vpack.c.b16 %v874, %v866
        %v1051 = vpack.c.b16 %v875, %v867
        %v1052 = vpack.c.b16 %v876, %v868
        %v1053 = vpack.c.b16 %v885, %v877
        %v1054 = vpack.c.b16 %v886, %v878
        %v1055 = vpack.c.b16 %v887, %v879
        %v1056 = vpack.c.b16 %v888, %v880
        %v1057 = vpack.c.b16 %v889, %v881
        %v1058 = vpack.c.b16 %v890, %v882
        %v1059 = vpack.c.b16 %v891, %v883
        %v1060 = vpack.c.b16 %v892, %v884
        %v1061 = vpack.c.b16 %v901, %v893
        %v1062 = vpack.c.b16 %v902, %v894
        %v1063 = vpack.c.b16 %v903, %v895
        %v1064 = vpack.c.b16 %v904, %v896
        %v1065 = vpack.c.b16 %v905, %v897
        %v1066 = vpack.c.b16 %v906, %v898
        %v1067 = vpack.c.b16 %v907, %v899
        %v1068 = vpack.c.b16 %v908, %v900
        %v1069 = vpack.c.b16 %v917, %v909
        %v1070 = vpack.c.b16 %v918, %v910
        %v1071 = vpack.c.b16 %v919, %v911
        %v1072 = vpack.c.b16 %v920, %v912
        %v1073 = vpack.c.b16 %v921, %v913
        %v1074 = vpack.c.b16 %v922, %v914
        %v1075 = vpack.c.b16 %v923, %v915
        %v1076 = vpack.c.b16 %v924, %v916
        %v1077 = vpack.c.b16 %v933, %v925
        %v1078 = vpack.c.b16 %v934, %v926
        %v1079 = vpack.c.b16 %v935, %v927
        %v1080 = vpack.c.b16 %v936, %v928
        %v1081 = vpack.c.b16 %v937, %v929
        %v1082 = vpack.c.b16 %v938, %v930
        %v1083 = vpack.c.b16 %v939, %v931
        %v1084 = vpack.c.b16 %v940, %v932
        %v1085 = vpack.c.b16 %v949, %v941
        %v1086 = vpack.c.b16 %v950, %v942
        %v1087 = vpack.c.b16 %v951, %v943
        %v1088 = vpack.c.b16 %v952, %v944
        %v1089 = vpack.c.b16 %v953, %v945
        %v1090 = vpack.c.b16 %v954, %v946
        %v1091 = vpack.c.b16 %v955, %v947
        %v1092 = vpack.c.b16 %v956, %v948
        %v1093 = vpack.c.b16 %v965, %v957
        %v1094 = vpack.c.b16 %v966, %v958
        %v1095 = vpack.c.b16 %v967, %v959
        %v1096 = vpack.c.b16 %v968, %v960
        %v1097 = vpack.c.b16 %v969, %v961
        %v1098 = vpack.c.b16 %v970, %v962
        %v1099 = vpack.c.b16 %v971, %v963
        %v1100 = vpack.c.b16 %v972, %v964
        %1229 = vmatprep.subr.bf16.mxu0 %v1030
        %1230 = vmatpush1.bf16.msra.mxu0 %v1029
        %1231 = vmatprep.subr.bf16.mxu0 %v1022
        %1232 = vmatpush1.bf16.msra.mxu0 %v1021
        %1233 = vmatprep.subr.bf16.mxu0 %v1014
        %1234 = vmatpush1.bf16.msra.mxu0 %v1013
        %1235 = vmatprep.subr.bf16.mxu0 %v1006
        %1236 = vmatpush1.bf16.msra.mxu0 %v1005
        %1237 = vmatprep.subr.bf16.mxu0 %v998
        %1238 = vmatpush1.bf16.msra.mxu0 %v997
        %1239 = vmatprep.subr.bf16.mxu0 %v990
        %1240 = vmatpush1.bf16.msra.mxu0 %v989
        %1241 = vmatprep.subr.bf16.mxu0 %v982
        %1242 = vmatpush1.bf16.msra.mxu0 %v981
        %1243 = vmatprep.subr.bf16.mxu0 %v974
        %1244 = vmatpush1.bf16.msra.mxu0 %v973
        %1245 = vmatprep.subr.bf16.mxu0 %v1094
        %1246 = vmatpush2.bf16.msra.mxu0 %v1093
        %1247 = vmatprep.subr.bf16.mxu0 %v1086
        %1248 = vmatpush2.bf16.msra.mxu0 %v1085
        %1249 = vmatprep.subr.bf16.mxu0 %v1078
        %1250 = vmatpush2.bf16.msra.mxu0 %v1077
        %1251 = vmatprep.subr.bf16.mxu0 %v1070
        %1252 = vmatpush2.bf16.msra.mxu0 %v1069
        %1253 = vmatprep.subr.bf16.mxu0 %v1062
        %1254 = vmatpush2.bf16.msra.mxu0 %v1061
        %1255 = vmatprep.subr.bf16.mxu0 %v1054
        %1256 = vmatpush2.bf16.msra.mxu0 %v1053
        %1257 = vmatprep.subr.bf16.mxu0 %v1046
        %1258 = vmatpush2.bf16.msra.mxu0 %v1045
        %1259 = vmatprep.subr.bf16.mxu0 %v1038
        %1260 = vmatpush2.bf16.msra.mxu0 %v1037
        %1261 = vmatprep.mubr.bf16.mxu0 %v586
        %1262 = vmatmul.mubr.bf16.gmra.mxu0 %v585
        %v1263 = vpop.f32.mrf.mxu0
        %v1264 = vadd.f32 %v580, %v1263
        %v1265 = vpop.f32.mrf.mxu0
        %v1266 = vadd.f32 %v580, %v1265
        %v1267 = vpop.f32.mrf.mxu0
        %v1268 = vpop.f32.mrf.mxu0
        %1269 = vdwg.mxu0
        %1270 = vmatprep.subr.bf16.mxu0 %v1032
        %1271 = vmatpush1.bf16.msra.mxu0 %v1031
        %1272 = vmatprep.subr.bf16.mxu0 %v1024
        %1273 = vmatpush1.bf16.msra.mxu0 %v1023
        %1274 = vmatprep.subr.bf16.mxu0 %v1016
        %1275 = vmatpush1.bf16.msra.mxu0 %v1015
        %1276 = vmatprep.subr.bf16.mxu0 %v1008
        %1277 = vmatpush1.bf16.msra.mxu0 %v1007
        %1278 = vmatprep.subr.bf16.mxu0 %v1000
        %1279 = vmatpush1.bf16.msra.mxu0 %v999
        %1280 = vmatprep.subr.bf16.mxu0 %v992
        %1281 = vmatpush1.bf16.msra.mxu0 %v991
        %1282 = vmatprep.subr.bf16.mxu0 %v984
        %1283 = vmatpush1.bf16.msra.mxu0 %v983
        %1284 = vmatprep.subr.bf16.mxu0 %v976
        %1285 = vmatpush1.bf16.msra.mxu0 %v975
        %1286 = vmatprep.subr.bf16.mxu0 %v1096
        %1287 = vmatpush2.bf16.msra.mxu0 %v1095
        %1288 = vmatprep.subr.bf16.mxu0 %v1088
        %1289 = vmatpush2.bf16.msra.mxu0 %v1087
        %1290 = vmatprep.subr.bf16.mxu0 %v1080
        %1291 = vmatpush2.bf16.msra.mxu0 %v1079
        %1292 = vmatprep.subr.bf16.mxu0 %v1072
        %1293 = vmatpush2.bf16.msra.mxu0 %v1071
        %1294 = vmatprep.subr.bf16.mxu0 %v1064
        %1295 = vmatpush2.bf16.msra.mxu0 %v1063
        %1296 = vmatprep.subr.bf16.mxu0 %v1056
        %1297 = vmatpush2.bf16.msra.mxu0 %v1055
        %1298 = vmatprep.subr.bf16.mxu0 %v1048
        %1299 = vmatpush2.bf16.msra.mxu0 %v1047
        %1300 = vmatprep.subr.bf16.mxu0 %v1040
        %1301 = vmatpush2.bf16.msra.mxu0 %v1039
        %1302 = vmatprep.mubr.bf16.mxu0 %v586
        %1303 = vmatmul.mubr.bf16.gmra.mxu0 %v585
        %v1304 = vpop.f32.mrf.mxu0
        %v1305 = vadd.f32 %v580, %v1304
        %v1306 = vpop.f32.mrf.mxu0
        %v1307 = vadd.f32 %v580, %v1306
        %v1308 = vpop.f32.mrf.mxu0
        %v1309 = vpop.f32.mrf.mxu0
        %1310 = vdwg.mxu0
        %1311 = vmatprep.subr.bf16.mxu0 %v1034
        %1312 = vmatpush1.bf16.msra.mxu0 %v1033
        %1313 = vmatprep.subr.bf16.mxu0 %v1026
        %1314 = vmatpush1.bf16.msra.mxu0 %v1025
        %1315 = vmatprep.subr.bf16.mxu0 %v1018
        %1316 = vmatpush1.bf16.msra.mxu0 %v1017
        %1317 = vmatprep.subr.bf16.mxu0 %v1010
        %1318 = vmatpush1.bf16.msra.mxu0 %v1009
        %1319 = vmatprep.subr.bf16.mxu0 %v1002
        %1320 = vmatpush1.bf16.msra.mxu0 %v1001
        %1321 = vmatprep.subr.bf16.mxu0 %v994
        %1322 = vmatpush1.bf16.msra.mxu0 %v993
        %1323 = vmatprep.subr.bf16.mxu0 %v986
        %1324 = vmatpush1.bf16.msra.mxu0 %v985
        %1325 = vmatprep.subr.bf16.mxu0 %v978
        %1326 = vmatpush1.bf16.msra.mxu0 %v977
        %1327 = vmatprep.subr.bf16.mxu0 %v1098
        %1328 = vmatpush2.bf16.msra.mxu0 %v1097
        %1329 = vmatprep.subr.bf16.mxu0 %v1090
        %1330 = vmatpush2.bf16.msra.mxu0 %v1089
        %1331 = vmatprep.subr.bf16.mxu0 %v1082
        %1332 = vmatpush2.bf16.msra.mxu0 %v1081
        %1333 = vmatprep.subr.bf16.mxu0 %v1074
        %1334 = vmatpush2.bf16.msra.mxu0 %v1073
        %1335 = vmatprep.subr.bf16.mxu0 %v1066
        %1336 = vmatpush2.bf16.msra.mxu0 %v1065
        %1337 = vmatprep.subr.bf16.mxu0 %v1058
        %1338 = vmatpush2.bf16.msra.mxu0 %v1057
        %1339 = vmatprep.subr.bf16.mxu0 %v1050
        %1340 = vmatpush2.bf16.msra.mxu0 %v1049
        %1341 = vmatprep.subr.bf16.mxu0 %v1042
        %1342 = vmatpush2.bf16.msra.mxu0 %v1041
        %1343 = vmatprep.mubr.bf16.mxu0 %v586
        %1344 = vmatmul.mubr.bf16.gmra.mxu0 %v585
        %v1345 = vpop.f32.mrf.mxu0
        %v1346 = vadd.f32 %v580, %v1345
        %v1347 = vpop.f32.mrf.mxu0
        %v1348 = vadd.f32 %v580, %v1347
        %v1349 = vpop.f32.mrf.mxu0
        %v1350 = vpop.f32.mrf.mxu0
        %1351 = vdwg.mxu0
        %1352 = vmatprep.subr.bf16.mxu0 %v1036
        %1353 = vmatpush1.bf16.msra.mxu0 %v1035
        %1354 = vmatprep.subr.bf16.mxu0 %v1028
        %1355 = vmatpush1.bf16.msra.mxu0 %v1027
        %1356 = vmatprep.subr.bf16.mxu0 %v1020
        %1357 = vmatpush1.bf16.msra.mxu0 %v1019
        %1358 = vmatprep.subr.bf16.mxu0 %v1012
        %1359 = vmatpush1.bf16.msra.mxu0 %v1011
        %1360 = vmatprep.subr.bf16.mxu0 %v1004
        %1361 = vmatpush1.bf16.msra.mxu0 %v1003
        %1362 = vmatprep.subr.bf16.mxu0 %v996
        %1363 = vmatpush1.bf16.msra.mxu0 %v995
        %1364 = vmatprep.subr.bf16.mxu0 %v988
        %1365 = vmatpush1.bf16.msra.mxu0 %v987
        %1366 = vmatprep.subr.bf16.mxu0 %v980
        %1367 = vmatpush1.bf16.msra.mxu0 %v979
        %1368 = vmatprep.subr.bf16.mxu0 %v1100
        %1369 = vmatpush2.bf16.msra.mxu0 %v1099
        %1370 = vmatprep.subr.bf16.mxu0 %v1092
        %1371 = vmatpush2.bf16.msra.mxu0 %v1091
        %1372 = vmatprep.subr.bf16.mxu0 %v1084
        %1373 = vmatpush2.bf16.msra.mxu0 %v1083
        %1374 = vmatprep.subr.bf16.mxu0 %v1076
        %1375 = vmatpush2.bf16.msra.mxu0 %v1075
        %1376 = vmatprep.subr.bf16.mxu0 %v1068
        %1377 = vmatpush2.bf16.msra.mxu0 %v1067
        %1378 = vmatprep.subr.bf16.mxu0 %v1060
        %1379 = vmatpush2.bf16.msra.mxu0 %v1059
        %1380 = vmatprep.subr.bf16.mxu0 %v1052
        %1381 = vmatpush2.bf16.msra.mxu0 %v1051
        %1382 = vmatprep.subr.bf16.mxu0 %v1044
        %1383 = vmatpush2.bf16.msra.mxu0 %v1043
        %1384 = vmatprep.mubr.bf16.mxu0 %v586
        %1385 = vmatmul.mubr.bf16.gmra.mxu0 %v585
        %v1386 = vpop.f32.mrf.mxu0
        %v1387 = vadd.f32 %v580, %v1386
        %v1388 = vpop.f32.mrf.mxu0
        %v1389 = vadd.f32 %v580, %v1388
        %v1390 = vpop.f32.mrf.mxu0
        %v1391 = vpop.f32.mrf.mxu0
        %1392 = vdwg.mxu0
        %v1393 = vmax.f32 %v1264, 0.0
        %v1394 = vmax.f32 %v1266, 0.0
        %v1395 = vmax.f32 %v1305, 0.0
        %v1396 = vmax.f32 %v1307, 0.0
        %v1397 = vmax.f32 %v1346, 0.0
        %v1398 = vmax.f32 %v1348, 0.0
        %v1399 = vmax.f32 %v1387, 0.0
        %v1400 = vmax.f32 %v1389, 0.0
        %1401 = vst [vmem:[%s445] sm:$0xff] %v1393
        %1402 = vst [vmem:[%s445 + $0x8] sm:$0xff] %v1394
        %1403 = vst [vmem:[%s445 + $0x10] sm:$0xff] %v1395
        %1404 = vst [vmem:[%s445 + $0x18] sm:$0xff] %v1396
        %1405 = vst [vmem:[%s445 + $0x20] sm:$0xff] %v1397
        %1406 = vst [vmem:[%s445 + $0x28] sm:$0xff] %v1398
        %1407 = vst [vmem:[%s445 + $0x30] sm:$0xff] %v1399
        %1408 = vst [vmem:[%s445 + $0x38] sm:$0xff] %v1400
        %s1409 = smul.u32 8, %s14
        %p1410 = scmp.lt.s32.totalorder %s1409, 103
        %s1411 = scalar_select %p1410, %s1409, 103
        %s1412 = smul.addr %s1411, 8
        %s1413 = scalar_lea.vmem %s3, %s1412
        // Predicated region
        $region56: #{forward.15} parent=50 // pred_check
          %p1414 = pneg %p100
        $region57: #{forward.15} parent=50 // pred_check_branch
          %1416 = sbr.rel (%p1414) target = $region59
        $region58: #{forward.15} parent=50 // pred_region
          %s1417 = smul.u32 8, %s14
        $region59: #{forward.15} parent=50 // pred_fallthru
          _
      $region51: #{forward.15} parent=5 // pred_fallthru
        _
      %p1418 = scmp.le.s32.totalorder 2, %s9
      // Predicated region
      $region60: #{forward.15} parent=5 // pred_check
        %p1419 = pneg %p1418
      $region61: #{forward.15} parent=5 // pred_check_branch
        %1421 = sbr.rel (%p1419) target = $region63
      $region62: #{forward.15} parent=5 // pred_region
        %s1422 = ssub.s32 %s9, 2
        // Predicated region
        $region64: #{forward.15} parent=62 // pred_check
          %p1423 = pneg %p106
        $region65: #{forward.15} parent=62 // pred_check_branch
          %1425 = sbr.rel (%p1423) target = $region67
        $region66: #{forward.15} parent=62 // pred_region
          %s1426 = smul.u32 8, %s15
          %p1427 = scmp.lt.s32.totalorder %s1426, 103
          %s1428 = scalar_select %p1427, %s1426, 103
          %s1429 = smul.addr %s1428, 8
          %s1430 = scalar_lea.vmem %s3, %s1429
        $region67: #{forward.15} parent=62 // pred_fallthru
          _
      $region63: #{forward.15} parent=5 // pred_fallthru
        _
    $region6: #{forward.15} parent=1 // loop_footer
      %s13 = sadd.s32 1, %s9
    $region7: #{forward.15} parent=1 // loop_footer_branch
      %8 = sbr.rel target = $region3
    $region8: #{forward.15} parent=1 // loop_exit
      _

</llo_original>
